<compile_context>
chip_gen: v6e
topology: v6e:2x2x1
jax: 0.10.0
libtpu: 0.0.40
codegen_flags: <defaults>
</compile_context>

<pallas_src>
import functools

import jax
import jax.numpy as jnp
from jax.experimental import pallas as pl
from jax.experimental.pallas import tpu as pltpu

EPS = 1e-5


# ---------------------------------------------------------------------------
# Per-generation VMEM budget and tile selection.
# ---------------------------------------------------------------------------
_VMEM_LIMIT_CACHE = None


def _vmem_limit_bytes():
    """Scoped-VMEM budget: ~3/4 of physical, capped at 100 MiB.

    v5e/v6e (128 MiB physical) -> ~96 MiB; v7x (64 MiB physical) -> 48 MiB.
    """
    global _VMEM_LIMIT_CACHE
    if _VMEM_LIMIT_CACHE is None:
        cap = 128 * 1024 * 1024
        try:
            cap = int(getattr(pltpu.get_tpu_info(), "vmem_capacity_bytes", cap))
        except Exception:
            pass
        _VMEM_LIMIT_CACHE = min(cap * 3 // 4, 100 * 1024 * 1024)
    return _VMEM_LIMIT_CACHE


def _conv_tile_bytes(th, w, cin, cout):
    """Approximate VMEM resident bytes for one pass-1 grid step."""
    db = 2  # double-buffered pipeline blocks
    in_b = db * (th * w * cin + 2 * w * cin) * 2            # slab + halo rows, bf16
    wgt_b = db * 9 * cin * cout * 2                         # packed taps, bf16
    out_b = db * (th * w * cout * 2 + 2 * cout * 4)         # conv bf16 + stats f32
    slab_b = (th + 2) * (w + 2) * cin * 2                   # scratch, bf16
    patch_b = th * w * 9 * cin * 2                          # scratch, bf16
    return in_b + wgt_b + out_b + slab_b + patch_b


def _pick_conv_row_tile(h, w, cin, cout, vmem_limit):
    """Largest row tile TH (divisor of H, output block 8-aligned) in budget."""
    budget = int(vmem_limit * 0.6)  # headroom for compiler-internal scratch
    cands = [t for t in range(h, 0, -1)
             if h % t == 0 and ((t * w) % 8 == 0 or t == h)]
    for t in cands:
        if _conv_tile_bytes(t, w, cin, cout) <= budget:
            return t
    return cands[-1]


def _pick_bn_row_tile(h, wc, vmem_limit):
    budget = int(vmem_limit * 0.6)
    cands = [t for t in range(h, 0, -1)
             if h % t == 0 and (t % 8 == 0 or t == h)]
    for t in cands:
        if 2 * t * wc * (2 + 4) <= budget:   # bf16 in + f32 out, double-buffered
            return t
    return cands[-1]


# ---------------------------------------------------------------------------
# Pass 1: 3x3 conv (zero pad=1 handled in-kernel) + partial BN statistics,
# with optional fused BN+ReLU of the *previous* stage on the input path.
# ---------------------------------------------------------------------------
def _conv_stats_kernel(main_ref, top_ref, bot_ref, scale_ref, shift_ref, w_ref,
                       conv_ref, stats_ref, slab_ref, patch_ref, *, apply_pre):
    """Grid = (batch, row-tiles).

    main_ref  : (1, TH, W, Cin)   rows [t*TH, t*TH+TH) of this image
    top_ref   : (1, 1, W, Cin)    row t*TH-1 (any valid row when t == 0)
    bot_ref   : (1, 1, W, Cin)    row t*TH+TH (any valid row when t == last)
    scale_ref : (1, Cin) f32      fused input-BN scale (stage 2 only)
    shift_ref : (1, Cin) f32      fused input-BN shift (stage 2 only)
    w_ref     : (9*Cin, Cout)     taps packed along K, k = dy*3 + dx
    conv_ref  : (1, TH*W, Cout)   raw conv tile, bf16, flat (no relayout)
    stats_ref : (1, 1, 2, Cout)   per-tile [sum, sum_sq] of the f32 accumulator
    slab_ref  : (TH+2, W+2, Cin)  VMEM scratch, zero-padded halo
    patch_ref : (TH*W, 9*Cin)     VMEM im2col scratch
    """
    t = pl.program_id(1)
    last_t = pl.num_programs(1) - 1
    _, th, w, cin = main_ref.shape

    if apply_pre:
        sc = scale_ref[...].astype(jnp.float32).reshape(1, 1, cin)
        sh = shift_ref[...].astype(jnp.float32).reshape(1, 1, cin)

    def pre(v):
        # Previous stage's BN+ReLU fused into this conv's input path
        # (removes one HBM write+read of the intermediate activation).
        if not apply_pre:
            return v
        return jnp.maximum(v.astype(jnp.float32) * sc + sh, 0.0).astype(v.dtype)

    # ---- assemble the zero-padded (TH+2, W+2, Cin) input slab in VMEM ------
    # Width-halo columns (incl. corners) are always zero: conv padding is
    # applied AFTER the previous BN+ReLU, so padded pixels are exactly zero
    # even in the fused stage-2 path.
    zcol = jnp.zeros((th + 2, 1, cin), slab_ref.dtype)
    slab_ref[:, 0:1, :] = zcol
    slab_ref[:, w + 1:w + 2, :] = zcol

    slab_ref[1:th + 1, 1:w + 1, :] = pre(main_ref[0])

    zrow = jnp.zeros((1, w, cin), slab_ref.dtype)

    @pl.when(t == 0)
    def _():
        slab_ref[0:1, 1:w + 1, :] = zrow

    @pl.when(t > 0)
    def _():
        slab_ref[0:1, 1:w + 1, :] = pre(top_ref[0])

    @pl.when(t == last_t)
    def _():
        slab_ref[th + 1:th + 2, 1:w + 1, :] = zrow

    @pl.when(t < last_t)
    def _():
        slab_ref[th + 1:th + 2, 1:w + 1, :] = pre(bot_ref[0])

    # ---- im2col + one fat MXU dot (K = 9*Cin, f32 accumulation) ------------
    # Per-tap slices come straight from the VMEM scratch ref (no whole-slab
    # value bound in vregs).
    # TODO(synk): for Cin % 128 != 0 the per-tap patch writes are masked
    # partial stores; measure the 9-accumulating-K=Cin-dots variant against
    # this on realistic channel widths and keep the faster one.
    for dy in range(3):
        for dx in range(3):
            k = dy * 3 + dx
            patch_ref[:, k * cin:(k + 1) * cin] = (
                slab_ref[dy:dy + th, dx:dx + w, :].reshape(th * w, cin))

    acc = jnp.dot(patch_ref[...], w_ref[...],
                  preferred_element_type=jnp.float32)         # (TH*W, Cout)

    # Partial BatchNorm statistics from the f32 accumulator (never from the
    # bf16-stored tensor).
    stats_ref[0, 0, 0:1, :] = jnp.sum(acc, axis=0, keepdims=True)
    stats_ref[0, 0, 1:2, :] = jnp.sum(acc * acc, axis=0, keepdims=True)

    # Flat (TH*W, Cout) store: no in-kernel relayout; wrapper reshapes are
    # free bitcasts of the contiguous buffer.
    conv_ref[0] = acc.astype(conv_ref.dtype)


def _conv3x3_stats(x_nhwc, w_packed, pre_scale, pre_shift, *, apply_pre,
                   vmem_limit):
    """x_nhwc: (N, H, W, Cin) bf16.  w_packed: (9*Cin, Cout) bf16.

    Returns (conv_raw (N, H*W, Cout) bf16, part_stats (N, HT, 2, Cout) f32).
    """
    n, h, w, cin = x_nhwc.shape
    kcin, cout = w_packed.shape
    assert kcin == 9 * cin
    th = _pick_conv_row_tile(h, w, cin, cout, vmem_limit)
    ht = h // th

    flops = 2 * n * h * w * kcin * cout + (5 * n * h * w * cin if apply_pre else 0)
    bytes_accessed = (n * h * w * cin * 2 + n * ht * 2 * w * cin * 2
                      + kcin * cout * 2
                      + n * h * w * cout * 2 + n * ht * 2 * cout * 4)

    kernel = functools.partial(_conv_stats_kernel, apply_pre=apply_pre)

    grid_spec = pltpu.PrefetchScalarGridSpec(
        num_scalar_prefetch=0,
        grid=(n, ht),
        in_specs=[
            # Row-slab streaming: only TH (+2 halo) rows resident per step.
            pl.BlockSpec((1, th, w, cin), lambda b, t: (b, t, 0, 0)),
            # Halo rows as 1-row blocks (block size 1 => block index == row).
            # Clamped at the image border; the kernel overwrites with zeros.
            pl.BlockSpec((1, 1, w, cin),
                         lambda b, t: (b, (t > 0) * (t * th - 1), 0, 0)),
            pl.BlockSpec((1, 1, w, cin),
                         lambda b, t: (b, (t + 1) * th - (t == ht - 1), 0, 0)),
            pl.BlockSpec((1, cin), lambda b, t: (0, 0)),
            pl.BlockSpec((1, cin), lambda b, t: (0, 0)),
            pl.BlockSpec((kcin, cout), lambda b, t: (0, 0)),
        ],
        out_specs=(
            pl.BlockSpec((1, th * w, cout), lambda b, t: (b, t, 0)),
            pl.BlockSpec((1, 1, 2, cout), lambda b, t: (b, t, 0, 0)),
        ),
        scratch_shapes=[
            pltpu.VMEM((th + 2, w + 2, cin), x_nhwc.dtype),   # padded slab
            pltpu.VMEM((th * w, kcin), x_nhwc.dtype),         # im2col patch
        ],
    )
    return pl.pallas_call(
        kernel,
        out_shape=(
            jax.ShapeDtypeStruct((n, h * w, cout), jnp.bfloat16),
            jax.ShapeDtypeStruct((n, ht, 2, cout), jnp.float32),
        ),
        grid_spec=grid_spec,
        compiler_params=pltpu.CompilerParams(
            # Both axes are independent (stats reduced outside the kernel), so
            # both can be sharded across TensorCores (v7x has 2 per chip).
            dimension_semantics=("parallel", "parallel"),
            vmem_limit_bytes=vmem_limit),
        cost_estimate=pl.CostEstimate(flops=flops, transcendentals=0,
                                      bytes_accessed=bytes_accessed),
    )(x_nhwc, x_nhwc, x_nhwc, pre_scale, pre_shift, w_packed)


# ---------------------------------------------------------------------------
# BN scale/shift from partial sums, and the final lane-dense BN + ReLU pass.
# ---------------------------------------------------------------------------
def _bn_scale_shift(part_stats, gamma, beta, count):
    """Training-mode BN affine from per-tile partial sums (f32, biased var)."""
    # TODO(synk): switch to mean-shifted / Welford partial sums if the
    # E[x^2]-E[x]^2 formula loses precision at very large N*H*W.
    s = jnp.sum(part_stats, axis=(0, 1))                     # (2, Cout)
    mean = s[0] / count
    var = jnp.maximum(s[1] / count - mean * mean, 0.0)
    scale = gamma * jax.lax.rsqrt(var + EPS)
    shift = beta - mean * scale
    return scale, shift


def _bn_relu_kernel(y_ref, scale_ref, shift_ref, o_ref):
    y = y_ref[...].astype(jnp.float32)                       # (1, TH, W*Cout)
    o_ref[...] = jnp.maximum(y * scale_ref[...] + shift_ref[...],
                             0.0).astype(o_ref.dtype)


def _bn_relu(y_flat, scale_row, shift_row, *, vmem_limit):
    """y_flat: (N, H, W*Cout) bf16 -> (N, H, W*Cout) f32, lane-dense tiles."""
    n, h, wc = y_flat.shape
    th = _pick_bn_row_tile(h, wc, vmem_limit)
    ht = h // th
    grid_spec = pltpu.PrefetchScalarGridSpec(
        num_scalar_prefetch=0,
        grid=(n, ht),
        in_specs=[
            pl.BlockSpec((1, th, wc), lambda b, t: (b, t, 0)),
            pl.BlockSpec((1, wc), lambda b, t: (0, 0)),
            pl.BlockSpec((1, wc), lambda b, t: (0, 0)),
        ],
        out_specs=pl.BlockSpec((1, th, wc), lambda b, t: (b, t, 0)),
    )
    return pl.pallas_call(
        _bn_relu_kernel,
        out_shape=jax.ShapeDtypeStruct((n, h, wc), jnp.float32),
        grid_spec=grid_spec,
        compiler_params=pltpu.CompilerParams(
            dimension_semantics=("parallel", "parallel"),
            vmem_limit_bytes=vmem_limit),
        cost_estimate=pl.CostEstimate(flops=3 * n * h * wc, transcendentals=0,
                                      bytes_accessed=n * h * wc * (2 + 4) + 2 * wc * 4),
    )(y_flat, scale_row, shift_row)


# ---------------------------------------------------------------------------
# Full DoubleConv forward (NCHW in/out, like the PyTorch module).
# ---------------------------------------------------------------------------
def double_conv(x_nchw, params, *, compute_dtype=jnp.bfloat16):
    w1, g1, b1, w2, g2, b2 = params
    n, cin, h, w = x_nchw.shape
    cout = w1.shape[1]
    count = n * h * w
    vmem_limit = _vmem_limit_bytes()

    x = jnp.transpose(x_nchw, (0, 2, 3, 1)).astype(compute_dtype)   # NHWC bf16

    # Stage 1: conv1 + BN1 partial statistics (no input pre-activation).
    ones = jnp.ones((1, cin), jnp.float32)
    zeros = jnp.zeros((1, cin), jnp.float32)
    conv1, st1 = _conv3x3_stats(x, w1.astype(compute_dtype), ones, zeros,
                                apply_pre=False, vmem_limit=vmem_limit)
    scale1, shift1 = _bn_scale_shift(st1, g1, b1, count)

    # Stage 2: BN1 + ReLU fused into conv2's input path.
    y1 = conv1.reshape(n, h, w, cout)                 # free view of (n, h*w, c)
    conv2, st2 = _conv3x3_stats(y1, w2.astype(compute_dtype),
                                scale1[None, :], shift1[None, :],
                                apply_pre=True, vmem_limit=vmem_limit)
    scale2, shift2 = _bn_scale_shift(st2, g2, b2, count)

    # Final BN2 + ReLU on the lane-dense (N, H, W*Cout) view.
    conv2_flat = conv2.reshape(n, h, w * cout)        # free view
    scale_row = jnp.tile(scale2, w)[None, :]          # (1, W*Cout)
    shift_row = jnp.tile(shift2, w)[None, :]
    y = _bn_relu(conv2_flat, scale_row, shift_row, vmem_limit=vmem_limit)
    return jnp.transpose(y.reshape(n, h, w, cout), (0, 3, 1, 2))    # NCHW f32


# ---------------------------------------------------------------------------
# Parameter construction and pure-JAX reference.
# ---------------------------------------------------------------------------
def _pack_taps(w_torch):
    """(Cout, Cin, 3, 3) -> (9*Cin, Cout), row index = (dy*3 + dx)*Cin + ci."""
    cout, cin = w_torch.shape[0], w_torch.shape[1]
    return jnp.transpose(w_torch, (2, 3, 1, 0)).reshape(9 * cin, cout)


def init_params(key, in_channels, out_channels):
    """Synthetic params with nn.Conv2d/BatchNorm2d (fresh module) shapes."""
    k1, k2 = jax.random.split(key, 2)
    w1_t = 0.1 * jax.random.normal(k1, (out_channels, in_channels, 3, 3),
                                   jnp.float32)
    w2_t = 0.1 * jax.random.normal(k2, (out_channels, out_channels, 3, 3),
                                   jnp.float32)
    g1 = jnp.ones((out_channels,), jnp.float32)   # BN default gamma=1
    b1 = jnp.zeros((out_channels,), jnp.float32)  # BN default beta=0
    g2 = jnp.ones((out_channels,), jnp.float32)
    b2 = jnp.zeros((out_channels,), jnp.float32)
    params = (_pack_taps(w1_t), g1, b1, _pack_taps(w2_t), g2, b2)
    return params, (w1_t, w2_t)


def _reference(x_nchw, w1_t, w2_t, g1, b1, g2, b2,
               compute_dtype=jnp.bfloat16, store_dtype=jnp.bfloat16):
    """Pure-JAX reference of the PyTorch forward (train-mode BN), evaluated at
    the kernel's storage precision: conv operands in bf16 (MXU), f32
    accumulation and BN statistics, conv tensors stored in bf16."""
    def q(a, dt):
        return a.astype(dt).astype(jnp.float32)

    def stage(x, w_torch, g, b):
        y = jax.lax.conv_general_dilated(
            q(x, compute_dtype), q(w_torch, compute_dtype),
            window_strides=(1, 1), padding=((1, 1), (1, 1)),
            dimension_numbers=("NCHW", "OIHW", "NCHW"),
            precision=jax.lax.Precision.HIGHEST)
        mean = jnp.mean(y, axis=(0, 2, 3))
        var = jnp.mean((y - mean.reshape(1, -1, 1, 1)) ** 2, axis=(0, 2, 3))
        inv = jax.lax.rsqrt(var + EPS)
        scale = (g * inv).reshape(1, -1, 1, 1)
        shift = (b - mean * g * inv).reshape(1, -1, 1, 1)
        ys = q(y, store_dtype)            # mirror bf16 storage of the conv tensor
        return jnp.maximum(ys * scale + shift, 0.0)

    y = stage(x_nchw, w1_t, g1, b1)
    return stage(y, w2_t, g2, b2)


if __name__ == "__main__":
    key = jax.random.PRNGKey(0)
    kx, kp = jax.random.split(key)

    N, Cin, Cout, H, W = 2, 4, 8, 16, 16
    x = jax.random.normal(kx, (N, Cin, H, W), jnp.float32)

    params, (w1_t, w2_t) = init_params(kp, Cin, Cout)

    fwd = jax.jit(double_conv)
    out = jax.block_until_ready(fwd(x, params))
    assert out.shape == (N, Cout, H, W), out.shape

    ref = _reference(x, w1_t, w2_t, params[1], params[2], params[4], params[5])
    max_err = float(jnp.max(jnp.abs(out - ref)))
    assert jnp.allclose(out, ref, rtol=1e-2, atol=1e-2), f"max_err={max_err}"

    print("KERNEL_OK")
</pallas_src>

<mosaic_0001>
module attributes {stable_mosaic.version = 11 : i64} {
  func.func @_conv_stats_kernel(%arg0: i32, %arg1: i32, %arg2: memref<1x16x16x4xbf16, #tpu.memory_space<vmem>>, %arg3: memref<1x1x16x4xbf16, #tpu.memory_space<vmem>>, %arg4: memref<1x1x16x4xbf16, #tpu.memory_space<vmem>>, %arg5: memref<1x4xf32, #tpu.memory_space<vmem>>, %arg6: memref<1x4xf32, #tpu.memory_space<vmem>>, %arg7: memref<36x8xbf16, #tpu.memory_space<vmem>>, %arg8: memref<1x256x8xbf16, #tpu.memory_space<vmem>>, %arg9: memref<1x1x2x8xf32, #tpu.memory_space<vmem>>, %arg10: memref<18x18x4xbf16, #tpu.memory_space<vmem>>, %arg11: memref<256x36xbf16, #tpu.memory_space<vmem>>) attributes {dimension_semantics = [#tpu.dimension_semantics<parallel>, #tpu.dimension_semantics<parallel>], iteration_bounds = array<i64: 2, 1>, scalar_prefetch = 0 : i64, scratch_operands = 2 : i64, tpu.core_type = #tpu.core_type<tc>, window_params = [{transform_indices = @transform_0, window_bounds = array<i64: 1, 16, 16, 4>}, {transform_indices = @transform_1, window_bounds = array<i64: 1, 1, 16, 4>}, {transform_indices = @transform_2, window_bounds = array<i64: 1, 1, 16, 4>}, {pipeline_mode = #tpu.pipeline_mode<synchronous>, transform_indices = @transform_3, window_bounds = array<i64: 1, 4>}, {pipeline_mode = #tpu.pipeline_mode<synchronous>, transform_indices = @transform_4, window_bounds = array<i64: 1, 4>}, {pipeline_mode = #tpu.pipeline_mode<synchronous>, transform_indices = @transform_5, window_bounds = array<i64: 36, 8>}, {transform_indices = @transform_6, window_bounds = array<i64: 1, 256, 8>}, {transform_indices = @transform_7, window_bounds = array<i64: 1, 1, 2, 8>}]} {
    %cst = arith.constant 0.000000e+00 : bf16
    %0 = vector.broadcast %cst : bf16 to vector<18x1x4xbf16>
    %c0 = arith.constant 0 : index
    %c0_0 = arith.constant 0 : index
    %c0_1 = arith.constant 0 : index
    %1 = vector.load %arg10[%c0, %c0_0, %c0_1] : memref<18x18x4xbf16, #tpu.memory_space<vmem>>, vector<18x1x4xbf16>
    tpu.vector_store %arg10[%c0, %c0_0, %c0_1], %0 {strides = array<i32>} : memref<18x18x4xbf16, #tpu.memory_space<vmem>>, vector<18x1x4xbf16>,
    %c0_2 = arith.constant 0 : index
    %c17 = arith.constant 17 : index
    %c0_3 = arith.constant 0 : index
    %2 = vector.load %arg10[%c0_2, %c17, %c0_3] : memref<18x18x4xbf16, #tpu.memory_space<vmem>>, vector<18x1x4xbf16>
    tpu.vector_store %arg10[%c0_2, %c17, %c0_3], %0 {strides = array<i32>} : memref<18x18x4xbf16, #tpu.memory_space<vmem>>, vector<18x1x4xbf16>,
    %c0_4 = arith.constant 0 : index
    %c0_5 = arith.constant 0 : index
    %c0_6 = arith.constant 0 : index
    %c0_7 = arith.constant 0 : index
    %3 = vector.load %arg2[%c0_4, %c0_5, %c0_6, %c0_7] : memref<1x16x16x4xbf16, #tpu.memory_space<vmem>>, vector<1x16x16x4xbf16>
    %4 = vector.shape_cast %3 : vector<1x16x16x4xbf16> to vector<16x16x4xbf16>
    %c1 = arith.constant 1 : index
    %c1_8 = arith.constant 1 : index
    %c0_9 = arith.constant 0 : index
    %5 = vector.load %arg10[%c1, %c1_8, %c0_9] : memref<18x18x4xbf16, #tpu.memory_space<vmem>>, vector<16x16x4xbf16>
    tpu.vector_store %arg10[%c1, %c1_8, %c0_9], %4 {strides = array<i32>} : memref<18x18x4xbf16, #tpu.memory_space<vmem>>, vector<16x16x4xbf16>,
    %cst_10 = arith.constant 0.000000e+00 : bf16
    %6 = vector.broadcast %cst_10 : bf16 to vector<1x16x4xbf16>
    %c0_i32 = arith.constant 0 : i32
    %7 = arith.cmpi eq, %arg1, %c0_i32 : i32
    %8 = arith.extui %7 : i1 to i32
    %c0_i32_11 = arith.constant 0 : i32
    %9 = arith.cmpi ne, %8, %c0_i32_11 : i32
    scf.if %9 {
      %c0_72 = arith.constant 0 : index
      %c1_73 = arith.constant 1 : index
      %c0_74 = arith.constant 0 : index
      %64 = vector.load %arg10[%c0_72, %c1_73, %c0_74] : memref<18x18x4xbf16, #tpu.memory_space<vmem>>, vector<1x16x4xbf16>
      tpu.vector_store %arg10[%c0_72, %c1_73, %c0_74], %6 {strides = array<i32>} : memref<18x18x4xbf16, #tpu.memory_space<vmem>>, vector<1x16x4xbf16>,
    } else {
    }
    %c0_i32_12 = arith.constant 0 : i32
    %10 = arith.cmpi sgt, %arg1, %c0_i32_12 : i32
    %11 = arith.extui %10 : i1 to i32
    %c0_i32_13 = arith.constant 0 : i32
    %12 = arith.cmpi ne, %11, %c0_i32_13 : i32
    scf.if %12 {
      %c0_72 = arith.constant 0 : index
      %c0_73 = arith.constant 0 : index
      %c0_74 = arith.constant 0 : index
      %c0_75 = arith.constant 0 : index
      %64 = vector.load %arg3[%c0_72, %c0_73, %c0_74, %c0_75] : memref<1x1x16x4xbf16, #tpu.memory_space<vmem>>, vector<1x1x16x4xbf16>
      %65 = vector.shape_cast %64 : vector<1x1x16x4xbf16> to vector<1x16x4xbf16>
      %c0_76 = arith.constant 0 : index
      %c1_77 = arith.constant 1 : index
      %c0_78 = arith.constant 0 : index
      %66 = vector.load %arg10[%c0_76, %c1_77, %c0_78] : memref<18x18x4xbf16, #tpu.memory_space<vmem>>, vector<1x16x4xbf16>
      tpu.vector_store %arg10[%c0_76, %c1_77, %c0_78], %65 {strides = array<i32>} : memref<18x18x4xbf16, #tpu.memory_space<vmem>>, vector<1x16x4xbf16>,
    } else {
    }
    %c0_i32_14 = arith.constant 0 : i32
    %13 = arith.cmpi eq, %arg1, %c0_i32_14 : i32
    %14 = arith.extui %13 : i1 to i32
    %c0_i32_15 = arith.constant 0 : i32
    %15 = arith.cmpi ne, %14, %c0_i32_15 : i32
    scf.if %15 {
      %c17_72 = arith.constant 17 : index
      %c1_73 = arith.constant 1 : index
      %c0_74 = arith.constant 0 : index
      %64 = vector.load %arg10[%c17_72, %c1_73, %c0_74] : memref<18x18x4xbf16, #tpu.memory_space<vmem>>, vector<1x16x4xbf16>
      tpu.vector_store %arg10[%c17_72, %c1_73, %c0_74], %6 {strides = array<i32>} : memref<18x18x4xbf16, #tpu.memory_space<vmem>>, vector<1x16x4xbf16>,
    } else {
    }
    %c0_i32_16 = arith.constant 0 : i32
    %16 = arith.cmpi slt, %arg1, %c0_i32_16 : i32
    %17 = arith.extui %16 : i1 to i32
    %c0_i32_17 = arith.constant 0 : i32
    %18 = arith.cmpi ne, %17, %c0_i32_17 : i32
    scf.if %18 {
      %c0_72 = arith.constant 0 : index
      %c0_73 = arith.constant 0 : index
      %c0_74 = arith.constant 0 : index
      %c0_75 = arith.constant 0 : index
      %64 = vector.load %arg4[%c0_72, %c0_73, %c0_74, %c0_75] : memref<1x1x16x4xbf16, #tpu.memory_space<vmem>>, vector<1x1x16x4xbf16>
      %65 = vector.shape_cast %64 : vector<1x1x16x4xbf16> to vector<1x16x4xbf16>
      %c17_76 = arith.constant 17 : index
      %c1_77 = arith.constant 1 : index
      %c0_78 = arith.constant 0 : index
      %66 = vector.load %arg10[%c17_76, %c1_77, %c0_78] : memref<18x18x4xbf16, #tpu.memory_space<vmem>>, vector<1x16x4xbf16>
      tpu.vector_store %arg10[%c17_76, %c1_77, %c0_78], %65 {strides = array<i32>} : memref<18x18x4xbf16, #tpu.memory_space<vmem>>, vector<1x16x4xbf16>,
    } else {
    }
    %c0_18 = arith.constant 0 : index
    %c0_19 = arith.constant 0 : index
    %c0_20 = arith.constant 0 : index
    %19 = vector.load %arg10[%c0_18, %c0_19, %c0_20] : memref<18x18x4xbf16, #tpu.memory_space<vmem>>, vector<16x16x4xbf16>
    %20 = vector.shape_cast %19 : vector<16x16x4xbf16> to vector<256x4xbf16>
    %c0_21 = arith.constant 0 : index
    %c0_22 = arith.constant 0 : index
    %21 = vector.load %arg11[%c0_21, %c0_22] : memref<256x36xbf16, #tpu.memory_space<vmem>>, vector<256x4xbf16>
    tpu.vector_store %arg11[%c0_21, %c0_22], %20 {strides = array<i32>} : memref<256x36xbf16, #tpu.memory_space<vmem>>, vector<256x4xbf16>,
    %c0_23 = arith.constant 0 : index
    %c1_24 = arith.constant 1 : index
    %c0_25 = arith.constant 0 : index
    %22 = vector.load %arg10[%c0_23, %c1_24, %c0_25] : memref<18x18x4xbf16, #tpu.memory_space<vmem>>, vector<16x16x4xbf16>
    %23 = vector.shape_cast %22 : vector<16x16x4xbf16> to vector<256x4xbf16>
    %c0_26 = arith.constant 0 : index
    %c4 = arith.constant 4 : index
    %24 = vector.load %arg11[%c0_26, %c4] : memref<256x36xbf16, #tpu.memory_space<vmem>>, vector<256x4xbf16>
    tpu.vector_store %arg11[%c0_26, %c4], %23 {strides = array<i32>} : memref<256x36xbf16, #tpu.memory_space<vmem>>, vector<256x4xbf16>,
    %c0_27 = arith.constant 0 : index
    %c2 = arith.constant 2 : index
    %c0_28 = arith.constant 0 : index
    %25 = vector.load %arg10[%c0_27, %c2, %c0_28] : memref<18x18x4xbf16, #tpu.memory_space<vmem>>, vector<16x16x4xbf16>
    %26 = vector.shape_cast %25 : vector<16x16x4xbf16> to vector<256x4xbf16>
    %c0_29 = arith.constant 0 : index
    %c8 = arith.constant 8 : index
    %27 = vector.load %arg11[%c0_29, %c8] : memref<256x36xbf16, #tpu.memory_space<vmem>>, vector<256x4xbf16>
    tpu.vector_store %arg11[%c0_29, %c8], %26 {strides = array<i32>} : memref<256x36xbf16, #tpu.memory_space<vmem>>, vector<256x4xbf16>,
    %c1_30 = arith.constant 1 : index
    %c0_31 = arith.constant 0 : index
    %c0_32 = arith.constant 0 : index
    %28 = vector.load %arg10[%c1_30, %c0_31, %c0_32] : memref<18x18x4xbf16, #tpu.memory_space<vmem>>, vector<16x16x4xbf16>
    %29 = vector.shape_cast %28 : vector<16x16x4xbf16> to vector<256x4xbf16>
    %c0_33 = arith.constant 0 : index
    %c12 = arith.constant 12 : index
    %30 = vector.load %arg11[%c0_33, %c12] : memref<256x36xbf16, #tpu.memory_space<vmem>>, vector<256x4xbf16>
    tpu.vector_store %arg11[%c0_33, %c12], %29 {strides = array<i32>} : memref<256x36xbf16, #tpu.memory_space<vmem>>, vector<256x4xbf16>,
    %c1_34 = arith.constant 1 : index
    %c1_35 = arith.constant 1 : index
    %c0_36 = arith.constant 0 : index
    %31 = vector.load %arg10[%c1_34, %c1_35, %c0_36] : memref<18x18x4xbf16, #tpu.memory_space<vmem>>, vector<16x16x4xbf16>
    %32 = vector.shape_cast %31 : vector<16x16x4xbf16> to vector<256x4xbf16>
    %c0_37 = arith.constant 0 : index
    %c16 = arith.constant 16 : index
    %33 = vector.load %arg11[%c0_37, %c16] : memref<256x36xbf16, #tpu.memory_space<vmem>>, vector<256x4xbf16>
    tpu.vector_store %arg11[%c0_37, %c16], %32 {strides = array<i32>} : memref<256x36xbf16, #tpu.memory_space<vmem>>, vector<256x4xbf16>,
    %c1_38 = arith.constant 1 : index
    %c2_39 = arith.constant 2 : index
    %c0_40 = arith.constant 0 : index
    %34 = vector.load %arg10[%c1_38, %c2_39, %c0_40] : memref<18x18x4xbf16, #tpu.memory_space<vmem>>, vector<16x16x4xbf16>
    %35 = vector.shape_cast %34 : vector<16x16x4xbf16> to vector<256x4xbf16>
    %c0_41 = arith.constant 0 : index
    %c20 = arith.constant 20 : index
    %36 = vector.load %arg11[%c0_41, %c20] : memref<256x36xbf16, #tpu.memory_space<vmem>>, vector<256x4xbf16>
    tpu.vector_store %arg11[%c0_41, %c20], %35 {strides = array<i32>} : memref<256x36xbf16, #tpu.memory_space<vmem>>, vector<256x4xbf16>,
    %c2_42 = arith.constant 2 : index
    %c0_43 = arith.constant 0 : index
    %c0_44 = arith.constant 0 : index
    %37 = vector.load %arg10[%c2_42, %c0_43, %c0_44] : memref<18x18x4xbf16, #tpu.memory_space<vmem>>, vector<16x16x4xbf16>
    %38 = vector.shape_cast %37 : vector<16x16x4xbf16> to vector<256x4xbf16>
    %c0_45 = arith.constant 0 : index
    %c24 = arith.constant 24 : index
    %39 = vector.load %arg11[%c0_45, %c24] : memref<256x36xbf16, #tpu.memory_space<vmem>>, vector<256x4xbf16>
    tpu.vector_store %arg11[%c0_45, %c24], %38 {strides = array<i32>} : memref<256x36xbf16, #tpu.memory_space<vmem>>, vector<256x4xbf16>,
    %c2_46 = arith.constant 2 : index
    %c1_47 = arith.constant 1 : index
    %c0_48 = arith.constant 0 : index
    %40 = vector.load %arg10[%c2_46, %c1_47, %c0_48] : memref<18x18x4xbf16, #tpu.memory_space<vmem>>, vector<16x16x4xbf16>
    %41 = vector.shape_cast %40 : vector<16x16x4xbf16> to vector<256x4xbf16>
    %c0_49 = arith.constant 0 : index
    %c28 = arith.constant 28 : index
    %42 = vector.load %arg11[%c0_49, %c28] : memref<256x36xbf16, #tpu.memory_space<vmem>>, vector<256x4xbf16>
    tpu.vector_store %arg11[%c0_49, %c28], %41 {strides = array<i32>} : memref<256x36xbf16, #tpu.memory_space<vmem>>, vector<256x4xbf16>,
    %c2_50 = arith.constant 2 : index
    %c2_51 = arith.constant 2 : index
    %c0_52 = arith.constant 0 : index
    %43 = vector.load %arg10[%c2_50, %c2_51, %c0_52] : memref<18x18x4xbf16, #tpu.memory_space<vmem>>, vector<16x16x4xbf16>
    %44 = vector.shape_cast %43 : vector<16x16x4xbf16> to vector<256x4xbf16>
    %c0_53 = arith.constant 0 : index
    %c32 = arith.constant 32 : index
    %45 = vector.load %arg11[%c0_53, %c32] : memref<256x36xbf16, #tpu.memory_space<vmem>>, vector<256x4xbf16>
    tpu.vector_store %arg11[%c0_53, %c32], %44 {strides = array<i32>} : memref<256x36xbf16, #tpu.memory_space<vmem>>, vector<256x4xbf16>,
    %c0_54 = arith.constant 0 : index
    %c0_55 = arith.constant 0 : index
    %46 = vector.load %arg11[%c0_54, %c0_55] : memref<256x36xbf16, #tpu.memory_space<vmem>>, vector<256x36xbf16>
    %c0_56 = arith.constant 0 : index
    %c0_57 = arith.constant 0 : index
    %47 = vector.load %arg7[%c0_56, %c0_57] : memref<36x8xbf16, #tpu.memory_space<vmem>>, vector<36x8xbf16>
    %cst_58 = arith.constant dense<0.000000e+00> : vector<256x8xf32>
    %48 = tpu.matmul %46, %47, %cst_58 {dimension_numbers = #tpu.dot_dimension_numbers<[1], [0], [0], [1], [0, 0, 1, 1], [], []>} : vector<256x36xbf16>, vector<36x8xbf16>, vector<256x8xf32> -> vector<256x8xf32>
    %cst_59 = arith.constant dense<0.000000e+00> : vector<8xf32>
    %49 = vector.multi_reduction <add>, %48, %cst_59 [0] : vector<256x8xf32> to vector<8xf32>
    %50 = vector.shape_cast %49 : vector<8xf32> to vector<1x8xf32>
    %c0_60 = arith.constant 0 : index
    %c0_61 = arith.constant 0 : index
    %c0_62 = arith.constant 0 : index
    %c0_63 = arith.constant 0 : index
    %51 = vector.load %arg9[%c0_60, %c0_61, %c0_62, %c0_63] : memref<1x1x2x8xf32, #tpu.memory_space<vmem>>, vector<1x1x1x8xf32>
    %52 = vector.shape_cast %51 : vector<1x1x1x8xf32> to vector<1x8xf32>
    %53 = vector.shape_cast %50 : vector<1x8xf32> to vector<1x1x1x8xf32>
    tpu.vector_store %arg9[%c0_60, %c0_61, %c0_62, %c0_63], %53 {strides = array<i32>} : memref<1x1x2x8xf32, #tpu.memory_space<vmem>>, vector<1x1x1x8xf32>,
    %54 = arith.mulf %48, %48 : vector<256x8xf32>
    %cst_64 = arith.constant dense<0.000000e+00> : vector<8xf32>
    %55 = vector.multi_reduction <add>, %54, %cst_64 [0] : vector<256x8xf32> to vector<8xf32>
    %56 = vector.shape_cast %55 : vector<8xf32> to vector<1x8xf32>
    %c0_65 = arith.constant 0 : index
    %c0_66 = arith.constant 0 : index
    %c1_67 = arith.constant 1 : index
    %c0_68 = arith.constant 0 : index
    %57 = vector.load %arg9[%c0_65, %c0_66, %c1_67, %c0_68] : memref<1x1x2x8xf32, #tpu.memory_space<vmem>>, vector<1x1x1x8xf32>
    %58 = vector.shape_cast %57 : vector<1x1x1x8xf32> to vector<1x8xf32>
    %59 = vector.shape_cast %56 : vector<1x8xf32> to vector<1x1x1x8xf32>
    tpu.vector_store %arg9[%c0_65, %c0_66, %c1_67, %c0_68], %59 {strides = array<i32>} : memref<1x1x2x8xf32, #tpu.memory_space<vmem>>, vector<1x1x1x8xf32>,
    %60 = arith.truncf %48 : vector<256x8xf32> to vector<256x8xbf16>
    %c0_69 = arith.constant 0 : index
    %c0_70 = arith.constant 0 : index
    %c0_71 = arith.constant 0 : index
    %61 = vector.load %arg8[%c0_69, %c0_70, %c0_71] : memref<1x256x8xbf16, #tpu.memory_space<vmem>>, vector<1x256x8xbf16>
    %62 = vector.shape_cast %61 : vector<1x256x8xbf16> to vector<256x8xbf16>
    %63 = vector.shape_cast %60 : vector<256x8xbf16> to vector<1x256x8xbf16>
    tpu.vector_store %arg8[%c0_69, %c0_70, %c0_71], %63 {strides = array<i32>} : memref<1x256x8xbf16, #tpu.memory_space<vmem>>, vector<1x256x8xbf16>,
    return
  }
  func.func @transform_0(%arg0: i32, %arg1: i32) -> (i32, i32, i32, i32) {
    %c0_i32 = arith.constant 0 : i32
    %c0_i32_0 = arith.constant 0 : i32
    %c0_i32_1 = arith.constant 0 : i32
    return %arg0, %arg1, %c0_i32, %c0_i32_0 : i32, i32, i32, i32
  }
  func.func @transform_1(%arg0: i32, %arg1: i32) -> (i32, i32, i32, i32) {
    %c0_i32 = arith.constant 0 : i32
    %0 = arith.cmpi sgt, %arg1, %c0_i32 : i32
    %c16_i32 = arith.constant 16 : i32
    %1 = arith.muli %arg1, %c16_i32 : i32
    %c1_i32 = arith.constant 1 : i32
    %2 = arith.subi %1, %c1_i32 : i32
    %3 = arith.extui %0 : i1 to i32
    %4 = arith.muli %3, %2 : i32
    %c0_i32_0 = arith.constant 0 : i32
    %c0_i32_1 = arith.constant 0 : i32
    %c0_i32_2 = arith.constant 0 : i32
    return %arg0, %4, %c0_i32_0, %c0_i32_1 : i32, i32, i32, i32
  }
  func.func @transform_2(%arg0: i32, %arg1: i32) -> (i32, i32, i32, i32) {
    %c1_i32 = arith.constant 1 : i32
    %0 = arith.addi %arg1, %c1_i32 : i32
    %c16_i32 = arith.constant 16 : i32
    %1 = arith.muli %0, %c16_i32 : i32
    %c0_i32 = arith.constant 0 : i32
    %2 = arith.cmpi eq, %arg1, %c0_i32 : i32
    %3 = arith.extui %2 : i1 to i32
    %4 = arith.subi %1, %3 : i32
    %c0_i32_0 = arith.constant 0 : i32
    %c0_i32_1 = arith.constant 0 : i32
    %c0_i32_2 = arith.constant 0 : i32
    return %arg0, %4, %c0_i32_0, %c0_i32_1 : i32, i32, i32, i32
  }
  func.func @transform_3(%arg0: i32, %arg1: i32) -> (i32, i32) {
    %c0_i32 = arith.constant 0 : i32
    %c0_i32_0 = arith.constant 0 : i32
    %c0_i32_1 = arith.constant 0 : i32
    return %c0_i32, %c0_i32_0 : i32, i32
  }
  func.func @transform_4(%arg0: i32, %arg1: i32) -> (i32, i32) {
    %c0_i32 = arith.constant 0 : i32
    %c0_i32_0 = arith.constant 0 : i32
    %c0_i32_1 = arith.constant 0 : i32
    return %c0_i32, %c0_i32_0 : i32, i32
  }
  func.func @transform_5(%arg0: i32, %arg1: i32) -> (i32, i32) {
    %c0_i32 = arith.constant 0 : i32
    %c0_i32_0 = arith.constant 0 : i32
    %c0_i32_1 = arith.constant 0 : i32
    return %c0_i32, %c0_i32_0 : i32, i32
  }
  func.func @transform_6(%arg0: i32, %arg1: i32) -> (i32, i32, i32) {
    %c0_i32 = arith.constant 0 : i32
    %c0_i32_0 = arith.constant 0 : i32
    return %arg0, %arg1, %c0_i32 : i32, i32, i32
  }
  func.func @transform_7(%arg0: i32, %arg1: i32) -> (i32, i32, i32, i32) {
    %c0_i32 = arith.constant 0 : i32
    %c0_i32_0 = arith.constant 0 : i32
    %c0_i32_1 = arith.constant 0 : i32
    return %arg0, %arg1, %c0_i32, %c0_i32_0 : i32, i32, i32, i32
  }
}

module attributes {stable_mosaic.version = 11 : i64} {
  func.func @_conv_stats_kernel(%arg0: i32, %arg1: i32, %arg2: memref<1x16x16x8xbf16, #tpu.memory_space<vmem>>, %arg3: memref<1x1x16x8xbf16, #tpu.memory_space<vmem>>, %arg4: memref<1x1x16x8xbf16, #tpu.memory_space<vmem>>, %arg5: memref<1x8xf32, #tpu.memory_space<vmem>>, %arg6: memref<1x8xf32, #tpu.memory_space<vmem>>, %arg7: memref<72x8xbf16, #tpu.memory_space<vmem>>, %arg8: memref<1x256x8xbf16, #tpu.memory_space<vmem>>, %arg9: memref<1x1x2x8xf32, #tpu.memory_space<vmem>>, %arg10: memref<18x18x8xbf16, #tpu.memory_space<vmem>>, %arg11: memref<256x72xbf16, #tpu.memory_space<vmem>>) attributes {dimension_semantics = [#tpu.dimension_semantics<parallel>, #tpu.dimension_semantics<parallel>], iteration_bounds = array<i64: 2, 1>, scalar_prefetch = 0 : i64, scratch_operands = 2 : i64, tpu.core_type = #tpu.core_type<tc>, window_params = [{transform_indices = @transform_0, window_bounds = array<i64: 1, 16, 16, 8>}, {transform_indices = @transform_1, window_bounds = array<i64: 1, 1, 16, 8>}, {transform_indices = @transform_2, window_bounds = array<i64: 1, 1, 16, 8>}, {pipeline_mode = #tpu.pipeline_mode<synchronous>, transform_indices = @transform_3, window_bounds = array<i64: 1, 8>}, {pipeline_mode = #tpu.pipeline_mode<synchronous>, transform_indices = @transform_4, window_bounds = array<i64: 1, 8>}, {pipeline_mode = #tpu.pipeline_mode<synchronous>, transform_indices = @transform_5, window_bounds = array<i64: 72, 8>}, {transform_indices = @transform_6, window_bounds = array<i64: 1, 256, 8>}, {transform_indices = @transform_7, window_bounds = array<i64: 1, 1, 2, 8>}]} {
    %c0 = arith.constant 0 : index
    %c0_0 = arith.constant 0 : index
    %0 = vector.load %arg5[%c0, %c0_0] : memref<1x8xf32, #tpu.memory_space<vmem>>, vector<1x8xf32>
    %1 = vector.shape_cast %0 : vector<1x8xf32> to vector<1x1x8xf32>
    %c0_1 = arith.constant 0 : index
    %c0_2 = arith.constant 0 : index
    %2 = vector.load %arg6[%c0_1, %c0_2] : memref<1x8xf32, #tpu.memory_space<vmem>>, vector<1x8xf32>
    %3 = vector.shape_cast %2 : vector<1x8xf32> to vector<1x1x8xf32>
    %cst = arith.constant 0.000000e+00 : bf16
    %4 = vector.broadcast %cst : bf16 to vector<18x1x8xbf16>
    %c0_3 = arith.constant 0 : index
    %c0_4 = arith.constant 0 : index
    %c0_5 = arith.constant 0 : index
    %5 = vector.load %arg10[%c0_3, %c0_4, %c0_5] : memref<18x18x8xbf16, #tpu.memory_space<vmem>>, vector<18x1x8xbf16>
    tpu.vector_store %arg10[%c0_3, %c0_4, %c0_5], %4 {strides = array<i32>} : memref<18x18x8xbf16, #tpu.memory_space<vmem>>, vector<18x1x8xbf16>,
    %c0_6 = arith.constant 0 : index
    %c17 = arith.constant 17 : index
    %c0_7 = arith.constant 0 : index
    %6 = vector.load %arg10[%c0_6, %c17, %c0_7] : memref<18x18x8xbf16, #tpu.memory_space<vmem>>, vector<18x1x8xbf16>
    tpu.vector_store %arg10[%c0_6, %c17, %c0_7], %4 {strides = array<i32>} : memref<18x18x8xbf16, #tpu.memory_space<vmem>>, vector<18x1x8xbf16>,
    %c0_8 = arith.constant 0 : index
    %c0_9 = arith.constant 0 : index
    %c0_10 = arith.constant 0 : index
    %c0_11 = arith.constant 0 : index
    %7 = vector.load %arg2[%c0_8, %c0_9, %c0_10, %c0_11] : memref<1x16x16x8xbf16, #tpu.memory_space<vmem>>, vector<1x16x16x8xbf16>
    %8 = vector.shape_cast %7 : vector<1x16x16x8xbf16> to vector<16x16x8xbf16>
    %9 = arith.extf %8 : vector<16x16x8xbf16> to vector<16x16x8xf32>
    %10 = vector.broadcast %1 : vector<1x1x8xf32> to vector<16x16x8xf32>
    %11 = arith.mulf %9, %10 : vector<16x16x8xf32>
    %12 = vector.broadcast %3 : vector<1x1x8xf32> to vector<16x16x8xf32>
    %13 = arith.addf %11, %12 : vector<16x16x8xf32>
    %cst_12 = arith.constant 0.000000e+00 : f32
    %14 = vector.broadcast %cst_12 : f32 to vector<16x16x8xf32>
    %15 = arith.maximumf %13, %14 : vector<16x16x8xf32>
    %16 = arith.truncf %15 : vector<16x16x8xf32> to vector<16x16x8xbf16>
    %c1 = arith.constant 1 : index
    %c1_13 = arith.constant 1 : index
    %c0_14 = arith.constant 0 : index
    %17 = vector.load %arg10[%c1, %c1_13, %c0_14] : memref<18x18x8xbf16, #tpu.memory_space<vmem>>, vector<16x16x8xbf16>
    tpu.vector_store %arg10[%c1, %c1_13, %c0_14], %16 {strides = array<i32>} : memref<18x18x8xbf16, #tpu.memory_space<vmem>>, vector<16x16x8xbf16>,
    %cst_15 = arith.constant 0.000000e+00 : bf16
    %18 = vector.broadcast %cst_15 : bf16 to vector<1x16x8xbf16>
    %c0_i32 = arith.constant 0 : i32
    %19 = arith.cmpi eq, %arg1, %c0_i32 : i32
    %20 = arith.extui %19 : i1 to i32
    %c0_i32_16 = arith.constant 0 : i32
    %21 = arith.cmpi ne, %20, %c0_i32_16 : i32
    scf.if %21 {
      %c0_77 = arith.constant 0 : index
      %c1_78 = arith.constant 1 : index
      %c0_79 = arith.constant 0 : index
      %76 = vector.load %arg10[%c0_77, %c1_78, %c0_79] : memref<18x18x8xbf16, #tpu.memory_space<vmem>>, vector<1x16x8xbf16>
      tpu.vector_store %arg10[%c0_77, %c1_78, %c0_79], %18 {strides = array<i32>} : memref<18x18x8xbf16, #tpu.memory_space<vmem>>, vector<1x16x8xbf16>,
    } else {
    }
    %c0_i32_17 = arith.constant 0 : i32
    %22 = arith.cmpi sgt, %arg1, %c0_i32_17 : i32
    %23 = arith.extui %22 : i1 to i32
    %c0_i32_18 = arith.constant 0 : i32
    %24 = arith.cmpi ne, %23, %c0_i32_18 : i32
    scf.if %24 {
      %c0_77 = arith.constant 0 : index
      %c0_78 = arith.constant 0 : index
      %c0_79 = arith.constant 0 : index
      %c0_80 = arith.constant 0 : index
      %76 = vector.load %arg3[%c0_77, %c0_78, %c0_79, %c0_80] : memref<1x1x16x8xbf16, #tpu.memory_space<vmem>>, vector<1x1x16x8xbf16>
      %77 = vector.shape_cast %76 : vector<1x1x16x8xbf16> to vector<1x16x8xbf16>
      %78 = arith.extf %77 : vector<1x16x8xbf16> to vector<1x16x8xf32>
      %79 = vector.broadcast %1 : vector<1x1x8xf32> to vector<1x16x8xf32>
      %80 = arith.mulf %78, %79 : vector<1x16x8xf32>
      %81 = vector.broadcast %3 : vector<1x1x8xf32> to vector<1x16x8xf32>
      %82 = arith.addf %80, %81 : vector<1x16x8xf32>
      %cst_81 = arith.constant 0.000000e+00 : f32
      %83 = vector.broadcast %cst_81 : f32 to vector<1x16x8xf32>
      %84 = arith.maximumf %82, %83 : vector<1x16x8xf32>
      %85 = arith.truncf %84 : vector<1x16x8xf32> to vector<1x16x8xbf16>
      %c0_82 = arith.constant 0 : index
      %c1_83 = arith.constant 1 : index
      %c0_84 = arith.constant 0 : index
      %86 = vector.load %arg10[%c0_82, %c1_83, %c0_84] : memref<18x18x8xbf16, #tpu.memory_space<vmem>>, vector<1x16x8xbf16>
      tpu.vector_store %arg10[%c0_82, %c1_83, %c0_84], %85 {strides = array<i32>} : memref<18x18x8xbf16, #tpu.memory_space<vmem>>, vector<1x16x8xbf16>,
    } else {
    }
    %c0_i32_19 = arith.constant 0 : i32
    %25 = arith.cmpi eq, %arg1, %c0_i32_19 : i32
    %26 = arith.extui %25 : i1 to i32
    %c0_i32_20 = arith.constant 0 : i32
    %27 = arith.cmpi ne, %26, %c0_i32_20 : i32
    scf.if %27 {
      %c17_77 = arith.constant 17 : index
      %c1_78 = arith.constant 1 : index
      %c0_79 = arith.constant 0 : index
      %76 = vector.load %arg10[%c17_77, %c1_78, %c0_79] : memref<18x18x8xbf16, #tpu.memory_space<vmem>>, vector<1x16x8xbf16>
      tpu.vector_store %arg10[%c17_77, %c1_78, %c0_79], %18 {strides = array<i32>} : memref<18x18x8xbf16, #tpu.memory_space<vmem>>, vector<1x16x8xbf16>,
    } else {
    }
    %c0_i32_21 = arith.constant 0 : i32
    %28 = arith.cmpi slt, %arg1, %c0_i32_21 : i32
    %29 = arith.extui %28 : i1 to i32
    %c0_i32_22 = arith.constant 0 : i32
    %30 = arith.cmpi ne, %29, %c0_i32_22 : i32
    scf.if %30 {
      %c0_77 = arith.constant 0 : index
      %c0_78 = arith.constant 0 : index
      %c0_79 = arith.constant 0 : index
      %c0_80 = arith.constant 0 : index
      %76 = vector.load %arg4[%c0_77, %c0_78, %c0_79, %c0_80] : memref<1x1x16x8xbf16, #tpu.memory_space<vmem>>, vector<1x1x16x8xbf16>
      %77 = vector.shape_cast %76 : vector<1x1x16x8xbf16> to vector<1x16x8xbf16>
      %78 = arith.extf %77 : vector<1x16x8xbf16> to vector<1x16x8xf32>
      %79 = vector.broadcast %1 : vector<1x1x8xf32> to vector<1x16x8xf32>
      %80 = arith.mulf %78, %79 : vector<1x16x8xf32>
      %81 = vector.broadcast %3 : vector<1x1x8xf32> to vector<1x16x8xf32>
      %82 = arith.addf %80, %81 : vector<1x16x8xf32>
      %cst_81 = arith.constant 0.000000e+00 : f32
      %83 = vector.broadcast %cst_81 : f32 to vector<1x16x8xf32>
      %84 = arith.maximumf %82, %83 : vector<1x16x8xf32>
      %85 = arith.truncf %84 : vector<1x16x8xf32> to vector<1x16x8xbf16>
      %c17_82 = arith.constant 17 : index
      %c1_83 = arith.constant 1 : index
      %c0_84 = arith.constant 0 : index
      %86 = vector.load %arg10[%c17_82, %c1_83, %c0_84] : memref<18x18x8xbf16, #tpu.memory_space<vmem>>, vector<1x16x8xbf16>
      tpu.vector_store %arg10[%c17_82, %c1_83, %c0_84], %85 {strides = array<i32>} : memref<18x18x8xbf16, #tpu.memory_space<vmem>>, vector<1x16x8xbf16>,
    } else {
    }
    %c0_23 = arith.constant 0 : index
    %c0_24 = arith.constant 0 : index
    %c0_25 = arith.constant 0 : index
    %31 = vector.load %arg10[%c0_23, %c0_24, %c0_25] : memref<18x18x8xbf16, #tpu.memory_space<vmem>>, vector<16x16x8xbf16>
    %32 = vector.shape_cast %31 : vector<16x16x8xbf16> to vector<256x8xbf16>
    %c0_26 = arith.constant 0 : index
    %c0_27 = arith.constant 0 : index
    %33 = vector.load %arg11[%c0_26, %c0_27] : memref<256x72xbf16, #tpu.memory_space<vmem>>, vector<256x8xbf16>
    tpu.vector_store %arg11[%c0_26, %c0_27], %32 {strides = array<i32>} : memref<256x72xbf16, #tpu.memory_space<vmem>>, vector<256x8xbf16>,
    %c0_28 = arith.constant 0 : index
    %c1_29 = arith.constant 1 : index
    %c0_30 = arith.constant 0 : index
    %34 = vector.load %arg10[%c0_28, %c1_29, %c0_30] : memref<18x18x8xbf16, #tpu.memory_space<vmem>>, vector<16x16x8xbf16>
    %35 = vector.shape_cast %34 : vector<16x16x8xbf16> to vector<256x8xbf16>
    %c0_31 = arith.constant 0 : index
    %c8 = arith.constant 8 : index
    %36 = vector.load %arg11[%c0_31, %c8] : memref<256x72xbf16, #tpu.memory_space<vmem>>, vector<256x8xbf16>
    tpu.vector_store %arg11[%c0_31, %c8], %35 {strides = array<i32>} : memref<256x72xbf16, #tpu.memory_space<vmem>>, vector<256x8xbf16>,
    %c0_32 = arith.constant 0 : index
    %c2 = arith.constant 2 : index
    %c0_33 = arith.constant 0 : index
    %37 = vector.load %arg10[%c0_32, %c2, %c0_33] : memref<18x18x8xbf16, #tpu.memory_space<vmem>>, vector<16x16x8xbf16>
    %38 = vector.shape_cast %37 : vector<16x16x8xbf16> to vector<256x8xbf16>
    %c0_34 = arith.constant 0 : index
    %c16 = arith.constant 16 : index
    %39 = vector.load %arg11[%c0_34, %c16] : memref<256x72xbf16, #tpu.memory_space<vmem>>, vector<256x8xbf16>
    tpu.vector_store %arg11[%c0_34, %c16], %38 {strides = array<i32>} : memref<256x72xbf16, #tpu.memory_space<vmem>>, vector<256x8xbf16>,
    %c1_35 = arith.constant 1 : index
    %c0_36 = arith.constant 0 : index
    %c0_37 = arith.constant 0 : index
    %40 = vector.load %arg10[%c1_35, %c0_36, %c0_37] : memref<18x18x8xbf16, #tpu.memory_space<vmem>>, vector<16x16x8xbf16>
    %41 = vector.shape_cast %40 : vector<16x16x8xbf16> to vector<256x8xbf16>
    %c0_38 = arith.constant 0 : index
    %c24 = arith.constant 24 : index
    %42 = vector.load %arg11[%c0_38, %c24] : memref<256x72xbf16, #tpu.memory_space<vmem>>, vector<256x8xbf16>
    tpu.vector_store %arg11[%c0_38, %c24], %41 {strides = array<i32>} : memref<256x72xbf16, #tpu.memory_space<vmem>>, vector<256x8xbf16>,
    %c1_39 = arith.constant 1 : index
    %c1_40 = arith.constant 1 : index
    %c0_41 = arith.constant 0 : index
    %43 = vector.load %arg10[%c1_39, %c1_40, %c0_41] : memref<18x18x8xbf16, #tpu.memory_space<vmem>>, vector<16x16x8xbf16>
    %44 = vector.shape_cast %43 : vector<16x16x8xbf16> to vector<256x8xbf16>
    %c0_42 = arith.constant 0 : index
    %c32 = arith.constant 32 : index
    %45 = vector.load %arg11[%c0_42, %c32] : memref<256x72xbf16, #tpu.memory_space<vmem>>, vector<256x8xbf16>
    tpu.vector_store %arg11[%c0_42, %c32], %44 {strides = array<i32>} : memref<256x72xbf16, #tpu.memory_space<vmem>>, vector<256x8xbf16>,
    %c1_43 = arith.constant 1 : index
    %c2_44 = arith.constant 2 : index
    %c0_45 = arith.constant 0 : index
    %46 = vector.load %arg10[%c1_43, %c2_44, %c0_45] : memref<18x18x8xbf16, #tpu.memory_space<vmem>>, vector<16x16x8xbf16>
    %47 = vector.shape_cast %46 : vector<16x16x8xbf16> to vector<256x8xbf16>
    %c0_46 = arith.constant 0 : index
    %c40 = arith.constant 40 : index
    %48 = vector.load %arg11[%c0_46, %c40] : memref<256x72xbf16, #tpu.memory_space<vmem>>, vector<256x8xbf16>
    tpu.vector_store %arg11[%c0_46, %c40], %47 {strides = array<i32>} : memref<256x72xbf16, #tpu.memory_space<vmem>>, vector<256x8xbf16>,
    %c2_47 = arith.constant 2 : index
    %c0_48 = arith.constant 0 : index
    %c0_49 = arith.constant 0 : index
    %49 = vector.load %arg10[%c2_47, %c0_48, %c0_49] : memref<18x18x8xbf16, #tpu.memory_space<vmem>>, vector<16x16x8xbf16>
    %50 = vector.shape_cast %49 : vector<16x16x8xbf16> to vector<256x8xbf16>
    %c0_50 = arith.constant 0 : index
    %c48 = arith.constant 48 : index
    %51 = vector.load %arg11[%c0_50, %c48] : memref<256x72xbf16, #tpu.memory_space<vmem>>, vector<256x8xbf16>
    tpu.vector_store %arg11[%c0_50, %c48], %50 {strides = array<i32>} : memref<256x72xbf16, #tpu.memory_space<vmem>>, vector<256x8xbf16>,
    %c2_51 = arith.constant 2 : index
    %c1_52 = arith.constant 1 : index
    %c0_53 = arith.constant 0 : index
    %52 = vector.load %arg10[%c2_51, %c1_52, %c0_53] : memref<18x18x8xbf16, #tpu.memory_space<vmem>>, vector<16x16x8xbf16>
    %53 = vector.shape_cast %52 : vector<16x16x8xbf16> to vector<256x8xbf16>
    %c0_54 = arith.constant 0 : index
    %c56 = arith.constant 56 : index
    %54 = vector.load %arg11[%c0_54, %c56] : memref<256x72xbf16, #tpu.memory_space<vmem>>, vector<256x8xbf16>
    tpu.vector_store %arg11[%c0_54, %c56], %53 {strides = array<i32>} : memref<256x72xbf16, #tpu.memory_space<vmem>>, vector<256x8xbf16>,
    %c2_55 = arith.constant 2 : index
    %c2_56 = arith.constant 2 : index
    %c0_57 = arith.constant 0 : index
    %55 = vector.load %arg10[%c2_55, %c2_56, %c0_57] : memref<18x18x8xbf16, #tpu.memory_space<vmem>>, vector<16x16x8xbf16>
    %56 = vector.shape_cast %55 : vector<16x16x8xbf16> to vector<256x8xbf16>
    %c0_58 = arith.constant 0 : index
    %c64 = arith.constant 64 : index
    %57 = vector.load %arg11[%c0_58, %c64] : memref<256x72xbf16, #tpu.memory_space<vmem>>, vector<256x8xbf16>
    tpu.vector_store %arg11[%c0_58, %c64], %56 {strides = array<i32>} : memref<256x72xbf16, #tpu.memory_space<vmem>>, vector<256x8xbf16>,
    %c0_59 = arith.constant 0 : index
    %c0_60 = arith.constant 0 : index
    %58 = vector.load %arg11[%c0_59, %c0_60] : memref<256x72xbf16, #tpu.memory_space<vmem>>, vector<256x72xbf16>
    %c0_61 = arith.constant 0 : index
    %c0_62 = arith.constant 0 : index
    %59 = vector.load %arg7[%c0_61, %c0_62] : memref<72x8xbf16, #tpu.memory_space<vmem>>, vector<72x8xbf16>
    %cst_63 = arith.constant dense<0.000000e+00> : vector<256x8xf32>
    %60 = tpu.matmul %58, %59, %cst_63 {dimension_numbers = #tpu.dot_dimension_numbers<[1], [0], [0], [1], [0, 0, 1, 1], [], []>} : vector<256x72xbf16>, vector<72x8xbf16>, vector<256x8xf32> -> vector<256x8xf32>
    %cst_64 = arith.constant dense<0.000000e+00> : vector<8xf32>
    %61 = vector.multi_reduction <add>, %60, %cst_64 [0] : vector<256x8xf32> to vector<8xf32>
    %62 = vector.shape_cast %61 : vector<8xf32> to vector<1x8xf32>
    %c0_65 = arith.constant 0 : index
    %c0_66 = arith.constant 0 : index
    %c0_67 = arith.constant 0 : index
    %c0_68 = arith.constant 0 : index
    %63 = vector.load %arg9[%c0_65, %c0_66, %c0_67, %c0_68] : memref<1x1x2x8xf32, #tpu.memory_space<vmem>>, vector<1x1x1x8xf32>
    %64 = vector.shape_cast %63 : vector<1x1x1x8xf32> to vector<1x8xf32>
    %65 = vector.shape_cast %62 : vector<1x8xf32> to vector<1x1x1x8xf32>
    tpu.vector_store %arg9[%c0_65, %c0_66, %c0_67, %c0_68], %65 {strides = array<i32>} : memref<1x1x2x8xf32, #tpu.memory_space<vmem>>, vector<1x1x1x8xf32>,
    %66 = arith.mulf %60, %60 : vector<256x8xf32>
    %cst_69 = arith.constant dense<0.000000e+00> : vector<8xf32>
    %67 = vector.multi_reduction <add>, %66, %cst_69 [0] : vector<256x8xf32> to vector<8xf32>
    %68 = vector.shape_cast %67 : vector<8xf32> to vector<1x8xf32>
    %c0_70 = arith.constant 0 : index
    %c0_71 = arith.constant 0 : index
    %c1_72 = arith.constant 1 : index
    %c0_73 = arith.constant 0 : index
    %69 = vector.load %arg9[%c0_70, %c0_71, %c1_72, %c0_73] : memref<1x1x2x8xf32, #tpu.memory_space<vmem>>, vector<1x1x1x8xf32>
    %70 = vector.shape_cast %69 : vector<1x1x1x8xf32> to vector<1x8xf32>
    %71 = vector.shape_cast %68 : vector<1x8xf32> to vector<1x1x1x8xf32>
    tpu.vector_store %arg9[%c0_70, %c0_71, %c1_72, %c0_73], %71 {strides = array<i32>} : memref<1x1x2x8xf32, #tpu.memory_space<vmem>>, vector<1x1x1x8xf32>,
    %72 = arith.truncf %60 : vector<256x8xf32> to vector<256x8xbf16>
    %c0_74 = arith.constant 0 : index
    %c0_75 = arith.constant 0 : index
    %c0_76 = arith.constant 0 : index
    %73 = vector.load %arg8[%c0_74, %c0_75, %c0_76] : memref<1x256x8xbf16, #tpu.memory_space<vmem>>, vector<1x256x8xbf16>
    %74 = vector.shape_cast %73 : vector<1x256x8xbf16> to vector<256x8xbf16>
    %75 = vector.shape_cast %72 : vector<256x8xbf16> to vector<1x256x8xbf16>
    tpu.vector_store %arg8[%c0_74, %c0_75, %c0_76], %75 {strides = array<i32>} : memref<1x256x8xbf16, #tpu.memory_space<vmem>>, vector<1x256x8xbf16>,
    return
  }
  func.func @transform_0(%arg0: i32, %arg1: i32) -> (i32, i32, i32, i32) {
    %c0_i32 = arith.constant 0 : i32
    %c0_i32_0 = arith.constant 0 : i32
    %c0_i32_1 = arith.constant 0 : i32
    return %arg0, %arg1, %c0_i32, %c0_i32_0 : i32, i32, i32, i32
  }
  func.func @transform_1(%arg0: i32, %arg1: i32) -> (i32, i32, i32, i32) {
    %c0_i32 = arith.constant 0 : i32
    %0 = arith.cmpi sgt, %arg1, %c0_i32 : i32
    %c16_i32 = arith.constant 16 : i32
    %1 = arith.muli %arg1, %c16_i32 : i32
    %c1_i32 = arith.constant 1 : i32
    %2 = arith.subi %1, %c1_i32 : i32
    %3 = arith.extui %0 : i1 to i32
    %4 = arith.muli %3, %2 : i32
    %c0_i32_0 = arith.constant 0 : i32
    %c0_i32_1 = arith.constant 0 : i32
    %c0_i32_2 = arith.constant 0 : i32
    return %arg0, %4, %c0_i32_0, %c0_i32_1 : i32, i32, i32, i32
  }
  func.func @transform_2(%arg0: i32, %arg1: i32) -> (i32, i32, i32, i32) {
    %c1_i32 = arith.constant 1 : i32
    %0 = arith.addi %arg1, %c1_i32 : i32
    %c16_i32 = arith.constant 16 : i32
    %1 = arith.muli %0, %c16_i32 : i32
    %c0_i32 = arith.constant 0 : i32
    %2 = arith.cmpi eq, %arg1, %c0_i32 : i32
    %3 = arith.extui %2 : i1 to i32
    %4 = arith.subi %1, %3 : i32
    %c0_i32_0 = arith.constant 0 : i32
    %c0_i32_1 = arith.constant 0 : i32
    %c0_i32_2 = arith.constant 0 : i32
    return %arg0, %4, %c0_i32_0, %c0_i32_1 : i32, i32, i32, i32
  }
  func.func @transform_3(%arg0: i32, %arg1: i32) -> (i32, i32) {
    %c0_i32 = arith.constant 0 : i32
    %c0_i32_0 = arith.constant 0 : i32
    %c0_i32_1 = arith.constant 0 : i32
    return %c0_i32, %c0_i32_0 : i32, i32
  }
  func.func @transform_4(%arg0: i32, %arg1: i32) -> (i32, i32) {
    %c0_i32 = arith.constant 0 : i32
    %c0_i32_0 = arith.constant 0 : i32
    %c0_i32_1 = arith.constant 0 : i32
    return %c0_i32, %c0_i32_0 : i32, i32
  }
  func.func @transform_5(%arg0: i32, %arg1: i32) -> (i32, i32) {
    %c0_i32 = arith.constant 0 : i32
    %c0_i32_0 = arith.constant 0 : i32
    %c0_i32_1 = arith.constant 0 : i32
    return %c0_i32, %c0_i32_0 : i32, i32
  }
  func.func @transform_6(%arg0: i32, %arg1: i32) -> (i32, i32, i32) {
    %c0_i32 = arith.constant 0 : i32
    %c0_i32_0 = arith.constant 0 : i32
    return %arg0, %arg1, %c0_i32 : i32, i32, i32
  }
  func.func @transform_7(%arg0: i32, %arg1: i32) -> (i32, i32, i32, i32) {
    %c0_i32 = arith.constant 0 : i32
    %c0_i32_0 = arith.constant 0 : i32
    %c0_i32_1 = arith.constant 0 : i32
    return %arg0, %arg1, %c0_i32, %c0_i32_0 : i32, i32, i32, i32
  }
}

module attributes {stable_mosaic.version = 11 : i64} {
  func.func @_bn_relu_kernel(%arg0: i32, %arg1: i32, %arg2: memref<1x16x128xbf16, #tpu.memory_space<vmem>>, %arg3: memref<1x128xf32, #tpu.memory_space<vmem>>, %arg4: memref<1x128xf32, #tpu.memory_space<vmem>>, %arg5: memref<1x16x128xf32, #tpu.memory_space<vmem>>) attributes {dimension_semantics = [#tpu.dimension_semantics<parallel>, #tpu.dimension_semantics<parallel>], iteration_bounds = array<i64: 2, 1>, scalar_prefetch = 0 : i64, scratch_operands = 0 : i64, tpu.core_type = #tpu.core_type<tc>, window_params = [{transform_indices = @transform_0, window_bounds = array<i64: 1, 16, 128>}, {pipeline_mode = #tpu.pipeline_mode<synchronous>, transform_indices = @transform_1, window_bounds = array<i64: 1, 128>}, {pipeline_mode = #tpu.pipeline_mode<synchronous>, transform_indices = @transform_2, window_bounds = array<i64: 1, 128>}, {transform_indices = @transform_3, window_bounds = array<i64: 1, 16, 128>}]} {
    %c0 = arith.constant 0 : index
    %c0_0 = arith.constant 0 : index
    %c0_1 = arith.constant 0 : index
    %0 = vector.load %arg2[%c0, %c0_0, %c0_1] : memref<1x16x128xbf16, #tpu.memory_space<vmem>>, vector<1x16x128xbf16>
    %1 = arith.extf %0 : vector<1x16x128xbf16> to vector<1x16x128xf32>
    %c0_2 = arith.constant 0 : index
    %c0_3 = arith.constant 0 : index
    %2 = vector.load %arg3[%c0_2, %c0_3] : memref<1x128xf32, #tpu.memory_space<vmem>>, vector<1x128xf32>
    %3 = vector.shape_cast %2 : vector<1x128xf32> to vector<1x1x128xf32>
    %4 = vector.broadcast %3 : vector<1x1x128xf32> to vector<1x16x128xf32>
    %5 = arith.mulf %1, %4 : vector<1x16x128xf32>
    %c0_4 = arith.constant 0 : index
    %c0_5 = arith.constant 0 : index
    %6 = vector.load %arg4[%c0_4, %c0_5] : memref<1x128xf32, #tpu.memory_space<vmem>>, vector<1x128xf32>
    %7 = vector.shape_cast %6 : vector<1x128xf32> to vector<1x1x128xf32>
    %8 = vector.broadcast %7 : vector<1x1x128xf32> to vector<1x16x128xf32>
    %9 = arith.addf %5, %8 : vector<1x16x128xf32>
    %cst = arith.constant 0.000000e+00 : f32
    %10 = vector.broadcast %cst : f32 to vector<1x16x128xf32>
    %11 = arith.maximumf %9, %10 : vector<1x16x128xf32>
    %c0_6 = arith.constant 0 : index
    %c0_7 = arith.constant 0 : index
    %c0_8 = arith.constant 0 : index
    %12 = vector.load %arg5[%c0_6, %c0_7, %c0_8] : memref<1x16x128xf32, #tpu.memory_space<vmem>>, vector<1x16x128xf32>
    tpu.vector_store %arg5[%c0_6, %c0_7, %c0_8], %11 {strides = array<i32>} : memref<1x16x128xf32, #tpu.memory_space<vmem>>, vector<1x16x128xf32>,
    return
  }
  func.func @transform_0(%arg0: i32, %arg1: i32) -> (i32, i32, i32) {
    %c0_i32 = arith.constant 0 : i32
    %c0_i32_0 = arith.constant 0 : i32
    return %arg0, %arg1, %c0_i32 : i32, i32, i32
  }
  func.func @transform_1(%arg0: i32, %arg1: i32) -> (i32, i32) {
    %c0_i32 = arith.constant 0 : i32
    %c0_i32_0 = arith.constant 0 : i32
    %c0_i32_1 = arith.constant 0 : i32
    return %c0_i32, %c0_i32_0 : i32, i32
  }
  func.func @transform_2(%arg0: i32, %arg1: i32) -> (i32, i32) {
    %c0_i32 = arith.constant 0 : i32
    %c0_i32_0 = arith.constant 0 : i32
    %c0_i32_1 = arith.constant 0 : i32
    return %c0_i32, %c0_i32_0 : i32, i32
  }
  func.func @transform_3(%arg0: i32, %arg1: i32) -> (i32, i32, i32) {
    %c0_i32 = arith.constant 0 : i32
    %c0_i32_0 = arith.constant 0 : i32
    return %arg0, %arg1, %c0_i32 : i32, i32, i32
  }
}

</mosaic_0001>

<llo_original>
// kernel: tile.13
$region0: #{tile.13}
  #allocation0 [shape = 's32[1]{0}', space=sflag, size = 0x4, scoped, tag = 'scoped memory for tile.13']
  %s0 = inlined_call_operand.vmem [shape: f32[8], index: 0, kind: input, shape index: {}]
  %s1 = inlined_call_operand.vmem [shape: f32[16,8], index: 1, kind: output, shape index: {}]
  // Predicated region
  $region2: #{tile.13} parent=0 // pred_check
    _
  $region3: #{tile.13} parent=0 // pred_check_branch
    %3 = sbr.rel (0) target = $region5
  $region4: #{tile.13} parent=0 // pred_region
    _
  $region5: #{tile.13} parent=0 // pred_fallthru
    _
  %v4 = vld [vmem:[%s0] ss:$0 sm:$0xff]
  %5 = vst [vmem:[%s1] sm:$0xff] %v4
  %s6 = scalar_lea.vmem %s1, 8
  %7 = vst [vmem:[%s6] sm:$0xff] %v4

// kernel: tile.14
$region0: #{tile.14}
  %s0 = inlined_call_operand.vmem [shape: f32[16,8], index: 0, kind: input, shape index: {}]
  %s1 = inlined_call_operand.vmem [shape: f32[1,128], index: 1, kind: output, shape index: {}]
  $region1: #{tile.14} parent=0
    #allocation0 [shape = 'u8[4096]{0}', space=vmem, size = 0x1000, scoped, tag = 'scoped mem for output reshape']
    %v2 = vld [vmem:[%s0] sm:$0x1]
    %vm3 = vcmask 64512
    %4 = vst.msk [vmem:[#allocation0] sm:$0x1] %vm3, %v2
    %s5 = scalar_lea.vmem %s0, 15
    %v6 = vld [vmem:[%s5] sm:$0x1]
    %7 = vrot.lane.b32.xlu0 %v6, 120
    %v8 = vpop.permute.xlu0 %7
    %vm9 = vcmask 1048512
    %10 = vst.msk [vmem:[#allocation0] sm:$0x1] %vm9, %v8
    %s11 = scalar_lea.vmem %s0, 14
    %v12 = vld [vmem:[%s11] sm:$0x1]
    %13 = vrot.lane.b32.xlu0 %v12, 112
    %v14 = vpop.permute.xlu0 %13
    %vm15 = vcmask 982912
    %16 = vst.msk [vmem:[#allocation0] sm:$0x1] %vm15, %v14
    %s17 = scalar_lea.vmem %s0, 13
    %v18 = vld [vmem:[%s17] sm:$0x1]
    %19 = vrot.lane.b32.xlu0 %v18, 104
    %v20 = vpop.permute.xlu0 %19
    %vm21 = vcmask 917312
    %22 = vst.msk [vmem:[#allocation0] sm:$0x1] %vm21, %v20
    %s23 = scalar_lea.vmem %s0, 12
    %v24 = vld [vmem:[%s23] sm:$0x1]
    %25 = vrot.lane.b32.xlu0 %v24, 96
    %v26 = vpop.permute.xlu0 %25
    %vm27 = vcmask 851712
    %28 = vst.msk [vmem:[#allocation0] sm:$0x1] %vm27, %v26
    %s29 = scalar_lea.vmem %s0, 11
    %v30 = vld [vmem:[%s29] sm:$0x1]
    %31 = vrot.lane.b32.xlu0 %v30, 88
    %v32 = vpop.permute.xlu0 %31
    %vm33 = vcmask 786112
    %34 = vst.msk [vmem:[#allocation0] sm:$0x1] %vm33, %v32
    %s35 = scalar_lea.vmem %s0, 10
    %v36 = vld [vmem:[%s35] sm:$0x1]
    %37 = vrot.lane.b32.xlu0 %v36, 80
    %v38 = vpop.permute.xlu0 %37
    %vm39 = vcmask 720512
    %40 = vst.msk [vmem:[#allocation0] sm:$0x1] %vm39, %v38
    %s41 = scalar_lea.vmem %s0, 9
    %v42 = vld [vmem:[%s41] sm:$0x1]
    %43 = vrot.lane.b32.xlu0 %v42, 72
    %v44 = vpop.permute.xlu0 %43
    %vm45 = vcmask 654912
    %46 = vst.msk [vmem:[#allocation0] sm:$0x1] %vm45, %v44
    %s47 = scalar_lea.vmem %s0, 8
    %v48 = vld [vmem:[%s47] sm:$0x1]
    %49 = vrot.lane.b32.xlu0 %v48, 64
    %v50 = vpop.permute.xlu0 %49
    %vm51 = vcmask 589312
    %52 = vst.msk [vmem:[#allocation0] sm:$0x1] %vm51, %v50
    %s53 = scalar_lea.vmem %s0, 7
    %v54 = vld [vmem:[%s53] sm:$0x1]
    %55 = vrot.lane.b32.xlu0 %v54, 56
    %v56 = vpop.permute.xlu0 %55
    %vm57 = vcmask 523712
    %58 = vst.msk [vmem:[#allocation0] sm:$0x1] %vm57, %v56
    %s59 = scalar_lea.vmem %s0, 6
    %v60 = vld [vmem:[%s59] sm:$0x1]
    %61 = vrot.lane.b32.xlu0 %v60, 48
    %v62 = vpop.permute.xlu0 %61
    %vm63 = vcmask 458112
    %64 = vst.msk [vmem:[#allocation0] sm:$0x1] %vm63, %v62
    %s65 = scalar_lea.vmem %s0, 5
    %v66 = vld [vmem:[%s65] sm:$0x1]
    %67 = vrot.lane.b32.xlu0 %v66, 40
    %v68 = vpop.permute.xlu0 %67
    %vm69 = vcmask 392512
    %70 = vst.msk [vmem:[#allocation0] sm:$0x1] %vm69, %v68
    %s71 = scalar_lea.vmem %s0, 4
    %v72 = vld [vmem:[%s71] sm:$0x1]
    %73 = vrot.lane.b32.xlu0 %v72, 32
    %v74 = vpop.permute.xlu0 %73
    %vm75 = vcmask 326912
    %76 = vst.msk [vmem:[#allocation0] sm:$0x1] %vm75, %v74
    %s77 = scalar_lea.vmem %s0, 3
    %v78 = vld [vmem:[%s77] sm:$0x1]
    %79 = vrot.lane.b32.xlu0 %v78, 24
    %v80 = vpop.permute.xlu0 %79
    %vm81 = vcmask 261312
    %82 = vst.msk [vmem:[#allocation0] sm:$0x1] %vm81, %v80
    %s83 = scalar_lea.vmem %s0, 2
    %v84 = vld [vmem:[%s83] sm:$0x1]
    %85 = vrot.lane.b32.xlu0 %v84, 16
    %v86 = vpop.permute.xlu0 %85
    %vm87 = vcmask 195712
    %88 = vst.msk [vmem:[#allocation0] sm:$0x1] %vm87, %v86
    %s89 = scalar_lea.vmem %s0, 1
    %v90 = vld [vmem:[%s89] sm:$0x1]
    %91 = vrot.lane.b32.xlu0 %v90, 8
    %v92 = vpop.permute.xlu0 %91
    %vm93 = vcmask 130112
    %94 = vst.msk [vmem:[#allocation0] sm:$0x1] %vm93, %v92
    %s96 = sshll.u32 1, 1
    %s97 = ssub.s32 %s96, 1
    %v99 = vld [vmem:[#allocation0] sm:%s97]
    %s100 = sshll.u32 1, 1
    %s101 = ssub.s32 %s100, 1
    %102 = vst [vmem:[%s1] sm:%s101] %v99

// kernel: double_conv.5
$region0: #{double_conv.5}
  #allocation0 [shape = 'u32[]', space=smem, size = 0x4, offset = 0x4, fixed_abs, tag = 'smem constant byte address 0x4 - core index']
  #allocation1 [shape = 'u32[144,128]{1,0:T(1,128)}', space=vmem, size = 0x12000, scoped, tag = 'internal scratch']
  %s0 = inlined_call_operand.vmem [shape: bf16[2,16,128], index: 0, kind: input, shape index: {}]
  %s1 = inlined_call_operand.vmem [shape: f32[1,128], index: 1, kind: input, shape index: {}]
  %s2 = inlined_call_operand.vmem [shape: f32[1,128], index: 2, kind: input, shape index: {}]
  %s3 = inlined_call_operand.vmem [shape: f32[2,16,128], index: 3, kind: output, shape index: {}]
  %s4 = sld [smem:[#allocation0]]
  $region45: #{double_conv.5} parent=0
    _
  %s6 = ssub.s32 1, %s4
  %s7 = scalar_select 0, %s6, %s4
  loop: start=0, step=1, limit=4
  $region2: #{double_conv.5} parent=0 // loop_pre_header
    _
  $region3: #{double_conv.5} parent=0 // loop_header
    %s9 = sphi 0, %s13
    %p10 = scmp.ge.s32.totalorder %s9, 4
    %s16 = sphi 0, %s28
    %s17 = sphi 0, %s24
    %s18 = sphi 0, %s16
    %s19 = sphi 0, %s17
    %s20 = sphi 0, %s18
    %s21 = sphi 0, %s19
    %s33 = sphi 0, %s35
    %s36 = sphi 0, %s33
    %s37 = sphi 0, %s36
    %s53 = sphi 0, %s37
    %s57 = sphi 0, %s57
    %s59 = sphi 0, %s57
    %s60 = sphi 0, %s59
    %s74 = sphi 0, %s60
    %s78 = sphi 0, %s78
    %s80 = sphi 0, %s78
    %s81 = sphi 0, %s80
    %s95 = sphi 0, %s81
    %s103 = sphi 0, %s105
    %s106 = sphi 0, %s103
    %s107 = sphi 0, %s106
    %s123 = sphi 0, %s107
  $region4: #{double_conv.5} parent=0 // loop_header_branch
    %12 = sbr.rel (%p10) target = $region8
  $region5: #{double_conv.5} parent=0 // loop_body
    %s14 = ssub.s32 %s9, 1
    %s15 = ssub.s32 %s9, 2
    %s22 = sadd.s32 1, %s17
    %p23 = scmp.ge.s32.totalorder %s22, 1
    %s24 = scalar_select %p23, 0, %s22
    %s25 = sadd.s32 1, %s16
    %s26 = scalar_select %p23, %s25, %s16
    %p27 = scmp.ge.s32.totalorder %s26, 2
    %s28 = scalar_select %p27, 0, %s26
    %s29 = ssub.s32 %s16, %s28
    %s30 = ssub.s32 %s17, %s24
    %s31 = sor.u32 %s29, %s30
    %p32 = scmp.eq.s32.totalorder %s31, 0
    %s34 = sadd.s32 %s33, 1
    %s35 = scalar_select %p32, %s33, %s34
    %p38 = pneg %p32
    %p39 = scmp.eq.s32.totalorder %s9, 1
    %p40 = por %p38, %p39
    %p41 = scmp.ne.s32.totalorder %s33, %s36
    %p42 = scmp.eq.s32.totalorder %s9, 0
    %p43 = por %p41, %p42
    %p44 = scmp.ne.s32.totalorder %s33, %s36
    %p45 = scmp.eq.s32.totalorder %s14, 1
    %p46 = por %p44, %p45
    %p47 = scmp.ne.s32.totalorder %s36, %s37
    %p48 = scmp.eq.s32.totalorder %s14, 0
    %p49 = por %p47, %p48
    %p50 = scmp.ne.s32.totalorder %s36, %s37
    %p51 = scmp.eq.s32.totalorder %s15, 1
    %p52 = por %p50, %p51
    %p54 = scmp.ne.s32.totalorder %s37, %s53
    %p55 = scmp.eq.s32.totalorder %s15, 0
    %p56 = por %p54, %p55
    %s58 = sadd.s32 %s57, 1
    %p61 = scmp.eq.s32.totalorder %s9, 1
    %p62 = scmp.ne.s32.totalorder %s57, %s59
    %p63 = scmp.eq.s32.totalorder %s9, 0
    %p64 = por %p62, %p63
    %p65 = scmp.ne.s32.totalorder %s57, %s59
    %p66 = scmp.eq.s32.totalorder %s14, 1
    %p67 = por %p65, %p66
    %p68 = scmp.ne.s32.totalorder %s59, %s60
    %p69 = scmp.eq.s32.totalorder %s14, 0
    %p70 = por %p68, %p69
    %p71 = scmp.ne.s32.totalorder %s59, %s60
    %p72 = scmp.eq.s32.totalorder %s15, 1
    %p73 = por %p71, %p72
    %p75 = scmp.ne.s32.totalorder %s60, %s74
    %p76 = scmp.eq.s32.totalorder %s15, 0
    %p77 = por %p75, %p76
    %s79 = sadd.s32 %s78, 1
    %p82 = scmp.eq.s32.totalorder %s9, 1
    %p83 = scmp.ne.s32.totalorder %s78, %s80
    %p84 = scmp.eq.s32.totalorder %s9, 0
    %p85 = por %p83, %p84
    %p86 = scmp.ne.s32.totalorder %s78, %s80
    %p87 = scmp.eq.s32.totalorder %s14, 1
    %p88 = por %p86, %p87
    %p89 = scmp.ne.s32.totalorder %s80, %s81
    %p90 = scmp.eq.s32.totalorder %s14, 0
    %p91 = por %p89, %p90
    %p92 = scmp.ne.s32.totalorder %s80, %s81
    %p93 = scmp.eq.s32.totalorder %s15, 1
    %p94 = por %p92, %p93
    %p96 = scmp.ne.s32.totalorder %s81, %s95
    %p97 = scmp.eq.s32.totalorder %s15, 0
    %p98 = por %p96, %p97
    %s99 = ssub.s32 %s16, %s28
    %s100 = ssub.s32 %s17, %s24
    %s101 = sor.u32 %s99, %s100
    %p102 = scmp.eq.s32.totalorder %s101, 0
    %s104 = sadd.s32 %s103, 1
    %s105 = scalar_select %p102, %s103, %s104
    %p108 = pneg %p102
    %p109 = scmp.eq.s32.totalorder %s9, 1
    %p110 = por %p108, %p109
    %p111 = scmp.ne.s32.totalorder %s103, %s106
    %p112 = scmp.eq.s32.totalorder %s9, 0
    %p113 = por %p111, %p112
    %p114 = scmp.ne.s32.totalorder %s103, %s106
    %p115 = scmp.eq.s32.totalorder %s14, 1
    %p116 = por %p114, %p115
    %p117 = scmp.ne.s32.totalorder %s106, %s107
    %p118 = scmp.eq.s32.totalorder %s14, 0
    %p119 = por %p117, %p118
    %p120 = scmp.ne.s32.totalorder %s106, %s107
    %p121 = scmp.eq.s32.totalorder %s15, 1
    %p122 = por %p120, %p121
    %p124 = scmp.ne.s32.totalorder %s107, %s123
    %p125 = scmp.eq.s32.totalorder %s15, 0
    %p126 = por %p124, %p125
    %p127 = scmp.le.s32.totalorder 1, %s9
    %p128 = scmp.lt.s32.totalorder %s9, 3
    %p129 = pnand %p127, %p128
    %p130 = pneg %p129
    // Predicated region
    $region9: #{double_conv.5} parent=5 // pred_check
      _
    $region10: #{double_conv.5} parent=5 // pred_check_branch
      %132 = sbr.rel (%p129) target = $region12
    $region11: #{double_conv.5} parent=5 // pred_region
      %s133 = ssub.s32 %s9, 1
      // Predicated region
      $region13: #{double_conv.5} parent=11 // pred_check
        %p134 = pneg %p70
      $region14: #{double_conv.5} parent=11 // pred_check_branch
        %136 = sbr.rel (%p134) target = $region16
      $region15: #{double_conv.5} parent=11 // pred_region
        _
      $region16: #{double_conv.5} parent=11 // pred_fallthru
        _
      // Predicated region
      $region17: #{double_conv.5} parent=11 // pred_check
        %p137 = pneg %p91
      $region18: #{double_conv.5} parent=11 // pred_check_branch
        %139 = sbr.rel (%p137) target = $region20
      $region19: #{double_conv.5} parent=11 // pred_region
        _
      $region20: #{double_conv.5} parent=11 // pred_fallthru
        _
    $region12: #{double_conv.5} parent=5 // pred_fallthru
      _
    %p140 = scmp.lt.s32.totalorder %s9, 2
    // Predicated region
    $region21: #{double_conv.5} parent=5 // pred_check
      %p141 = pneg %p140
    $region22: #{double_conv.5} parent=5 // pred_check_branch
      %143 = sbr.rel (%p141) target = $region24
    $region23: #{double_conv.5} parent=5 // pred_region
      // Predicated region
      $region25: #{double_conv.5} parent=23 // pred_check
        %p144 = pneg %p43
      $region26: #{double_conv.5} parent=23 // pred_check_branch
        %146 = sbr.rel (%p144) target = $region28
      $region27: #{double_conv.5} parent=23 // pred_region
        %s147 = smul.u32 2, %s17
        %p148 = scmp.lt.s32.totalorder %s16, 1
        %s149 = scalar_select %p148, %s16, 1
        %p150 = scmp.lt.s32.totalorder %s147, 1
        %s151 = scalar_select %p150, %s147, 1
        %s152 = smul.addr %s149, 2
        %s153 = sadd.s32 %s151, %s152
        %s154 = smul.addr %s153, 4
        %s155 = scalar_lea.vmem %s0, %s154
        %s156 = smul.u32 2, %s17
      $region28: #{double_conv.5} parent=23 // pred_fallthru
        _
    $region24: #{double_conv.5} parent=5 // pred_fallthru
      _
    %p157 = scmp.le.s32.totalorder 1, %s9
    %p158 = scmp.lt.s32.totalorder %s9, 3
    %p159 = pnand %p157, %p158
    %p160 = pneg %p159
    // Predicated region
    $region29: #{double_conv.5} parent=5 // pred_check
      _
    $region30: #{double_conv.5} parent=5 // pred_check_branch
      %162 = sbr.rel (%p159) target = $region32
    $region31: #{double_conv.5} parent=5 // pred_region
      %s163 = ssub.s32 %s9, 1
      %s164 = smul.u32 2, %s19
      %p165 = scmp.lt.s32.totalorder %s18, 1
      %s166 = scalar_select %p165, %s18, 1
      %p167 = scmp.lt.s32.totalorder %s164, 1
      %s168 = scalar_select %p167, %s164, 1
      %s169 = smul.addr %s166, 2
      %s170 = sadd.s32 %s168, %s169
      %s171 = smul.addr %s170, 4
      %s172 = scalar_lea.vmem %s0, %s171
      %p173 = pneg %p49
      %p174 = pneg %p46
      %p175 = pneg %p70
      %p176 = pneg %p67
      %p177 = pneg %p91
      %p178 = pneg %p88
      %p179 = pneg %p119
      %p180 = pneg %p116
      %s181 = smul.u32 2, %s19
      %p182 = scmp.lt.s32.totalorder %s18, 1
      %s183 = scalar_select %p182, %s18, 1
      %p184 = scmp.lt.s32.totalorder %s181, 1
      %s185 = scalar_select %p184, %s181, 1
      %s186 = smul.addr %s183, 2
      %s187 = sadd.s32 %s185, %s186
      %s188 = smul.addr %s187, 8
      %s189 = scalar_lea.vmem %s3, %s188
      %s190 = smul.u32 2, %s19
      %p191 = scmp.lt.s32.totalorder %s18, 1
      %s192 = scalar_select %p191, %s18, 1
      %p193 = scmp.lt.s32.totalorder %s190, 1
      %s194 = scalar_select %p193, %s190, 1
      %s195 = smul.addr %s192, 2
      %s196 = sadd.s32 %s194, %s195
      %s197 = smul.addr %s196, 4
      %s198 = scalar_lea.vmem %s0, %s197
      %s199 = smul.u32 2, %s19
      %s200 = smul.u32 2, %s19
      %p201 = scmp.lt.s32.totalorder %s18, 1
      %s202 = scalar_select %p201, %s18, 1
      %p203 = scmp.lt.s32.totalorder %s200, 1
      %s204 = scalar_select %p203, %s200, 1
      %s205 = smul.addr %s202, 2
      %s206 = sadd.s32 %s204, %s205
      %s207 = smul.addr %s206, 8
      %s208 = scalar_lea.vmem %s3, %s207
      %s209 = smul.u32 2, %s19
      %v210 = vld [vmem:[%s198] sm:$0xf]
      %v211 = vld [vmem:[%s198 + $0x4] sm:$0xf]
      %v212 = vunpack.c.l.bf16 %v210
      %v213 = vunpack.c.l.bf16 %v211
      %v214 = vld [vmem:[%s1] sm:$0x1]
      %v216 = vlaneseq
      %v217 = vshrl.u32 %v216, 7
      %v218 = vsub.s32 0, %v217
      %v219 = vrot.slane %v214, %v218
      %v221 = vmul.f32 %v212, %v219
      %v222 = vmul.f32 %v213, %v219
      %v223 = vld [vmem:[%s2] sm:$0x1]
      %v225 = vlaneseq
      %v226 = vshrl.u32 %v225, 7
      %v227 = vsub.s32 0, %v226
      %v228 = vrot.slane %v223, %v227
      %v230 = vadd.f32 %v221, %v228
      %v231 = vadd.f32 %v222, %v228
      %v232 = vmax.f32 %v230, 0.0
      %v233 = vmax.f32 %v231, 0.0
      %234 = vst [vmem:[%s208] sm:$0xff] %v232
      %235 = vst [vmem:[%s208 + $0x8] sm:$0xff] %v233
      %s236 = smul.u32 2, %s19
      %p237 = scmp.lt.s32.totalorder %s18, 1
      %s238 = scalar_select %p237, %s18, 1
      %p239 = scmp.lt.s32.totalorder %s236, 1
      %s240 = scalar_select %p239, %s236, 1
      %s241 = smul.addr %s238, 2
      %s242 = sadd.s32 %s240, %s241
      %s243 = smul.addr %s242, 8
      %s244 = scalar_lea.vmem %s3, %s243
      // Predicated region
      $region33: #{double_conv.5} parent=31 // pred_check
        %p245 = pneg %p116
      $region34: #{double_conv.5} parent=31 // pred_check_branch
        %247 = sbr.rel (%p245) target = $region36
      $region35: #{double_conv.5} parent=31 // pred_region
        %s248 = smul.u32 2, %s19
      $region36: #{double_conv.5} parent=31 // pred_fallthru
        _
    $region32: #{double_conv.5} parent=5 // pred_fallthru
      _
    %p249 = scmp.le.s32.totalorder 2, %s9
    // Predicated region
    $region37: #{double_conv.5} parent=5 // pred_check
      %p250 = pneg %p249
    $region38: #{double_conv.5} parent=5 // pred_check_branch
      %252 = sbr.rel (%p250) target = $region40
    $region39: #{double_conv.5} parent=5 // pred_region
      %s253 = ssub.s32 %s9, 2
      // Predicated region
      $region41: #{double_conv.5} parent=39 // pred_check
        %p254 = pneg %p122
      $region42: #{double_conv.5} parent=39 // pred_check_branch
        %256 = sbr.rel (%p254) target = $region44
      $region43: #{double_conv.5} parent=39 // pred_region
        %s257 = smul.u32 2, %s21
        %p258 = scmp.lt.s32.totalorder %s20, 1
        %s259 = scalar_select %p258, %s20, 1
        %p260 = scmp.lt.s32.totalorder %s257, 1
        %s261 = scalar_select %p260, %s257, 1
        %s262 = smul.addr %s259, 2
        %s263 = sadd.s32 %s261, %s262
        %s264 = smul.addr %s263, 8
        %s265 = scalar_lea.vmem %s3, %s264
      $region44: #{double_conv.5} parent=39 // pred_fallthru
        _
    $region40: #{double_conv.5} parent=5 // pred_fallthru
      _
  $region6: #{double_conv.5} parent=0 // loop_footer
    %s13 = sadd.s32 1, %s9
  $region7: #{double_conv.5} parent=0 // loop_footer_branch
    %8 = sbr.rel target = $region3
  $region8: #{double_conv.5} parent=0 // loop_exit
    _

// kernel: double_conv.4
$region0: #{double_conv.4}
  #allocation0 [shape = 'u32[]', space=smem, size = 0x4, offset = 0x4, fixed_abs, tag = 'smem constant byte address 0x4 - core index']
  #allocation1 [shape = 'u32[144,128]{1,0:T(1,128)}', space=vmem, size = 0x12000, scoped, tag = 'internal scratch']
  #allocation2 [shape = 'bf16[18,18,8]{2,1,0:T(8,128)(2,1)}', space=vmem, size = 0x1b000, scoped, tag = 'scratch operand']
  #allocation3 [shape = 'bf16[256,72]{1,0:T(8,128)(2,1)}', space=vmem, size = 0x10000, scoped, tag = 'scratch operand']
  %s0 = inlined_call_operand.vmem [shape: bf16[2,16,16,8], index: 0, kind: input, shape index: {}, may-alias: {0,1,2}]
  %s1 = inlined_call_operand.vmem [shape: bf16[2,16,16,8], index: 1, kind: input, shape index: {}, may-alias: {0,1,2}]
  %s2 = inlined_call_operand.vmem [shape: bf16[2,16,16,8], index: 2, kind: input, shape index: {}, may-alias: {0,1,2}]
  %s3 = inlined_call_operand.vmem [shape: f32[1,8], index: 3, kind: input, shape index: {}]
  %s4 = inlined_call_operand.vmem [shape: f32[1,8], index: 4, kind: input, shape index: {}]
  %s5 = inlined_call_operand.vmem [shape: bf16[72,8], index: 5, kind: input, shape index: {}]
  %s6 = inlined_call_operand.vmem [shape: bf16[2,256,8], index: 6, kind: output, shape index: {0}]
  %s7 = inlined_call_operand.vmem [shape: f32[2,1,2,8], index: 7, kind: output, shape index: {1}]
  %8 = xla_tuple %s6, %s7
  %s9 = sld [smem:[#allocation0]]
  $region81: #{double_conv.4} parent=0
    _
  %s11 = ssub.s32 1, %s9
  %s12 = scalar_select 0, %s11, %s9
  loop: start=0, step=1, limit=4
  $region2: #{double_conv.4} parent=0 // loop_pre_header
    _
  $region3: #{double_conv.4} parent=0 // loop_header
    %s14 = sphi 0, %s18
    %p15 = scmp.ge.s32.totalorder %s14, 4
    %s21 = sphi 0, %s33
    %s22 = sphi 0, %s29
    %s23 = sphi 0, %s21
    %s24 = sphi 0, %s22
    %s25 = sphi 0, %s23
    %s26 = sphi 0, %s24
    %s38 = sphi 0, %s40
    %s41 = sphi 0, %s38
    %s42 = sphi 0, %s41
    %s58 = sphi 0, %s42
    %s76 = sphi 0, %s78
    %s79 = sphi 0, %s76
    %s80 = sphi 0, %s79
    %s96 = sphi 0, %s80
    %s114 = sphi 0, %s116
    %s117 = sphi 0, %s114
    %s118 = sphi 0, %s117
    %s134 = sphi 0, %s118
    %s138 = sphi 0, %s138
    %s140 = sphi 0, %s138
    %s141 = sphi 0, %s140
    %s155 = sphi 0, %s141
    %s159 = sphi 0, %s159
    %s161 = sphi 0, %s159
    %s162 = sphi 0, %s161
    %s176 = sphi 0, %s162
    %s180 = sphi 0, %s180
    %s182 = sphi 0, %s180
    %s183 = sphi 0, %s182
    %s197 = sphi 0, %s183
    %s205 = sphi 0, %s207
    %s208 = sphi 0, %s205
    %s209 = sphi 0, %s208
    %s225 = sphi 0, %s209
    %s233 = sphi 0, %s235
    %s236 = sphi 0, %s233
    %s237 = sphi 0, %s236
    %s253 = sphi 0, %s237
  $region4: #{double_conv.4} parent=0 // loop_header_branch
    %17 = sbr.rel (%p15) target = $region8
  $region5: #{double_conv.4} parent=0 // loop_body
    %s19 = ssub.s32 %s14, 1
    %s20 = ssub.s32 %s14, 2
    %s27 = sadd.s32 1, %s22
    %p28 = scmp.ge.s32.totalorder %s27, 1
    %s29 = scalar_select %p28, 0, %s27
    %s30 = sadd.s32 1, %s21
    %s31 = scalar_select %p28, %s30, %s21
    %p32 = scmp.ge.s32.totalorder %s31, 2
    %s33 = scalar_select %p32, 0, %s31
    %s34 = ssub.s32 %s21, %s33
    %s35 = ssub.s32 %s22, %s29
    %s36 = sor.u32 %s34, %s35
    %p37 = scmp.eq.s32.totalorder %s36, 0
    %s39 = sadd.s32 %s38, 1
    %s40 = scalar_select %p37, %s38, %s39
    %p43 = pneg %p37
    %p44 = scmp.eq.s32.totalorder %s14, 1
    %p45 = por %p43, %p44
    %p46 = scmp.ne.s32.totalorder %s38, %s41
    %p47 = scmp.eq.s32.totalorder %s14, 0
    %p48 = por %p46, %p47
    %p49 = scmp.ne.s32.totalorder %s38, %s41
    %p50 = scmp.eq.s32.totalorder %s19, 1
    %p51 = por %p49, %p50
    %p52 = scmp.ne.s32.totalorder %s41, %s42
    %p53 = scmp.eq.s32.totalorder %s19, 0
    %p54 = por %p52, %p53
    %p55 = scmp.ne.s32.totalorder %s41, %s42
    %p56 = scmp.eq.s32.totalorder %s20, 1
    %p57 = por %p55, %p56
    %p59 = scmp.ne.s32.totalorder %s42, %s58
    %p60 = scmp.eq.s32.totalorder %s20, 0
    %p61 = por %p59, %p60
    %p62 = scmp.gt.s32.totalorder %s22, 0
    %s63 = smul.u32 %s22, 16
    %s64 = ssub.s32 %s63, 1
    %s65 = scalar_select %p62, 1, 0
    %s66 = smul.u32 %s65, %s64
    %p67 = scmp.gt.s32.totalorder %s29, 0
    %s68 = smul.u32 %s29, 16
    %s69 = ssub.s32 %s68, 1
    %s70 = scalar_select %p67, 1, 0
    %s71 = smul.u32 %s70, %s69
    %s72 = ssub.s32 %s21, %s33
    %s73 = ssub.s32 %s66, %s71
    %s74 = sor.u32 %s72, %s73
    %p75 = scmp.eq.s32.totalorder %s74, 0
    %s77 = sadd.s32 %s76, 1
    %s78 = scalar_select %p75, %s76, %s77
    %p81 = pneg %p75
    %p82 = scmp.eq.s32.totalorder %s14, 1
    %p83 = por %p81, %p82
    %p84 = scmp.ne.s32.totalorder %s76, %s79
    %p85 = scmp.eq.s32.totalorder %s14, 0
    %p86 = por %p84, %p85
    %p87 = scmp.ne.s32.totalorder %s76, %s79
    %p88 = scmp.eq.s32.totalorder %s19, 1
    %p89 = por %p87, %p88
    %p90 = scmp.ne.s32.totalorder %s79, %s80
    %p91 = scmp.eq.s32.totalorder %s19, 0
    %p92 = por %p90, %p91
    %p93 = scmp.ne.s32.totalorder %s79, %s80
    %p94 = scmp.eq.s32.totalorder %s20, 1
    %p95 = por %p93, %p94
    %p97 = scmp.ne.s32.totalorder %s80, %s96
    %p98 = scmp.eq.s32.totalorder %s20, 0
    %p99 = por %p97, %p98
    %s100 = sadd.s32 %s22, 1
    %s101 = smul.u32 %s100, 16
    %p102 = scmp.eq.s32.totalorder %s22, 0
    %s103 = scalar_select %p102, 1, 0
    %s104 = ssub.s32 %s101, %s103
    %s105 = sadd.s32 %s29, 1
    %s106 = smul.u32 %s105, 16
    %p107 = scmp.eq.s32.totalorder %s29, 0
    %s108 = scalar_select %p107, 1, 0
    %s109 = ssub.s32 %s106, %s108
    %s110 = ssub.s32 %s21, %s33
    %s111 = ssub.s32 %s104, %s109
    %s112 = sor.u32 %s110, %s111
    %p113 = scmp.eq.s32.totalorder %s112, 0
    %s115 = sadd.s32 %s114, 1
    %s116 = scalar_select %p113, %s114, %s115
    %p119 = pneg %p113
    %p120 = scmp.eq.s32.totalorder %s14, 1
    %p121 = por %p119, %p120
    %p122 = scmp.ne.s32.totalorder %s114, %s117
    %p123 = scmp.eq.s32.totalorder %s14, 0
    %p124 = por %p122, %p123
    %p125 = scmp.ne.s32.totalorder %s114, %s117
    %p126 = scmp.eq.s32.totalorder %s19, 1
    %p127 = por %p125, %p126
    %p128 = scmp.ne.s32.totalorder %s117, %s118
    %p129 = scmp.eq.s32.totalorder %s19, 0
    %p130 = por %p128, %p129
    %p131 = scmp.ne.s32.totalorder %s117, %s118
    %p132 = scmp.eq.s32.totalorder %s20, 1
    %p133 = por %p131, %p132
    %p135 = scmp.ne.s32.totalorder %s118, %s134
    %p136 = scmp.eq.s32.totalorder %s20, 0
    %p137 = por %p135, %p136
    %s139 = sadd.s32 %s138, 1
    %p142 = scmp.eq.s32.totalorder %s14, 1
    %p143 = scmp.ne.s32.totalorder %s138, %s140
    %p144 = scmp.eq.s32.totalorder %s14, 0
    %p145 = por %p143, %p144
    %p146 = scmp.ne.s32.totalorder %s138, %s140
    %p147 = scmp.eq.s32.totalorder %s19, 1
    %p148 = por %p146, %p147
    %p149 = scmp.ne.s32.totalorder %s140, %s141
    %p150 = scmp.eq.s32.totalorder %s19, 0
    %p151 = por %p149, %p150
    %p152 = scmp.ne.s32.totalorder %s140, %s141
    %p153 = scmp.eq.s32.totalorder %s20, 1
    %p154 = por %p152, %p153
    %p156 = scmp.ne.s32.totalorder %s141, %s155
    %p157 = scmp.eq.s32.totalorder %s20, 0
    %p158 = por %p156, %p157
    %s160 = sadd.s32 %s159, 1
    %p163 = scmp.eq.s32.totalorder %s14, 1
    %p164 = scmp.ne.s32.totalorder %s159, %s161
    %p165 = scmp.eq.s32.totalorder %s14, 0
    %p166 = por %p164, %p165
    %p167 = scmp.ne.s32.totalorder %s159, %s161
    %p168 = scmp.eq.s32.totalorder %s19, 1
    %p169 = por %p167, %p168
    %p170 = scmp.ne.s32.totalorder %s161, %s162
    %p171 = scmp.eq.s32.totalorder %s19, 0
    %p172 = por %p170, %p171
    %p173 = scmp.ne.s32.totalorder %s161, %s162
    %p174 = scmp.eq.s32.totalorder %s20, 1
    %p175 = por %p173, %p174
    %p177 = scmp.ne.s32.totalorder %s162, %s176
    %p178 = scmp.eq.s32.totalorder %s20, 0
    %p179 = por %p177, %p178
    %s181 = sadd.s32 %s180, 1
    %p184 = scmp.eq.s32.totalorder %s14, 1
    %p185 = scmp.ne.s32.totalorder %s180, %s182
    %p186 = scmp.eq.s32.totalorder %s14, 0
    %p187 = por %p185, %p186
    %p188 = scmp.ne.s32.totalorder %s180, %s182
    %p189 = scmp.eq.s32.totalorder %s19, 1
    %p190 = por %p188, %p189
    %p191 = scmp.ne.s32.totalorder %s182, %s183
    %p192 = scmp.eq.s32.totalorder %s19, 0
    %p193 = por %p191, %p192
    %p194 = scmp.ne.s32.totalorder %s182, %s183
    %p195 = scmp.eq.s32.totalorder %s20, 1
    %p196 = por %p194, %p195
    %p198 = scmp.ne.s32.totalorder %s183, %s197
    %p199 = scmp.eq.s32.totalorder %s20, 0
    %p200 = por %p198, %p199
    %s201 = ssub.s32 %s21, %s33
    %s202 = ssub.s32 %s22, %s29
    %s203 = sor.u32 %s201, %s202
    %p204 = scmp.eq.s32.totalorder %s203, 0
    %s206 = sadd.s32 %s205, 1
    %s207 = scalar_select %p204, %s205, %s206
    %p210 = pneg %p204
    %p211 = scmp.eq.s32.totalorder %s14, 1
    %p212 = por %p210, %p211
    %p213 = scmp.ne.s32.totalorder %s205, %s208
    %p214 = scmp.eq.s32.totalorder %s14, 0
    %p215 = por %p213, %p214
    %p216 = scmp.ne.s32.totalorder %s205, %s208
    %p217 = scmp.eq.s32.totalorder %s19, 1
    %p218 = por %p216, %p217
    %p219 = scmp.ne.s32.totalorder %s208, %s209
    %p220 = scmp.eq.s32.totalorder %s19, 0
    %p221 = por %p219, %p220
    %p222 = scmp.ne.s32.totalorder %s208, %s209
    %p223 = scmp.eq.s32.totalorder %s20, 1
    %p224 = por %p222, %p223
    %p226 = scmp.ne.s32.totalorder %s209, %s225
    %p227 = scmp.eq.s32.totalorder %s20, 0
    %p228 = por %p226, %p227
    %s229 = ssub.s32 %s21, %s33
    %s230 = ssub.s32 %s22, %s29
    %s231 = sor.u32 %s229, %s230
    %p232 = scmp.eq.s32.totalorder %s231, 0
    %s234 = sadd.s32 %s233, 1
    %s235 = scalar_select %p232, %s233, %s234
    %p238 = pneg %p232
    %p239 = scmp.eq.s32.totalorder %s14, 1
    %p240 = por %p238, %p239
    %p241 = scmp.ne.s32.totalorder %s233, %s236
    %p242 = scmp.eq.s32.totalorder %s14, 0
    %p243 = por %p241, %p242
    %p244 = scmp.ne.s32.totalorder %s233, %s236
    %p245 = scmp.eq.s32.totalorder %s19, 1
    %p246 = por %p244, %p245
    %p247 = scmp.ne.s32.totalorder %s236, %s237
    %p248 = scmp.eq.s32.totalorder %s19, 0
    %p249 = por %p247, %p248
    %p250 = scmp.ne.s32.totalorder %s236, %s237
    %p251 = scmp.eq.s32.totalorder %s20, 1
    %p252 = por %p250, %p251
    %p254 = scmp.ne.s32.totalorder %s237, %s253
    %p255 = scmp.eq.s32.totalorder %s20, 0
    %p256 = por %p254, %p255
    %p257 = scmp.le.s32.totalorder 1, %s14
    %p258 = scmp.lt.s32.totalorder %s14, 3
    %p259 = pnand %p257, %p258
    %p260 = pneg %p259
    // Predicated region
    $region9: #{double_conv.4} parent=5 // pred_check
      _
    $region10: #{double_conv.4} parent=5 // pred_check_branch
      %262 = sbr.rel (%p259) target = $region12
    $region11: #{double_conv.4} parent=5 // pred_region
      %s263 = ssub.s32 %s14, 1
      // Predicated region
      $region13: #{double_conv.4} parent=11 // pred_check
        %p264 = pneg %p151
      $region14: #{double_conv.4} parent=11 // pred_check_branch
        %266 = sbr.rel (%p264) target = $region16
      $region15: #{double_conv.4} parent=11 // pred_region
        _
      $region16: #{double_conv.4} parent=11 // pred_fallthru
        _
      // Predicated region
      $region17: #{double_conv.4} parent=11 // pred_check
        %p267 = pneg %p172
      $region18: #{double_conv.4} parent=11 // pred_check_branch
        %269 = sbr.rel (%p267) target = $region20
      $region19: #{double_conv.4} parent=11 // pred_region
        _
      $region20: #{double_conv.4} parent=11 // pred_fallthru
        _
      // Predicated region
      $region21: #{double_conv.4} parent=11 // pred_check
        %p270 = pneg %p193
      $region22: #{double_conv.4} parent=11 // pred_check_branch
        %272 = sbr.rel (%p270) target = $region24
      $region23: #{double_conv.4} parent=11 // pred_region
        _
      $region24: #{double_conv.4} parent=11 // pred_fallthru
        _
    $region12: #{double_conv.4} parent=5 // pred_fallthru
      _
    %p273 = scmp.lt.s32.totalorder %s14, 2
    // Predicated region
    $region25: #{double_conv.4} parent=5 // pred_check
      %p274 = pneg %p273
    $region26: #{double_conv.4} parent=5 // pred_check_branch
      %276 = sbr.rel (%p274) target = $region28
    $region27: #{double_conv.4} parent=5 // pred_region
      // Predicated region
      $region29: #{double_conv.4} parent=27 // pred_check
        %p277 = pneg %p48
      $region30: #{double_conv.4} parent=27 // pred_check_branch
        %279 = sbr.rel (%p277) target = $region32
      $region31: #{double_conv.4} parent=27 // pred_region
        %s280 = smul.u32 16, %s22
        %p281 = scmp.lt.s32.totalorder %s21, 1
        %s282 = scalar_select %p281, %s21, 1
        %p283 = scmp.lt.s32.totalorder %s280, 15
        %s284 = scalar_select %p283, %s280, 15
        %s285 = smul.addr %s284, 2
        %s286 = smul.addr %s282, 32
        %s287 = sadd.s32 %s285, %s286
        %s288 = smul.addr %s287, 4
        %s289 = scalar_lea.vmem %s0, %s288
        %s290 = smul.u32 16, %s22
      $region32: #{double_conv.4} parent=27 // pred_fallthru
        _
      // Predicated region
      $region33: #{double_conv.4} parent=27 // pred_check
        %p291 = pneg %p86
      $region34: #{double_conv.4} parent=27 // pred_check_branch
        %293 = sbr.rel (%p291) target = $region36
      $region35: #{double_conv.4} parent=27 // pred_region
        %p294 = scmp.gt.s32.totalorder %s22, 0
        %s295 = smul.u32 %s22, 16
        %s296 = ssub.s32 %s295, 1
        %s297 = scalar_select %p294, 1, 0
        %s298 = smul.u32 %s297, %s296
        %p299 = scmp.lt.s32.totalorder %s21, 1
        %s300 = scalar_select %p299, %s21, 1
        %p301 = scmp.lt.s32.totalorder %s298, 15
        %s302 = scalar_select %p301, %s298, 15
        %s303 = smul.addr %s302, 2
        %s304 = smul.addr %s300, 32
        %s305 = sadd.s32 %s303, %s304
        %s306 = smul.addr %s305, 4
        %s307 = scalar_lea.vmem %s1, %s306
        %p308 = scmp.gt.s32.totalorder %s22, 0
        %s309 = smul.u32 %s22, 16
        %s310 = ssub.s32 %s309, 1
        %s311 = scalar_select %p308, 1, 0
        %s312 = smul.u32 %s311, %s310
      $region36: #{double_conv.4} parent=27 // pred_fallthru
        _
      // Predicated region
      $region37: #{double_conv.4} parent=27 // pred_check
        %p313 = pneg %p124
      $region38: #{double_conv.4} parent=27 // pred_check_branch
        %315 = sbr.rel (%p313) target = $region40
      $region39: #{double_conv.4} parent=27 // pred_region
        %s316 = sadd.s32 %s22, 1
        %s317 = smul.u32 %s316, 16
        %p318 = scmp.eq.s32.totalorder %s22, 0
        %s319 = scalar_select %p318, 1, 0
        %s320 = ssub.s32 %s317, %s319
        %p321 = scmp.lt.s32.totalorder %s21, 1
        %s322 = scalar_select %p321, %s21, 1
        %p323 = scmp.lt.s32.totalorder %s320, 15
        %s324 = scalar_select %p323, %s320, 15
        %s325 = smul.addr %s324, 2
        %s326 = smul.addr %s322, 32
        %s327 = sadd.s32 %s325, %s326
        %s328 = smul.addr %s327, 4
        %s329 = scalar_lea.vmem %s2, %s328
        %s330 = sadd.s32 %s22, 1
        %s331 = smul.u32 %s330, 16
        %p332 = scmp.eq.s32.totalorder %s22, 0
        %s333 = scalar_select %p332, 1, 0
        %s334 = ssub.s32 %s331, %s333
      $region40: #{double_conv.4} parent=27 // pred_fallthru
        _
    $region28: #{double_conv.4} parent=5 // pred_fallthru
      _
    %p335 = scmp.le.s32.totalorder 1, %s14
    %p336 = scmp.lt.s32.totalorder %s14, 3
    %p337 = pnand %p335, %p336
    %p338 = pneg %p337
    // Predicated region
    $region41: #{double_conv.4} parent=5 // pred_check
      _
    $region42: #{double_conv.4} parent=5 // pred_check_branch
      %340 = sbr.rel (%p337) target = $region44
    $region43: #{double_conv.4} parent=5 // pred_region
      %s341 = ssub.s32 %s14, 1
      %s342 = smul.u32 16, %s24
      %p343 = scmp.lt.s32.totalorder %s23, 1
      %s344 = scalar_select %p343, %s23, 1
      %p345 = scmp.lt.s32.totalorder %s342, 15
      %s346 = scalar_select %p345, %s342, 15
      %s347 = smul.addr %s346, 2
      %s348 = smul.addr %s344, 32
      %s349 = sadd.s32 %s347, %s348
      %s350 = smul.addr %s349, 4
      %s351 = scalar_lea.vmem %s0, %s350
      %p352 = pneg %p54
      %p353 = pneg %p51
      %p354 = scmp.gt.s32.totalorder %s24, 0
      %s355 = smul.u32 %s24, 16
      %s356 = ssub.s32 %s355, 1
      %s357 = scalar_select %p354, 1, 0
      %s358 = smul.u32 %s357, %s356
      %p359 = scmp.lt.s32.totalorder %s23, 1
      %s360 = scalar_select %p359, %s23, 1
      %p361 = scmp.lt.s32.totalorder %s358, 15
      %s362 = scalar_select %p361, %s358, 15
      %s363 = smul.addr %s362, 2
      %s364 = smul.addr %s360, 32
      %s365 = sadd.s32 %s363, %s364
      %s366 = smul.addr %s365, 4
      %s367 = scalar_lea.vmem %s1, %s366
      %p368 = pneg %p92
      %p369 = pneg %p89
      %s370 = sadd.s32 %s24, 1
      %s371 = smul.u32 %s370, 16
      %p372 = scmp.eq.s32.totalorder %s24, 0
      %s373 = scalar_select %p372, 1, 0
      %s374 = ssub.s32 %s371, %s373
      %p375 = scmp.lt.s32.totalorder %s23, 1
      %s376 = scalar_select %p375, %s23, 1
      %p377 = scmp.lt.s32.totalorder %s374, 15
      %s378 = scalar_select %p377, %s374, 15
      %s379 = smul.addr %s378, 2
      %s380 = smul.addr %s376, 32
      %s381 = sadd.s32 %s379, %s380
      %s382 = smul.addr %s381, 4
      %s383 = scalar_lea.vmem %s2, %s382
      %p384 = pneg %p130
      %p385 = pneg %p127
      %p386 = pneg %p151
      %p387 = pneg %p148
      %p388 = pneg %p172
      %p389 = pneg %p169
      %p390 = pneg %p193
      %p391 = pneg %p190
      %p392 = pneg %p221
      %p393 = pneg %p218
      %s394 = smul.u32 32, %s24
      %p395 = scmp.lt.s32.totalorder %s23, 1
      %s396 = scalar_select %p395, %s23, 1
      %p397 = scmp.lt.s32.totalorder %s394, 31
      %s398 = scalar_select %p397, %s394, 31
      %s399 = smul.addr %s396, 32
      %s400 = sadd.s32 %s398, %s399
      %s401 = smul.addr %s400, 4
      %s402 = scalar_lea.vmem %s6, %s401
      %p403 = pneg %p249
      %p404 = pneg %p246
      %p405 = scmp.lt.s32.totalorder %s23, 1
      %s406 = scalar_select %p405, %s23, 1
      %p407 = scmp.lt.s32.totalorder %s24, 0
      %s408 = scalar_select %p407, %s24, 0
      %s409 = sadd.s32 %s408, %s406
      %s410 = smul.addr %s409, 2
      %s411 = scalar_lea.vmem %s7, %s410
      %s412 = smul.u32 16, %s24
      %p413 = scmp.lt.s32.totalorder %s23, 1
      %s414 = scalar_select %p413, %s23, 1
      %p415 = scmp.lt.s32.totalorder %s412, 15
      %s416 = scalar_select %p415, %s412, 15
      %s417 = smul.addr %s416, 2
      %s418 = smul.addr %s414, 32
      %s419 = sadd.s32 %s417, %s418
      %s420 = smul.addr %s419, 4
      %s421 = scalar_lea.vmem %s0, %s420
      %s422 = smul.u32 16, %s24
      %p423 = scmp.gt.s32.totalorder %s24, 0
      %s424 = smul.u32 %s24, 16
      %s425 = ssub.s32 %s424, 1
      %s426 = scalar_select %p423, 1, 0
      %s427 = smul.u32 %s426, %s425
      %p428 = scmp.lt.s32.totalorder %s23, 1
      %s429 = scalar_select %p428, %s23, 1
      %p430 = scmp.lt.s32.totalorder %s427, 15
      %s431 = scalar_select %p430, %s427, 15
      %s432 = smul.addr %s431, 2
      %s433 = smul.addr %s429, 32
      %s434 = sadd.s32 %s432, %s433
      %s435 = smul.addr %s434, 4
      %s436 = scalar_lea.vmem %s1, %s435
      %p437 = scmp.gt.s32.totalorder %s24, 0
      %s438 = smul.u32 %s24, 16
      %s439 = ssub.s32 %s438, 1
      %s440 = scalar_select %p437, 1, 0
      %s441 = smul.u32 %s440, %s439
      %s442 = sadd.s32 %s24, 1
      %s443 = smul.u32 %s442, 16
      %p444 = scmp.eq.s32.totalorder %s24, 0
      %s445 = scalar_select %p444, 1, 0
      %s446 = ssub.s32 %s443, %s445
      %p447 = scmp.lt.s32.totalorder %s23, 1
      %s448 = scalar_select %p447, %s23, 1
      %p449 = scmp.lt.s32.totalorder %s446, 15
      %s450 = scalar_select %p449, %s446, 15
      %s451 = smul.addr %s450, 2
      %s452 = smul.addr %s448, 32
      %s453 = sadd.s32 %s451, %s452
      %s454 = smul.addr %s453, 4
      %s455 = scalar_lea.vmem %s2, %s454
      %s456 = sadd.s32 %s24, 1
      %s457 = smul.u32 %s456, 16
      %p458 = scmp.eq.s32.totalorder %s24, 0
      %s459 = scalar_select %p458, 1, 0
      %s460 = ssub.s32 %s457, %s459
      %s461 = smul.u32 32, %s24
      %p462 = scmp.lt.s32.totalorder %s23, 1
      %s463 = scalar_select %p462, %s23, 1
      %p464 = scmp.lt.s32.totalorder %s461, 31
      %s465 = scalar_select %p464, %s461, 31
      %s466 = smul.addr %s463, 32
      %s467 = sadd.s32 %s465, %s466
      %s468 = smul.addr %s467, 4
      %s469 = scalar_lea.vmem %s6, %s468
      %s470 = smul.u32 32, %s24
      %p471 = scmp.lt.s32.totalorder %s23, 1
      %s472 = scalar_select %p471, %s23, 1
      %p473 = scmp.lt.s32.totalorder %s24, 0
      %s474 = scalar_select %p473, %s24, 0
      %s475 = sadd.s32 %s474, %s472
      %s476 = smul.addr %s475, 2
      %s477 = scalar_lea.vmem %s7, %s476
      %v479 = vld [vmem:[%s3] sm:$0x1]
      %v480 = vld [vmem:[%s4] sm:$0x1]
      %vm481 = vcmask 57344
      %vm482 = vsmask.f32 256
      %vm483 = vmand %vm481, %vm482
      %v484 = vld [vmem:[#allocation2] sm:$0x1]
      %v485 = vsel %vm483, 0, %v484
      %486 = vst [vmem:[#allocation2] sm:$0x1] %v485
      %v487 = vld [vmem:[#allocation2 + $0xc] sm:$0x1]
      %v488 = vsel %vm483, 0, %v487
      %489 = vst [vmem:[#allocation2 + $0xc] sm:$0x1] %v488
      %v490 = vld [vmem:[#allocation2 + $0x18] sm:$0x1]
      %v491 = vsel %vm483, 0, %v490
      %492 = vst [vmem:[#allocation2 + $0x18] sm:$0x1] %v491
      %v493 = vld [vmem:[#allocation2 + $0x24] sm:$0x1]
      %v494 = vsel %vm483, 0, %v493
      %495 = vst [vmem:[#allocation2 + $0x24] sm:$0x1] %v494
      %v496 = vld [vmem:[#allocation2 + $0x30] sm:$0x1]
      %v497 = vsel %vm483, 0, %v496
      %498 = vst [vmem:[#allocation2 + $0x30] sm:$0x1] %v497
      %v499 = vld [vmem:[#allocation2 + $0x3c] sm:$0x1]
      %v500 = vsel %vm483, 0, %v499
      %501 = vst [vmem:[#allocation2 + $0x3c] sm:$0x1] %v500
      %v502 = vld [vmem:[#allocation2 + $0x48] sm:$0x1]
      %v503 = vsel %vm483, 0, %v502
      %504 = vst [vmem:[#allocation2 + $0x48] sm:$0x1] %v503
      %v505 = vld [vmem:[#allocation2 + $0x54] sm:$0x1]
      %v506 = vsel %vm483, 0, %v505
      %507 = vst [vmem:[#allocation2 + $0x54] sm:$0x1] %v506
      %v508 = vld [vmem:[#allocation2 + $0x60] sm:$0x1]
      %v509 = vsel %vm483, 0, %v508
      %510 = vst [vmem:[#allocation2 + $0x60] sm:$0x1] %v509
      %v511 = vld [vmem:[#allocation2 + $0x6c] sm:$0x1]
      %v512 = vsel %vm483, 0, %v511
      %513 = vst [vmem:[#allocation2 + $0x6c] sm:$0x1] %v512
      %v514 = vld [vmem:[#allocation2 + $0x78] sm:$0x1]
      %v515 = vsel %vm483, 0, %v514
      %516 = vst [vmem:[#allocation2 + $0x78] sm:$0x1] %v515
      %v517 = vld [vmem:[#allocation2 + $0x84] sm:$0x1]
      %v518 = vsel %vm483, 0, %v517
      %519 = vst [vmem:[#allocation2 + $0x84] sm:$0x1] %v518
      %v520 = vld [vmem:[#allocation2 + $0x90] sm:$0x1]
      %v521 = vsel %vm483, 0, %v520
      %522 = vst [vmem:[#allocation2 + $0x90] sm:$0x1] %v521
      %v523 = vld [vmem:[#allocation2 + $0x9c] sm:$0x1]
      %v524 = vsel %vm483, 0, %v523
      %525 = vst [vmem:[#allocation2 + $0x9c] sm:$0x1] %v524
      %v526 = vld [vmem:[#allocation2 + $0xa8] sm:$0x1]
      %v527 = vsel %vm483, 0, %v526
      %528 = vst [vmem:[#allocation2 + $0xa8] sm:$0x1] %v527
      %v529 = vld [vmem:[#allocation2 + $0xb4] sm:$0x1]
      %v530 = vsel %vm483, 0, %v529
      %531 = vst [vmem:[#allocation2 + $0xb4] sm:$0x1] %v530
      %v532 = vld [vmem:[#allocation2 + $0xc0] sm:$0x1]
      %v533 = vsel %vm483, 0, %v532
      %534 = vst [vmem:[#allocation2 + $0xc0] sm:$0x1] %v533
      %v535 = vld [vmem:[#allocation2 + $0xcc] sm:$0x1]
      %v536 = vsel %vm483, 0, %v535
      %537 = vst [vmem:[#allocation2 + $0xcc] sm:$0x1] %v536
      %vm538 = vsmask.f32 7938
      %vm539 = vmand %vm481, %vm538
      %v540 = vld [vmem:[#allocation2 + $0x8] sm:$0x1]
      %v541 = vsel %vm539, 0, %v540
      %542 = vst [vmem:[#allocation2 + $0x8] sm:$0x1] %v541
      %v543 = vld [vmem:[#allocation2 + $0x14] sm:$0x1]
      %v544 = vsel %vm539, 0, %v543
      %545 = vst [vmem:[#allocation2 + $0x14] sm:$0x1] %v544
      %v546 = vld [vmem:[#allocation2 + $0x20] sm:$0x1]
      %v547 = vsel %vm539, 0, %v546
      %548 = vst [vmem:[#allocation2 + $0x20] sm:$0x1] %v547
      %v549 = vld [vmem:[#allocation2 + $0x2c] sm:$0x1]
      %v550 = vsel %vm539, 0, %v549
      %551 = vst [vmem:[#allocation2 + $0x2c] sm:$0x1] %v550
      %v552 = vld [vmem:[#allocation2 + $0x38] sm:$0x1]
      %v553 = vsel %vm539, 0, %v552
      %554 = vst [vmem:[#allocation2 + $0x38] sm:$0x1] %v553
      %v555 = vld [vmem:[#allocation2 + $0x44] sm:$0x1]
      %v556 = vsel %vm539, 0, %v555
      %557 = vst [vmem:[#allocation2 + $0x44] sm:$0x1] %v556
      %v558 = vld [vmem:[#allocation2 + $0x50] sm:$0x1]
      %v559 = vsel %vm539, 0, %v558
      %560 = vst [vmem:[#allocation2 + $0x50] sm:$0x1] %v559
      %v561 = vld [vmem:[#allocation2 + $0x5c] sm:$0x1]
      %v562 = vsel %vm539, 0, %v561
      %563 = vst [vmem:[#allocation2 + $0x5c] sm:$0x1] %v562
      %v564 = vld [vmem:[#allocation2 + $0x68] sm:$0x1]
      %v565 = vsel %vm539, 0, %v564
      %566 = vst [vmem:[#allocation2 + $0x68] sm:$0x1] %v565
      %v567 = vld [vmem:[#allocation2 + $0x74] sm:$0x1]
      %v568 = vsel %vm539, 0, %v567
      %569 = vst [vmem:[#allocation2 + $0x74] sm:$0x1] %v568
      %v570 = vld [vmem:[#allocation2 + $0x80] sm:$0x1]
      %v571 = vsel %vm539, 0, %v570
      %572 = vst [vmem:[#allocation2 + $0x80] sm:$0x1] %v571
      %v573 = vld [vmem:[#allocation2 + $0x8c] sm:$0x1]
      %v574 = vsel %vm539, 0, %v573
      %575 = vst [vmem:[#allocation2 + $0x8c] sm:$0x1] %v574
      %v576 = vld [vmem:[#allocation2 + $0x98] sm:$0x1]
      %v577 = vsel %vm539, 0, %v576
      %578 = vst [vmem:[#allocation2 + $0x98] sm:$0x1] %v577
      %v579 = vld [vmem:[#allocation2 + $0xa4] sm:$0x1]
      %v580 = vsel %vm539, 0, %v579
      %581 = vst [vmem:[#allocation2 + $0xa4] sm:$0x1] %v580
      %v582 = vld [vmem:[#allocation2 + $0xb0] sm:$0x1]
      %v583 = vsel %vm539, 0, %v582
      %584 = vst [vmem:[#allocation2 + $0xb0] sm:$0x1] %v583
      %v585 = vld [vmem:[#allocation2 + $0xbc] sm:$0x1]
      %v586 = vsel %vm539, 0, %v585
      %587 = vst [vmem:[#allocation2 + $0xbc] sm:$0x1] %v586
      %v588 = vld [vmem:[#allocation2 + $0xc8] sm:$0x1]
      %v589 = vsel %vm539, 0, %v588
      %590 = vst [vmem:[#allocation2 + $0xc8] sm:$0x1] %v589
      %v591 = vld [vmem:[#allocation2 + $0xd4] sm:$0x1]
      %v592 = vsel %vm539, 0, %v591
      %593 = vst [vmem:[#allocation2 + $0xd4] sm:$0x1] %v592
      %v594 = vld [vmem:[%s421] sm:$0xf]
      %v595 = vld [vmem:[%s421 + $0x4] sm:$0xf]
      %v596 = vld [vmem:[%s421 + $0x8] sm:$0xf]
      %v597 = vld [vmem:[%s421 + $0xc] sm:$0xf]
      %v598 = vld [vmem:[%s421 + $0x10] sm:$0xf]
      %v599 = vld [vmem:[%s421 + $0x14] sm:$0xf]
      %v600 = vld [vmem:[%s421 + $0x18] sm:$0xf]
      %v601 = vld [vmem:[%s421 + $0x1c] sm:$0xf]
      %v602 = vld [vmem:[%s421 + $0x20] sm:$0xf]
      %v603 = vld [vmem:[%s421 + $0x24] sm:$0xf]
      %v604 = vld [vmem:[%s421 + $0x28] sm:$0xf]
      %v605 = vld [vmem:[%s421 + $0x2c] sm:$0xf]
      %v606 = vld [vmem:[%s421 + $0x30] sm:$0xf]
      %v607 = vld [vmem:[%s421 + $0x34] sm:$0xf]
      %v608 = vld [vmem:[%s421 + $0x38] sm:$0xf]
      %v609 = vld [vmem:[%s421 + $0x3c] sm:$0xf]
      %v610 = vld [vmem:[%s421 + $0x40] sm:$0xf]
      %v611 = vld [vmem:[%s421 + $0x44] sm:$0xf]
      %v612 = vld [vmem:[%s421 + $0x48] sm:$0xf]
      %v613 = vld [vmem:[%s421 + $0x4c] sm:$0xf]
      %v614 = vld [vmem:[%s421 + $0x50] sm:$0xf]
      %v615 = vld [vmem:[%s421 + $0x54] sm:$0xf]
      %v616 = vld [vmem:[%s421 + $0x58] sm:$0xf]
      %v617 = vld [vmem:[%s421 + $0x5c] sm:$0xf]
      %v618 = vld [vmem:[%s421 + $0x60] sm:$0xf]
      %v619 = vld [vmem:[%s421 + $0x64] sm:$0xf]
      %v620 = vld [vmem:[%s421 + $0x68] sm:$0xf]
      %v621 = vld [vmem:[%s421 + $0x6c] sm:$0xf]
      %v622 = vld [vmem:[%s421 + $0x70] sm:$0xf]
      %v623 = vld [vmem:[%s421 + $0x74] sm:$0xf]
      %v624 = vld [vmem:[%s421 + $0x78] sm:$0xf]
      %v625 = vld [vmem:[%s421 + $0x7c] sm:$0xf]
      %v626 = vunpack.c.l.bf16 %v594
      %v627 = vunpack.c.l.bf16 %v595
      %v628 = vunpack.c.l.bf16 %v596
      %v629 = vunpack.c.l.bf16 %v597
      %v630 = vunpack.c.l.bf16 %v598
      %v631 = vunpack.c.l.bf16 %v599
      %v632 = vunpack.c.l.bf16 %v600
      %v633 = vunpack.c.l.bf16 %v601
      %v634 = vunpack.c.l.bf16 %v602
      %v635 = vunpack.c.l.bf16 %v603
      %v636 = vunpack.c.l.bf16 %v604
      %v637 = vunpack.c.l.bf16 %v605
      %v638 = vunpack.c.l.bf16 %v606
      %v639 = vunpack.c.l.bf16 %v607
      %v640 = vunpack.c.l.bf16 %v608
      %v641 = vunpack.c.l.bf16 %v609
      %v642 = vunpack.c.l.bf16 %v610
      %v643 = vunpack.c.l.bf16 %v611
      %v644 = vunpack.c.l.bf16 %v612
      %v645 = vunpack.c.l.bf16 %v613
      %v646 = vunpack.c.l.bf16 %v614
      %v647 = vunpack.c.l.bf16 %v615
      %v648 = vunpack.c.l.bf16 %v616
      %v649 = vunpack.c.l.bf16 %v617
      %v650 = vunpack.c.l.bf16 %v618
      %v651 = vunpack.c.l.bf16 %v619
      %v652 = vunpack.c.l.bf16 %v620
      %v653 = vunpack.c.l.bf16 %v621
      %v654 = vunpack.c.l.bf16 %v622
      %v655 = vunpack.c.l.bf16 %v623
      %v656 = vunpack.c.l.bf16 %v624
      %v657 = vunpack.c.l.bf16 %v625
      %v659 = vlaneseq
      %v660 = vshrl.u32 %v659, 7
      %v661 = vsub.s32 0, %v660
      %v662 = vrot.slane %v479, %v661
      %v664 = vmul.f32 %v626, %v662
      %v665 = vmul.f32 %v627, %v662
      %v666 = vmul.f32 %v628, %v662
      %v667 = vmul.f32 %v629, %v662
      %v668 = vmul.f32 %v630, %v662
      %v669 = vmul.f32 %v631, %v662
      %v670 = vmul.f32 %v632, %v662
      %v671 = vmul.f32 %v633, %v662
      %v672 = vmul.f32 %v634, %v662
      %v673 = vmul.f32 %v635, %v662
      %v674 = vmul.f32 %v636, %v662
      %v675 = vmul.f32 %v637, %v662
      %v676 = vmul.f32 %v638, %v662
      %v677 = vmul.f32 %v639, %v662
      %v678 = vmul.f32 %v640, %v662
      %v679 = vmul.f32 %v641, %v662
      %v680 = vmul.f32 %v642, %v662
      %v681 = vmul.f32 %v643, %v662
      %v682 = vmul.f32 %v644, %v662
      %v683 = vmul.f32 %v645, %v662
      %v684 = vmul.f32 %v646, %v662
      %v685 = vmul.f32 %v647, %v662
      %v686 = vmul.f32 %v648, %v662
      %v687 = vmul.f32 %v649, %v662
      %v688 = vmul.f32 %v650, %v662
      %v689 = vmul.f32 %v651, %v662
      %v690 = vmul.f32 %v652, %v662
      %v691 = vmul.f32 %v653, %v662
      %v692 = vmul.f32 %v654, %v662
      %v693 = vmul.f32 %v655, %v662
      %v694 = vmul.f32 %v656, %v662
      %v695 = vmul.f32 %v657, %v662
      %v697 = vlaneseq
      %v698 = vshrl.u32 %v697, 7
      %v699 = vsub.s32 0, %v698
      %v700 = vrot.slane %v480, %v699
      %v702 = vadd.f32 %v664, %v700
      %v703 = vadd.f32 %v665, %v700
      %v704 = vadd.f32 %v666, %v700
      %v705 = vadd.f32 %v667, %v700
      %v706 = vadd.f32 %v668, %v700
      %v707 = vadd.f32 %v669, %v700
      %v708 = vadd.f32 %v670, %v700
      %v709 = vadd.f32 %v671, %v700
      %v710 = vadd.f32 %v672, %v700
      %v711 = vadd.f32 %v673, %v700
      %v712 = vadd.f32 %v674, %v700
      %v713 = vadd.f32 %v675, %v700
      %v714 = vadd.f32 %v676, %v700
      %v715 = vadd.f32 %v677, %v700
      %v716 = vadd.f32 %v678, %v700
      %v717 = vadd.f32 %v679, %v700
      %v718 = vadd.f32 %v680, %v700
      %v719 = vadd.f32 %v681, %v700
      %v720 = vadd.f32 %v682, %v700
      %v721 = vadd.f32 %v683, %v700
      %v722 = vadd.f32 %v684, %v700
      %v723 = vadd.f32 %v685, %v700
      %v724 = vadd.f32 %v686, %v700
      %v725 = vadd.f32 %v687, %v700
      %v726 = vadd.f32 %v688, %v700
      %v727 = vadd.f32 %v689, %v700
      %v728 = vadd.f32 %v690, %v700
      %v729 = vadd.f32 %v691, %v700
      %v730 = vadd.f32 %v692, %v700
      %v731 = vadd.f32 %v693, %v700
      %v732 = vadd.f32 %v694, %v700
      %v733 = vadd.f32 %v695, %v700
      %v734 = vmax.f32 %v702, 0.0
      %v735 = vmax.f32 %v703, 0.0
      %v736 = vmax.f32 %v704, 0.0
      %v737 = vmax.f32 %v705, 0.0
      %v738 = vmax.f32 %v706, 0.0
      %v739 = vmax.f32 %v707, 0.0
      %v740 = vmax.f32 %v708, 0.0
      %v741 = vmax.f32 %v709, 0.0
      %v742 = vmax.f32 %v710, 0.0
      %v743 = vmax.f32 %v711, 0.0
      %v744 = vmax.f32 %v712, 0.0
      %v745 = vmax.f32 %v713, 0.0
      %v746 = vmax.f32 %v714, 0.0
      %v747 = vmax.f32 %v715, 0.0
      %v748 = vmax.f32 %v716, 0.0
      %v749 = vmax.f32 %v717, 0.0
      %v750 = vmax.f32 %v718, 0.0
      %v751 = vmax.f32 %v719, 0.0
      %v752 = vmax.f32 %v720, 0.0
      %v753 = vmax.f32 %v721, 0.0
      %v754 = vmax.f32 %v722, 0.0
      %v755 = vmax.f32 %v723, 0.0
      %v756 = vmax.f32 %v724, 0.0
      %v757 = vmax.f32 %v725, 0.0
      %v758 = vmax.f32 %v726, 0.0
      %v759 = vmax.f32 %v727, 0.0
      %v760 = vmax.f32 %v728, 0.0
      %v761 = vmax.f32 %v729, 0.0
      %v762 = vmax.f32 %v730, 0.0
      %v763 = vmax.f32 %v731, 0.0
      %v764 = vmax.f32 %v732, 0.0
      %v765 = vmax.f32 %v733, 0.0
      %v766 = vpack.c.bf16 %v735, %v734
      %v767 = vpack.c.bf16 %v737, %v736
      %v768 = vpack.c.bf16 %v739, %v738
      %v769 = vpack.c.bf16 %v741, %v740
      %v770 = vpack.c.bf16 %v743, %v742
      %v771 = vpack.c.bf16 %v745, %v744
      %v772 = vpack.c.bf16 %v747, %v746
      %v773 = vpack.c.bf16 %v749, %v748
      %v774 = vpack.c.bf16 %v751, %v750
      %v775 = vpack.c.bf16 %v753, %v752
      %v776 = vpack.c.bf16 %v755, %v754
      %v777 = vpack.c.bf16 %v757, %v756
      %v778 = vpack.c.bf16 %v759, %v758
      %v779 = vpack.c.bf16 %v761, %v760
      %v780 = vpack.c.bf16 %v763, %v762
      %v781 = vpack.c.bf16 %v765, %v764
      %v798 = vunpack.c.l.b16 %v766
      %v799 = vunpack.c.h.b16 %v766
      %v800 = vunpack.c.l.b16 %v767
      %v801 = vunpack.c.h.b16 %v767
      %v802 = vunpack.c.l.b16 %v768
      %v803 = vunpack.c.h.b16 %v768
      %v804 = vunpack.c.l.b16 %v769
      %v805 = vunpack.c.h.b16 %v769
      %v806 = vunpack.c.l.b16 %v770
      %v807 = vunpack.c.h.b16 %v770
      %v808 = vunpack.c.l.b16 %v771
      %v809 = vunpack.c.h.b16 %v771
      %v810 = vunpack.c.l.b16 %v772
      %v811 = vunpack.c.h.b16 %v772
      %v812 = vunpack.c.l.b16 %v773
      %v813 = vunpack.c.h.b16 %v773
      %v814 = vunpack.c.l.b16 %v774
      %v815 = vunpack.c.h.b16 %v774
      %v816 = vunpack.c.l.b16 %v775
      %v817 = vunpack.c.h.b16 %v775
      %v818 = vunpack.c.l.b16 %v776
      %v819 = vunpack.c.h.b16 %v776
      %v820 = vunpack.c.l.b16 %v777
      %v821 = vunpack.c.h.b16 %v777
      %v822 = vunpack.c.l.b16 %v778
      %v823 = vunpack.c.h.b16 %v778
      %v824 = vunpack.c.l.b16 %v779
      %v825 = vunpack.c.h.b16 %v779
      %v826 = vunpack.c.l.b16 %v780
      %v827 = vunpack.c.h.b16 %v780
      %v828 = vunpack.c.l.b16 %v781
      %v829 = vunpack.c.h.b16 %v781
      %v830 = vpack.c.b16 %v798, %v798
      %v831 = vpack.c.b16 %v799, %v799
      %v832 = vpack.c.b16 %v800, %v800
      %v833 = vpack.c.b16 %v801, %v801
      %v834 = vpack.c.b16 %v802, %v802
      %v835 = vpack.c.b16 %v803, %v803
      %v836 = vpack.c.b16 %v804, %v804
      %v837 = vpack.c.b16 %v805, %v805
      %v838 = vpack.c.b16 %v806, %v806
      %v839 = vpack.c.b16 %v807, %v807
      %v840 = vpack.c.b16 %v808, %v808
      %v841 = vpack.c.b16 %v809, %v809
      %v842 = vpack.c.b16 %v810, %v810
      %v843 = vpack.c.b16 %v811, %v811
      %v844 = vpack.c.b16 %v812, %v812
      %v845 = vpack.c.b16 %v813, %v813
      %v846 = vpack.c.b16 %v814, %v814
      %v847 = vpack.c.b16 %v815, %v815
      %v848 = vpack.c.b16 %v816, %v816
      %v849 = vpack.c.b16 %v817, %v817
      %v850 = vpack.c.b16 %v818, %v818
      %v851 = vpack.c.b16 %v819, %v819
      %v852 = vpack.c.b16 %v820, %v820
      %v853 = vpack.c.b16 %v821, %v821
      %v854 = vpack.c.b16 %v822, %v822
      %v855 = vpack.c.b16 %v823, %v823
      %v856 = vpack.c.b16 %v824, %v824
      %v857 = vpack.c.b16 %v825, %v825
      %v858 = vpack.c.b16 %v826, %v826
      %v859 = vpack.c.b16 %v827, %v827
      %v860 = vpack.c.b16 %v828, %v828
      %v861 = vpack.c.b16 %v829, %v829
      %vm862 = vsmask.f32 4368
      %vm863 = vmor %vm482, %vm862
      %v865 = vshrl.u32 %v830, 16
      %v867 = vrot.slane %v865, 7
      %v868 = vshll.u32 %v830, 16
      %v870 = vor.u32 %v867, %v868
      %v871 = vrot.slane %v867, 4
      %v873 = vshrl.u32 %v831, 16
      %v875 = vrot.slane %v873, 7
      %v876 = vshll.u32 %v831, 16
      %v878 = vor.u32 %v875, %v876
      %v879 = vsel %vm863, %v871, %v878
      %v880 = vrot.slane %v875, 4
      %v882 = vshrl.u32 %v832, 16
      %v884 = vrot.slane %v882, 7
      %v885 = vshll.u32 %v832, 16
      %v887 = vor.u32 %v884, %v885
      %v888 = vrot.slane %v884, 4
      %v890 = vshrl.u32 %v833, 16
      %v892 = vrot.slane %v890, 7
      %v893 = vshll.u32 %v833, 16
      %v895 = vor.u32 %v892, %v893
      %v896 = vsel %vm863, %v888, %v895
      %v897 = vrot.slane %v892, 4
      %v899 = vshrl.u32 %v834, 16
      %v901 = vrot.slane %v899, 7
      %v902 = vshll.u32 %v834, 16
      %v904 = vor.u32 %v901, %v902
      %v905 = vrot.slane %v901, 4
      %v907 = vshrl.u32 %v835, 16
      %v909 = vrot.slane %v907, 7
      %v910 = vshll.u32 %v835, 16
      %v912 = vor.u32 %v909, %v910
      %v913 = vsel %vm863, %v905, %v912
      %v914 = vrot.slane %v909, 4
      %v916 = vshrl.u32 %v836, 16
      %v918 = vrot.slane %v916, 7
      %v919 = vshll.u32 %v836, 16
      %v921 = vor.u32 %v918, %v919
      %v922 = vrot.slane %v918, 4
      %v924 = vshrl.u32 %v837, 16
      %v926 = vrot.slane %v924, 7
      %v927 = vshll.u32 %v837, 16
      %v929 = vor.u32 %v926, %v927
      %v930 = vsel %vm863, %v922, %v929
      %v931 = vrot.slane %v926, 4
      %v933 = vshrl.u32 %v838, 16
      %v935 = vrot.slane %v933, 7
      %v936 = vshll.u32 %v838, 16
      %v938 = vor.u32 %v935, %v936
      %v939 = vrot.slane %v935, 4
      %v941 = vshrl.u32 %v839, 16
      %v943 = vrot.slane %v941, 7
      %v944 = vshll.u32 %v839, 16
      %v946 = vor.u32 %v943, %v944
      %v947 = vsel %vm863, %v939, %v946
      %v948 = vrot.slane %v943, 4
      %v950 = vshrl.u32 %v840, 16
      %v952 = vrot.slane %v950, 7
      %v953 = vshll.u32 %v840, 16
      %v955 = vor.u32 %v952, %v953
      %v956 = vrot.slane %v952, 4
      %v958 = vshrl.u32 %v841, 16
      %v960 = vrot.slane %v958, 7
      %v961 = vshll.u32 %v841, 16
      %v963 = vor.u32 %v960, %v961
      %v964 = vsel %vm863, %v956, %v963
      %v965 = vrot.slane %v960, 4
      %v967 = vshrl.u32 %v842, 16
      %v969 = vrot.slane %v967, 7
      %v970 = vshll.u32 %v842, 16
      %v972 = vor.u32 %v969, %v970
      %v973 = vrot.slane %v969, 4
      %v975 = vshrl.u32 %v843, 16
      %v977 = vrot.slane %v975, 7
      %v978 = vshll.u32 %v843, 16
      %v980 = vor.u32 %v977, %v978
      %v981 = vsel %vm863, %v973, %v980
      %v982 = vrot.slane %v977, 4
      %v984 = vshrl.u32 %v844, 16
      %v986 = vrot.slane %v984, 7
      %v987 = vshll.u32 %v844, 16
      %v989 = vor.u32 %v986, %v987
      %v990 = vrot.slane %v986, 4
      %v992 = vshrl.u32 %v845, 16
      %v994 = vrot.slane %v992, 7
      %v995 = vshll.u32 %v845, 16
      %v997 = vor.u32 %v994, %v995
      %v998 = vsel %vm863, %v990, %v997
      %v999 = vrot.slane %v994, 4
      %v1001 = vshrl.u32 %v846, 16
      %v1003 = vrot.slane %v1001, 7
      %v1004 = vshll.u32 %v846, 16
      %v1006 = vor.u32 %v1003, %v1004
      %v1007 = vrot.slane %v1003, 4
      %v1009 = vshrl.u32 %v847, 16
      %v1011 = vrot.slane %v1009, 7
      %v1012 = vshll.u32 %v847, 16
      %v1014 = vor.u32 %v1011, %v1012
      %v1015 = vsel %vm863, %v1007, %v1014
      %v1016 = vrot.slane %v1011, 4
      %v1018 = vshrl.u32 %v848, 16
      %v1020 = vrot.slane %v1018, 7
      %v1021 = vshll.u32 %v848, 16
      %v1023 = vor.u32 %v1020, %v1021
      %v1024 = vrot.slane %v1020, 4
      %v1026 = vshrl.u32 %v849, 16
      %v1028 = vrot.slane %v1026, 7
      %v1029 = vshll.u32 %v849, 16
      %v1031 = vor.u32 %v1028, %v1029
      %v1032 = vsel %vm863, %v1024, %v1031
      %v1033 = vrot.slane %v1028, 4
      %v1035 = vshrl.u32 %v850, 16
      %v1037 = vrot.slane %v1035, 7
      %v1038 = vshll.u32 %v850, 16
      %v1040 = vor.u32 %v1037, %v1038
      %v1041 = vrot.slane %v1037, 4
      %v1043 = vshrl.u32 %v851, 16
      %v1045 = vrot.slane %v1043, 7
      %v1046 = vshll.u32 %v851, 16
      %v1048 = vor.u32 %v1045, %v1046
      %v1049 = vsel %vm863, %v1041, %v1048
      %v1050 = vrot.slane %v1045, 4
      %v1052 = vshrl.u32 %v852, 16
      %v1054 = vrot.slane %v1052, 7
      %v1055 = vshll.u32 %v852, 16
      %v1057 = vor.u32 %v1054, %v1055
      %v1058 = vrot.slane %v1054, 4
      %v1060 = vshrl.u32 %v853, 16
      %v1062 = vrot.slane %v1060, 7
      %v1063 = vshll.u32 %v853, 16
      %v1065 = vor.u32 %v1062, %v1063
      %v1066 = vsel %vm863, %v1058, %v1065
      %v1067 = vrot.slane %v1062, 4
      %v1069 = vshrl.u32 %v854, 16
      %v1071 = vrot.slane %v1069, 7
      %v1072 = vshll.u32 %v854, 16
      %v1074 = vor.u32 %v1071, %v1072
      %v1075 = vrot.slane %v1071, 4
      %v1077 = vshrl.u32 %v855, 16
      %v1079 = vrot.slane %v1077, 7
      %v1080 = vshll.u32 %v855, 16
      %v1082 = vor.u32 %v1079, %v1080
      %v1083 = vsel %vm863, %v1075, %v1082
      %v1084 = vrot.slane %v1079, 4
      %v1086 = vshrl.u32 %v856, 16
      %v1088 = vrot.slane %v1086, 7
      %v1089 = vshll.u32 %v856, 16
      %v1091 = vor.u32 %v1088, %v1089
      %v1092 = vrot.slane %v1088, 4
      %v1094 = vshrl.u32 %v857, 16
      %v1096 = vrot.slane %v1094, 7
      %v1097 = vshll.u32 %v857, 16
      %v1099 = vor.u32 %v1096, %v1097
      %v1100 = vsel %vm863, %v1092, %v1099
      %v1101 = vrot.slane %v1096, 4
      %v1103 = vshrl.u32 %v858, 16
      %v1105 = vrot.slane %v1103, 7
      %v1106 = vshll.u32 %v858, 16
      %v1108 = vor.u32 %v1105, %v1106
      %v1109 = vrot.slane %v1105, 4
      %v1111 = vshrl.u32 %v859, 16
      %v1113 = vrot.slane %v1111, 7
      %v1114 = vshll.u32 %v859, 16
      %v1116 = vor.u32 %v1113, %v1114
      %v1117 = vsel %vm863, %v1109, %v1116
      %v1118 = vrot.slane %v1113, 4
      %v1120 = vshrl.u32 %v860, 16
      %v1122 = vrot.slane %v1120, 7
      %v1123 = vshll.u32 %v860, 16
      %v1125 = vor.u32 %v1122, %v1123
      %v1126 = vrot.slane %v1122, 4
      %v1128 = vshrl.u32 %v861, 16
      %v1130 = vrot.slane %v1128, 7
      %v1131 = vshll.u32 %v861, 16
      %v1133 = vor.u32 %v1130, %v1131
      %v1134 = vsel %vm863, %v1126, %v1133
      %v1135 = vrot.slane %v1130, 4
      %s1184 = scalar_lea.vmem [#allocation2], 12
      %vm1185 = vcmask 60416
      %vm1186 = vmand %vm1185, %vm538
      %v1187 = vld [vmem:[%s1184] sm:$0xf]
      %v1188 = vsel %vm1186, %v870, %v1187
      %1189 = vst [vmem:[%s1184] sm:$0xf] %v1188
      %vm1190 = vcmask 60416
      %1191 = vst.msk [vmem:[%s1184 + $0x4] sm:$0xf] %vm1190, %v879
      %v1192 = vld [vmem:[%s1184 + $0x8] sm:$0x1]
      %v1193 = vsel %vm483, %v880, %v1192
      %1194 = vst [vmem:[%s1184 + $0x8] sm:$0x1] %v1193
      %v1195 = vld [vmem:[%s1184 + $0xc] sm:$0xf]
      %v1196 = vsel %vm1186, %v887, %v1195
      %1197 = vst [vmem:[%s1184 + $0xc] sm:$0xf] %v1196
      %1198 = vst.msk [vmem:[%s1184 + $0x10] sm:$0xf] %vm1190, %v896
      %v1199 = vld [vmem:[%s1184 + $0x14] sm:$0x1]
      %v1200 = vsel %vm483, %v897, %v1199
      %1201 = vst [vmem:[%s1184 + $0x14] sm:$0x1] %v1200
      %v1202 = vld [vmem:[%s1184 + $0x18] sm:$0xf]
      %v1203 = vsel %vm1186, %v904, %v1202
      %1204 = vst [vmem:[%s1184 + $0x18] sm:$0xf] %v1203
      %1205 = vst.msk [vmem:[%s1184 + $0x1c] sm:$0xf] %vm1190, %v913
      %v1206 = vld [vmem:[%s1184 + $0x20] sm:$0x1]
      %v1207 = vsel %vm483, %v914, %v1206
      %1208 = vst [vmem:[%s1184 + $0x20] sm:$0x1] %v1207
      %v1209 = vld [vmem:[%s1184 + $0x24] sm:$0xf]
      %v1210 = vsel %vm1186, %v921, %v1209
      %1211 = vst [vmem:[%s1184 + $0x24] sm:$0xf] %v1210
      %1212 = vst.msk [vmem:[%s1184 + $0x28] sm:$0xf] %vm1190, %v930
      %v1213 = vld [vmem:[%s1184 + $0x2c] sm:$0x1]
      %v1214 = vsel %vm483, %v931, %v1213
      %1215 = vst [vmem:[%s1184 + $0x2c] sm:$0x1] %v1214
      %v1216 = vld [vmem:[%s1184 + $0x30] sm:$0xf]
      %v1217 = vsel %vm1186, %v938, %v1216
      %1218 = vst [vmem:[%s1184 + $0x30] sm:$0xf] %v1217
      %1219 = vst.msk [vmem:[%s1184 + $0x34] sm:$0xf] %vm1190, %v947
      %v1220 = vld [vmem:[%s1184 + $0x38] sm:$0x1]
      %v1221 = vsel %vm483, %v948, %v1220
      %1222 = vst [vmem:[%s1184 + $0x38] sm:$0x1] %v1221
      %v1223 = vld [vmem:[%s1184 + $0x3c] sm:$0xf]
      %v1224 = vsel %vm1186, %v955, %v1223
      %1225 = vst [vmem:[%s1184 + $0x3c] sm:$0xf] %v1224
      %1226 = vst.msk [vmem:[%s1184 + $0x40] sm:$0xf] %vm1190, %v964
      %v1227 = vld [vmem:[%s1184 + $0x44] sm:$0x1]
      %v1228 = vsel %vm483, %v965, %v1227
      %1229 = vst [vmem:[%s1184 + $0x44] sm:$0x1] %v1228
      %v1230 = vld [vmem:[%s1184 + $0x48] sm:$0xf]
      %v1231 = vsel %vm1186, %v972, %v1230
      %1232 = vst [vmem:[%s1184 + $0x48] sm:$0xf] %v1231
      %1233 = vst.msk [vmem:[%s1184 + $0x4c] sm:$0xf] %vm1190, %v981
      %v1234 = vld [vmem:[%s1184 + $0x50] sm:$0x1]
      %v1235 = vsel %vm483, %v982, %v1234
      %1236 = vst [vmem:[%s1184 + $0x50] sm:$0x1] %v1235
      %v1237 = vld [vmem:[%s1184 + $0x54] sm:$0xf]
      %v1238 = vsel %vm1186, %v989, %v1237
      %1239 = vst [vmem:[%s1184 + $0x54] sm:$0xf] %v1238
      %1240 = vst.msk [vmem:[%s1184 + $0x58] sm:$0xf] %vm1190, %v998
      %v1241 = vld [vmem:[%s1184 + $0x5c] sm:$0x1]
      %v1242 = vsel %vm483, %v999, %v1241
      %1243 = vst [vmem:[%s1184 + $0x5c] sm:$0x1] %v1242
      %v1244 = vld [vmem:[%s1184 + $0x60] sm:$0xf]
      %v1245 = vsel %vm1186, %v1006, %v1244
      %1246 = vst [vmem:[%s1184 + $0x60] sm:$0xf] %v1245
      %1247 = vst.msk [vmem:[%s1184 + $0x64] sm:$0xf] %vm1190, %v1015
      %v1248 = vld [vmem:[%s1184 + $0x68] sm:$0x1]
      %v1249 = vsel %vm483, %v1016, %v1248
      %1250 = vst [vmem:[%s1184 + $0x68] sm:$0x1] %v1249
      %v1251 = vld [vmem:[%s1184 + $0x6c] sm:$0xf]
      %v1252 = vsel %vm1186, %v1023, %v1251
      %1253 = vst [vmem:[%s1184 + $0x6c] sm:$0xf] %v1252
      %1254 = vst.msk [vmem:[%s1184 + $0x70] sm:$0xf] %vm1190, %v1032
      %v1255 = vld [vmem:[%s1184 + $0x74] sm:$0x1]
      %v1256 = vsel %vm483, %v1033, %v1255
      %1257 = vst [vmem:[%s1184 + $0x74] sm:$0x1] %v1256
      %v1258 = vld [vmem:[%s1184 + $0x78] sm:$0xf]
      %v1259 = vsel %vm1186, %v1040, %v1258
      %1260 = vst [vmem:[%s1184 + $0x78] sm:$0xf] %v1259
      %1261 = vst.msk [vmem:[%s1184 + $0x7c] sm:$0xf] %vm1190, %v1049
      %v1262 = vld [vmem:[%s1184 + $0x80] sm:$0x1]
      %v1263 = vsel %vm483, %v1050, %v1262
      %1264 = vst [vmem:[%s1184 + $0x80] sm:$0x1] %v1263
      %v1265 = vld [vmem:[%s1184 + $0x84] sm:$0xf]
      %v1266 = vsel %vm1186, %v1057, %v1265
      %1267 = vst [vmem:[%s1184 + $0x84] sm:$0xf] %v1266
      %1268 = vst.msk [vmem:[%s1184 + $0x88] sm:$0xf] %vm1190, %v1066
      %v1269 = vld [vmem:[%s1184 + $0x8c] sm:$0x1]
      %v1270 = vsel %vm483, %v1067, %v1269
      %1271 = vst [vmem:[%s1184 + $0x8c] sm:$0x1] %v1270
      %v1272 = vld [vmem:[%s1184 + $0x90] sm:$0xf]
      %v1273 = vsel %vm1186, %v1074, %v1272
      %1274 = vst [vmem:[%s1184 + $0x90] sm:$0xf] %v1273
      %1275 = vst.msk [vmem:[%s1184 + $0x94] sm:$0xf] %vm1190, %v1083
      %v1276 = vld [vmem:[%s1184 + $0x98] sm:$0x1]
      %v1277 = vsel %vm483, %v1084, %v1276
      %1278 = vst [vmem:[%s1184 + $0x98] sm:$0x1] %v1277
      %v1279 = vld [vmem:[%s1184 + $0x9c] sm:$0xf]
      %v1280 = vsel %vm1186, %v1091, %v1279
      %1281 = vst [vmem:[%s1184 + $0x9c] sm:$0xf] %v1280
      %1282 = vst.msk [vmem:[%s1184 + $0xa0] sm:$0xf] %vm1190, %v1100
      %v1283 = vld [vmem:[%s1184 + $0xa4] sm:$0x1]
      %v1284 = vsel %vm483, %v1101, %v1283
      %1285 = vst [vmem:[%s1184 + $0xa4] sm:$0x1] %v1284
      %v1286 = vld [vmem:[%s1184 + $0xa8] sm:$0xf]
      %v1287 = vsel %vm1186, %v1108, %v1286
      %1288 = vst [vmem:[%s1184 + $0xa8] sm:$0xf] %v1287
      %1289 = vst.msk [vmem:[%s1184 + $0xac] sm:$0xf] %vm1190, %v1117
      %v1290 = vld [vmem:[%s1184 + $0xb0] sm:$0x1]
      %v1291 = vsel %vm483, %v1118, %v1290
      %1292 = vst [vmem:[%s1184 + $0xb0] sm:$0x1] %v1291
      %v1293 = vld [vmem:[%s1184 + $0xb4] sm:$0xf]
      %v1294 = vsel %vm1186, %v1125, %v1293
      %1295 = vst [vmem:[%s1184 + $0xb4] sm:$0xf] %v1294
      %1296 = vst.msk [vmem:[%s1184 + $0xb8] sm:$0xf] %vm1190, %v1134
      %v1297 = vld [vmem:[%s1184 + $0xbc] sm:$0x1]
      %v1298 = vsel %vm483, %v1135, %v1297
      %1299 = vst [vmem:[%s1184 + $0xbc] sm:$0x1] %v1298
      %p1300 = scmp.eq.s32.totalorder %s24, 0
      // Predicated region
      $region45: #{double_conv.4} parent=43 // pred_check
        %p1301 = pneg %p1300
      $region46: #{double_conv.4} parent=43 // pred_check_branch
        %1303 = sbr.rel (%p1301) target = $region48
      $region47: #{double_conv.4} parent=43 // pred_region
        %v1304 = vld [vmem:[#allocation2] sm:$0xf]
        %v1305 = vsel %vm1186, 0, %v1304
        %1306 = vst [vmem:[#allocation2] sm:$0xf] %v1305
        %1307 = vst.msk [vmem:[#allocation2 + $0x4] sm:$0xf] %vm1190, 0
        %v1308 = vld [vmem:[#allocation2 + $0x8] sm:$0x1]
        %v1309 = vsel %vm483, 0, %v1308
        %1310 = vst [vmem:[#allocation2 + $0x8] sm:$0x1] %v1309
      $region48: #{double_conv.4} parent=43 // pred_fallthru
        _
      %p1311 = scmp.gt.s32.totalorder %s24, 0
      // Predicated region
      $region49: #{double_conv.4} parent=43 // pred_check
        %p1312 = pneg %p1311
      $region50: #{double_conv.4} parent=43 // pred_check_branch
        %1314 = sbr.rel (%p1312) target = $region52
      $region51: #{double_conv.4} parent=43 // pred_region
        %v1315 = vld [vmem:[%s436] sm:$0xf]
        %v1316 = vld [vmem:[%s436 + $0x4] sm:$0xf]
        %v1317 = vunpack.c.l.bf16 %v1315
        %v1318 = vunpack.c.l.bf16 %v1316
        %v1319 = vmul.f32 %v1317, %v662
        %v1320 = vmul.f32 %v1318, %v662
        %v1321 = vadd.f32 %v1319, %v700
        %v1322 = vadd.f32 %v1320, %v700
        %v1323 = vmax.f32 %v1321, 0.0
        %v1324 = vmax.f32 %v1322, 0.0
        %v1325 = vpack.c.bf16 %v1324, %v1323
        %v1327 = vunpack.c.l.b16 %v1325
        %v1328 = vunpack.c.h.b16 %v1325
        %v1329 = vpack.c.b16 %v1327, %v1327
        %v1330 = vpack.c.b16 %v1328, %v1328
        %v1332 = vshrl.u32 %v1329, 16
        %v1334 = vrot.slane %v1332, 7
        %v1335 = vshll.u32 %v1329, 16
        %v1337 = vor.u32 %v1334, %v1335
        %v1338 = vrot.slane %v1334, 4
        %v1340 = vshrl.u32 %v1330, 16
        %v1342 = vrot.slane %v1340, 7
        %v1343 = vshll.u32 %v1330, 16
        %v1345 = vor.u32 %v1342, %v1343
        %v1346 = vsel %vm863, %v1338, %v1345
        %v1347 = vrot.slane %v1342, 4
        %v1351 = vld [vmem:[#allocation2] sm:$0xf]
        %v1352 = vsel %vm1186, %v1337, %v1351
        %1353 = vst [vmem:[#allocation2] sm:$0xf] %v1352
        %1354 = vst.msk [vmem:[#allocation2 + $0x4] sm:$0xf] %vm1190, %v1346
        %v1355 = vld [vmem:[#allocation2 + $0x8] sm:$0x1]
        %v1356 = vsel %vm483, %v1347, %v1355
        %1357 = vst [vmem:[#allocation2 + $0x8] sm:$0x1] %v1356
      $region52: #{double_conv.4} parent=43 // pred_fallthru
        _
      // Predicated region
      $region53: #{double_conv.4} parent=43 // pred_check
        %p1358 = pneg %p1300
      $region54: #{double_conv.4} parent=43 // pred_check_branch
        %1360 = sbr.rel (%p1358) target = $region56
      $region55: #{double_conv.4} parent=43 // pred_region
        %s1361 = scalar_lea.vmem [#allocation2], 204
        %v1362 = vld [vmem:[%s1361] sm:$0xf]
        %v1363 = vsel %vm1186, 0, %v1362
        %1364 = vst [vmem:[%s1361] sm:$0xf] %v1363
        %1365 = vst.msk [vmem:[%s1361 + $0x4] sm:$0xf] %vm1190, 0
        %v1366 = vld [vmem:[%s1361 + $0x8] sm:$0x1]
        %v1367 = vsel %vm483, 0, %v1366
        %1368 = vst [vmem:[%s1361 + $0x8] sm:$0x1] %v1367
      $region56: #{double_conv.4} parent=43 // pred_fallthru
        _
      %p1369 = scmp.lt.s32.totalorder %s24, 0
      // Predicated region
      $region57: #{double_conv.4} parent=43 // pred_check
        %p1370 = pneg %p1369
      $region58: #{double_conv.4} parent=43 // pred_check_branch
        %1372 = sbr.rel (%p1370) target = $region60
      $region59: #{double_conv.4} parent=43 // pred_region
        %v1373 = vld [vmem:[%s455] sm:$0xf]
        %v1374 = vld [vmem:[%s455 + $0x4] sm:$0xf]
        %v1375 = vunpack.c.l.bf16 %v1373
        %v1376 = vunpack.c.l.bf16 %v1374
        %v1377 = vmul.f32 %v1375, %v662
        %v1378 = vmul.f32 %v1376, %v662
        %v1379 = vadd.f32 %v1377, %v700
        %v1380 = vadd.f32 %v1378, %v700
        %v1381 = vmax.f32 %v1379, 0.0
        %v1382 = vmax.f32 %v1380, 0.0
        %v1383 = vpack.c.bf16 %v1382, %v1381
        %v1385 = vunpack.c.l.b16 %v1383
        %v1386 = vunpack.c.h.b16 %v1383
        %v1387 = vpack.c.b16 %v1385, %v1385
        %v1388 = vpack.c.b16 %v1386, %v1386
        %v1390 = vshrl.u32 %v1387, 16
        %v1392 = vrot.slane %v1390, 7
        %v1393 = vshll.u32 %v1387, 16
        %v1395 = vor.u32 %v1392, %v1393
        %v1396 = vrot.slane %v1392, 4
        %v1398 = vshrl.u32 %v1388, 16
        %v1400 = vrot.slane %v1398, 7
        %v1401 = vshll.u32 %v1388, 16
        %v1403 = vor.u32 %v1400, %v1401
        %v1404 = vsel %vm863, %v1396, %v1403
        %v1405 = vrot.slane %v1400, 4
        %s1409 = scalar_lea.vmem [#allocation2], 204
        %v1410 = vld [vmem:[%s1409] sm:$0xf]
        %v1411 = vsel %vm1186, %v1395, %v1410
        %1412 = vst [vmem:[%s1409] sm:$0xf] %v1411
        %1413 = vst.msk [vmem:[%s1409 + $0x4] sm:$0xf] %vm1190, %v1404
        %v1414 = vld [vmem:[%s1409 + $0x8] sm:$0x1]
        %v1415 = vsel %vm483, %v1405, %v1414
        %1416 = vst [vmem:[%s1409 + $0x8] sm:$0x1] %v1415
      $region60: #{double_conv.4} parent=43 // pred_fallthru
        _
      %v1417 = vld [vmem:[#allocation2] sm:$0xf]
      %v1418 = vld [vmem:[#allocation2 + $0x4] sm:$0xf]
      %v1419 = vld [vmem:[#allocation2 + $0xc] sm:$0xf]
      %v1420 = vld [vmem:[#allocation2 + $0x10] sm:$0xf]
      %v1421 = vld [vmem:[#allocation2 + $0x18] sm:$0xf]
      %v1422 = vld [vmem:[#allocation2 + $0x1c] sm:$0xf]
      %v1423 = vld [vmem:[#allocation2 + $0x24] sm:$0xf]
      %v1424 = vld [vmem:[#allocation2 + $0x28] sm:$0xf]
      %v1425 = vld [vmem:[#allocation2 + $0x30] sm:$0xf]
      %v1426 = vld [vmem:[#allocation2 + $0x34] sm:$0xf]
      %v1427 = vld [vmem:[#allocation2 + $0x3c] sm:$0xf]
      %v1428 = vld [vmem:[#allocation2 + $0x40] sm:$0xf]
      %v1429 = vld [vmem:[#allocation2 + $0x48] sm:$0xf]
      %v1430 = vld [vmem:[#allocation2 + $0x4c] sm:$0xf]
      %v1431 = vld [vmem:[#allocation2 + $0x54] sm:$0xf]
      %v1432 = vld [vmem:[#allocation2 + $0x58] sm:$0xf]
      %v1433 = vld [vmem:[#allocation2 + $0x60] sm:$0xf]
      %v1434 = vld [vmem:[#allocation2 + $0x64] sm:$0xf]
      %v1435 = vld [vmem:[#allocation2 + $0x6c] sm:$0xf]
      %v1436 = vld [vmem:[#allocation2 + $0x70] sm:$0xf]
      %v1437 = vld [vmem:[#allocation2 + $0x78] sm:$0xf]
      %v1438 = vld [vmem:[#allocation2 + $0x7c] sm:$0xf]
      %v1439 = vld [vmem:[#allocation2 + $0x84] sm:$0xf]
      %v1440 = vld [vmem:[#allocation2 + $0x88] sm:$0xf]
      %v1441 = vld [vmem:[#allocation2 + $0x90] sm:$0xf]
      %v1442 = vld [vmem:[#allocation2 + $0x94] sm:$0xf]
      %v1443 = vld [vmem:[#allocation2 + $0x9c] sm:$0xf]
      %v1444 = vld [vmem:[#allocation2 + $0xa0] sm:$0xf]
      %v1445 = vld [vmem:[#allocation2 + $0xa8] sm:$0xf]
      %v1446 = vld [vmem:[#allocation2 + $0xac] sm:$0xf]
      %v1447 = vld [vmem:[#allocation2 + $0xb4] sm:$0xf]
      %v1448 = vld [vmem:[#allocation2 + $0xb8] sm:$0xf]
      %1449 = vst.msk [vmem:[#allocation3] sm:$0xf] %vm1190, %v1417
      %1450 = vst.msk [vmem:[#allocation3 + $0x4] sm:$0xf] %vm1190, %v1418
      %1451 = vst.msk [vmem:[#allocation3 + $0x8] sm:$0xf] %vm1190, %v1419
      %1452 = vst.msk [vmem:[#allocation3 + $0xc] sm:$0xf] %vm1190, %v1420
      %1453 = vst.msk [vmem:[#allocation3 + $0x10] sm:$0xf] %vm1190, %v1421
      %1454 = vst.msk [vmem:[#allocation3 + $0x14] sm:$0xf] %vm1190, %v1422
      %1455 = vst.msk [vmem:[#allocation3 + $0x18] sm:$0xf] %vm1190, %v1423
      %1456 = vst.msk [vmem:[#allocation3 + $0x1c] sm:$0xf] %vm1190, %v1424
      %1457 = vst.msk [vmem:[#allocation3 + $0x20] sm:$0xf] %vm1190, %v1425
      %1458 = vst.msk [vmem:[#allocation3 + $0x24] sm:$0xf] %vm1190, %v1426
      %1459 = vst.msk [vmem:[#allocation3 + $0x28] sm:$0xf] %vm1190, %v1427
      %1460 = vst.msk [vmem:[#allocation3 + $0x2c] sm:$0xf] %vm1190, %v1428
      %1461 = vst.msk [vmem:[#allocation3 + $0x30] sm:$0xf] %vm1190, %v1429
      %1462 = vst.msk [vmem:[#allocation3 + $0x34] sm:$0xf] %vm1190, %v1430
      %1463 = vst.msk [vmem:[#allocation3 + $0x38] sm:$0xf] %vm1190, %v1431
      %1464 = vst.msk [vmem:[#allocation3 + $0x3c] sm:$0xf] %vm1190, %v1432
      %1465 = vst.msk [vmem:[#allocation3 + $0x40] sm:$0xf] %vm1190, %v1433
      %1466 = vst.msk [vmem:[#allocation3 + $0x44] sm:$0xf] %vm1190, %v1434
      %1467 = vst.msk [vmem:[#allocation3 + $0x48] sm:$0xf] %vm1190, %v1435
      %1468 = vst.msk [vmem:[#allocation3 + $0x4c] sm:$0xf] %vm1190, %v1436
      %1469 = vst.msk [vmem:[#allocation3 + $0x50] sm:$0xf] %vm1190, %v1437
      %1470 = vst.msk [vmem:[#allocation3 + $0x54] sm:$0xf] %vm1190, %v1438
      %1471 = vst.msk [vmem:[#allocation3 + $0x58] sm:$0xf] %vm1190, %v1439
      %1472 = vst.msk [vmem:[#allocation3 + $0x5c] sm:$0xf] %vm1190, %v1440
      %1473 = vst.msk [vmem:[#allocation3 + $0x60] sm:$0xf] %vm1190, %v1441
      %1474 = vst.msk [vmem:[#allocation3 + $0x64] sm:$0xf] %vm1190, %v1442
      %1475 = vst.msk [vmem:[#allocation3 + $0x68] sm:$0xf] %vm1190, %v1443
      %1476 = vst.msk [vmem:[#allocation3 + $0x6c] sm:$0xf] %vm1190, %v1444
      %1477 = vst.msk [vmem:[#allocation3 + $0x70] sm:$0xf] %vm1190, %v1445
      %1478 = vst.msk [vmem:[#allocation3 + $0x74] sm:$0xf] %vm1190, %v1446
      %1479 = vst.msk [vmem:[#allocation3 + $0x78] sm:$0xf] %vm1190, %v1447
      %1480 = vst.msk [vmem:[#allocation3 + $0x7c] sm:$0xf] %vm1190, %v1448
      %v1481 = vld [vmem:[#allocation2] sm:$0xf]
      %v1482 = vld [vmem:[#allocation2 + $0x4] sm:$0xf]
      %v1483 = vld [vmem:[#allocation2 + $0x8] sm:$0x1]
      %v1484 = vld [vmem:[#allocation2 + $0xc] sm:$0xf]
      %v1485 = vld [vmem:[#allocation2 + $0x10] sm:$0xf]
      %v1486 = vld [vmem:[#allocation2 + $0x14] sm:$0x1]
      %v1487 = vld [vmem:[#allocation2 + $0x18] sm:$0xf]
      %v1488 = vld [vmem:[#allocation2 + $0x1c] sm:$0xf]
      %v1489 = vld [vmem:[#allocation2 + $0x20] sm:$0x1]
      %v1490 = vld [vmem:[#allocation2 + $0x24] sm:$0xf]
      %v1491 = vld [vmem:[#allocation2 + $0x28] sm:$0xf]
      %v1492 = vld [vmem:[#allocation2 + $0x2c] sm:$0x1]
      %v1493 = vld [vmem:[#allocation2 + $0x30] sm:$0xf]
      %v1494 = vld [vmem:[#allocation2 + $0x34] sm:$0xf]
      %v1495 = vld [vmem:[#allocation2 + $0x38] sm:$0x1]
      %v1496 = vld [vmem:[#allocation2 + $0x3c] sm:$0xf]
      %v1497 = vld [vmem:[#allocation2 + $0x40] sm:$0xf]
      %v1498 = vld [vmem:[#allocation2 + $0x44] sm:$0x1]
      %v1499 = vld [vmem:[#allocation2 + $0x48] sm:$0xf]
      %v1500 = vld [vmem:[#allocation2 + $0x4c] sm:$0xf]
      %v1501 = vld [vmem:[#allocation2 + $0x50] sm:$0x1]
      %v1502 = vld [vmem:[#allocation2 + $0x54] sm:$0xf]
      %v1503 = vld [vmem:[#allocation2 + $0x58] sm:$0xf]
      %v1504 = vld [vmem:[#allocation2 + $0x5c] sm:$0x1]
      %v1505 = vld [vmem:[#allocation2 + $0x60] sm:$0xf]
      %v1506 = vld [vmem:[#allocation2 + $0x64] sm:$0xf]
      %v1507 = vld [vmem:[#allocation2 + $0x68] sm:$0x1]
      %v1508 = vld [vmem:[#allocation2 + $0x6c] sm:$0xf]
      %v1509 = vld [vmem:[#allocation2 + $0x70] sm:$0xf]
      %v1510 = vld [vmem:[#allocation2 + $0x74] sm:$0x1]
      %v1511 = vld [vmem:[#allocation2 + $0x78] sm:$0xf]
      %v1512 = vld [vmem:[#allocation2 + $0x7c] sm:$0xf]
      %v1513 = vld [vmem:[#allocation2 + $0x80] sm:$0x1]
      %v1514 = vld [vmem:[#allocation2 + $0x84] sm:$0xf]
      %v1515 = vld [vmem:[#allocation2 + $0x88] sm:$0xf]
      %v1516 = vld [vmem:[#allocation2 + $0x8c] sm:$0x1]
      %v1517 = vld [vmem:[#allocation2 + $0x90] sm:$0xf]
      %v1518 = vld [vmem:[#allocation2 + $0x94] sm:$0xf]
      %v1519 = vld [vmem:[#allocation2 + $0x98] sm:$0x1]
      %v1520 = vld [vmem:[#allocation2 + $0x9c] sm:$0xf]
      %v1521 = vld [vmem:[#allocation2 + $0xa0] sm:$0xf]
      %v1522 = vld [vmem:[#allocation2 + $0xa4] sm:$0x1]
      %v1523 = vld [vmem:[#allocation2 + $0xa8] sm:$0xf]
      %v1524 = vld [vmem:[#allocation2 + $0xac] sm:$0xf]
      %v1525 = vld [vmem:[#allocation2 + $0xb0] sm:$0x1]
      %v1526 = vld [vmem:[#allocation2 + $0xb4] sm:$0xf]
      %v1527 = vld [vmem:[#allocation2 + $0xb8] sm:$0xf]
      %v1528 = vld [vmem:[#allocation2 + $0xbc] sm:$0x1]
      %vm1529 = vsmask.f32 3328
      %vm1530 = vsmask.f32 7440
      %vm1531 = vmor %vm1529, %vm1530
      %v1533 = vshrl.u32 %v1481, 16
      %v1535 = vrot.slane %v1533, 4
      %v1536 = vshll.u32 %v1481, 16
      %v1538 = vrot.slane %v1536, 5
      %v1539 = vor.u32 %v1535, %v1538
      %v1540 = vrot.slane %v1539, 4
      %v1542 = vshll.u32 %v1482, 16
      %v1544 = vrot.slane %v1542, 5
      %v1545 = vsel %vm1531, %v1540, %v1544
      %v1546 = vshrl.u32 %v1482, 16
      %v1548 = vrot.slane %v1546, 4
      %v1549 = vor.u32 %v1548, %v1544
      %v1550 = vrot.slane %v1549, 4
      %v1552 = vshll.u32 %v1483, 16
      %v1554 = vrot.slane %v1552, 5
      %v1555 = vsel %vm1531, %v1550, %v1554
      %v1557 = vshrl.u32 %v1484, 16
      %v1559 = vrot.slane %v1557, 4
      %v1560 = vshll.u32 %v1484, 16
      %v1562 = vrot.slane %v1560, 5
      %v1563 = vor.u32 %v1559, %v1562
      %v1564 = vrot.slane %v1563, 4
      %v1566 = vshll.u32 %v1485, 16
      %v1568 = vrot.slane %v1566, 5
      %v1569 = vsel %vm1531, %v1564, %v1568
      %v1570 = vshrl.u32 %v1485, 16
      %v1572 = vrot.slane %v1570, 4
      %v1573 = vor.u32 %v1572, %v1568
      %v1574 = vrot.slane %v1573, 4
      %v1576 = vshll.u32 %v1486, 16
      %v1578 = vrot.slane %v1576, 5
      %v1579 = vsel %vm1531, %v1574, %v1578
      %v1581 = vshrl.u32 %v1487, 16
      %v1583 = vrot.slane %v1581, 4
      %v1584 = vshll.u32 %v1487, 16
      %v1586 = vrot.slane %v1584, 5
      %v1587 = vor.u32 %v1583, %v1586
      %v1588 = vrot.slane %v1587, 4
      %v1590 = vshll.u32 %v1488, 16
      %v1592 = vrot.slane %v1590, 5
      %v1593 = vsel %vm1531, %v1588, %v1592
      %v1594 = vshrl.u32 %v1488, 16
      %v1596 = vrot.slane %v1594, 4
      %v1597 = vor.u32 %v1596, %v1592
      %v1598 = vrot.slane %v1597, 4
      %v1600 = vshll.u32 %v1489, 16
      %v1602 = vrot.slane %v1600, 5
      %v1603 = vsel %vm1531, %v1598, %v1602
      %v1605 = vshrl.u32 %v1490, 16
      %v1607 = vrot.slane %v1605, 4
      %v1608 = vshll.u32 %v1490, 16
      %v1610 = vrot.slane %v1608, 5
      %v1611 = vor.u32 %v1607, %v1610
      %v1612 = vrot.slane %v1611, 4
      %v1614 = vshll.u32 %v1491, 16
      %v1616 = vrot.slane %v1614, 5
      %v1617 = vsel %vm1531, %v1612, %v1616
      %v1618 = vshrl.u32 %v1491, 16
      %v1620 = vrot.slane %v1618, 4
      %v1621 = vor.u32 %v1620, %v1616
      %v1622 = vrot.slane %v1621, 4
      %v1624 = vshll.u32 %v1492, 16
      %v1626 = vrot.slane %v1624, 5
      %v1627 = vsel %vm1531, %v1622, %v1626
      %v1629 = vshrl.u32 %v1493, 16
      %v1631 = vrot.slane %v1629, 4
      %v1632 = vshll.u32 %v1493, 16
      %v1634 = vrot.slane %v1632, 5
      %v1635 = vor.u32 %v1631, %v1634
      %v1636 = vrot.slane %v1635, 4
      %v1638 = vshll.u32 %v1494, 16
      %v1640 = vrot.slane %v1638, 5
      %v1641 = vsel %vm1531, %v1636, %v1640
      %v1642 = vshrl.u32 %v1494, 16
      %v1644 = vrot.slane %v1642, 4
      %v1645 = vor.u32 %v1644, %v1640
      %v1646 = vrot.slane %v1645, 4
      %v1648 = vshll.u32 %v1495, 16
      %v1650 = vrot.slane %v1648, 5
      %v1651 = vsel %vm1531, %v1646, %v1650
      %v1653 = vshrl.u32 %v1496, 16
      %v1655 = vrot.slane %v1653, 4
      %v1656 = vshll.u32 %v1496, 16
      %v1658 = vrot.slane %v1656, 5
      %v1659 = vor.u32 %v1655, %v1658
      %v1660 = vrot.slane %v1659, 4
      %v1662 = vshll.u32 %v1497, 16
      %v1664 = vrot.slane %v1662, 5
      %v1665 = vsel %vm1531, %v1660, %v1664
      %v1666 = vshrl.u32 %v1497, 16
      %v1668 = vrot.slane %v1666, 4
      %v1669 = vor.u32 %v1668, %v1664
      %v1670 = vrot.slane %v1669, 4
      %v1672 = vshll.u32 %v1498, 16
      %v1674 = vrot.slane %v1672, 5
      %v1675 = vsel %vm1531, %v1670, %v1674
      %v1677 = vshrl.u32 %v1499, 16
      %v1679 = vrot.slane %v1677, 4
      %v1680 = vshll.u32 %v1499, 16
      %v1682 = vrot.slane %v1680, 5
      %v1683 = vor.u32 %v1679, %v1682
      %v1684 = vrot.slane %v1683, 4
      %v1686 = vshll.u32 %v1500, 16
      %v1688 = vrot.slane %v1686, 5
      %v1689 = vsel %vm1531, %v1684, %v1688
      %v1690 = vshrl.u32 %v1500, 16
      %v1692 = vrot.slane %v1690, 4
      %v1693 = vor.u32 %v1692, %v1688
      %v1694 = vrot.slane %v1693, 4
      %v1696 = vshll.u32 %v1501, 16
      %v1698 = vrot.slane %v1696, 5
      %v1699 = vsel %vm1531, %v1694, %v1698
      %v1701 = vshrl.u32 %v1502, 16
      %v1703 = vrot.slane %v1701, 4
      %v1704 = vshll.u32 %v1502, 16
      %v1706 = vrot.slane %v1704, 5
      %v1707 = vor.u32 %v1703, %v1706
      %v1708 = vrot.slane %v1707, 4
      %v1710 = vshll.u32 %v1503, 16
      %v1712 = vrot.slane %v1710, 5
      %v1713 = vsel %vm1531, %v1708, %v1712
      %v1714 = vshrl.u32 %v1503, 16
      %v1716 = vrot.slane %v1714, 4
      %v1717 = vor.u32 %v1716, %v1712
      %v1718 = vrot.slane %v1717, 4
      %v1720 = vshll.u32 %v1504, 16
      %v1722 = vrot.slane %v1720, 5
      %v1723 = vsel %vm1531, %v1718, %v1722
      %v1725 = vshrl.u32 %v1505, 16
      %v1727 = vrot.slane %v1725, 4
      %v1728 = vshll.u32 %v1505, 16
      %v1730 = vrot.slane %v1728, 5
      %v1731 = vor.u32 %v1727, %v1730
      %v1732 = vrot.slane %v1731, 4
      %v1734 = vshll.u32 %v1506, 16
      %v1736 = vrot.slane %v1734, 5
      %v1737 = vsel %vm1531, %v1732, %v1736
      %v1738 = vshrl.u32 %v1506, 16
      %v1740 = vrot.slane %v1738, 4
      %v1741 = vor.u32 %v1740, %v1736
      %v1742 = vrot.slane %v1741, 4
      %v1744 = vshll.u32 %v1507, 16
      %v1746 = vrot.slane %v1744, 5
      %v1747 = vsel %vm1531, %v1742, %v1746
      %v1749 = vshrl.u32 %v1508, 16
      %v1751 = vrot.slane %v1749, 4
      %v1752 = vshll.u32 %v1508, 16
      %v1754 = vrot.slane %v1752, 5
      %v1755 = vor.u32 %v1751, %v1754
      %v1756 = vrot.slane %v1755, 4
      %v1758 = vshll.u32 %v1509, 16
      %v1760 = vrot.slane %v1758, 5
      %v1761 = vsel %vm1531, %v1756, %v1760
      %v1762 = vshrl.u32 %v1509, 16
      %v1764 = vrot.slane %v1762, 4
      %v1765 = vor.u32 %v1764, %v1760
      %v1766 = vrot.slane %v1765, 4
      %v1768 = vshll.u32 %v1510, 16
      %v1770 = vrot.slane %v1768, 5
      %v1771 = vsel %vm1531, %v1766, %v1770
      %v1773 = vshrl.u32 %v1511, 16
      %v1775 = vrot.slane %v1773, 4
      %v1776 = vshll.u32 %v1511, 16
      %v1778 = vrot.slane %v1776, 5
      %v1779 = vor.u32 %v1775, %v1778
      %v1780 = vrot.slane %v1779, 4
      %v1782 = vshll.u32 %v1512, 16
      %v1784 = vrot.slane %v1782, 5
      %v1785 = vsel %vm1531, %v1780, %v1784
      %v1786 = vshrl.u32 %v1512, 16
      %v1788 = vrot.slane %v1786, 4
      %v1789 = vor.u32 %v1788, %v1784
      %v1790 = vrot.slane %v1789, 4
      %v1792 = vshll.u32 %v1513, 16
      %v1794 = vrot.slane %v1792, 5
      %v1795 = vsel %vm1531, %v1790, %v1794
      %v1797 = vshrl.u32 %v1514, 16
      %v1799 = vrot.slane %v1797, 4
      %v1800 = vshll.u32 %v1514, 16
      %v1802 = vrot.slane %v1800, 5
      %v1803 = vor.u32 %v1799, %v1802
      %v1804 = vrot.slane %v1803, 4
      %v1806 = vshll.u32 %v1515, 16
      %v1808 = vrot.slane %v1806, 5
      %v1809 = vsel %vm1531, %v1804, %v1808
      %v1810 = vshrl.u32 %v1515, 16
      %v1812 = vrot.slane %v1810, 4
      %v1813 = vor.u32 %v1812, %v1808
      %v1814 = vrot.slane %v1813, 4
      %v1816 = vshll.u32 %v1516, 16
      %v1818 = vrot.slane %v1816, 5
      %v1819 = vsel %vm1531, %v1814, %v1818
      %v1821 = vshrl.u32 %v1517, 16
      %v1823 = vrot.slane %v1821, 4
      %v1824 = vshll.u32 %v1517, 16
      %v1826 = vrot.slane %v1824, 5
      %v1827 = vor.u32 %v1823, %v1826
      %v1828 = vrot.slane %v1827, 4
      %v1830 = vshll.u32 %v1518, 16
      %v1832 = vrot.slane %v1830, 5
      %v1833 = vsel %vm1531, %v1828, %v1832
      %v1834 = vshrl.u32 %v1518, 16
      %v1836 = vrot.slane %v1834, 4
      %v1837 = vor.u32 %v1836, %v1832
      %v1838 = vrot.slane %v1837, 4
      %v1840 = vshll.u32 %v1519, 16
      %v1842 = vrot.slane %v1840, 5
      %v1843 = vsel %vm1531, %v1838, %v1842
      %v1845 = vshrl.u32 %v1520, 16
      %v1847 = vrot.slane %v1845, 4
      %v1848 = vshll.u32 %v1520, 16
      %v1850 = vrot.slane %v1848, 5
      %v1851 = vor.u32 %v1847, %v1850
      %v1852 = vrot.slane %v1851, 4
      %v1854 = vshll.u32 %v1521, 16
      %v1856 = vrot.slane %v1854, 5
      %v1857 = vsel %vm1531, %v1852, %v1856
      %v1858 = vshrl.u32 %v1521, 16
      %v1860 = vrot.slane %v1858, 4
      %v1861 = vor.u32 %v1860, %v1856
      %v1862 = vrot.slane %v1861, 4
      %v1864 = vshll.u32 %v1522, 16
      %v1866 = vrot.slane %v1864, 5
      %v1867 = vsel %vm1531, %v1862, %v1866
      %v1869 = vshrl.u32 %v1523, 16
      %v1871 = vrot.slane %v1869, 4
      %v1872 = vshll.u32 %v1523, 16
      %v1874 = vrot.slane %v1872, 5
      %v1875 = vor.u32 %v1871, %v1874
      %v1876 = vrot.slane %v1875, 4
      %v1878 = vshll.u32 %v1524, 16
      %v1880 = vrot.slane %v1878, 5
      %v1881 = vsel %vm1531, %v1876, %v1880
      %v1882 = vshrl.u32 %v1524, 16
      %v1884 = vrot.slane %v1882, 4
      %v1885 = vor.u32 %v1884, %v1880
      %v1886 = vrot.slane %v1885, 4
      %v1888 = vshll.u32 %v1525, 16
      %v1890 = vrot.slane %v1888, 5
      %v1891 = vsel %vm1531, %v1886, %v1890
      %v1893 = vshrl.u32 %v1526, 16
      %v1895 = vrot.slane %v1893, 4
      %v1896 = vshll.u32 %v1526, 16
      %v1898 = vrot.slane %v1896, 5
      %v1899 = vor.u32 %v1895, %v1898
      %v1900 = vrot.slane %v1899, 4
      %v1902 = vshll.u32 %v1527, 16
      %v1904 = vrot.slane %v1902, 5
      %v1905 = vsel %vm1531, %v1900, %v1904
      %v1906 = vshrl.u32 %v1527, 16
      %v1908 = vrot.slane %v1906, 4
      %v1909 = vor.u32 %v1908, %v1904
      %v1910 = vrot.slane %v1909, 4
      %v1912 = vshll.u32 %v1528, 16
      %v1914 = vrot.slane %v1912, 5
      %v1915 = vsel %vm1531, %v1910, %v1914
      %1916 = vrot.lane.b32.xlu0 %v1545, 8
      %v1917 = vpop.permute.xlu0 %1916
      %1918 = vrot.lane.b32.xlu0 %v1555, 8
      %v1919 = vpop.permute.xlu0 %1918
      %1920 = vrot.lane.b32.xlu0 %v1569, 8
      %v1921 = vpop.permute.xlu0 %1920
      %1922 = vrot.lane.b32.xlu0 %v1579, 8
      %v1923 = vpop.permute.xlu0 %1922
      %1924 = vrot.lane.b32.xlu0 %v1593, 8
      %v1925 = vpop.permute.xlu0 %1924
      %1926 = vrot.lane.b32.xlu0 %v1603, 8
      %v1927 = vpop.permute.xlu0 %1926
      %1928 = vrot.lane.b32.xlu0 %v1617, 8
      %v1929 = vpop.permute.xlu0 %1928
      %1930 = vrot.lane.b32.xlu0 %v1627, 8
      %v1931 = vpop.permute.xlu0 %1930
      %1932 = vrot.lane.b32.xlu0 %v1641, 8
      %v1933 = vpop.permute.xlu0 %1932
      %1934 = vrot.lane.b32.xlu0 %v1651, 8
      %v1935 = vpop.permute.xlu0 %1934
      %1936 = vrot.lane.b32.xlu0 %v1665, 8
      %v1937 = vpop.permute.xlu0 %1936
      %1938 = vrot.lane.b32.xlu0 %v1675, 8
      %v1939 = vpop.permute.xlu0 %1938
      %1940 = vrot.lane.b32.xlu0 %v1689, 8
      %v1941 = vpop.permute.xlu0 %1940
      %1942 = vrot.lane.b32.xlu0 %v1699, 8
      %v1943 = vpop.permute.xlu0 %1942
      %1944 = vrot.lane.b32.xlu0 %v1713, 8
      %v1945 = vpop.permute.xlu0 %1944
      %1946 = vrot.lane.b32.xlu0 %v1723, 8
      %v1947 = vpop.permute.xlu0 %1946
      %1948 = vrot.lane.b32.xlu0 %v1737, 8
      %v1949 = vpop.permute.xlu0 %1948
      %1950 = vrot.lane.b32.xlu0 %v1747, 8
      %v1951 = vpop.permute.xlu0 %1950
      %1952 = vrot.lane.b32.xlu0 %v1761, 8
      %v1953 = vpop.permute.xlu0 %1952
      %1954 = vrot.lane.b32.xlu0 %v1771, 8
      %v1955 = vpop.permute.xlu0 %1954
      %1956 = vrot.lane.b32.xlu0 %v1785, 8
      %v1957 = vpop.permute.xlu0 %1956
      %1958 = vrot.lane.b32.xlu0 %v1795, 8
      %v1959 = vpop.permute.xlu0 %1958
      %1960 = vrot.lane.b32.xlu0 %v1809, 8
      %v1961 = vpop.permute.xlu0 %1960
      %1962 = vrot.lane.b32.xlu0 %v1819, 8
      %v1963 = vpop.permute.xlu0 %1962
      %1964 = vrot.lane.b32.xlu0 %v1833, 8
      %v1965 = vpop.permute.xlu0 %1964
      %1966 = vrot.lane.b32.xlu0 %v1843, 8
      %v1967 = vpop.permute.xlu0 %1966
      %1968 = vrot.lane.b32.xlu0 %v1857, 8
      %v1969 = vpop.permute.xlu0 %1968
      %1970 = vrot.lane.b32.xlu0 %v1867, 8
      %v1971 = vpop.permute.xlu0 %1970
      %1972 = vrot.lane.b32.xlu0 %v1881, 8
      %v1973 = vpop.permute.xlu0 %1972
      %1974 = vrot.lane.b32.xlu0 %v1891, 8
      %v1975 = vpop.permute.xlu0 %1974
      %1976 = vrot.lane.b32.xlu0 %v1905, 8
      %v1977 = vpop.permute.xlu0 %1976
      %1978 = vrot.lane.b32.xlu0 %v1915, 8
      %v1979 = vpop.permute.xlu0 %1978
      %vm2012 = vcmask 126016
      %2013 = vst.msk [vmem:[#allocation3] sm:$0xf] %vm2012, %v1917
      %2014 = vst.msk [vmem:[#allocation3 + $0x4] sm:$0xf] %vm2012, %v1919
      %2015 = vst.msk [vmem:[#allocation3 + $0x8] sm:$0xf] %vm2012, %v1921
      %2016 = vst.msk [vmem:[#allocation3 + $0xc] sm:$0xf] %vm2012, %v1923
      %2017 = vst.msk [vmem:[#allocation3 + $0x10] sm:$0xf] %vm2012, %v1925
      %2018 = vst.msk [vmem:[#allocation3 + $0x14] sm:$0xf] %vm2012, %v1927
      %2019 = vst.msk [vmem:[#allocation3 + $0x18] sm:$0xf] %vm2012, %v1929
      %2020 = vst.msk [vmem:[#allocation3 + $0x1c] sm:$0xf] %vm2012, %v1931
      %2021 = vst.msk [vmem:[#allocation3 + $0x20] sm:$0xf] %vm2012, %v1933
      %2022 = vst.msk [vmem:[#allocation3 + $0x24] sm:$0xf] %vm2012, %v1935
      %2023 = vst.msk [vmem:[#allocation3 + $0x28] sm:$0xf] %vm2012, %v1937
      %2024 = vst.msk [vmem:[#allocation3 + $0x2c] sm:$0xf] %vm2012, %v1939
      %2025 = vst.msk [vmem:[#allocation3 + $0x30] sm:$0xf] %vm2012, %v1941
      %2026 = vst.msk [vmem:[#allocation3 + $0x34] sm:$0xf] %vm2012, %v1943
      %2027 = vst.msk [vmem:[#allocation3 + $0x38] sm:$0xf] %vm2012, %v1945
      %2028 = vst.msk [vmem:[#allocation3 + $0x3c] sm:$0xf] %vm2012, %v1947
      %2029 = vst.msk [vmem:[#allocation3 + $0x40] sm:$0xf] %vm2012, %v1949
      %2030 = vst.msk [vmem:[#allocation3 + $0x44] sm:$0xf] %vm2012, %v1951
      %2031 = vst.msk [vmem:[#allocation3 + $0x48] sm:$0xf] %vm2012, %v1953
      %2032 = vst.msk [vmem:[#allocation3 + $0x4c] sm:$0xf] %vm2012, %v1955
      %2033 = vst.msk [vmem:[#allocation3 + $0x50] sm:$0xf] %vm2012, %v1957
      %2034 = vst.msk [vmem:[#allocation3 + $0x54] sm:$0xf] %vm2012, %v1959
      %2035 = vst.msk [vmem:[#allocation3 + $0x58] sm:$0xf] %vm2012, %v1961
      %2036 = vst.msk [vmem:[#allocation3 + $0x5c] sm:$0xf] %vm2012, %v1963
      %2037 = vst.msk [vmem:[#allocation3 + $0x60] sm:$0xf] %vm2012, %v1965
      %2038 = vst.msk [vmem:[#allocation3 + $0x64] sm:$0xf] %vm2012, %v1967
      %2039 = vst.msk [vmem:[#allocation3 + $0x68] sm:$0xf] %vm2012, %v1969
      %2040 = vst.msk [vmem:[#allocation3 + $0x6c] sm:$0xf] %vm2012, %v1971
      %2041 = vst.msk [vmem:[#allocation3 + $0x70] sm:$0xf] %vm2012, %v1973
      %2042 = vst.msk [vmem:[#allocation3 + $0x74] sm:$0xf] %vm2012, %v1975
      %2043 = vst.msk [vmem:[#allocation3 + $0x78] sm:$0xf] %vm2012, %v1977
      %2044 = vst.msk [vmem:[#allocation3 + $0x7c] sm:$0xf] %vm2012, %v1979
      %v2045 = vld [vmem:[#allocation2] sm:$0xe]
      %v2046 = vld [vmem:[#allocation2 + $0x4] sm:$0xf]
      %v2047 = vld [vmem:[#allocation2 + $0x8] sm:$0x1]
      %v2048 = vld [vmem:[#allocation2 + $0xc] sm:$0xe]
      %v2049 = vld [vmem:[#allocation2 + $0x10] sm:$0xf]
      %v2050 = vld [vmem:[#allocation2 + $0x14] sm:$0x1]
      %v2051 = vld [vmem:[#allocation2 + $0x18] sm:$0xe]
      %v2052 = vld [vmem:[#allocation2 + $0x1c] sm:$0xf]
      %v2053 = vld [vmem:[#allocation2 + $0x20] sm:$0x1]
      %v2054 = vld [vmem:[#allocation2 + $0x24] sm:$0xe]
      %v2055 = vld [vmem:[#allocation2 + $0x28] sm:$0xf]
      %v2056 = vld [vmem:[#allocation2 + $0x2c] sm:$0x1]
      %v2057 = vld [vmem:[#allocation2 + $0x30] sm:$0xe]
      %v2058 = vld [vmem:[#allocation2 + $0x34] sm:$0xf]
      %v2059 = vld [vmem:[#allocation2 + $0x38] sm:$0x1]
      %v2060 = vld [vmem:[#allocation2 + $0x3c] sm:$0xe]
      %v2061 = vld [vmem:[#allocation2 + $0x40] sm:$0xf]
      %v2062 = vld [vmem:[#allocation2 + $0x44] sm:$0x1]
      %v2063 = vld [vmem:[#allocation2 + $0x48] sm:$0xe]
      %v2064 = vld [vmem:[#allocation2 + $0x4c] sm:$0xf]
      %v2065 = vld [vmem:[#allocation2 + $0x50] sm:$0x1]
      %v2066 = vld [vmem:[#allocation2 + $0x54] sm:$0xe]
      %v2067 = vld [vmem:[#allocation2 + $0x58] sm:$0xf]
      %v2068 = vld [vmem:[#allocation2 + $0x5c] sm:$0x1]
      %v2069 = vld [vmem:[#allocation2 + $0x60] sm:$0xe]
      %v2070 = vld [vmem:[#allocation2 + $0x64] sm:$0xf]
      %v2071 = vld [vmem:[#allocation2 + $0x68] sm:$0x1]
      %v2072 = vld [vmem:[#allocation2 + $0x6c] sm:$0xe]
      %v2073 = vld [vmem:[#allocation2 + $0x70] sm:$0xf]
      %v2074 = vld [vmem:[#allocation2 + $0x74] sm:$0x1]
      %v2075 = vld [vmem:[#allocation2 + $0x78] sm:$0xe]
      %v2076 = vld [vmem:[#allocation2 + $0x7c] sm:$0xf]
      %v2077 = vld [vmem:[#allocation2 + $0x80] sm:$0x1]
      %v2078 = vld [vmem:[#allocation2 + $0x84] sm:$0xe]
      %v2079 = vld [vmem:[#allocation2 + $0x88] sm:$0xf]
      %v2080 = vld [vmem:[#allocation2 + $0x8c] sm:$0x1]
      %v2081 = vld [vmem:[#allocation2 + $0x90] sm:$0xe]
      %v2082 = vld [vmem:[#allocation2 + $0x94] sm:$0xf]
      %v2083 = vld [vmem:[#allocation2 + $0x98] sm:$0x1]
      %v2084 = vld [vmem:[#allocation2 + $0x9c] sm:$0xe]
      %v2085 = vld [vmem:[#allocation2 + $0xa0] sm:$0xf]
      %v2086 = vld [vmem:[#allocation2 + $0xa4] sm:$0x1]
      %v2087 = vld [vmem:[#allocation2 + $0xa8] sm:$0xe]
      %v2088 = vld [vmem:[#allocation2 + $0xac] sm:$0xf]
      %v2089 = vld [vmem:[#allocation2 + $0xb0] sm:$0x1]
      %v2090 = vld [vmem:[#allocation2 + $0xb4] sm:$0xe]
      %v2091 = vld [vmem:[#allocation2 + $0xb8] sm:$0xf]
      %v2092 = vld [vmem:[#allocation2 + $0xbc] sm:$0x1]
      %vm2141 = vcmask 1042432
      %vm2142 = vcmask 1046532
      %vm2143 = vmor %vm2141, %vm2142
      %v2144 = vrot.slane %v2045, 5
      %v2145 = vrot.slane %v2144, 4
      %v2146 = vrot.slane %v2046, 5
      %v2147 = vsel %vm2143, %v2145, %v2146
      %v2148 = vrot.slane %v2146, 4
      %v2149 = vrot.slane %v2047, 5
      %v2150 = vsel %vm2143, %v2148, %v2149
      %v2151 = vrot.slane %v2048, 5
      %v2152 = vrot.slane %v2151, 4
      %v2153 = vrot.slane %v2049, 5
      %v2154 = vsel %vm2143, %v2152, %v2153
      %v2155 = vrot.slane %v2153, 4
      %v2156 = vrot.slane %v2050, 5
      %v2157 = vsel %vm2143, %v2155, %v2156
      %v2158 = vrot.slane %v2051, 5
      %v2159 = vrot.slane %v2158, 4
      %v2160 = vrot.slane %v2052, 5
      %v2161 = vsel %vm2143, %v2159, %v2160
      %v2162 = vrot.slane %v2160, 4
      %v2163 = vrot.slane %v2053, 5
      %v2164 = vsel %vm2143, %v2162, %v2163
      %v2165 = vrot.slane %v2054, 5
      %v2166 = vrot.slane %v2165, 4
      %v2167 = vrot.slane %v2055, 5
      %v2168 = vsel %vm2143, %v2166, %v2167
      %v2169 = vrot.slane %v2167, 4
      %v2170 = vrot.slane %v2056, 5
      %v2171 = vsel %vm2143, %v2169, %v2170
      %v2172 = vrot.slane %v2057, 5
      %v2173 = vrot.slane %v2172, 4
      %v2174 = vrot.slane %v2058, 5
      %v2175 = vsel %vm2143, %v2173, %v2174
      %v2176 = vrot.slane %v2174, 4
      %v2177 = vrot.slane %v2059, 5
      %v2178 = vsel %vm2143, %v2176, %v2177
      %v2179 = vrot.slane %v2060, 5
      %v2180 = vrot.slane %v2179, 4
      %v2181 = vrot.slane %v2061, 5
      %v2182 = vsel %vm2143, %v2180, %v2181
      %v2183 = vrot.slane %v2181, 4
      %v2184 = vrot.slane %v2062, 5
      %v2185 = vsel %vm2143, %v2183, %v2184
      %v2186 = vrot.slane %v2063, 5
      %v2187 = vrot.slane %v2186, 4
      %v2188 = vrot.slane %v2064, 5
      %v2189 = vsel %vm2143, %v2187, %v2188
      %v2190 = vrot.slane %v2188, 4
      %v2191 = vrot.slane %v2065, 5
      %v2192 = vsel %vm2143, %v2190, %v2191
      %v2193 = vrot.slane %v2066, 5
      %v2194 = vrot.slane %v2193, 4
      %v2195 = vrot.slane %v2067, 5
      %v2196 = vsel %vm2143, %v2194, %v2195
      %v2197 = vrot.slane %v2195, 4
      %v2198 = vrot.slane %v2068, 5
      %v2199 = vsel %vm2143, %v2197, %v2198
      %v2200 = vrot.slane %v2069, 5
      %v2201 = vrot.slane %v2200, 4
      %v2202 = vrot.slane %v2070, 5
      %v2203 = vsel %vm2143, %v2201, %v2202
      %v2204 = vrot.slane %v2202, 4
      %v2205 = vrot.slane %v2071, 5
      %v2206 = vsel %vm2143, %v2204, %v2205
      %v2207 = vrot.slane %v2072, 5
      %v2208 = vrot.slane %v2207, 4
      %v2209 = vrot.slane %v2073, 5
      %v2210 = vsel %vm2143, %v2208, %v2209
      %v2211 = vrot.slane %v2209, 4
      %v2212 = vrot.slane %v2074, 5
      %v2213 = vsel %vm2143, %v2211, %v2212
      %v2214 = vrot.slane %v2075, 5
      %v2215 = vrot.slane %v2214, 4
      %v2216 = vrot.slane %v2076, 5
      %v2217 = vsel %vm2143, %v2215, %v2216
      %v2218 = vrot.slane %v2216, 4
      %v2219 = vrot.slane %v2077, 5
      %v2220 = vsel %vm2143, %v2218, %v2219
      %v2221 = vrot.slane %v2078, 5
      %v2222 = vrot.slane %v2221, 4
      %v2223 = vrot.slane %v2079, 5
      %v2224 = vsel %vm2143, %v2222, %v2223
      %v2225 = vrot.slane %v2223, 4
      %v2226 = vrot.slane %v2080, 5
      %v2227 = vsel %vm2143, %v2225, %v2226
      %v2228 = vrot.slane %v2081, 5
      %v2229 = vrot.slane %v2228, 4
      %v2230 = vrot.slane %v2082, 5
      %v2231 = vsel %vm2143, %v2229, %v2230
      %v2232 = vrot.slane %v2230, 4
      %v2233 = vrot.slane %v2083, 5
      %v2234 = vsel %vm2143, %v2232, %v2233
      %v2235 = vrot.slane %v2084, 5
      %v2236 = vrot.slane %v2235, 4
      %v2237 = vrot.slane %v2085, 5
      %v2238 = vsel %vm2143, %v2236, %v2237
      %v2239 = vrot.slane %v2237, 4
      %v2240 = vrot.slane %v2086, 5
      %v2241 = vsel %vm2143, %v2239, %v2240
      %v2242 = vrot.slane %v2087, 5
      %v2243 = vrot.slane %v2242, 4
      %v2244 = vrot.slane %v2088, 5
      %v2245 = vsel %vm2143, %v2243, %v2244
      %v2246 = vrot.slane %v2244, 4
      %v2247 = vrot.slane %v2089, 5
      %v2248 = vsel %vm2143, %v2246, %v2247
      %v2249 = vrot.slane %v2090, 5
      %v2250 = vrot.slane %v2249, 4
      %v2251 = vrot.slane %v2091, 5
      %v2252 = vsel %vm2143, %v2250, %v2251
      %v2253 = vrot.slane %v2251, 4
      %v2254 = vrot.slane %v2092, 5
      %v2255 = vsel %vm2143, %v2253, %v2254
      %2256 = vrot.lane.b32.xlu0 %v2147, 16
      %v2257 = vpop.permute.xlu0 %2256
      %2258 = vrot.lane.b32.xlu0 %v2150, 16
      %v2259 = vpop.permute.xlu0 %2258
      %2260 = vrot.lane.b32.xlu0 %v2154, 16
      %v2261 = vpop.permute.xlu0 %2260
      %2262 = vrot.lane.b32.xlu0 %v2157, 16
      %v2263 = vpop.permute.xlu0 %2262
      %2264 = vrot.lane.b32.xlu0 %v2161, 16
      %v2265 = vpop.permute.xlu0 %2264
      %2266 = vrot.lane.b32.xlu0 %v2164, 16
      %v2267 = vpop.permute.xlu0 %2266
      %2268 = vrot.lane.b32.xlu0 %v2168, 16
      %v2269 = vpop.permute.xlu0 %2268
      %2270 = vrot.lane.b32.xlu0 %v2171, 16
      %v2271 = vpop.permute.xlu0 %2270
      %2272 = vrot.lane.b32.xlu0 %v2175, 16
      %v2273 = vpop.permute.xlu0 %2272
      %2274 = vrot.lane.b32.xlu0 %v2178, 16
      %v2275 = vpop.permute.xlu0 %2274
      %2276 = vrot.lane.b32.xlu0 %v2182, 16
      %v2277 = vpop.permute.xlu0 %2276
      %2278 = vrot.lane.b32.xlu0 %v2185, 16
      %v2279 = vpop.permute.xlu0 %2278
      %2280 = vrot.lane.b32.xlu0 %v2189, 16
      %v2281 = vpop.permute.xlu0 %2280
      %2282 = vrot.lane.b32.xlu0 %v2192, 16
      %v2283 = vpop.permute.xlu0 %2282
      %2284 = vrot.lane.b32.xlu0 %v2196, 16
      %v2285 = vpop.permute.xlu0 %2284
      %2286 = vrot.lane.b32.xlu0 %v2199, 16
      %v2287 = vpop.permute.xlu0 %2286
      %2288 = vrot.lane.b32.xlu0 %v2203, 16
      %v2289 = vpop.permute.xlu0 %2288
      %2290 = vrot.lane.b32.xlu0 %v2206, 16
      %v2291 = vpop.permute.xlu0 %2290
      %2292 = vrot.lane.b32.xlu0 %v2210, 16
      %v2293 = vpop.permute.xlu0 %2292
      %2294 = vrot.lane.b32.xlu0 %v2213, 16
      %v2295 = vpop.permute.xlu0 %2294
      %2296 = vrot.lane.b32.xlu0 %v2217, 16
      %v2297 = vpop.permute.xlu0 %2296
      %2298 = vrot.lane.b32.xlu0 %v2220, 16
      %v2299 = vpop.permute.xlu0 %2298
      %2300 = vrot.lane.b32.xlu0 %v2224, 16
      %v2301 = vpop.permute.xlu0 %2300
      %2302 = vrot.lane.b32.xlu0 %v2227, 16
      %v2303 = vpop.permute.xlu0 %2302
      %2304 = vrot.lane.b32.xlu0 %v2231, 16
      %v2305 = vpop.permute.xlu0 %2304
      %2306 = vrot.lane.b32.xlu0 %v2234, 16
      %v2307 = vpop.permute.xlu0 %2306
      %2308 = vrot.lane.b32.xlu0 %v2238, 16
      %v2309 = vpop.permute.xlu0 %2308
      %2310 = vrot.lane.b32.xlu0 %v2241, 16
      %v2311 = vpop.permute.xlu0 %2310
      %2312 = vrot.lane.b32.xlu0 %v2245, 16
      %v2313 = vpop.permute.xlu0 %2312
      %2314 = vrot.lane.b32.xlu0 %v2248, 16
      %v2315 = vpop.permute.xlu0 %2314
      %2316 = vrot.lane.b32.xlu0 %v2252, 16
      %v2317 = vpop.permute.xlu0 %2316
      %2318 = vrot.lane.b32.xlu0 %v2255, 16
      %v2319 = vpop.permute.xlu0 %2318
      %vm2352 = vcmask 191616
      %2353 = vst.msk [vmem:[#allocation3] sm:$0xf] %vm2352, %v2257
      %2354 = vst.msk [vmem:[#allocation3 + $0x4] sm:$0xf] %vm2352, %v2259
      %2355 = vst.msk [vmem:[#allocation3 + $0x8] sm:$0xf] %vm2352, %v2261
      %2356 = vst.msk [vmem:[#allocation3 + $0xc] sm:$0xf] %vm2352, %v2263
      %2357 = vst.msk [vmem:[#allocation3 + $0x10] sm:$0xf] %vm2352, %v2265
      %2358 = vst.msk [vmem:[#allocation3 + $0x14] sm:$0xf] %vm2352, %v2267
      %2359 = vst.msk [vmem:[#allocation3 + $0x18] sm:$0xf] %vm2352, %v2269
      %2360 = vst.msk [vmem:[#allocation3 + $0x1c] sm:$0xf] %vm2352, %v2271
      %2361 = vst.msk [vmem:[#allocation3 + $0x20] sm:$0xf] %vm2352, %v2273
      %2362 = vst.msk [vmem:[#allocation3 + $0x24] sm:$0xf] %vm2352, %v2275
      %2363 = vst.msk [vmem:[#allocation3 + $0x28] sm:$0xf] %vm2352, %v2277
      %2364 = vst.msk [vmem:[#allocation3 + $0x2c] sm:$0xf] %vm2352, %v2279
      %2365 = vst.msk [vmem:[#allocation3 + $0x30] sm:$0xf] %vm2352, %v2281
      %2366 = vst.msk [vmem:[#allocation3 + $0x34] sm:$0xf] %vm2352, %v2283
      %2367 = vst.msk [vmem:[#allocation3 + $0x38] sm:$0xf] %vm2352, %v2285
      %2368 = vst.msk [vmem:[#allocation3 + $0x3c] sm:$0xf] %vm2352, %v2287
      %2369 = vst.msk [vmem:[#allocation3 + $0x40] sm:$0xf] %vm2352, %v2289
      %2370 = vst.msk [vmem:[#allocation3 + $0x44] sm:$0xf] %vm2352, %v2291
      %2371 = vst.msk [vmem:[#allocation3 + $0x48] sm:$0xf] %vm2352, %v2293
      %2372 = vst.msk [vmem:[#allocation3 + $0x4c] sm:$0xf] %vm2352, %v2295
      %2373 = vst.msk [vmem:[#allocation3 + $0x50] sm:$0xf] %vm2352, %v2297
      %2374 = vst.msk [vmem:[#allocation3 + $0x54] sm:$0xf] %vm2352, %v2299
      %2375 = vst.msk [vmem:[#allocation3 + $0x58] sm:$0xf] %vm2352, %v2301
      %2376 = vst.msk [vmem:[#allocation3 + $0x5c] sm:$0xf] %vm2352, %v2303
      %2377 = vst.msk [vmem:[#allocation3 + $0x60] sm:$0xf] %vm2352, %v2305
      %2378 = vst.msk [vmem:[#allocation3 + $0x64] sm:$0xf] %vm2352, %v2307
      %2379 = vst.msk [vmem:[#allocation3 + $0x68] sm:$0xf] %vm2352, %v2309
      %2380 = vst.msk [vmem:[#allocation3 + $0x6c] sm:$0xf] %vm2352, %v2311
      %2381 = vst.msk [vmem:[#allocation3 + $0x70] sm:$0xf] %vm2352, %v2313
      %2382 = vst.msk [vmem:[#allocation3 + $0x74] sm:$0xf] %vm2352, %v2315
      %2383 = vst.msk [vmem:[#allocation3 + $0x78] sm:$0xf] %vm2352, %v2317
      %2384 = vst.msk [vmem:[#allocation3 + $0x7c] sm:$0xf] %vm2352, %v2319
      %v2385 = vld [vmem:[%s1184] sm:$0xf]
      %v2386 = vld [vmem:[%s1184 + $0x4] sm:$0xf]
      %v2387 = vld [vmem:[%s1184 + $0xc] sm:$0xf]
      %v2388 = vld [vmem:[%s1184 + $0x10] sm:$0xf]
      %v2389 = vld [vmem:[%s1184 + $0x18] sm:$0xf]
      %v2390 = vld [vmem:[%s1184 + $0x1c] sm:$0xf]
      %v2391 = vld [vmem:[%s1184 + $0x24] sm:$0xf]
      %v2392 = vld [vmem:[%s1184 + $0x28] sm:$0xf]
      %v2393 = vld [vmem:[%s1184 + $0x30] sm:$0xf]
      %v2394 = vld [vmem:[%s1184 + $0x34] sm:$0xf]
      %v2395 = vld [vmem:[%s1184 + $0x3c] sm:$0xf]
      %v2396 = vld [vmem:[%s1184 + $0x40] sm:$0xf]
      %v2397 = vld [vmem:[%s1184 + $0x48] sm:$0xf]
      %v2398 = vld [vmem:[%s1184 + $0x4c] sm:$0xf]
      %v2399 = vld [vmem:[%s1184 + $0x54] sm:$0xf]
      %v2400 = vld [vmem:[%s1184 + $0x58] sm:$0xf]
      %v2401 = vld [vmem:[%s1184 + $0x60] sm:$0xf]
      %v2402 = vld [vmem:[%s1184 + $0x64] sm:$0xf]
      %v2403 = vld [vmem:[%s1184 + $0x6c] sm:$0xf]
      %v2404 = vld [vmem:[%s1184 + $0x70] sm:$0xf]
      %v2405 = vld [vmem:[%s1184 + $0x78] sm:$0xf]
      %v2406 = vld [vmem:[%s1184 + $0x7c] sm:$0xf]
      %v2407 = vld [vmem:[%s1184 + $0x84] sm:$0xf]
      %v2408 = vld [vmem:[%s1184 + $0x88] sm:$0xf]
      %v2409 = vld [vmem:[%s1184 + $0x90] sm:$0xf]
      %v2410 = vld [vmem:[%s1184 + $0x94] sm:$0xf]
      %v2411 = vld [vmem:[%s1184 + $0x9c] sm:$0xf]
      %v2412 = vld [vmem:[%s1184 + $0xa0] sm:$0xf]
      %v2413 = vld [vmem:[%s1184 + $0xa8] sm:$0xf]
      %v2414 = vld [vmem:[%s1184 + $0xac] sm:$0xf]
      %v2415 = vld [vmem:[%s1184 + $0xb4] sm:$0xf]
      %v2416 = vld [vmem:[%s1184 + $0xb8] sm:$0xf]
      %2449 = vrot.lane.b32.xlu0 %v2385, 24
      %v2450 = vpop.permute.xlu0 %2449
      %2451 = vrot.lane.b32.xlu0 %v2386, 24
      %v2452 = vpop.permute.xlu0 %2451
      %2453 = vrot.lane.b32.xlu0 %v2387, 24
      %v2454 = vpop.permute.xlu0 %2453
      %2455 = vrot.lane.b32.xlu0 %v2388, 24
      %v2456 = vpop.permute.xlu0 %2455
      %2457 = vrot.lane.b32.xlu0 %v2389, 24
      %v2458 = vpop.permute.xlu0 %2457
      %2459 = vrot.lane.b32.xlu0 %v2390, 24
      %v2460 = vpop.permute.xlu0 %2459
      %2461 = vrot.lane.b32.xlu0 %v2391, 24
      %v2462 = vpop.permute.xlu0 %2461
      %2463 = vrot.lane.b32.xlu0 %v2392, 24
      %v2464 = vpop.permute.xlu0 %2463
      %2465 = vrot.lane.b32.xlu0 %v2393, 24
      %v2466 = vpop.permute.xlu0 %2465
      %2467 = vrot.lane.b32.xlu0 %v2394, 24
      %v2468 = vpop.permute.xlu0 %2467
      %2469 = vrot.lane.b32.xlu0 %v2395, 24
      %v2470 = vpop.permute.xlu0 %2469
      %2471 = vrot.lane.b32.xlu0 %v2396, 24
      %v2472 = vpop.permute.xlu0 %2471
      %2473 = vrot.lane.b32.xlu0 %v2397, 24
      %v2474 = vpop.permute.xlu0 %2473
      %2475 = vrot.lane.b32.xlu0 %v2398, 24
      %v2476 = vpop.permute.xlu0 %2475
      %2477 = vrot.lane.b32.xlu0 %v2399, 24
      %v2478 = vpop.permute.xlu0 %2477
      %2479 = vrot.lane.b32.xlu0 %v2400, 24
      %v2480 = vpop.permute.xlu0 %2479
      %2481 = vrot.lane.b32.xlu0 %v2401, 24
      %v2482 = vpop.permute.xlu0 %2481
      %2483 = vrot.lane.b32.xlu0 %v2402, 24
      %v2484 = vpop.permute.xlu0 %2483
      %2485 = vrot.lane.b32.xlu0 %v2403, 24
      %v2486 = vpop.permute.xlu0 %2485
      %2487 = vrot.lane.b32.xlu0 %v2404, 24
      %v2488 = vpop.permute.xlu0 %2487
      %2489 = vrot.lane.b32.xlu0 %v2405, 24
      %v2490 = vpop.permute.xlu0 %2489
      %2491 = vrot.lane.b32.xlu0 %v2406, 24
      %v2492 = vpop.permute.xlu0 %2491
      %2493 = vrot.lane.b32.xlu0 %v2407, 24
      %v2494 = vpop.permute.xlu0 %2493
      %2495 = vrot.lane.b32.xlu0 %v2408, 24
      %v2496 = vpop.permute.xlu0 %2495
      %2497 = vrot.lane.b32.xlu0 %v2409, 24
      %v2498 = vpop.permute.xlu0 %2497
      %2499 = vrot.lane.b32.xlu0 %v2410, 24
      %v2500 = vpop.permute.xlu0 %2499
      %2501 = vrot.lane.b32.xlu0 %v2411, 24
      %v2502 = vpop.permute.xlu0 %2501
      %2503 = vrot.lane.b32.xlu0 %v2412, 24
      %v2504 = vpop.permute.xlu0 %2503
      %2505 = vrot.lane.b32.xlu0 %v2413, 24
      %v2506 = vpop.permute.xlu0 %2505
      %2507 = vrot.lane.b32.xlu0 %v2414, 24
      %v2508 = vpop.permute.xlu0 %2507
      %2509 = vrot.lane.b32.xlu0 %v2415, 24
      %v2510 = vpop.permute.xlu0 %2509
      %2511 = vrot.lane.b32.xlu0 %v2416, 24
      %v2512 = vpop.permute.xlu0 %2511
      %vm2545 = vcmask 257216
      %2546 = vst.msk [vmem:[#allocation3] sm:$0xf] %vm2545, %v2450
      %2547 = vst.msk [vmem:[#allocation3 + $0x4] sm:$0xf] %vm2545, %v2452
      %2548 = vst.msk [vmem:[#allocation3 + $0x8] sm:$0xf] %vm2545, %v2454
      %2549 = vst.msk [vmem:[#allocation3 + $0xc] sm:$0xf] %vm2545, %v2456
      %2550 = vst.msk [vmem:[#allocation3 + $0x10] sm:$0xf] %vm2545, %v2458
      %2551 = vst.msk [vmem:[#allocation3 + $0x14] sm:$0xf] %vm2545, %v2460
      %2552 = vst.msk [vmem:[#allocation3 + $0x18] sm:$0xf] %vm2545, %v2462
      %2553 = vst.msk [vmem:[#allocation3 + $0x1c] sm:$0xf] %vm2545, %v2464
      %2554 = vst.msk [vmem:[#allocation3 + $0x20] sm:$0xf] %vm2545, %v2466
      %2555 = vst.msk [vmem:[#allocation3 + $0x24] sm:$0xf] %vm2545, %v2468
      %2556 = vst.msk [vmem:[#allocation3 + $0x28] sm:$0xf] %vm2545, %v2470
      %2557 = vst.msk [vmem:[#allocation3 + $0x2c] sm:$0xf] %vm2545, %v2472
      %2558 = vst.msk [vmem:[#allocation3 + $0x30] sm:$0xf] %vm2545, %v2474
      %2559 = vst.msk [vmem:[#allocation3 + $0x34] sm:$0xf] %vm2545, %v2476
      %2560 = vst.msk [vmem:[#allocation3 + $0x38] sm:$0xf] %vm2545, %v2478
      %2561 = vst.msk [vmem:[#allocation3 + $0x3c] sm:$0xf] %vm2545, %v2480
      %2562 = vst.msk [vmem:[#allocation3 + $0x40] sm:$0xf] %vm2545, %v2482
      %2563 = vst.msk [vmem:[#allocation3 + $0x44] sm:$0xf] %vm2545, %v2484
      %2564 = vst.msk [vmem:[#allocation3 + $0x48] sm:$0xf] %vm2545, %v2486
      %2565 = vst.msk [vmem:[#allocation3 + $0x4c] sm:$0xf] %vm2545, %v2488
      %2566 = vst.msk [vmem:[#allocation3 + $0x50] sm:$0xf] %vm2545, %v2490
      %2567 = vst.msk [vmem:[#allocation3 + $0x54] sm:$0xf] %vm2545, %v2492
      %2568 = vst.msk [vmem:[#allocation3 + $0x58] sm:$0xf] %vm2545, %v2494
      %2569 = vst.msk [vmem:[#allocation3 + $0x5c] sm:$0xf] %vm2545, %v2496
      %2570 = vst.msk [vmem:[#allocation3 + $0x60] sm:$0xf] %vm2545, %v2498
      %2571 = vst.msk [vmem:[#allocation3 + $0x64] sm:$0xf] %vm2545, %v2500
      %2572 = vst.msk [vmem:[#allocation3 + $0x68] sm:$0xf] %vm2545, %v2502
      %2573 = vst.msk [vmem:[#allocation3 + $0x6c] sm:$0xf] %vm2545, %v2504
      %2574 = vst.msk [vmem:[#allocation3 + $0x70] sm:$0xf] %vm2545, %v2506
      %2575 = vst.msk [vmem:[#allocation3 + $0x74] sm:$0xf] %vm2545, %v2508
      %2576 = vst.msk [vmem:[#allocation3 + $0x78] sm:$0xf] %vm2545, %v2510
      %2577 = vst.msk [vmem:[#allocation3 + $0x7c] sm:$0xf] %vm2545, %v2512
      %v2578 = vld [vmem:[%s1184] sm:$0xf]
      %v2579 = vld [vmem:[%s1184 + $0x4] sm:$0xf]
      %v2580 = vld [vmem:[%s1184 + $0x8] sm:$0x1]
      %v2581 = vld [vmem:[%s1184 + $0xc] sm:$0xf]
      %v2582 = vld [vmem:[%s1184 + $0x10] sm:$0xf]
      %v2583 = vld [vmem:[%s1184 + $0x14] sm:$0x1]
      %v2584 = vld [vmem:[%s1184 + $0x18] sm:$0xf]
      %v2585 = vld [vmem:[%s1184 + $0x1c] sm:$0xf]
      %v2586 = vld [vmem:[%s1184 + $0x20] sm:$0x1]
      %v2587 = vld [vmem:[%s1184 + $0x24] sm:$0xf]
      %v2588 = vld [vmem:[%s1184 + $0x28] sm:$0xf]
      %v2589 = vld [vmem:[%s1184 + $0x2c] sm:$0x1]
      %v2590 = vld [vmem:[%s1184 + $0x30] sm:$0xf]
      %v2591 = vld [vmem:[%s1184 + $0x34] sm:$0xf]
      %v2592 = vld [vmem:[%s1184 + $0x38] sm:$0x1]
      %v2593 = vld [vmem:[%s1184 + $0x3c] sm:$0xf]
      %v2594 = vld [vmem:[%s1184 + $0x40] sm:$0xf]
      %v2595 = vld [vmem:[%s1184 + $0x44] sm:$0x1]
      %v2596 = vld [vmem:[%s1184 + $0x48] sm:$0xf]
      %v2597 = vld [vmem:[%s1184 + $0x4c] sm:$0xf]
      %v2598 = vld [vmem:[%s1184 + $0x50] sm:$0x1]
      %v2599 = vld [vmem:[%s1184 + $0x54] sm:$0xf]
      %v2600 = vld [vmem:[%s1184 + $0x58] sm:$0xf]
      %v2601 = vld [vmem:[%s1184 + $0x5c] sm:$0x1]
      %v2602 = vld [vmem:[%s1184 + $0x60] sm:$0xf]
      %v2603 = vld [vmem:[%s1184 + $0x64] sm:$0xf]
      %v2604 = vld [vmem:[%s1184 + $0x68] sm:$0x1]
      %v2605 = vld [vmem:[%s1184 + $0x6c] sm:$0xf]
      %v2606 = vld [vmem:[%s1184 + $0x70] sm:$0xf]
      %v2607 = vld [vmem:[%s1184 + $0x74] sm:$0x1]
      %v2608 = vld [vmem:[%s1184 + $0x78] sm:$0xf]
      %v2609 = vld [vmem:[%s1184 + $0x7c] sm:$0xf]
      %v2610 = vld [vmem:[%s1184 + $0x80] sm:$0x1]
      %v2611 = vld [vmem:[%s1184 + $0x84] sm:$0xf]
      %v2612 = vld [vmem:[%s1184 + $0x88] sm:$0xf]
      %v2613 = vld [vmem:[%s1184 + $0x8c] sm:$0x1]
      %v2614 = vld [vmem:[%s1184 + $0x90] sm:$0xf]
      %v2615 = vld [vmem:[%s1184 + $0x94] sm:$0xf]
      %v2616 = vld [vmem:[%s1184 + $0x98] sm:$0x1]
      %v2617 = vld [vmem:[%s1184 + $0x9c] sm:$0xf]
      %v2618 = vld [vmem:[%s1184 + $0xa0] sm:$0xf]
      %v2619 = vld [vmem:[%s1184 + $0xa4] sm:$0x1]
      %v2620 = vld [vmem:[%s1184 + $0xa8] sm:$0xf]
      %v2621 = vld [vmem:[%s1184 + $0xac] sm:$0xf]
      %v2622 = vld [vmem:[%s1184 + $0xb0] sm:$0x1]
      %v2623 = vld [vmem:[%s1184 + $0xb4] sm:$0xf]
      %v2624 = vld [vmem:[%s1184 + $0xb8] sm:$0xf]
      %v2625 = vld [vmem:[%s1184 + $0xbc] sm:$0x1]
      %v2627 = vshrl.u32 %v2578, 16
      %v2629 = vrot.slane %v2627, 4
      %v2630 = vshll.u32 %v2578, 16
      %v2632 = vrot.slane %v2630, 5
      %v2633 = vor.u32 %v2629, %v2632
      %v2634 = vrot.slane %v2633, 4
      %v2636 = vshll.u32 %v2579, 16
      %v2638 = vrot.slane %v2636, 5
      %v2639 = vsel %vm1531, %v2634, %v2638
      %v2640 = vshrl.u32 %v2579, 16
      %v2642 = vrot.slane %v2640, 4
      %v2643 = vor.u32 %v2642, %v2638
      %v2644 = vrot.slane %v2643, 4
      %v2646 = vshll.u32 %v2580, 16
      %v2648 = vrot.slane %v2646, 5
      %v2649 = vsel %vm1531, %v2644, %v2648
      %v2651 = vshrl.u32 %v2581, 16
      %v2653 = vrot.slane %v2651, 4
      %v2654 = vshll.u32 %v2581, 16
      %v2656 = vrot.slane %v2654, 5
      %v2657 = vor.u32 %v2653, %v2656
      %v2658 = vrot.slane %v2657, 4
      %v2660 = vshll.u32 %v2582, 16
      %v2662 = vrot.slane %v2660, 5
      %v2663 = vsel %vm1531, %v2658, %v2662
      %v2664 = vshrl.u32 %v2582, 16
      %v2666 = vrot.slane %v2664, 4
      %v2667 = vor.u32 %v2666, %v2662
      %v2668 = vrot.slane %v2667, 4
      %v2670 = vshll.u32 %v2583, 16
      %v2672 = vrot.slane %v2670, 5
      %v2673 = vsel %vm1531, %v2668, %v2672
      %v2675 = vshrl.u32 %v2584, 16
      %v2677 = vrot.slane %v2675, 4
      %v2678 = vshll.u32 %v2584, 16
      %v2680 = vrot.slane %v2678, 5
      %v2681 = vor.u32 %v2677, %v2680
      %v2682 = vrot.slane %v2681, 4
      %v2684 = vshll.u32 %v2585, 16
      %v2686 = vrot.slane %v2684, 5
      %v2687 = vsel %vm1531, %v2682, %v2686
      %v2688 = vshrl.u32 %v2585, 16
      %v2690 = vrot.slane %v2688, 4
      %v2691 = vor.u32 %v2690, %v2686
      %v2692 = vrot.slane %v2691, 4
      %v2694 = vshll.u32 %v2586, 16
      %v2696 = vrot.slane %v2694, 5
      %v2697 = vsel %vm1531, %v2692, %v2696
      %v2699 = vshrl.u32 %v2587, 16
      %v2701 = vrot.slane %v2699, 4
      %v2702 = vshll.u32 %v2587, 16
      %v2704 = vrot.slane %v2702, 5
      %v2705 = vor.u32 %v2701, %v2704
      %v2706 = vrot.slane %v2705, 4
      %v2708 = vshll.u32 %v2588, 16
      %v2710 = vrot.slane %v2708, 5
      %v2711 = vsel %vm1531, %v2706, %v2710
      %v2712 = vshrl.u32 %v2588, 16
      %v2714 = vrot.slane %v2712, 4
      %v2715 = vor.u32 %v2714, %v2710
      %v2716 = vrot.slane %v2715, 4
      %v2718 = vshll.u32 %v2589, 16
      %v2720 = vrot.slane %v2718, 5
      %v2721 = vsel %vm1531, %v2716, %v2720
      %v2723 = vshrl.u32 %v2590, 16
      %v2725 = vrot.slane %v2723, 4
      %v2726 = vshll.u32 %v2590, 16
      %v2728 = vrot.slane %v2726, 5
      %v2729 = vor.u32 %v2725, %v2728
      %v2730 = vrot.slane %v2729, 4
      %v2732 = vshll.u32 %v2591, 16
      %v2734 = vrot.slane %v2732, 5
      %v2735 = vsel %vm1531, %v2730, %v2734
      %v2736 = vshrl.u32 %v2591, 16
      %v2738 = vrot.slane %v2736, 4
      %v2739 = vor.u32 %v2738, %v2734
      %v2740 = vrot.slane %v2739, 4
      %v2742 = vshll.u32 %v2592, 16
      %v2744 = vrot.slane %v2742, 5
      %v2745 = vsel %vm1531, %v2740, %v2744
      %v2747 = vshrl.u32 %v2593, 16
      %v2749 = vrot.slane %v2747, 4
      %v2750 = vshll.u32 %v2593, 16
      %v2752 = vrot.slane %v2750, 5
      %v2753 = vor.u32 %v2749, %v2752
      %v2754 = vrot.slane %v2753, 4
      %v2756 = vshll.u32 %v2594, 16
      %v2758 = vrot.slane %v2756, 5
      %v2759 = vsel %vm1531, %v2754, %v2758
      %v2760 = vshrl.u32 %v2594, 16
      %v2762 = vrot.slane %v2760, 4
      %v2763 = vor.u32 %v2762, %v2758
      %v2764 = vrot.slane %v2763, 4
      %v2766 = vshll.u32 %v2595, 16
      %v2768 = vrot.slane %v2766, 5
      %v2769 = vsel %vm1531, %v2764, %v2768
      %v2771 = vshrl.u32 %v2596, 16
      %v2773 = vrot.slane %v2771, 4
      %v2774 = vshll.u32 %v2596, 16
      %v2776 = vrot.slane %v2774, 5
      %v2777 = vor.u32 %v2773, %v2776
      %v2778 = vrot.slane %v2777, 4
      %v2780 = vshll.u32 %v2597, 16
      %v2782 = vrot.slane %v2780, 5
      %v2783 = vsel %vm1531, %v2778, %v2782
      %v2784 = vshrl.u32 %v2597, 16
      %v2786 = vrot.slane %v2784, 4
      %v2787 = vor.u32 %v2786, %v2782
      %v2788 = vrot.slane %v2787, 4
      %v2790 = vshll.u32 %v2598, 16
      %v2792 = vrot.slane %v2790, 5
      %v2793 = vsel %vm1531, %v2788, %v2792
      %v2795 = vshrl.u32 %v2599, 16
      %v2797 = vrot.slane %v2795, 4
      %v2798 = vshll.u32 %v2599, 16
      %v2800 = vrot.slane %v2798, 5
      %v2801 = vor.u32 %v2797, %v2800
      %v2802 = vrot.slane %v2801, 4
      %v2804 = vshll.u32 %v2600, 16
      %v2806 = vrot.slane %v2804, 5
      %v2807 = vsel %vm1531, %v2802, %v2806
      %v2808 = vshrl.u32 %v2600, 16
      %v2810 = vrot.slane %v2808, 4
      %v2811 = vor.u32 %v2810, %v2806
      %v2812 = vrot.slane %v2811, 4
      %v2814 = vshll.u32 %v2601, 16
      %v2816 = vrot.slane %v2814, 5
      %v2817 = vsel %vm1531, %v2812, %v2816
      %v2819 = vshrl.u32 %v2602, 16
      %v2821 = vrot.slane %v2819, 4
      %v2822 = vshll.u32 %v2602, 16
      %v2824 = vrot.slane %v2822, 5
      %v2825 = vor.u32 %v2821, %v2824
      %v2826 = vrot.slane %v2825, 4
      %v2828 = vshll.u32 %v2603, 16
      %v2830 = vrot.slane %v2828, 5
      %v2831 = vsel %vm1531, %v2826, %v2830
      %v2832 = vshrl.u32 %v2603, 16
      %v2834 = vrot.slane %v2832, 4
      %v2835 = vor.u32 %v2834, %v2830
      %v2836 = vrot.slane %v2835, 4
      %v2838 = vshll.u32 %v2604, 16
      %v2840 = vrot.slane %v2838, 5
      %v2841 = vsel %vm1531, %v2836, %v2840
      %v2843 = vshrl.u32 %v2605, 16
      %v2845 = vrot.slane %v2843, 4
      %v2846 = vshll.u32 %v2605, 16
      %v2848 = vrot.slane %v2846, 5
      %v2849 = vor.u32 %v2845, %v2848
      %v2850 = vrot.slane %v2849, 4
      %v2852 = vshll.u32 %v2606, 16
      %v2854 = vrot.slane %v2852, 5
      %v2855 = vsel %vm1531, %v2850, %v2854
      %v2856 = vshrl.u32 %v2606, 16
      %v2858 = vrot.slane %v2856, 4
      %v2859 = vor.u32 %v2858, %v2854
      %v2860 = vrot.slane %v2859, 4
      %v2862 = vshll.u32 %v2607, 16
      %v2864 = vrot.slane %v2862, 5
      %v2865 = vsel %vm1531, %v2860, %v2864
      %v2867 = vshrl.u32 %v2608, 16
      %v2869 = vrot.slane %v2867, 4
      %v2870 = vshll.u32 %v2608, 16
      %v2872 = vrot.slane %v2870, 5
      %v2873 = vor.u32 %v2869, %v2872
      %v2874 = vrot.slane %v2873, 4
      %v2876 = vshll.u32 %v2609, 16
      %v2878 = vrot.slane %v2876, 5
      %v2879 = vsel %vm1531, %v2874, %v2878
      %v2880 = vshrl.u32 %v2609, 16
      %v2882 = vrot.slane %v2880, 4
      %v2883 = vor.u32 %v2882, %v2878
      %v2884 = vrot.slane %v2883, 4
      %v2886 = vshll.u32 %v2610, 16
      %v2888 = vrot.slane %v2886, 5
      %v2889 = vsel %vm1531, %v2884, %v2888
      %v2891 = vshrl.u32 %v2611, 16
      %v2893 = vrot.slane %v2891, 4
      %v2894 = vshll.u32 %v2611, 16
      %v2896 = vrot.slane %v2894, 5
      %v2897 = vor.u32 %v2893, %v2896
      %v2898 = vrot.slane %v2897, 4
      %v2900 = vshll.u32 %v2612, 16
      %v2902 = vrot.slane %v2900, 5
      %v2903 = vsel %vm1531, %v2898, %v2902
      %v2904 = vshrl.u32 %v2612, 16
      %v2906 = vrot.slane %v2904, 4
      %v2907 = vor.u32 %v2906, %v2902
      %v2908 = vrot.slane %v2907, 4
      %v2910 = vshll.u32 %v2613, 16
      %v2912 = vrot.slane %v2910, 5
      %v2913 = vsel %vm1531, %v2908, %v2912
      %v2915 = vshrl.u32 %v2614, 16
      %v2917 = vrot.slane %v2915, 4
      %v2918 = vshll.u32 %v2614, 16
      %v2920 = vrot.slane %v2918, 5
      %v2921 = vor.u32 %v2917, %v2920
      %v2922 = vrot.slane %v2921, 4
      %v2924 = vshll.u32 %v2615, 16
      %v2926 = vrot.slane %v2924, 5
      %v2927 = vsel %vm1531, %v2922, %v2926
      %v2928 = vshrl.u32 %v2615, 16
      %v2930 = vrot.slane %v2928, 4
      %v2931 = vor.u32 %v2930, %v2926
      %v2932 = vrot.slane %v2931, 4
      %v2934 = vshll.u32 %v2616, 16
      %v2936 = vrot.slane %v2934, 5
      %v2937 = vsel %vm1531, %v2932, %v2936
      %v2939 = vshrl.u32 %v2617, 16
      %v2941 = vrot.slane %v2939, 4
      %v2942 = vshll.u32 %v2617, 16
      %v2944 = vrot.slane %v2942, 5
      %v2945 = vor.u32 %v2941, %v2944
      %v2946 = vrot.slane %v2945, 4
      %v2948 = vshll.u32 %v2618, 16
      %v2950 = vrot.slane %v2948, 5
      %v2951 = vsel %vm1531, %v2946, %v2950
      %v2952 = vshrl.u32 %v2618, 16
      %v2954 = vrot.slane %v2952, 4
      %v2955 = vor.u32 %v2954, %v2950
      %v2956 = vrot.slane %v2955, 4
      %v2958 = vshll.u32 %v2619, 16
      %v2960 = vrot.slane %v2958, 5
      %v2961 = vsel %vm1531, %v2956, %v2960
      %v2963 = vshrl.u32 %v2620, 16
      %v2965 = vrot.slane %v2963, 4
      %v2966 = vshll.u32 %v2620, 16
      %v2968 = vrot.slane %v2966, 5
      %v2969 = vor.u32 %v2965, %v2968
      %v2970 = vrot.slane %v2969, 4
      %v2972 = vshll.u32 %v2621, 16
      %v2974 = vrot.slane %v2972, 5
      %v2975 = vsel %vm1531, %v2970, %v2974
      %v2976 = vshrl.u32 %v2621, 16
      %v2978 = vrot.slane %v2976, 4
      %v2979 = vor.u32 %v2978, %v2974
      %v2980 = vrot.slane %v2979, 4
      %v2982 = vshll.u32 %v2622, 16
      %v2984 = vrot.slane %v2982, 5
      %v2985 = vsel %vm1531, %v2980, %v2984
      %v2987 = vshrl.u32 %v2623, 16
      %v2989 = vrot.slane %v2987, 4
      %v2990 = vshll.u32 %v2623, 16
      %v2992 = vrot.slane %v2990, 5
      %v2993 = vor.u32 %v2989, %v2992
      %v2994 = vrot.slane %v2993, 4
      %v2996 = vshll.u32 %v2624, 16
      %v2998 = vrot.slane %v2996, 5
      %v2999 = vsel %vm1531, %v2994, %v2998
      %v3000 = vshrl.u32 %v2624, 16
      %v3002 = vrot.slane %v3000, 4
      %v3003 = vor.u32 %v3002, %v2998
      %v3004 = vrot.slane %v3003, 4
      %v3006 = vshll.u32 %v2625, 16
      %v3008 = vrot.slane %v3006, 5
      %v3009 = vsel %vm1531, %v3004, %v3008
      %3010 = vrot.lane.b32.xlu0 %v2639, 32
      %v3011 = vpop.permute.xlu0 %3010
      %3012 = vrot.lane.b32.xlu0 %v2649, 32
      %v3013 = vpop.permute.xlu0 %3012
      %3014 = vrot.lane.b32.xlu0 %v2663, 32
      %v3015 = vpop.permute.xlu0 %3014
      %3016 = vrot.lane.b32.xlu0 %v2673, 32
      %v3017 = vpop.permute.xlu0 %3016
      %3018 = vrot.lane.b32.xlu0 %v2687, 32
      %v3019 = vpop.permute.xlu0 %3018
      %3020 = vrot.lane.b32.xlu0 %v2697, 32
      %v3021 = vpop.permute.xlu0 %3020
      %3022 = vrot.lane.b32.xlu0 %v2711, 32
      %v3023 = vpop.permute.xlu0 %3022
      %3024 = vrot.lane.b32.xlu0 %v2721, 32
      %v3025 = vpop.permute.xlu0 %3024
      %3026 = vrot.lane.b32.xlu0 %v2735, 32
      %v3027 = vpop.permute.xlu0 %3026
      %3028 = vrot.lane.b32.xlu0 %v2745, 32
      %v3029 = vpop.permute.xlu0 %3028
      %3030 = vrot.lane.b32.xlu0 %v2759, 32
      %v3031 = vpop.permute.xlu0 %3030
      %3032 = vrot.lane.b32.xlu0 %v2769, 32
      %v3033 = vpop.permute.xlu0 %3032
      %3034 = vrot.lane.b32.xlu0 %v2783, 32
      %v3035 = vpop.permute.xlu0 %3034
      %3036 = vrot.lane.b32.xlu0 %v2793, 32
      %v3037 = vpop.permute.xlu0 %3036
      %3038 = vrot.lane.b32.xlu0 %v2807, 32
      %v3039 = vpop.permute.xlu0 %3038
      %3040 = vrot.lane.b32.xlu0 %v2817, 32
      %v3041 = vpop.permute.xlu0 %3040
      %3042 = vrot.lane.b32.xlu0 %v2831, 32
      %v3043 = vpop.permute.xlu0 %3042
      %3044 = vrot.lane.b32.xlu0 %v2841, 32
      %v3045 = vpop.permute.xlu0 %3044
      %3046 = vrot.lane.b32.xlu0 %v2855, 32
      %v3047 = vpop.permute.xlu0 %3046
      %3048 = vrot.lane.b32.xlu0 %v2865, 32
      %v3049 = vpop.permute.xlu0 %3048
      %3050 = vrot.lane.b32.xlu0 %v2879, 32
      %v3051 = vpop.permute.xlu0 %3050
      %3052 = vrot.lane.b32.xlu0 %v2889, 32
      %v3053 = vpop.permute.xlu0 %3052
      %3054 = vrot.lane.b32.xlu0 %v2903, 32
      %v3055 = vpop.permute.xlu0 %3054
      %3056 = vrot.lane.b32.xlu0 %v2913, 32
      %v3057 = vpop.permute.xlu0 %3056
      %3058 = vrot.lane.b32.xlu0 %v2927, 32
      %v3059 = vpop.permute.xlu0 %3058
      %3060 = vrot.lane.b32.xlu0 %v2937, 32
      %v3061 = vpop.permute.xlu0 %3060
      %3062 = vrot.lane.b32.xlu0 %v2951, 32
      %v3063 = vpop.permute.xlu0 %3062
      %3064 = vrot.lane.b32.xlu0 %v2961, 32
      %v3065 = vpop.permute.xlu0 %3064
      %3066 = vrot.lane.b32.xlu0 %v2975, 32
      %v3067 = vpop.permute.xlu0 %3066
      %3068 = vrot.lane.b32.xlu0 %v2985, 32
      %v3069 = vpop.permute.xlu0 %3068
      %3070 = vrot.lane.b32.xlu0 %v2999, 32
      %v3071 = vpop.permute.xlu0 %3070
      %3072 = vrot.lane.b32.xlu0 %v3009, 32
      %v3073 = vpop.permute.xlu0 %3072
      %vm3106 = vcmask 322816
      %3107 = vst.msk [vmem:[#allocation3] sm:$0xf] %vm3106, %v3011
      %3108 = vst.msk [vmem:[#allocation3 + $0x4] sm:$0xf] %vm3106, %v3013
      %3109 = vst.msk [vmem:[#allocation3 + $0x8] sm:$0xf] %vm3106, %v3015
      %3110 = vst.msk [vmem:[#allocation3 + $0xc] sm:$0xf] %vm3106, %v3017
      %3111 = vst.msk [vmem:[#allocation3 + $0x10] sm:$0xf] %vm3106, %v3019
      %3112 = vst.msk [vmem:[#allocation3 + $0x14] sm:$0xf] %vm3106, %v3021
      %3113 = vst.msk [vmem:[#allocation3 + $0x18] sm:$0xf] %vm3106, %v3023
      %3114 = vst.msk [vmem:[#allocation3 + $0x1c] sm:$0xf] %vm3106, %v3025
      %3115 = vst.msk [vmem:[#allocation3 + $0x20] sm:$0xf] %vm3106, %v3027
      %3116 = vst.msk [vmem:[#allocation3 + $0x24] sm:$0xf] %vm3106, %v3029
      %3117 = vst.msk [vmem:[#allocation3 + $0x28] sm:$0xf] %vm3106, %v3031
      %3118 = vst.msk [vmem:[#allocation3 + $0x2c] sm:$0xf] %vm3106, %v3033
      %3119 = vst.msk [vmem:[#allocation3 + $0x30] sm:$0xf] %vm3106, %v3035
      %3120 = vst.msk [vmem:[#allocation3 + $0x34] sm:$0xf] %vm3106, %v3037
      %3121 = vst.msk [vmem:[#allocation3 + $0x38] sm:$0xf] %vm3106, %v3039
      %3122 = vst.msk [vmem:[#allocation3 + $0x3c] sm:$0xf] %vm3106, %v3041
      %3123 = vst.msk [vmem:[#allocation3 + $0x40] sm:$0xf] %vm3106, %v3043
      %3124 = vst.msk [vmem:[#allocation3 + $0x44] sm:$0xf] %vm3106, %v3045
      %3125 = vst.msk [vmem:[#allocation3 + $0x48] sm:$0xf] %vm3106, %v3047
      %3126 = vst.msk [vmem:[#allocation3 + $0x4c] sm:$0xf] %vm3106, %v3049
      %3127 = vst.msk [vmem:[#allocation3 + $0x50] sm:$0xf] %vm3106, %v3051
      %3128 = vst.msk [vmem:[#allocation3 + $0x54] sm:$0xf] %vm3106, %v3053
      %3129 = vst.msk [vmem:[#allocation3 + $0x58] sm:$0xf] %vm3106, %v3055
      %3130 = vst.msk [vmem:[#allocation3 + $0x5c] sm:$0xf] %vm3106, %v3057
      %3131 = vst.msk [vmem:[#allocation3 + $0x60] sm:$0xf] %vm3106, %v3059
      %3132 = vst.msk [vmem:[#allocation3 + $0x64] sm:$0xf] %vm3106, %v3061
      %3133 = vst.msk [vmem:[#allocation3 + $0x68] sm:$0xf] %vm3106, %v3063
      %3134 = vst.msk [vmem:[#allocation3 + $0x6c] sm:$0xf] %vm3106, %v3065
      %3135 = vst.msk [vmem:[#allocation3 + $0x70] sm:$0xf] %vm3106, %v3067
      %3136 = vst.msk [vmem:[#allocation3 + $0x74] sm:$0xf] %vm3106, %v3069
      %3137 = vst.msk [vmem:[#allocation3 + $0x78] sm:$0xf] %vm3106, %v3071
      %3138 = vst.msk [vmem:[#allocation3 + $0x7c] sm:$0xf] %vm3106, %v3073
      %v3139 = vld [vmem:[%s1184] sm:$0xe]
      %v3140 = vld [vmem:[%s1184 + $0x4] sm:$0xf]
      %v3141 = vld [vmem:[%s1184 + $0x8] sm:$0x1]
      %v3142 = vld [vmem:[%s1184 + $0xc] sm:$0xe]
      %v3143 = vld [vmem:[%s1184 + $0x10] sm:$0xf]
      %v3144 = vld [vmem:[%s1184 + $0x14] sm:$0x1]
      %v3145 = vld [vmem:[%s1184 + $0x18] sm:$0xe]
      %v3146 = vld [vmem:[%s1184 + $0x1c] sm:$0xf]
      %v3147 = vld [vmem:[%s1184 + $0x20] sm:$0x1]
      %v3148 = vld [vmem:[%s1184 + $0x24] sm:$0xe]
      %v3149 = vld [vmem:[%s1184 + $0x28] sm:$0xf]
      %v3150 = vld [vmem:[%s1184 + $0x2c] sm:$0x1]
      %v3151 = vld [vmem:[%s1184 + $0x30] sm:$0xe]
      %v3152 = vld [vmem:[%s1184 + $0x34] sm:$0xf]
      %v3153 = vld [vmem:[%s1184 + $0x38] sm:$0x1]
      %v3154 = vld [vmem:[%s1184 + $0x3c] sm:$0xe]
      %v3155 = vld [vmem:[%s1184 + $0x40] sm:$0xf]
      %v3156 = vld [vmem:[%s1184 + $0x44] sm:$0x1]
      %v3157 = vld [vmem:[%s1184 + $0x48] sm:$0xe]
      %v3158 = vld [vmem:[%s1184 + $0x4c] sm:$0xf]
      %v3159 = vld [vmem:[%s1184 + $0x50] sm:$0x1]
      %v3160 = vld [vmem:[%s1184 + $0x54] sm:$0xe]
      %v3161 = vld [vmem:[%s1184 + $0x58] sm:$0xf]
      %v3162 = vld [vmem:[%s1184 + $0x5c] sm:$0x1]
      %v3163 = vld [vmem:[%s1184 + $0x60] sm:$0xe]
      %v3164 = vld [vmem:[%s1184 + $0x64] sm:$0xf]
      %v3165 = vld [vmem:[%s1184 + $0x68] sm:$0x1]
      %v3166 = vld [vmem:[%s1184 + $0x6c] sm:$0xe]
      %v3167 = vld [vmem:[%s1184 + $0x70] sm:$0xf]
      %v3168 = vld [vmem:[%s1184 + $0x74] sm:$0x1]
      %v3169 = vld [vmem:[%s1184 + $0x78] sm:$0xe]
      %v3170 = vld [vmem:[%s1184 + $0x7c] sm:$0xf]
      %v3171 = vld [vmem:[%s1184 + $0x80] sm:$0x1]
      %v3172 = vld [vmem:[%s1184 + $0x84] sm:$0xe]
      %v3173 = vld [vmem:[%s1184 + $0x88] sm:$0xf]
      %v3174 = vld [vmem:[%s1184 + $0x8c] sm:$0x1]
      %v3175 = vld [vmem:[%s1184 + $0x90] sm:$0xe]
      %v3176 = vld [vmem:[%s1184 + $0x94] sm:$0xf]
      %v3177 = vld [vmem:[%s1184 + $0x98] sm:$0x1]
      %v3178 = vld [vmem:[%s1184 + $0x9c] sm:$0xe]
      %v3179 = vld [vmem:[%s1184 + $0xa0] sm:$0xf]
      %v3180 = vld [vmem:[%s1184 + $0xa4] sm:$0x1]
      %v3181 = vld [vmem:[%s1184 + $0xa8] sm:$0xe]
      %v3182 = vld [vmem:[%s1184 + $0xac] sm:$0xf]
      %v3183 = vld [vmem:[%s1184 + $0xb0] sm:$0x1]
      %v3184 = vld [vmem:[%s1184 + $0xb4] sm:$0xe]
      %v3185 = vld [vmem:[%s1184 + $0xb8] sm:$0xf]
      %v3186 = vld [vmem:[%s1184 + $0xbc] sm:$0x1]
      %v3235 = vrot.slane %v3139, 5
      %v3236 = vrot.slane %v3235, 4
      %v3237 = vrot.slane %v3140, 5
      %v3238 = vsel %vm2143, %v3236, %v3237
      %v3239 = vrot.slane %v3237, 4
      %v3240 = vrot.slane %v3141, 5
      %v3241 = vsel %vm2143, %v3239, %v3240
      %v3242 = vrot.slane %v3142, 5
      %v3243 = vrot.slane %v3242, 4
      %v3244 = vrot.slane %v3143, 5
      %v3245 = vsel %vm2143, %v3243, %v3244
      %v3246 = vrot.slane %v3244, 4
      %v3247 = vrot.slane %v3144, 5
      %v3248 = vsel %vm2143, %v3246, %v3247
      %v3249 = vrot.slane %v3145, 5
      %v3250 = vrot.slane %v3249, 4
      %v3251 = vrot.slane %v3146, 5
      %v3252 = vsel %vm2143, %v3250, %v3251
      %v3253 = vrot.slane %v3251, 4
      %v3254 = vrot.slane %v3147, 5
      %v3255 = vsel %vm2143, %v3253, %v3254
      %v3256 = vrot.slane %v3148, 5
      %v3257 = vrot.slane %v3256, 4
      %v3258 = vrot.slane %v3149, 5
      %v3259 = vsel %vm2143, %v3257, %v3258
      %v3260 = vrot.slane %v3258, 4
      %v3261 = vrot.slane %v3150, 5
      %v3262 = vsel %vm2143, %v3260, %v3261
      %v3263 = vrot.slane %v3151, 5
      %v3264 = vrot.slane %v3263, 4
      %v3265 = vrot.slane %v3152, 5
      %v3266 = vsel %vm2143, %v3264, %v3265
      %v3267 = vrot.slane %v3265, 4
      %v3268 = vrot.slane %v3153, 5
      %v3269 = vsel %vm2143, %v3267, %v3268
      %v3270 = vrot.slane %v3154, 5
      %v3271 = vrot.slane %v3270, 4
      %v3272 = vrot.slane %v3155, 5
      %v3273 = vsel %vm2143, %v3271, %v3272
      %v3274 = vrot.slane %v3272, 4
      %v3275 = vrot.slane %v3156, 5
      %v3276 = vsel %vm2143, %v3274, %v3275
      %v3277 = vrot.slane %v3157, 5
      %v3278 = vrot.slane %v3277, 4
      %v3279 = vrot.slane %v3158, 5
      %v3280 = vsel %vm2143, %v3278, %v3279
      %v3281 = vrot.slane %v3279, 4
      %v3282 = vrot.slane %v3159, 5
      %v3283 = vsel %vm2143, %v3281, %v3282
      %v3284 = vrot.slane %v3160, 5
      %v3285 = vrot.slane %v3284, 4
      %v3286 = vrot.slane %v3161, 5
      %v3287 = vsel %vm2143, %v3285, %v3286
      %v3288 = vrot.slane %v3286, 4
      %v3289 = vrot.slane %v3162, 5
      %v3290 = vsel %vm2143, %v3288, %v3289
      %v3291 = vrot.slane %v3163, 5
      %v3292 = vrot.slane %v3291, 4
      %v3293 = vrot.slane %v3164, 5
      %v3294 = vsel %vm2143, %v3292, %v3293
      %v3295 = vrot.slane %v3293, 4
      %v3296 = vrot.slane %v3165, 5
      %v3297 = vsel %vm2143, %v3295, %v3296
      %v3298 = vrot.slane %v3166, 5
      %v3299 = vrot.slane %v3298, 4
      %v3300 = vrot.slane %v3167, 5
      %v3301 = vsel %vm2143, %v3299, %v3300
      %v3302 = vrot.slane %v3300, 4
      %v3303 = vrot.slane %v3168, 5
      %v3304 = vsel %vm2143, %v3302, %v3303
      %v3305 = vrot.slane %v3169, 5
      %v3306 = vrot.slane %v3305, 4
      %v3307 = vrot.slane %v3170, 5
      %v3308 = vsel %vm2143, %v3306, %v3307
      %v3309 = vrot.slane %v3307, 4
      %v3310 = vrot.slane %v3171, 5
      %v3311 = vsel %vm2143, %v3309, %v3310
      %v3312 = vrot.slane %v3172, 5
      %v3313 = vrot.slane %v3312, 4
      %v3314 = vrot.slane %v3173, 5
      %v3315 = vsel %vm2143, %v3313, %v3314
      %v3316 = vrot.slane %v3314, 4
      %v3317 = vrot.slane %v3174, 5
      %v3318 = vsel %vm2143, %v3316, %v3317
      %v3319 = vrot.slane %v3175, 5
      %v3320 = vrot.slane %v3319, 4
      %v3321 = vrot.slane %v3176, 5
      %v3322 = vsel %vm2143, %v3320, %v3321
      %v3323 = vrot.slane %v3321, 4
      %v3324 = vrot.slane %v3177, 5
      %v3325 = vsel %vm2143, %v3323, %v3324
      %v3326 = vrot.slane %v3178, 5
      %v3327 = vrot.slane %v3326, 4
      %v3328 = vrot.slane %v3179, 5
      %v3329 = vsel %vm2143, %v3327, %v3328
      %v3330 = vrot.slane %v3328, 4
      %v3331 = vrot.slane %v3180, 5
      %v3332 = vsel %vm2143, %v3330, %v3331
      %v3333 = vrot.slane %v3181, 5
      %v3334 = vrot.slane %v3333, 4
      %v3335 = vrot.slane %v3182, 5
      %v3336 = vsel %vm2143, %v3334, %v3335
      %v3337 = vrot.slane %v3335, 4
      %v3338 = vrot.slane %v3183, 5
      %v3339 = vsel %vm2143, %v3337, %v3338
      %v3340 = vrot.slane %v3184, 5
      %v3341 = vrot.slane %v3340, 4
      %v3342 = vrot.slane %v3185, 5
      %v3343 = vsel %vm2143, %v3341, %v3342
      %v3344 = vrot.slane %v3342, 4
      %v3345 = vrot.slane %v3186, 5
      %v3346 = vsel %vm2143, %v3344, %v3345
      %3347 = vrot.lane.b32.xlu0 %v3238, 40
      %v3348 = vpop.permute.xlu0 %3347
      %3349 = vrot.lane.b32.xlu0 %v3241, 40
      %v3350 = vpop.permute.xlu0 %3349
      %3351 = vrot.lane.b32.xlu0 %v3245, 40
      %v3352 = vpop.permute.xlu0 %3351
      %3353 = vrot.lane.b32.xlu0 %v3248, 40
      %v3354 = vpop.permute.xlu0 %3353
      %3355 = vrot.lane.b32.xlu0 %v3252, 40
      %v3356 = vpop.permute.xlu0 %3355
      %3357 = vrot.lane.b32.xlu0 %v3255, 40
      %v3358 = vpop.permute.xlu0 %3357
      %3359 = vrot.lane.b32.xlu0 %v3259, 40
      %v3360 = vpop.permute.xlu0 %3359
      %3361 = vrot.lane.b32.xlu0 %v3262, 40
      %v3362 = vpop.permute.xlu0 %3361
      %3363 = vrot.lane.b32.xlu0 %v3266, 40
      %v3364 = vpop.permute.xlu0 %3363
      %3365 = vrot.lane.b32.xlu0 %v3269, 40
      %v3366 = vpop.permute.xlu0 %3365
      %3367 = vrot.lane.b32.xlu0 %v3273, 40
      %v3368 = vpop.permute.xlu0 %3367
      %3369 = vrot.lane.b32.xlu0 %v3276, 40
      %v3370 = vpop.permute.xlu0 %3369
      %3371 = vrot.lane.b32.xlu0 %v3280, 40
      %v3372 = vpop.permute.xlu0 %3371
      %3373 = vrot.lane.b32.xlu0 %v3283, 40
      %v3374 = vpop.permute.xlu0 %3373
      %3375 = vrot.lane.b32.xlu0 %v3287, 40
      %v3376 = vpop.permute.xlu0 %3375
      %3377 = vrot.lane.b32.xlu0 %v3290, 40
      %v3378 = vpop.permute.xlu0 %3377
      %3379 = vrot.lane.b32.xlu0 %v3294, 40
      %v3380 = vpop.permute.xlu0 %3379
      %3381 = vrot.lane.b32.xlu0 %v3297, 40
      %v3382 = vpop.permute.xlu0 %3381
      %3383 = vrot.lane.b32.xlu0 %v3301, 40
      %v3384 = vpop.permute.xlu0 %3383
      %3385 = vrot.lane.b32.xlu0 %v3304, 40
      %v3386 = vpop.permute.xlu0 %3385
      %3387 = vrot.lane.b32.xlu0 %v3308, 40
      %v3388 = vpop.permute.xlu0 %3387
      %3389 = vrot.lane.b32.xlu0 %v3311, 40
      %v3390 = vpop.permute.xlu0 %3389
      %3391 = vrot.lane.b32.xlu0 %v3315, 40
      %v3392 = vpop.permute.xlu0 %3391
      %3393 = vrot.lane.b32.xlu0 %v3318, 40
      %v3394 = vpop.permute.xlu0 %3393
      %3395 = vrot.lane.b32.xlu0 %v3322, 40
      %v3396 = vpop.permute.xlu0 %3395
      %3397 = vrot.lane.b32.xlu0 %v3325, 40
      %v3398 = vpop.permute.xlu0 %3397
      %3399 = vrot.lane.b32.xlu0 %v3329, 40
      %v3400 = vpop.permute.xlu0 %3399
      %3401 = vrot.lane.b32.xlu0 %v3332, 40
      %v3402 = vpop.permute.xlu0 %3401
      %3403 = vrot.lane.b32.xlu0 %v3336, 40
      %v3404 = vpop.permute.xlu0 %3403
      %3405 = vrot.lane.b32.xlu0 %v3339, 40
      %v3406 = vpop.permute.xlu0 %3405
      %3407 = vrot.lane.b32.xlu0 %v3343, 40
      %v3408 = vpop.permute.xlu0 %3407
      %3409 = vrot.lane.b32.xlu0 %v3346, 40
      %v3410 = vpop.permute.xlu0 %3409
      %vm3443 = vcmask 388416
      %3444 = vst.msk [vmem:[#allocation3] sm:$0xf] %vm3443, %v3348
      %3445 = vst.msk [vmem:[#allocation3 + $0x4] sm:$0xf] %vm3443, %v3350
      %3446 = vst.msk [vmem:[#allocation3 + $0x8] sm:$0xf] %vm3443, %v3352
      %3447 = vst.msk [vmem:[#allocation3 + $0xc] sm:$0xf] %vm3443, %v3354
      %3448 = vst.msk [vmem:[#allocation3 + $0x10] sm:$0xf] %vm3443, %v3356
      %3449 = vst.msk [vmem:[#allocation3 + $0x14] sm:$0xf] %vm3443, %v3358
      %3450 = vst.msk [vmem:[#allocation3 + $0x18] sm:$0xf] %vm3443, %v3360
      %3451 = vst.msk [vmem:[#allocation3 + $0x1c] sm:$0xf] %vm3443, %v3362
      %3452 = vst.msk [vmem:[#allocation3 + $0x20] sm:$0xf] %vm3443, %v3364
      %3453 = vst.msk [vmem:[#allocation3 + $0x24] sm:$0xf] %vm3443, %v3366
      %3454 = vst.msk [vmem:[#allocation3 + $0x28] sm:$0xf] %vm3443, %v3368
      %3455 = vst.msk [vmem:[#allocation3 + $0x2c] sm:$0xf] %vm3443, %v3370
      %3456 = vst.msk [vmem:[#allocation3 + $0x30] sm:$0xf] %vm3443, %v3372
      %3457 = vst.msk [vmem:[#allocation3 + $0x34] sm:$0xf] %vm3443, %v3374
      %3458 = vst.msk [vmem:[#allocation3 + $0x38] sm:$0xf] %vm3443, %v3376
      %3459 = vst.msk [vmem:[#allocation3 + $0x3c] sm:$0xf] %vm3443, %v3378
      %3460 = vst.msk [vmem:[#allocation3 + $0x40] sm:$0xf] %vm3443, %v3380
      %3461 = vst.msk [vmem:[#allocation3 + $0x44] sm:$0xf] %vm3443, %v3382
      %3462 = vst.msk [vmem:[#allocation3 + $0x48] sm:$0xf] %vm3443, %v3384
      %3463 = vst.msk [vmem:[#allocation3 + $0x4c] sm:$0xf] %vm3443, %v3386
      %3464 = vst.msk [vmem:[#allocation3 + $0x50] sm:$0xf] %vm3443, %v3388
      %3465 = vst.msk [vmem:[#allocation3 + $0x54] sm:$0xf] %vm3443, %v3390
      %3466 = vst.msk [vmem:[#allocation3 + $0x58] sm:$0xf] %vm3443, %v3392
      %3467 = vst.msk [vmem:[#allocation3 + $0x5c] sm:$0xf] %vm3443, %v3394
      %3468 = vst.msk [vmem:[#allocation3 + $0x60] sm:$0xf] %vm3443, %v3396
      %3469 = vst.msk [vmem:[#allocation3 + $0x64] sm:$0xf] %vm3443, %v3398
      %3470 = vst.msk [vmem:[#allocation3 + $0x68] sm:$0xf] %vm3443, %v3400
      %3471 = vst.msk [vmem:[#allocation3 + $0x6c] sm:$0xf] %vm3443, %v3402
      %3472 = vst.msk [vmem:[#allocation3 + $0x70] sm:$0xf] %vm3443, %v3404
      %3473 = vst.msk [vmem:[#allocation3 + $0x74] sm:$0xf] %vm3443, %v3406
      %3474 = vst.msk [vmem:[#allocation3 + $0x78] sm:$0xf] %vm3443, %v3408
      %3475 = vst.msk [vmem:[#allocation3 + $0x7c] sm:$0xf] %vm3443, %v3410
      %s3476 = scalar_lea.vmem [#allocation2], 24
      %v3477 = vld [vmem:[%s3476] sm:$0xf]
      %v3478 = vld [vmem:[%s3476 + $0x4] sm:$0xf]
      %v3479 = vld [vmem:[%s3476 + $0xc] sm:$0xf]
      %v3480 = vld [vmem:[%s3476 + $0x10] sm:$0xf]
      %v3481 = vld [vmem:[%s3476 + $0x18] sm:$0xf]
      %v3482 = vld [vmem:[%s3476 + $0x1c] sm:$0xf]
      %v3483 = vld [vmem:[%s3476 + $0x24] sm:$0xf]
      %v3484 = vld [vmem:[%s3476 + $0x28] sm:$0xf]
      %v3485 = vld [vmem:[%s3476 + $0x30] sm:$0xf]
      %v3486 = vld [vmem:[%s3476 + $0x34] sm:$0xf]
      %v3487 = vld [vmem:[%s3476 + $0x3c] sm:$0xf]
      %v3488 = vld [vmem:[%s3476 + $0x40] sm:$0xf]
      %v3489 = vld [vmem:[%s3476 + $0x48] sm:$0xf]
      %v3490 = vld [vmem:[%s3476 + $0x4c] sm:$0xf]
      %v3491 = vld [vmem:[%s3476 + $0x54] sm:$0xf]
      %v3492 = vld [vmem:[%s3476 + $0x58] sm:$0xf]
      %v3493 = vld [vmem:[%s3476 + $0x60] sm:$0xf]
      %v3494 = vld [vmem:[%s3476 + $0x64] sm:$0xf]
      %v3495 = vld [vmem:[%s3476 + $0x6c] sm:$0xf]
      %v3496 = vld [vmem:[%s3476 + $0x70] sm:$0xf]
      %v3497 = vld [vmem:[%s3476 + $0x78] sm:$0xf]
      %v3498 = vld [vmem:[%s3476 + $0x7c] sm:$0xf]
      %v3499 = vld [vmem:[%s3476 + $0x84] sm:$0xf]
      %v3500 = vld [vmem:[%s3476 + $0x88] sm:$0xf]
      %v3501 = vld [vmem:[%s3476 + $0x90] sm:$0xf]
      %v3502 = vld [vmem:[%s3476 + $0x94] sm:$0xf]
      %v3503 = vld [vmem:[%s3476 + $0x9c] sm:$0xf]
      %v3504 = vld [vmem:[%s3476 + $0xa0] sm:$0xf]
      %v3505 = vld [vmem:[%s3476 + $0xa8] sm:$0xf]
      %v3506 = vld [vmem:[%s3476 + $0xac] sm:$0xf]
      %v3507 = vld [vmem:[%s3476 + $0xb4] sm:$0xf]
      %v3508 = vld [vmem:[%s3476 + $0xb8] sm:$0xf]
      %3541 = vrot.lane.b32.xlu0 %v3477, 48
      %v3542 = vpop.permute.xlu0 %3541
      %3543 = vrot.lane.b32.xlu0 %v3478, 48
      %v3544 = vpop.permute.xlu0 %3543
      %3545 = vrot.lane.b32.xlu0 %v3479, 48
      %v3546 = vpop.permute.xlu0 %3545
      %3547 = vrot.lane.b32.xlu0 %v3480, 48
      %v3548 = vpop.permute.xlu0 %3547
      %3549 = vrot.lane.b32.xlu0 %v3481, 48
      %v3550 = vpop.permute.xlu0 %3549
      %3551 = vrot.lane.b32.xlu0 %v3482, 48
      %v3552 = vpop.permute.xlu0 %3551
      %3553 = vrot.lane.b32.xlu0 %v3483, 48
      %v3554 = vpop.permute.xlu0 %3553
      %3555 = vrot.lane.b32.xlu0 %v3484, 48
      %v3556 = vpop.permute.xlu0 %3555
      %3557 = vrot.lane.b32.xlu0 %v3485, 48
      %v3558 = vpop.permute.xlu0 %3557
      %3559 = vrot.lane.b32.xlu0 %v3486, 48
      %v3560 = vpop.permute.xlu0 %3559
      %3561 = vrot.lane.b32.xlu0 %v3487, 48
      %v3562 = vpop.permute.xlu0 %3561
      %3563 = vrot.lane.b32.xlu0 %v3488, 48
      %v3564 = vpop.permute.xlu0 %3563
      %3565 = vrot.lane.b32.xlu0 %v3489, 48
      %v3566 = vpop.permute.xlu0 %3565
      %3567 = vrot.lane.b32.xlu0 %v3490, 48
      %v3568 = vpop.permute.xlu0 %3567
      %3569 = vrot.lane.b32.xlu0 %v3491, 48
      %v3570 = vpop.permute.xlu0 %3569
      %3571 = vrot.lane.b32.xlu0 %v3492, 48
      %v3572 = vpop.permute.xlu0 %3571
      %3573 = vrot.lane.b32.xlu0 %v3493, 48
      %v3574 = vpop.permute.xlu0 %3573
      %3575 = vrot.lane.b32.xlu0 %v3494, 48
      %v3576 = vpop.permute.xlu0 %3575
      %3577 = vrot.lane.b32.xlu0 %v3495, 48
      %v3578 = vpop.permute.xlu0 %3577
      %3579 = vrot.lane.b32.xlu0 %v3496, 48
      %v3580 = vpop.permute.xlu0 %3579
      %3581 = vrot.lane.b32.xlu0 %v3497, 48
      %v3582 = vpop.permute.xlu0 %3581
      %3583 = vrot.lane.b32.xlu0 %v3498, 48
      %v3584 = vpop.permute.xlu0 %3583
      %3585 = vrot.lane.b32.xlu0 %v3499, 48
      %v3586 = vpop.permute.xlu0 %3585
      %3587 = vrot.lane.b32.xlu0 %v3500, 48
      %v3588 = vpop.permute.xlu0 %3587
      %3589 = vrot.lane.b32.xlu0 %v3501, 48
      %v3590 = vpop.permute.xlu0 %3589
      %3591 = vrot.lane.b32.xlu0 %v3502, 48
      %v3592 = vpop.permute.xlu0 %3591
      %3593 = vrot.lane.b32.xlu0 %v3503, 48
      %v3594 = vpop.permute.xlu0 %3593
      %3595 = vrot.lane.b32.xlu0 %v3504, 48
      %v3596 = vpop.permute.xlu0 %3595
      %3597 = vrot.lane.b32.xlu0 %v3505, 48
      %v3598 = vpop.permute.xlu0 %3597
      %3599 = vrot.lane.b32.xlu0 %v3506, 48
      %v3600 = vpop.permute.xlu0 %3599
      %3601 = vrot.lane.b32.xlu0 %v3507, 48
      %v3602 = vpop.permute.xlu0 %3601
      %3603 = vrot.lane.b32.xlu0 %v3508, 48
      %v3604 = vpop.permute.xlu0 %3603
      %vm3637 = vcmask 454016
      %3638 = vst.msk [vmem:[#allocation3] sm:$0xf] %vm3637, %v3542
      %3639 = vst.msk [vmem:[#allocation3 + $0x4] sm:$0xf] %vm3637, %v3544
      %3640 = vst.msk [vmem:[#allocation3 + $0x8] sm:$0xf] %vm3637, %v3546
      %3641 = vst.msk [vmem:[#allocation3 + $0xc] sm:$0xf] %vm3637, %v3548
      %3642 = vst.msk [vmem:[#allocation3 + $0x10] sm:$0xf] %vm3637, %v3550
      %3643 = vst.msk [vmem:[#allocation3 + $0x14] sm:$0xf] %vm3637, %v3552
      %3644 = vst.msk [vmem:[#allocation3 + $0x18] sm:$0xf] %vm3637, %v3554
      %3645 = vst.msk [vmem:[#allocation3 + $0x1c] sm:$0xf] %vm3637, %v3556
      %3646 = vst.msk [vmem:[#allocation3 + $0x20] sm:$0xf] %vm3637, %v3558
      %3647 = vst.msk [vmem:[#allocation3 + $0x24] sm:$0xf] %vm3637, %v3560
      %3648 = vst.msk [vmem:[#allocation3 + $0x28] sm:$0xf] %vm3637, %v3562
      %3649 = vst.msk [vmem:[#allocation3 + $0x2c] sm:$0xf] %vm3637, %v3564
      %3650 = vst.msk [vmem:[#allocation3 + $0x30] sm:$0xf] %vm3637, %v3566
      %3651 = vst.msk [vmem:[#allocation3 + $0x34] sm:$0xf] %vm3637, %v3568
      %3652 = vst.msk [vmem:[#allocation3 + $0x38] sm:$0xf] %vm3637, %v3570
      %3653 = vst.msk [vmem:[#allocation3 + $0x3c] sm:$0xf] %vm3637, %v3572
      %3654 = vst.msk [vmem:[#allocation3 + $0x40] sm:$0xf] %vm3637, %v3574
      %3655 = vst.msk [vmem:[#allocation3 + $0x44] sm:$0xf] %vm3637, %v3576
      %3656 = vst.msk [vmem:[#allocation3 + $0x48] sm:$0xf] %vm3637, %v3578
      %3657 = vst.msk [vmem:[#allocation3 + $0x4c] sm:$0xf] %vm3637, %v3580
      %3658 = vst.msk [vmem:[#allocation3 + $0x50] sm:$0xf] %vm3637, %v3582
      %3659 = vst.msk [vmem:[#allocation3 + $0x54] sm:$0xf] %vm3637, %v3584
      %3660 = vst.msk [vmem:[#allocation3 + $0x58] sm:$0xf] %vm3637, %v3586
      %3661 = vst.msk [vmem:[#allocation3 + $0x5c] sm:$0xf] %vm3637, %v3588
      %3662 = vst.msk [vmem:[#allocation3 + $0x60] sm:$0xf] %vm3637, %v3590
      %3663 = vst.msk [vmem:[#allocation3 + $0x64] sm:$0xf] %vm3637, %v3592
      %3664 = vst.msk [vmem:[#allocation3 + $0x68] sm:$0xf] %vm3637, %v3594
      %3665 = vst.msk [vmem:[#allocation3 + $0x6c] sm:$0xf] %vm3637, %v3596
      %3666 = vst.msk [vmem:[#allocation3 + $0x70] sm:$0xf] %vm3637, %v3598
      %3667 = vst.msk [vmem:[#allocation3 + $0x74] sm:$0xf] %vm3637, %v3600
      %3668 = vst.msk [vmem:[#allocation3 + $0x78] sm:$0xf] %vm3637, %v3602
      %3669 = vst.msk [vmem:[#allocation3 + $0x7c] sm:$0xf] %vm3637, %v3604
      %v3670 = vld [vmem:[%s3476] sm:$0xf]
      %v3671 = vld [vmem:[%s3476 + $0x4] sm:$0xf]
      %v3672 = vld [vmem:[%s3476 + $0x8] sm:$0x1]
      %v3673 = vld [vmem:[%s3476 + $0xc] sm:$0xf]
      %v3674 = vld [vmem:[%s3476 + $0x10] sm:$0xf]
      %v3675 = vld [vmem:[%s3476 + $0x14] sm:$0x1]
      %v3676 = vld [vmem:[%s3476 + $0x18] sm:$0xf]
      %v3677 = vld [vmem:[%s3476 + $0x1c] sm:$0xf]
      %v3678 = vld [vmem:[%s3476 + $0x20] sm:$0x1]
      %v3679 = vld [vmem:[%s3476 + $0x24] sm:$0xf]
      %v3680 = vld [vmem:[%s3476 + $0x28] sm:$0xf]
      %v3681 = vld [vmem:[%s3476 + $0x2c] sm:$0x1]
      %v3682 = vld [vmem:[%s3476 + $0x30] sm:$0xf]
      %v3683 = vld [vmem:[%s3476 + $0x34] sm:$0xf]
      %v3684 = vld [vmem:[%s3476 + $0x38] sm:$0x1]
      %v3685 = vld [vmem:[%s3476 + $0x3c] sm:$0xf]
      %v3686 = vld [vmem:[%s3476 + $0x40] sm:$0xf]
      %v3687 = vld [vmem:[%s3476 + $0x44] sm:$0x1]
      %v3688 = vld [vmem:[%s3476 + $0x48] sm:$0xf]
      %v3689 = vld [vmem:[%s3476 + $0x4c] sm:$0xf]
      %v3690 = vld [vmem:[%s3476 + $0x50] sm:$0x1]
      %v3691 = vld [vmem:[%s3476 + $0x54] sm:$0xf]
      %v3692 = vld [vmem:[%s3476 + $0x58] sm:$0xf]
      %v3693 = vld [vmem:[%s3476 + $0x5c] sm:$0x1]
      %v3694 = vld [vmem:[%s3476 + $0x60] sm:$0xf]
      %v3695 = vld [vmem:[%s3476 + $0x64] sm:$0xf]
      %v3696 = vld [vmem:[%s3476 + $0x68] sm:$0x1]
      %v3697 = vld [vmem:[%s3476 + $0x6c] sm:$0xf]
      %v3698 = vld [vmem:[%s3476 + $0x70] sm:$0xf]
      %v3699 = vld [vmem:[%s3476 + $0x74] sm:$0x1]
      %v3700 = vld [vmem:[%s3476 + $0x78] sm:$0xf]
      %v3701 = vld [vmem:[%s3476 + $0x7c] sm:$0xf]
      %v3702 = vld [vmem:[%s3476 + $0x80] sm:$0x1]
      %v3703 = vld [vmem:[%s3476 + $0x84] sm:$0xf]
      %v3704 = vld [vmem:[%s3476 + $0x88] sm:$0xf]
      %v3705 = vld [vmem:[%s3476 + $0x8c] sm:$0x1]
      %v3706 = vld [vmem:[%s3476 + $0x90] sm:$0xf]
      %v3707 = vld [vmem:[%s3476 + $0x94] sm:$0xf]
      %v3708 = vld [vmem:[%s3476 + $0x98] sm:$0x1]
      %v3709 = vld [vmem:[%s3476 + $0x9c] sm:$0xf]
      %v3710 = vld [vmem:[%s3476 + $0xa0] sm:$0xf]
      %v3711 = vld [vmem:[%s3476 + $0xa4] sm:$0x1]
      %v3712 = vld [vmem:[%s3476 + $0xa8] sm:$0xf]
      %v3713 = vld [vmem:[%s3476 + $0xac] sm:$0xf]
      %v3714 = vld [vmem:[%s3476 + $0xb0] sm:$0x1]
      %v3715 = vld [vmem:[%s3476 + $0xb4] sm:$0xf]
      %v3716 = vld [vmem:[%s3476 + $0xb8] sm:$0xf]
      %v3717 = vld [vmem:[%s3476 + $0xbc] sm:$0x1]
      %v3719 = vshrl.u32 %v3670, 16
      %v3721 = vrot.slane %v3719, 4
      %v3722 = vshll.u32 %v3670, 16
      %v3724 = vrot.slane %v3722, 5
      %v3725 = vor.u32 %v3721, %v3724
      %v3726 = vrot.slane %v3725, 4
      %v3728 = vshll.u32 %v3671, 16
      %v3730 = vrot.slane %v3728, 5
      %v3731 = vsel %vm1531, %v3726, %v3730
      %v3732 = vshrl.u32 %v3671, 16
      %v3734 = vrot.slane %v3732, 4
      %v3735 = vor.u32 %v3734, %v3730
      %v3736 = vrot.slane %v3735, 4
      %v3738 = vshll.u32 %v3672, 16
      %v3740 = vrot.slane %v3738, 5
      %v3741 = vsel %vm1531, %v3736, %v3740
      %v3743 = vshrl.u32 %v3673, 16
      %v3745 = vrot.slane %v3743, 4
      %v3746 = vshll.u32 %v3673, 16
      %v3748 = vrot.slane %v3746, 5
      %v3749 = vor.u32 %v3745, %v3748
      %v3750 = vrot.slane %v3749, 4
      %v3752 = vshll.u32 %v3674, 16
      %v3754 = vrot.slane %v3752, 5
      %v3755 = vsel %vm1531, %v3750, %v3754
      %v3756 = vshrl.u32 %v3674, 16
      %v3758 = vrot.slane %v3756, 4
      %v3759 = vor.u32 %v3758, %v3754
      %v3760 = vrot.slane %v3759, 4
      %v3762 = vshll.u32 %v3675, 16
      %v3764 = vrot.slane %v3762, 5
      %v3765 = vsel %vm1531, %v3760, %v3764
      %v3767 = vshrl.u32 %v3676, 16
      %v3769 = vrot.slane %v3767, 4
      %v3770 = vshll.u32 %v3676, 16
      %v3772 = vrot.slane %v3770, 5
      %v3773 = vor.u32 %v3769, %v3772
      %v3774 = vrot.slane %v3773, 4
      %v3776 = vshll.u32 %v3677, 16
      %v3778 = vrot.slane %v3776, 5
      %v3779 = vsel %vm1531, %v3774, %v3778
      %v3780 = vshrl.u32 %v3677, 16
      %v3782 = vrot.slane %v3780, 4
      %v3783 = vor.u32 %v3782, %v3778
      %v3784 = vrot.slane %v3783, 4
      %v3786 = vshll.u32 %v3678, 16
      %v3788 = vrot.slane %v3786, 5
      %v3789 = vsel %vm1531, %v3784, %v3788
      %v3791 = vshrl.u32 %v3679, 16
      %v3793 = vrot.slane %v3791, 4
      %v3794 = vshll.u32 %v3679, 16
      %v3796 = vrot.slane %v3794, 5
      %v3797 = vor.u32 %v3793, %v3796
      %v3798 = vrot.slane %v3797, 4
      %v3800 = vshll.u32 %v3680, 16
      %v3802 = vrot.slane %v3800, 5
      %v3803 = vsel %vm1531, %v3798, %v3802
      %v3804 = vshrl.u32 %v3680, 16
      %v3806 = vrot.slane %v3804, 4
      %v3807 = vor.u32 %v3806, %v3802
      %v3808 = vrot.slane %v3807, 4
      %v3810 = vshll.u32 %v3681, 16
      %v3812 = vrot.slane %v3810, 5
      %v3813 = vsel %vm1531, %v3808, %v3812
      %v3815 = vshrl.u32 %v3682, 16
      %v3817 = vrot.slane %v3815, 4
      %v3818 = vshll.u32 %v3682, 16
      %v3820 = vrot.slane %v3818, 5
      %v3821 = vor.u32 %v3817, %v3820
      %v3822 = vrot.slane %v3821, 4
      %v3824 = vshll.u32 %v3683, 16
      %v3826 = vrot.slane %v3824, 5
      %v3827 = vsel %vm1531, %v3822, %v3826
      %v3828 = vshrl.u32 %v3683, 16
      %v3830 = vrot.slane %v3828, 4
      %v3831 = vor.u32 %v3830, %v3826
      %v3832 = vrot.slane %v3831, 4
      %v3834 = vshll.u32 %v3684, 16
      %v3836 = vrot.slane %v3834, 5
      %v3837 = vsel %vm1531, %v3832, %v3836
      %v3839 = vshrl.u32 %v3685, 16
      %v3841 = vrot.slane %v3839, 4
      %v3842 = vshll.u32 %v3685, 16
      %v3844 = vrot.slane %v3842, 5
      %v3845 = vor.u32 %v3841, %v3844
      %v3846 = vrot.slane %v3845, 4
      %v3848 = vshll.u32 %v3686, 16
      %v3850 = vrot.slane %v3848, 5
      %v3851 = vsel %vm1531, %v3846, %v3850
      %v3852 = vshrl.u32 %v3686, 16
      %v3854 = vrot.slane %v3852, 4
      %v3855 = vor.u32 %v3854, %v3850
      %v3856 = vrot.slane %v3855, 4
      %v3858 = vshll.u32 %v3687, 16
      %v3860 = vrot.slane %v3858, 5
      %v3861 = vsel %vm1531, %v3856, %v3860
      %v3863 = vshrl.u32 %v3688, 16
      %v3865 = vrot.slane %v3863, 4
      %v3866 = vshll.u32 %v3688, 16
      %v3868 = vrot.slane %v3866, 5
      %v3869 = vor.u32 %v3865, %v3868
      %v3870 = vrot.slane %v3869, 4
      %v3872 = vshll.u32 %v3689, 16
      %v3874 = vrot.slane %v3872, 5
      %v3875 = vsel %vm1531, %v3870, %v3874
      %v3876 = vshrl.u32 %v3689, 16
      %v3878 = vrot.slane %v3876, 4
      %v3879 = vor.u32 %v3878, %v3874
      %v3880 = vrot.slane %v3879, 4
      %v3882 = vshll.u32 %v3690, 16
      %v3884 = vrot.slane %v3882, 5
      %v3885 = vsel %vm1531, %v3880, %v3884
      %v3887 = vshrl.u32 %v3691, 16
      %v3889 = vrot.slane %v3887, 4
      %v3890 = vshll.u32 %v3691, 16
      %v3892 = vrot.slane %v3890, 5
      %v3893 = vor.u32 %v3889, %v3892
      %v3894 = vrot.slane %v3893, 4
      %v3896 = vshll.u32 %v3692, 16
      %v3898 = vrot.slane %v3896, 5
      %v3899 = vsel %vm1531, %v3894, %v3898
      %v3900 = vshrl.u32 %v3692, 16
      %v3902 = vrot.slane %v3900, 4
      %v3903 = vor.u32 %v3902, %v3898
      %v3904 = vrot.slane %v3903, 4
      %v3906 = vshll.u32 %v3693, 16
      %v3908 = vrot.slane %v3906, 5
      %v3909 = vsel %vm1531, %v3904, %v3908
      %v3911 = vshrl.u32 %v3694, 16
      %v3913 = vrot.slane %v3911, 4
      %v3914 = vshll.u32 %v3694, 16
      %v3916 = vrot.slane %v3914, 5
      %v3917 = vor.u32 %v3913, %v3916
      %v3918 = vrot.slane %v3917, 4
      %v3920 = vshll.u32 %v3695, 16
      %v3922 = vrot.slane %v3920, 5
      %v3923 = vsel %vm1531, %v3918, %v3922
      %v3924 = vshrl.u32 %v3695, 16
      %v3926 = vrot.slane %v3924, 4
      %v3927 = vor.u32 %v3926, %v3922
      %v3928 = vrot.slane %v3927, 4
      %v3930 = vshll.u32 %v3696, 16
      %v3932 = vrot.slane %v3930, 5
      %v3933 = vsel %vm1531, %v3928, %v3932
      %v3935 = vshrl.u32 %v3697, 16
      %v3937 = vrot.slane %v3935, 4
      %v3938 = vshll.u32 %v3697, 16
      %v3940 = vrot.slane %v3938, 5
      %v3941 = vor.u32 %v3937, %v3940
      %v3942 = vrot.slane %v3941, 4
      %v3944 = vshll.u32 %v3698, 16
      %v3946 = vrot.slane %v3944, 5
      %v3947 = vsel %vm1531, %v3942, %v3946
      %v3948 = vshrl.u32 %v3698, 16
      %v3950 = vrot.slane %v3948, 4
      %v3951 = vor.u32 %v3950, %v3946
      %v3952 = vrot.slane %v3951, 4
      %v3954 = vshll.u32 %v3699, 16
      %v3956 = vrot.slane %v3954, 5
      %v3957 = vsel %vm1531, %v3952, %v3956
      %v3959 = vshrl.u32 %v3700, 16
      %v3961 = vrot.slane %v3959, 4
      %v3962 = vshll.u32 %v3700, 16
      %v3964 = vrot.slane %v3962, 5
      %v3965 = vor.u32 %v3961, %v3964
      %v3966 = vrot.slane %v3965, 4
      %v3968 = vshll.u32 %v3701, 16
      %v3970 = vrot.slane %v3968, 5
      %v3971 = vsel %vm1531, %v3966, %v3970
      %v3972 = vshrl.u32 %v3701, 16
      %v3974 = vrot.slane %v3972, 4
      %v3975 = vor.u32 %v3974, %v3970
      %v3976 = vrot.slane %v3975, 4
      %v3978 = vshll.u32 %v3702, 16
      %v3980 = vrot.slane %v3978, 5
      %v3981 = vsel %vm1531, %v3976, %v3980
      %v3983 = vshrl.u32 %v3703, 16
      %v3985 = vrot.slane %v3983, 4
      %v3986 = vshll.u32 %v3703, 16
      %v3988 = vrot.slane %v3986, 5
      %v3989 = vor.u32 %v3985, %v3988
      %v3990 = vrot.slane %v3989, 4
      %v3992 = vshll.u32 %v3704, 16
      %v3994 = vrot.slane %v3992, 5
      %v3995 = vsel %vm1531, %v3990, %v3994
      %v3996 = vshrl.u32 %v3704, 16
      %v3998 = vrot.slane %v3996, 4
      %v3999 = vor.u32 %v3998, %v3994
      %v4000 = vrot.slane %v3999, 4
      %v4002 = vshll.u32 %v3705, 16
      %v4004 = vrot.slane %v4002, 5
      %v4005 = vsel %vm1531, %v4000, %v4004
      %v4007 = vshrl.u32 %v3706, 16
      %v4009 = vrot.slane %v4007, 4
      %v4010 = vshll.u32 %v3706, 16
      %v4012 = vrot.slane %v4010, 5
      %v4013 = vor.u32 %v4009, %v4012
      %v4014 = vrot.slane %v4013, 4
      %v4016 = vshll.u32 %v3707, 16
      %v4018 = vrot.slane %v4016, 5
      %v4019 = vsel %vm1531, %v4014, %v4018
      %v4020 = vshrl.u32 %v3707, 16
      %v4022 = vrot.slane %v4020, 4
      %v4023 = vor.u32 %v4022, %v4018
      %v4024 = vrot.slane %v4023, 4
      %v4026 = vshll.u32 %v3708, 16
      %v4028 = vrot.slane %v4026, 5
      %v4029 = vsel %vm1531, %v4024, %v4028
      %v4031 = vshrl.u32 %v3709, 16
      %v4033 = vrot.slane %v4031, 4
      %v4034 = vshll.u32 %v3709, 16
      %v4036 = vrot.slane %v4034, 5
      %v4037 = vor.u32 %v4033, %v4036
      %v4038 = vrot.slane %v4037, 4
      %v4040 = vshll.u32 %v3710, 16
      %v4042 = vrot.slane %v4040, 5
      %v4043 = vsel %vm1531, %v4038, %v4042
      %v4044 = vshrl.u32 %v3710, 16
      %v4046 = vrot.slane %v4044, 4
      %v4047 = vor.u32 %v4046, %v4042
      %v4048 = vrot.slane %v4047, 4
      %v4050 = vshll.u32 %v3711, 16
      %v4052 = vrot.slane %v4050, 5
      %v4053 = vsel %vm1531, %v4048, %v4052
      %v4055 = vshrl.u32 %v3712, 16
      %v4057 = vrot.slane %v4055, 4
      %v4058 = vshll.u32 %v3712, 16
      %v4060 = vrot.slane %v4058, 5
      %v4061 = vor.u32 %v4057, %v4060
      %v4062 = vrot.slane %v4061, 4
      %v4064 = vshll.u32 %v3713, 16
      %v4066 = vrot.slane %v4064, 5
      %v4067 = vsel %vm1531, %v4062, %v4066
      %v4068 = vshrl.u32 %v3713, 16
      %v4070 = vrot.slane %v4068, 4
      %v4071 = vor.u32 %v4070, %v4066
      %v4072 = vrot.slane %v4071, 4
      %v4074 = vshll.u32 %v3714, 16
      %v4076 = vrot.slane %v4074, 5
      %v4077 = vsel %vm1531, %v4072, %v4076
      %v4079 = vshrl.u32 %v3715, 16
      %v4081 = vrot.slane %v4079, 4
      %v4082 = vshll.u32 %v3715, 16
      %v4084 = vrot.slane %v4082, 5
      %v4085 = vor.u32 %v4081, %v4084
      %v4086 = vrot.slane %v4085, 4
      %v4088 = vshll.u32 %v3716, 16
      %v4090 = vrot.slane %v4088, 5
      %v4091 = vsel %vm1531, %v4086, %v4090
      %v4092 = vshrl.u32 %v3716, 16
      %v4094 = vrot.slane %v4092, 4
      %v4095 = vor.u32 %v4094, %v4090
      %v4096 = vrot.slane %v4095, 4
      %v4098 = vshll.u32 %v3717, 16
      %v4100 = vrot.slane %v4098, 5
      %v4101 = vsel %vm1531, %v4096, %v4100
      %4102 = vrot.lane.b32.xlu0 %v3731, 56
      %v4103 = vpop.permute.xlu0 %4102
      %4104 = vrot.lane.b32.xlu0 %v3741, 56
      %v4105 = vpop.permute.xlu0 %4104
      %4106 = vrot.lane.b32.xlu0 %v3755, 56
      %v4107 = vpop.permute.xlu0 %4106
      %4108 = vrot.lane.b32.xlu0 %v3765, 56
      %v4109 = vpop.permute.xlu0 %4108
      %4110 = vrot.lane.b32.xlu0 %v3779, 56
      %v4111 = vpop.permute.xlu0 %4110
      %4112 = vrot.lane.b32.xlu0 %v3789, 56
      %v4113 = vpop.permute.xlu0 %4112
      %4114 = vrot.lane.b32.xlu0 %v3803, 56
      %v4115 = vpop.permute.xlu0 %4114
      %4116 = vrot.lane.b32.xlu0 %v3813, 56
      %v4117 = vpop.permute.xlu0 %4116
      %4118 = vrot.lane.b32.xlu0 %v3827, 56
      %v4119 = vpop.permute.xlu0 %4118
      %4120 = vrot.lane.b32.xlu0 %v3837, 56
      %v4121 = vpop.permute.xlu0 %4120
      %4122 = vrot.lane.b32.xlu0 %v3851, 56
      %v4123 = vpop.permute.xlu0 %4122
      %4124 = vrot.lane.b32.xlu0 %v3861, 56
      %v4125 = vpop.permute.xlu0 %4124
      %4126 = vrot.lane.b32.xlu0 %v3875, 56
      %v4127 = vpop.permute.xlu0 %4126
      %4128 = vrot.lane.b32.xlu0 %v3885, 56
      %v4129 = vpop.permute.xlu0 %4128
      %4130 = vrot.lane.b32.xlu0 %v3899, 56
      %v4131 = vpop.permute.xlu0 %4130
      %4132 = vrot.lane.b32.xlu0 %v3909, 56
      %v4133 = vpop.permute.xlu0 %4132
      %4134 = vrot.lane.b32.xlu0 %v3923, 56
      %v4135 = vpop.permute.xlu0 %4134
      %4136 = vrot.lane.b32.xlu0 %v3933, 56
      %v4137 = vpop.permute.xlu0 %4136
      %4138 = vrot.lane.b32.xlu0 %v3947, 56
      %v4139 = vpop.permute.xlu0 %4138
      %4140 = vrot.lane.b32.xlu0 %v3957, 56
      %v4141 = vpop.permute.xlu0 %4140
      %4142 = vrot.lane.b32.xlu0 %v3971, 56
      %v4143 = vpop.permute.xlu0 %4142
      %4144 = vrot.lane.b32.xlu0 %v3981, 56
      %v4145 = vpop.permute.xlu0 %4144
      %4146 = vrot.lane.b32.xlu0 %v3995, 56
      %v4147 = vpop.permute.xlu0 %4146
      %4148 = vrot.lane.b32.xlu0 %v4005, 56
      %v4149 = vpop.permute.xlu0 %4148
      %4150 = vrot.lane.b32.xlu0 %v4019, 56
      %v4151 = vpop.permute.xlu0 %4150
      %4152 = vrot.lane.b32.xlu0 %v4029, 56
      %v4153 = vpop.permute.xlu0 %4152
      %4154 = vrot.lane.b32.xlu0 %v4043, 56
      %v4155 = vpop.permute.xlu0 %4154
      %4156 = vrot.lane.b32.xlu0 %v4053, 56
      %v4157 = vpop.permute.xlu0 %4156
      %4158 = vrot.lane.b32.xlu0 %v4067, 56
      %v4159 = vpop.permute.xlu0 %4158
      %4160 = vrot.lane.b32.xlu0 %v4077, 56
      %v4161 = vpop.permute.xlu0 %4160
      %4162 = vrot.lane.b32.xlu0 %v4091, 56
      %v4163 = vpop.permute.xlu0 %4162
      %4164 = vrot.lane.b32.xlu0 %v4101, 56
      %v4165 = vpop.permute.xlu0 %4164
      %vm4198 = vcmask 519616
      %4199 = vst.msk [vmem:[#allocation3] sm:$0xf] %vm4198, %v4103
      %4200 = vst.msk [vmem:[#allocation3 + $0x4] sm:$0xf] %vm4198, %v4105
      %4201 = vst.msk [vmem:[#allocation3 + $0x8] sm:$0xf] %vm4198, %v4107
      %4202 = vst.msk [vmem:[#allocation3 + $0xc] sm:$0xf] %vm4198, %v4109
      %4203 = vst.msk [vmem:[#allocation3 + $0x10] sm:$0xf] %vm4198, %v4111
      %4204 = vst.msk [vmem:[#allocation3 + $0x14] sm:$0xf] %vm4198, %v4113
      %4205 = vst.msk [vmem:[#allocation3 + $0x18] sm:$0xf] %vm4198, %v4115
      %4206 = vst.msk [vmem:[#allocation3 + $0x1c] sm:$0xf] %vm4198, %v4117
      %4207 = vst.msk [vmem:[#allocation3 + $0x20] sm:$0xf] %vm4198, %v4119
      %4208 = vst.msk [vmem:[#allocation3 + $0x24] sm:$0xf] %vm4198, %v4121
      %4209 = vst.msk [vmem:[#allocation3 + $0x28] sm:$0xf] %vm4198, %v4123
      %4210 = vst.msk [vmem:[#allocation3 + $0x2c] sm:$0xf] %vm4198, %v4125
      %4211 = vst.msk [vmem:[#allocation3 + $0x30] sm:$0xf] %vm4198, %v4127
      %4212 = vst.msk [vmem:[#allocation3 + $0x34] sm:$0xf] %vm4198, %v4129
      %4213 = vst.msk [vmem:[#allocation3 + $0x38] sm:$0xf] %vm4198, %v4131
      %4214 = vst.msk [vmem:[#allocation3 + $0x3c] sm:$0xf] %vm4198, %v4133
      %4215 = vst.msk [vmem:[#allocation3 + $0x40] sm:$0xf] %vm4198, %v4135
      %4216 = vst.msk [vmem:[#allocation3 + $0x44] sm:$0xf] %vm4198, %v4137
      %4217 = vst.msk [vmem:[#allocation3 + $0x48] sm:$0xf] %vm4198, %v4139
      %4218 = vst.msk [vmem:[#allocation3 + $0x4c] sm:$0xf] %vm4198, %v4141
      %4219 = vst.msk [vmem:[#allocation3 + $0x50] sm:$0xf] %vm4198, %v4143
      %4220 = vst.msk [vmem:[#allocation3 + $0x54] sm:$0xf] %vm4198, %v4145
      %4221 = vst.msk [vmem:[#allocation3 + $0x58] sm:$0xf] %vm4198, %v4147
      %4222 = vst.msk [vmem:[#allocation3 + $0x5c] sm:$0xf] %vm4198, %v4149
      %4223 = vst.msk [vmem:[#allocation3 + $0x60] sm:$0xf] %vm4198, %v4151
      %4224 = vst.msk [vmem:[#allocation3 + $0x64] sm:$0xf] %vm4198, %v4153
      %4225 = vst.msk [vmem:[#allocation3 + $0x68] sm:$0xf] %vm4198, %v4155
      %4226 = vst.msk [vmem:[#allocation3 + $0x6c] sm:$0xf] %vm4198, %v4157
      %4227 = vst.msk [vmem:[#allocation3 + $0x70] sm:$0xf] %vm4198, %v4159
      %4228 = vst.msk [vmem:[#allocation3 + $0x74] sm:$0xf] %vm4198, %v4161
      %4229 = vst.msk [vmem:[#allocation3 + $0x78] sm:$0xf] %vm4198, %v4163
      %4230 = vst.msk [vmem:[#allocation3 + $0x7c] sm:$0xf] %vm4198, %v4165
      %v4231 = vld [vmem:[%s3476] sm:$0xe]
      %v4232 = vld [vmem:[%s3476 + $0x4] sm:$0xf]
      %v4233 = vld [vmem:[%s3476 + $0x8] sm:$0x1]
      %v4234 = vld [vmem:[%s3476 + $0xc] sm:$0xe]
      %v4235 = vld [vmem:[%s3476 + $0x10] sm:$0xf]
      %v4236 = vld [vmem:[%s3476 + $0x14] sm:$0x1]
      %v4237 = vld [vmem:[%s3476 + $0x18] sm:$0xe]
      %v4238 = vld [vmem:[%s3476 + $0x1c] sm:$0xf]
      %v4239 = vld [vmem:[%s3476 + $0x20] sm:$0x1]
      %v4240 = vld [vmem:[%s3476 + $0x24] sm:$0xe]
      %v4241 = vld [vmem:[%s3476 + $0x28] sm:$0xf]
      %v4242 = vld [vmem:[%s3476 + $0x2c] sm:$0x1]
      %v4243 = vld [vmem:[%s3476 + $0x30] sm:$0xe]
      %v4244 = vld [vmem:[%s3476 + $0x34] sm:$0xf]
      %v4245 = vld [vmem:[%s3476 + $0x38] sm:$0x1]
      %v4246 = vld [vmem:[%s3476 + $0x3c] sm:$0xe]
      %v4247 = vld [vmem:[%s3476 + $0x40] sm:$0xf]
      %v4248 = vld [vmem:[%s3476 + $0x44] sm:$0x1]
      %v4249 = vld [vmem:[%s3476 + $0x48] sm:$0xe]
      %v4250 = vld [vmem:[%s3476 + $0x4c] sm:$0xf]
      %v4251 = vld [vmem:[%s3476 + $0x50] sm:$0x1]
      %v4252 = vld [vmem:[%s3476 + $0x54] sm:$0xe]
      %v4253 = vld [vmem:[%s3476 + $0x58] sm:$0xf]
      %v4254 = vld [vmem:[%s3476 + $0x5c] sm:$0x1]
      %v4255 = vld [vmem:[%s3476 + $0x60] sm:$0xe]
      %v4256 = vld [vmem:[%s3476 + $0x64] sm:$0xf]
      %v4257 = vld [vmem:[%s3476 + $0x68] sm:$0x1]
      %v4258 = vld [vmem:[%s3476 + $0x6c] sm:$0xe]
      %v4259 = vld [vmem:[%s3476 + $0x70] sm:$0xf]
      %v4260 = vld [vmem:[%s3476 + $0x74] sm:$0x1]
      %v4261 = vld [vmem:[%s3476 + $0x78] sm:$0xe]
      %v4262 = vld [vmem:[%s3476 + $0x7c] sm:$0xf]
      %v4263 = vld [vmem:[%s3476 + $0x80] sm:$0x1]
      %v4264 = vld [vmem:[%s3476 + $0x84] sm:$0xe]
      %v4265 = vld [vmem:[%s3476 + $0x88] sm:$0xf]
      %v4266 = vld [vmem:[%s3476 + $0x8c] sm:$0x1]
      %v4267 = vld [vmem:[%s3476 + $0x90] sm:$0xe]
      %v4268 = vld [vmem:[%s3476 + $0x94] sm:$0xf]
      %v4269 = vld [vmem:[%s3476 + $0x98] sm:$0x1]
      %v4270 = vld [vmem:[%s3476 + $0x9c] sm:$0xe]
      %v4271 = vld [vmem:[%s3476 + $0xa0] sm:$0xf]
      %v4272 = vld [vmem:[%s3476 + $0xa4] sm:$0x1]
      %v4273 = vld [vmem:[%s3476 + $0xa8] sm:$0xe]
      %v4274 = vld [vmem:[%s3476 + $0xac] sm:$0xf]
      %v4275 = vld [vmem:[%s3476 + $0xb0] sm:$0x1]
      %v4276 = vld [vmem:[%s3476 + $0xb4] sm:$0xe]
      %v4277 = vld [vmem:[%s3476 + $0xb8] sm:$0xf]
      %v4278 = vld [vmem:[%s3476 + $0xbc] sm:$0x1]
      %v4327 = vrot.slane %v4231, 5
      %v4328 = vrot.slane %v4327, 4
      %v4329 = vrot.slane %v4232, 5
      %v4330 = vsel %vm2143, %v4328, %v4329
      %v4331 = vrot.slane %v4329, 4
      %v4332 = vrot.slane %v4233, 5
      %v4333 = vsel %vm2143, %v4331, %v4332
      %v4334 = vrot.slane %v4234, 5
      %v4335 = vrot.slane %v4334, 4
      %v4336 = vrot.slane %v4235, 5
      %v4337 = vsel %vm2143, %v4335, %v4336
      %v4338 = vrot.slane %v4336, 4
      %v4339 = vrot.slane %v4236, 5
      %v4340 = vsel %vm2143, %v4338, %v4339
      %v4341 = vrot.slane %v4237, 5
      %v4342 = vrot.slane %v4341, 4
      %v4343 = vrot.slane %v4238, 5
      %v4344 = vsel %vm2143, %v4342, %v4343
      %v4345 = vrot.slane %v4343, 4
      %v4346 = vrot.slane %v4239, 5
      %v4347 = vsel %vm2143, %v4345, %v4346
      %v4348 = vrot.slane %v4240, 5
      %v4349 = vrot.slane %v4348, 4
      %v4350 = vrot.slane %v4241, 5
      %v4351 = vsel %vm2143, %v4349, %v4350
      %v4352 = vrot.slane %v4350, 4
      %v4353 = vrot.slane %v4242, 5
      %v4354 = vsel %vm2143, %v4352, %v4353
      %v4355 = vrot.slane %v4243, 5
      %v4356 = vrot.slane %v4355, 4
      %v4357 = vrot.slane %v4244, 5
      %v4358 = vsel %vm2143, %v4356, %v4357
      %v4359 = vrot.slane %v4357, 4
      %v4360 = vrot.slane %v4245, 5
      %v4361 = vsel %vm2143, %v4359, %v4360
      %v4362 = vrot.slane %v4246, 5
      %v4363 = vrot.slane %v4362, 4
      %v4364 = vrot.slane %v4247, 5
      %v4365 = vsel %vm2143, %v4363, %v4364
      %v4366 = vrot.slane %v4364, 4
      %v4367 = vrot.slane %v4248, 5
      %v4368 = vsel %vm2143, %v4366, %v4367
      %v4369 = vrot.slane %v4249, 5
      %v4370 = vrot.slane %v4369, 4
      %v4371 = vrot.slane %v4250, 5
      %v4372 = vsel %vm2143, %v4370, %v4371
      %v4373 = vrot.slane %v4371, 4
      %v4374 = vrot.slane %v4251, 5
      %v4375 = vsel %vm2143, %v4373, %v4374
      %v4376 = vrot.slane %v4252, 5
      %v4377 = vrot.slane %v4376, 4
      %v4378 = vrot.slane %v4253, 5
      %v4379 = vsel %vm2143, %v4377, %v4378
      %v4380 = vrot.slane %v4378, 4
      %v4381 = vrot.slane %v4254, 5
      %v4382 = vsel %vm2143, %v4380, %v4381
      %v4383 = vrot.slane %v4255, 5
      %v4384 = vrot.slane %v4383, 4
      %v4385 = vrot.slane %v4256, 5
      %v4386 = vsel %vm2143, %v4384, %v4385
      %v4387 = vrot.slane %v4385, 4
      %v4388 = vrot.slane %v4257, 5
      %v4389 = vsel %vm2143, %v4387, %v4388
      %v4390 = vrot.slane %v4258, 5
      %v4391 = vrot.slane %v4390, 4
      %v4392 = vrot.slane %v4259, 5
      %v4393 = vsel %vm2143, %v4391, %v4392
      %v4394 = vrot.slane %v4392, 4
      %v4395 = vrot.slane %v4260, 5
      %v4396 = vsel %vm2143, %v4394, %v4395
      %v4397 = vrot.slane %v4261, 5
      %v4398 = vrot.slane %v4397, 4
      %v4399 = vrot.slane %v4262, 5
      %v4400 = vsel %vm2143, %v4398, %v4399
      %v4401 = vrot.slane %v4399, 4
      %v4402 = vrot.slane %v4263, 5
      %v4403 = vsel %vm2143, %v4401, %v4402
      %v4404 = vrot.slane %v4264, 5
      %v4405 = vrot.slane %v4404, 4
      %v4406 = vrot.slane %v4265, 5
      %v4407 = vsel %vm2143, %v4405, %v4406
      %v4408 = vrot.slane %v4406, 4
      %v4409 = vrot.slane %v4266, 5
      %v4410 = vsel %vm2143, %v4408, %v4409
      %v4411 = vrot.slane %v4267, 5
      %v4412 = vrot.slane %v4411, 4
      %v4413 = vrot.slane %v4268, 5
      %v4414 = vsel %vm2143, %v4412, %v4413
      %v4415 = vrot.slane %v4413, 4
      %v4416 = vrot.slane %v4269, 5
      %v4417 = vsel %vm2143, %v4415, %v4416
      %v4418 = vrot.slane %v4270, 5
      %v4419 = vrot.slane %v4418, 4
      %v4420 = vrot.slane %v4271, 5
      %v4421 = vsel %vm2143, %v4419, %v4420
      %v4422 = vrot.slane %v4420, 4
      %v4423 = vrot.slane %v4272, 5
      %v4424 = vsel %vm2143, %v4422, %v4423
      %v4425 = vrot.slane %v4273, 5
      %v4426 = vrot.slane %v4425, 4
      %v4427 = vrot.slane %v4274, 5
      %v4428 = vsel %vm2143, %v4426, %v4427
      %v4429 = vrot.slane %v4427, 4
      %v4430 = vrot.slane %v4275, 5
      %v4431 = vsel %vm2143, %v4429, %v4430
      %v4432 = vrot.slane %v4276, 5
      %v4433 = vrot.slane %v4432, 4
      %v4434 = vrot.slane %v4277, 5
      %v4435 = vsel %vm2143, %v4433, %v4434
      %v4436 = vrot.slane %v4434, 4
      %v4437 = vrot.slane %v4278, 5
      %v4438 = vsel %vm2143, %v4436, %v4437
      %4439 = vrot.lane.b32.xlu0 %v4330, 64
      %v4440 = vpop.permute.xlu0 %4439
      %4441 = vrot.lane.b32.xlu0 %v4333, 64
      %v4442 = vpop.permute.xlu0 %4441
      %4443 = vrot.lane.b32.xlu0 %v4337, 64
      %v4444 = vpop.permute.xlu0 %4443
      %4445 = vrot.lane.b32.xlu0 %v4340, 64
      %v4446 = vpop.permute.xlu0 %4445
      %4447 = vrot.lane.b32.xlu0 %v4344, 64
      %v4448 = vpop.permute.xlu0 %4447
      %4449 = vrot.lane.b32.xlu0 %v4347, 64
      %v4450 = vpop.permute.xlu0 %4449
      %4451 = vrot.lane.b32.xlu0 %v4351, 64
      %v4452 = vpop.permute.xlu0 %4451
      %4453 = vrot.lane.b32.xlu0 %v4354, 64
      %v4454 = vpop.permute.xlu0 %4453
      %4455 = vrot.lane.b32.xlu0 %v4358, 64
      %v4456 = vpop.permute.xlu0 %4455
      %4457 = vrot.lane.b32.xlu0 %v4361, 64
      %v4458 = vpop.permute.xlu0 %4457
      %4459 = vrot.lane.b32.xlu0 %v4365, 64
      %v4460 = vpop.permute.xlu0 %4459
      %4461 = vrot.lane.b32.xlu0 %v4368, 64
      %v4462 = vpop.permute.xlu0 %4461
      %4463 = vrot.lane.b32.xlu0 %v4372, 64
      %v4464 = vpop.permute.xlu0 %4463
      %4465 = vrot.lane.b32.xlu0 %v4375, 64
      %v4466 = vpop.permute.xlu0 %4465
      %4467 = vrot.lane.b32.xlu0 %v4379, 64
      %v4468 = vpop.permute.xlu0 %4467
      %4469 = vrot.lane.b32.xlu0 %v4382, 64
      %v4470 = vpop.permute.xlu0 %4469
      %4471 = vrot.lane.b32.xlu0 %v4386, 64
      %v4472 = vpop.permute.xlu0 %4471
      %4473 = vrot.lane.b32.xlu0 %v4389, 64
      %v4474 = vpop.permute.xlu0 %4473
      %4475 = vrot.lane.b32.xlu0 %v4393, 64
      %v4476 = vpop.permute.xlu0 %4475
      %4477 = vrot.lane.b32.xlu0 %v4396, 64
      %v4478 = vpop.permute.xlu0 %4477
      %4479 = vrot.lane.b32.xlu0 %v4400, 64
      %v4480 = vpop.permute.xlu0 %4479
      %4481 = vrot.lane.b32.xlu0 %v4403, 64
      %v4482 = vpop.permute.xlu0 %4481
      %4483 = vrot.lane.b32.xlu0 %v4407, 64
      %v4484 = vpop.permute.xlu0 %4483
      %4485 = vrot.lane.b32.xlu0 %v4410, 64
      %v4486 = vpop.permute.xlu0 %4485
      %4487 = vrot.lane.b32.xlu0 %v4414, 64
      %v4488 = vpop.permute.xlu0 %4487
      %4489 = vrot.lane.b32.xlu0 %v4417, 64
      %v4490 = vpop.permute.xlu0 %4489
      %4491 = vrot.lane.b32.xlu0 %v4421, 64
      %v4492 = vpop.permute.xlu0 %4491
      %4493 = vrot.lane.b32.xlu0 %v4424, 64
      %v4494 = vpop.permute.xlu0 %4493
      %4495 = vrot.lane.b32.xlu0 %v4428, 64
      %v4496 = vpop.permute.xlu0 %4495
      %4497 = vrot.lane.b32.xlu0 %v4431, 64
      %v4498 = vpop.permute.xlu0 %4497
      %4499 = vrot.lane.b32.xlu0 %v4435, 64
      %v4500 = vpop.permute.xlu0 %4499
      %4501 = vrot.lane.b32.xlu0 %v4438, 64
      %v4502 = vpop.permute.xlu0 %4501
      %vm4535 = vcmask 585216
      %4536 = vst.msk [vmem:[#allocation3] sm:$0xf] %vm4535, %v4440
      %4537 = vst.msk [vmem:[#allocation3 + $0x4] sm:$0xf] %vm4535, %v4442
      %4538 = vst.msk [vmem:[#allocation3 + $0x8] sm:$0xf] %vm4535, %v4444
      %4539 = vst.msk [vmem:[#allocation3 + $0xc] sm:$0xf] %vm4535, %v4446
      %4540 = vst.msk [vmem:[#allocation3 + $0x10] sm:$0xf] %vm4535, %v4448
      %4541 = vst.msk [vmem:[#allocation3 + $0x14] sm:$0xf] %vm4535, %v4450
      %4542 = vst.msk [vmem:[#allocation3 + $0x18] sm:$0xf] %vm4535, %v4452
      %4543 = vst.msk [vmem:[#allocation3 + $0x1c] sm:$0xf] %vm4535, %v4454
      %4544 = vst.msk [vmem:[#allocation3 + $0x20] sm:$0xf] %vm4535, %v4456
      %4545 = vst.msk [vmem:[#allocation3 + $0x24] sm:$0xf] %vm4535, %v4458
      %4546 = vst.msk [vmem:[#allocation3 + $0x28] sm:$0xf] %vm4535, %v4460
      %4547 = vst.msk [vmem:[#allocation3 + $0x2c] sm:$0xf] %vm4535, %v4462
      %4548 = vst.msk [vmem:[#allocation3 + $0x30] sm:$0xf] %vm4535, %v4464
      %4549 = vst.msk [vmem:[#allocation3 + $0x34] sm:$0xf] %vm4535, %v4466
      %4550 = vst.msk [vmem:[#allocation3 + $0x38] sm:$0xf] %vm4535, %v4468
      %4551 = vst.msk [vmem:[#allocation3 + $0x3c] sm:$0xf] %vm4535, %v4470
      %4552 = vst.msk [vmem:[#allocation3 + $0x40] sm:$0xf] %vm4535, %v4472
      %4553 = vst.msk [vmem:[#allocation3 + $0x44] sm:$0xf] %vm4535, %v4474
      %4554 = vst.msk [vmem:[#allocation3 + $0x48] sm:$0xf] %vm4535, %v4476
      %4555 = vst.msk [vmem:[#allocation3 + $0x4c] sm:$0xf] %vm4535, %v4478
      %4556 = vst.msk [vmem:[#allocation3 + $0x50] sm:$0xf] %vm4535, %v4480
      %4557 = vst.msk [vmem:[#allocation3 + $0x54] sm:$0xf] %vm4535, %v4482
      %4558 = vst.msk [vmem:[#allocation3 + $0x58] sm:$0xf] %vm4535, %v4484
      %4559 = vst.msk [vmem:[#allocation3 + $0x5c] sm:$0xf] %vm4535, %v4486
      %4560 = vst.msk [vmem:[#allocation3 + $0x60] sm:$0xf] %vm4535, %v4488
      %4561 = vst.msk [vmem:[#allocation3 + $0x64] sm:$0xf] %vm4535, %v4490
      %4562 = vst.msk [vmem:[#allocation3 + $0x68] sm:$0xf] %vm4535, %v4492
      %4563 = vst.msk [vmem:[#allocation3 + $0x6c] sm:$0xf] %vm4535, %v4494
      %4564 = vst.msk [vmem:[#allocation3 + $0x70] sm:$0xf] %vm4535, %v4496
      %4565 = vst.msk [vmem:[#allocation3 + $0x74] sm:$0xf] %vm4535, %v4498
      %4566 = vst.msk [vmem:[#allocation3 + $0x78] sm:$0xf] %vm4535, %v4500
      %4567 = vst.msk [vmem:[#allocation3 + $0x7c] sm:$0xf] %vm4535, %v4502
      %v4568 = vld [vmem:[#allocation3] sm:$0xf]
      %v4569 = vld [vmem:[#allocation3 + $0x4] sm:$0xf]
      %v4570 = vld [vmem:[#allocation3 + $0x8] sm:$0xf]
      %v4571 = vld [vmem:[#allocation3 + $0xc] sm:$0xf]
      %v4572 = vld [vmem:[#allocation3 + $0x10] sm:$0xf]
      %v4573 = vld [vmem:[#allocation3 + $0x14] sm:$0xf]
      %v4574 = vld [vmem:[#allocation3 + $0x18] sm:$0xf]
      %v4575 = vld [vmem:[#allocation3 + $0x1c] sm:$0xf]
      %v4576 = vld [vmem:[#allocation3 + $0x20] sm:$0xf]
      %v4577 = vld [vmem:[#allocation3 + $0x24] sm:$0xf]
      %v4578 = vld [vmem:[#allocation3 + $0x28] sm:$0xf]
      %v4579 = vld [vmem:[#allocation3 + $0x2c] sm:$0xf]
      %v4580 = vld [vmem:[#allocation3 + $0x30] sm:$0xf]
      %v4581 = vld [vmem:[#allocation3 + $0x34] sm:$0xf]
      %v4582 = vld [vmem:[#allocation3 + $0x38] sm:$0xf]
      %v4583 = vld [vmem:[#allocation3 + $0x3c] sm:$0xf]
      %v4584 = vld [vmem:[#allocation3 + $0x40] sm:$0xf]
      %v4585 = vld [vmem:[#allocation3 + $0x44] sm:$0xf]
      %v4586 = vld [vmem:[#allocation3 + $0x48] sm:$0xf]
      %v4587 = vld [vmem:[#allocation3 + $0x4c] sm:$0xf]
      %v4588 = vld [vmem:[#allocation3 + $0x50] sm:$0xf]
      %v4589 = vld [vmem:[#allocation3 + $0x54] sm:$0xf]
      %v4590 = vld [vmem:[#allocation3 + $0x58] sm:$0xf]
      %v4591 = vld [vmem:[#allocation3 + $0x5c] sm:$0xf]
      %v4592 = vld [vmem:[#allocation3 + $0x60] sm:$0xf]
      %v4593 = vld [vmem:[#allocation3 + $0x64] sm:$0xf]
      %v4594 = vld [vmem:[#allocation3 + $0x68] sm:$0xf]
      %v4595 = vld [vmem:[#allocation3 + $0x6c] sm:$0xf]
      %v4596 = vld [vmem:[#allocation3 + $0x70] sm:$0xf]
      %v4597 = vld [vmem:[#allocation3 + $0x74] sm:$0xf]
      %v4598 = vld [vmem:[#allocation3 + $0x78] sm:$0xf]
      %v4599 = vld [vmem:[#allocation3 + $0x7c] sm:$0xf]
      %v4600 = vld [vmem:[%s5] sm:$0xf]
      %v4601 = vld [vmem:[%s5 + $0x4] sm:$0xf]
      %v4602 = vld [vmem:[%s5 + $0x8] sm:$0xf]
      %v4603 = vld [vmem:[%s5 + $0xc] sm:$0xf]
      %v4604 = vld [vmem:[%s5 + $0x10] sm:$0xf]
      %v4605 = vld [vmem:[%s5 + $0x14] sm:$0xf]
      %v4606 = vld [vmem:[%s5 + $0x18] sm:$0xf]
      %v4607 = vld [vmem:[%s5 + $0x1c] sm:$0xf]
      %v4608 = vld [vmem:[%s5 + $0x20] sm:$0xf]
      %v4641 = vunpack.c.l.b16 %v4568
      %v4642 = vunpack.c.l.b16 %v4569
      %v4643 = vunpack.c.l.b16 %v4570
      %v4644 = vunpack.c.l.b16 %v4571
      %v4645 = vunpack.c.l.b16 %v4572
      %v4646 = vunpack.c.l.b16 %v4573
      %v4647 = vunpack.c.l.b16 %v4574
      %v4648 = vunpack.c.l.b16 %v4575
      %v4649 = vunpack.c.l.b16 %v4576
      %v4650 = vunpack.c.l.b16 %v4577
      %v4651 = vunpack.c.l.b16 %v4578
      %v4652 = vunpack.c.l.b16 %v4579
      %v4653 = vunpack.c.l.b16 %v4580
      %v4654 = vunpack.c.l.b16 %v4581
      %v4655 = vunpack.c.l.b16 %v4582
      %v4656 = vunpack.c.l.b16 %v4583
      %v4657 = vunpack.c.l.b16 %v4584
      %v4658 = vunpack.c.l.b16 %v4585
      %v4659 = vunpack.c.l.b16 %v4586
      %v4660 = vunpack.c.l.b16 %v4587
      %v4661 = vunpack.c.l.b16 %v4588
      %v4662 = vunpack.c.l.b16 %v4589
      %v4663 = vunpack.c.l.b16 %v4590
      %v4664 = vunpack.c.l.b16 %v4591
      %v4665 = vunpack.c.l.b16 %v4592
      %v4666 = vunpack.c.l.b16 %v4593
      %v4667 = vunpack.c.l.b16 %v4594
      %v4668 = vunpack.c.l.b16 %v4595
      %v4669 = vunpack.c.l.b16 %v4596
      %v4670 = vunpack.c.l.b16 %v4597
      %v4671 = vunpack.c.l.b16 %v4598
      %v4672 = vunpack.c.l.b16 %v4599
      %v4673 = vpack.c.b16 %v4642, %v4641
      %v4674 = vpack.c.b16 %v4644, %v4643
      %v4675 = vpack.c.b16 %v4646, %v4645
      %v4676 = vpack.c.b16 %v4648, %v4647
      %v4677 = vpack.c.b16 %v4650, %v4649
      %v4678 = vpack.c.b16 %v4652, %v4651
      %v4679 = vpack.c.b16 %v4654, %v4653
      %v4680 = vpack.c.b16 %v4656, %v4655
      %v4681 = vpack.c.b16 %v4658, %v4657
      %v4682 = vpack.c.b16 %v4660, %v4659
      %v4683 = vpack.c.b16 %v4662, %v4661
      %v4684 = vpack.c.b16 %v4664, %v4663
      %v4685 = vpack.c.b16 %v4666, %v4665
      %v4686 = vpack.c.b16 %v4668, %v4667
      %v4687 = vpack.c.b16 %v4670, %v4669
      %v4688 = vpack.c.b16 %v4672, %v4671
      %v4698 = vunpack.c.l.b16 %v4600
      %v4699 = vunpack.c.l.b16 %v4601
      %v4700 = vunpack.c.l.b16 %v4602
      %v4701 = vunpack.c.l.b16 %v4603
      %v4702 = vunpack.c.l.b16 %v4604
      %v4703 = vunpack.c.l.b16 %v4605
      %v4704 = vunpack.c.l.b16 %v4606
      %v4705 = vunpack.c.l.b16 %v4607
      %v4706 = vunpack.c.l.b16 %v4608
      %v4707 = vpack.c.b16 %v4699, %v4698
      %v4708 = vpack.c.b16 %v4701, %v4700
      %v4709 = vpack.c.b16 %v4703, %v4702
      %v4710 = vpack.c.b16 %v4705, %v4704
      %v4711 = vpack.c.b16 %v4706, %v4706
      %vm4716 = vcmask 588800
      %v4718 = vsel %vm4716, %v4673, 0
      %v4721 = vsel %vm4716, %v4674, 0
      %v4724 = vsel %vm4716, %v4675, 0
      %v4727 = vsel %vm4716, %v4676, 0
      %v4730 = vsel %vm4716, %v4677, 0
      %v4733 = vsel %vm4716, %v4678, 0
      %v4736 = vsel %vm4716, %v4679, 0
      %v4739 = vsel %vm4716, %v4680, 0
      %v4742 = vsel %vm4716, %v4681, 0
      %v4745 = vsel %vm4716, %v4682, 0
      %v4748 = vsel %vm4716, %v4683, 0
      %v4751 = vsel %vm4716, %v4684, 0
      %v4754 = vsel %vm4716, %v4685, 0
      %v4757 = vsel %vm4716, %v4686, 0
      %v4760 = vsel %vm4716, %v4687, 0
      %v4763 = vsel %vm4716, %v4688, 0
      %vm4765 = vcmask 1043456
      %v4767 = vsel %vm4765, %v4711, 0
      %4769 = vmatprep.subr.bf16.mxu0 0
      %4770 = vmatpush1.bf16.msra.mxu0 0
      %4771 = vmatprep.subr.bf16.mxu0 0
      %4772 = vmatpush1.bf16.msra.mxu0 0
      %4773 = vmatprep.subr.bf16.mxu0 0
      %4774 = vmatpush1.bf16.msra.mxu0 0
      %4775 = vmatprep.subr.bf16.mxu0 0
      %4776 = vmatpush1.bf16.msra.mxu0 %v4767
      %4777 = vmatprep.subr.bf16.mxu0 0
      %4778 = vmatpush1.bf16.msra.mxu0 %v4710
      %4779 = vmatprep.subr.bf16.mxu0 0
      %4780 = vmatpush1.bf16.msra.mxu0 %v4709
      %4781 = vmatprep.subr.bf16.mxu0 0
      %4782 = vmatpush1.bf16.msra.mxu0 %v4708
      %4783 = vmatprep.subr.bf16.mxu0 0
      %4784 = vmatpush1.bf16.msra.mxu0 %v4707
      %4785 = vmatprep.subr.bf16.mxu0 0
      %4786 = vmatpush2.bf16.msra.mxu0 0
      %4787 = vmatprep.subr.bf16.mxu0 0
      %4788 = vmatpush2.bf16.msra.mxu0 0
      %4789 = vmatprep.subr.bf16.mxu0 0
      %4790 = vmatpush2.bf16.msra.mxu0 0
      %4791 = vmatprep.subr.bf16.mxu0 0
      %4792 = vmatpush2.bf16.msra.mxu0 0
      %4793 = vmatprep.subr.bf16.mxu0 0
      %4794 = vmatpush2.bf16.msra.mxu0 0
      %4795 = vmatprep.subr.bf16.mxu0 0
      %4796 = vmatpush2.bf16.msra.mxu0 0
      %4797 = vmatprep.subr.bf16.mxu0 0
      %4798 = vmatpush2.bf16.msra.mxu0 0
      %4799 = vmatprep.subr.bf16.mxu0 0
      %4800 = vmatpush2.bf16.msra.mxu0 0
      %4801 = vmatprep.mubr.bf16.mxu0 0
      %4802 = vmatmul.mubr.bf16.gmra.mxu0 %v4718
      %v4803 = vpop.f32.mrf.mxu0
      %v4804 = vadd.f32 0.0, %v4803
      %v4805 = vpop.f32.mrf.mxu0
      %v4806 = vpop.f32.mrf.mxu0
      %v4807 = vadd.f32 0.0, %v4806
      %v4808 = vpop.f32.mrf.mxu0
      %4809 = vmatprep.mubr.bf16.mxu0 0
      %4810 = vmatmul.mubr.bf16.gmra.mxu0 %v4721
      %v4811 = vpop.f32.mrf.mxu0
      %v4812 = vadd.f32 0.0, %v4811
      %v4813 = vpop.f32.mrf.mxu0
      %v4814 = vpop.f32.mrf.mxu0
      %v4815 = vadd.f32 0.0, %v4814
      %v4816 = vpop.f32.mrf.mxu0
      %4817 = vmatprep.mubr.bf16.mxu0 0
      %4818 = vmatmul.mubr.bf16.gmra.mxu0 %v4724
      %v4819 = vpop.f32.mrf.mxu0
      %v4820 = vadd.f32 0.0, %v4819
      %v4821 = vpop.f32.mrf.mxu0
      %v4822 = vpop.f32.mrf.mxu0
      %v4823 = vadd.f32 0.0, %v4822
      %v4824 = vpop.f32.mrf.mxu0
      %4825 = vmatprep.mubr.bf16.mxu0 0
      %4826 = vmatmul.mubr.bf16.gmra.mxu0 %v4727
      %v4827 = vpop.f32.mrf.mxu0
      %v4828 = vadd.f32 0.0, %v4827
      %v4829 = vpop.f32.mrf.mxu0
      %v4830 = vpop.f32.mrf.mxu0
      %v4831 = vadd.f32 0.0, %v4830
      %v4832 = vpop.f32.mrf.mxu0
      %4833 = vmatprep.mubr.bf16.mxu0 0
      %4834 = vmatmul.mubr.bf16.gmra.mxu0 %v4730
      %v4835 = vpop.f32.mrf.mxu0
      %v4836 = vadd.f32 0.0, %v4835
      %v4837 = vpop.f32.mrf.mxu0
      %v4838 = vpop.f32.mrf.mxu0
      %v4839 = vadd.f32 0.0, %v4838
      %v4840 = vpop.f32.mrf.mxu0
      %4841 = vmatprep.mubr.bf16.mxu0 0
      %4842 = vmatmul.mubr.bf16.gmra.mxu0 %v4733
      %v4843 = vpop.f32.mrf.mxu0
      %v4844 = vadd.f32 0.0, %v4843
      %v4845 = vpop.f32.mrf.mxu0
      %v4846 = vpop.f32.mrf.mxu0
      %v4847 = vadd.f32 0.0, %v4846
      %v4848 = vpop.f32.mrf.mxu0
      %4849 = vmatprep.mubr.bf16.mxu0 0
      %4850 = vmatmul.mubr.bf16.gmra.mxu0 %v4736
      %v4851 = vpop.f32.mrf.mxu0
      %v4852 = vadd.f32 0.0, %v4851
      %v4853 = vpop.f32.mrf.mxu0
      %v4854 = vpop.f32.mrf.mxu0
      %v4855 = vadd.f32 0.0, %v4854
      %v4856 = vpop.f32.mrf.mxu0
      %4857 = vmatprep.mubr.bf16.mxu0 0
      %4858 = vmatmul.mubr.bf16.gmra.mxu0 %v4739
      %v4859 = vpop.f32.mrf.mxu0
      %v4860 = vadd.f32 0.0, %v4859
      %v4861 = vpop.f32.mrf.mxu0
      %v4862 = vpop.f32.mrf.mxu0
      %v4863 = vadd.f32 0.0, %v4862
      %v4864 = vpop.f32.mrf.mxu0
      %4865 = vmatprep.mubr.bf16.mxu0 0
      %4866 = vmatmul.mubr.bf16.gmra.mxu0 %v4742
      %v4867 = vpop.f32.mrf.mxu0
      %v4868 = vadd.f32 0.0, %v4867
      %v4869 = vpop.f32.mrf.mxu0
      %v4870 = vpop.f32.mrf.mxu0
      %v4871 = vadd.f32 0.0, %v4870
      %v4872 = vpop.f32.mrf.mxu0
      %4873 = vmatprep.mubr.bf16.mxu0 0
      %4874 = vmatmul.mubr.bf16.gmra.mxu0 %v4745
      %v4875 = vpop.f32.mrf.mxu0
      %v4876 = vadd.f32 0.0, %v4875
      %v4877 = vpop.f32.mrf.mxu0
      %v4878 = vpop.f32.mrf.mxu0
      %v4879 = vadd.f32 0.0, %v4878
      %v4880 = vpop.f32.mrf.mxu0
      %4881 = vmatprep.mubr.bf16.mxu0 0
      %4882 = vmatmul.mubr.bf16.gmra.mxu0 %v4748
      %v4883 = vpop.f32.mrf.mxu0
      %v4884 = vadd.f32 0.0, %v4883
      %v4885 = vpop.f32.mrf.mxu0
      %v4886 = vpop.f32.mrf.mxu0
      %v4887 = vadd.f32 0.0, %v4886
      %v4888 = vpop.f32.mrf.mxu0
      %4889 = vmatprep.mubr.bf16.mxu0 0
      %4890 = vmatmul.mubr.bf16.gmra.mxu0 %v4751
      %v4891 = vpop.f32.mrf.mxu0
      %v4892 = vadd.f32 0.0, %v4891
      %v4893 = vpop.f32.mrf.mxu0
      %v4894 = vpop.f32.mrf.mxu0
      %v4895 = vadd.f32 0.0, %v4894
      %v4896 = vpop.f32.mrf.mxu0
      %4897 = vmatprep.mubr.bf16.mxu0 0
      %4898 = vmatmul.mubr.bf16.gmra.mxu0 %v4754
      %v4899 = vpop.f32.mrf.mxu0
      %v4900 = vadd.f32 0.0, %v4899
      %v4901 = vpop.f32.mrf.mxu0
      %v4902 = vpop.f32.mrf.mxu0
      %v4903 = vadd.f32 0.0, %v4902
      %v4904 = vpop.f32.mrf.mxu0
      %4905 = vmatprep.mubr.bf16.mxu0 0
      %4906 = vmatmul.mubr.bf16.gmra.mxu0 %v4757
      %v4907 = vpop.f32.mrf.mxu0
      %v4908 = vadd.f32 0.0, %v4907
      %v4909 = vpop.f32.mrf.mxu0
      %v4910 = vpop.f32.mrf.mxu0
      %v4911 = vadd.f32 0.0, %v4910
      %v4912 = vpop.f32.mrf.mxu0
      %4913 = vmatprep.mubr.bf16.mxu0 0
      %4914 = vmatmul.mubr.bf16.gmra.mxu0 %v4760
      %v4915 = vpop.f32.mrf.mxu0
      %v4916 = vadd.f32 0.0, %v4915
      %v4917 = vpop.f32.mrf.mxu0
      %v4918 = vpop.f32.mrf.mxu0
      %v4919 = vadd.f32 0.0, %v4918
      %v4920 = vpop.f32.mrf.mxu0
      %4921 = vmatprep.mubr.bf16.mxu0 0
      %4922 = vmatmul.mubr.bf16.gmra.mxu0 %v4763
      %v4923 = vpop.f32.mrf.mxu0
      %v4924 = vadd.f32 0.0, %v4923
      %v4925 = vpop.f32.mrf.mxu0
      %v4926 = vpop.f32.mrf.mxu0
      %v4927 = vadd.f32 0.0, %v4926
      %v4928 = vpop.f32.mrf.mxu0
      %4929 = vdwg.mxu0
      %vm4930 = vcmask 64512
      %v4931 = vsel %vm4930, %v4804, 0.0
      %v4932 = vsel %vm4930, %v4807, 0.0
      %v4933 = vadd.f32 %v4931, %v4932
      %v4934 = vsel %vm4930, %v4812, 0.0
      %v4935 = vadd.f32 %v4933, %v4934
      %v4936 = vsel %vm4930, %v4815, 0.0
      %v4937 = vadd.f32 %v4935, %v4936
      %v4938 = vsel %vm4930, %v4820, 0.0
      %v4939 = vadd.f32 %v4937, %v4938
      %v4940 = vsel %vm4930, %v4823, 0.0
      %v4941 = vadd.f32 %v4939, %v4940
      %v4942 = vsel %vm4930, %v4828, 0.0
      %v4943 = vadd.f32 %v4941, %v4942
      %v4944 = vsel %vm4930, %v4831, 0.0
      %v4945 = vadd.f32 %v4943, %v4944
      %v4946 = vsel %vm4930, %v4836, 0.0
      %v4947 = vadd.f32 %v4945, %v4946
      %v4948 = vsel %vm4930, %v4839, 0.0
      %v4949 = vadd.f32 %v4947, %v4948
      %v4950 = vsel %vm4930, %v4844, 0.0
      %v4951 = vadd.f32 %v4949, %v4950
      %v4952 = vsel %vm4930, %v4847, 0.0
      %v4953 = vadd.f32 %v4951, %v4952
      %v4954 = vsel %vm4930, %v4852, 0.0
      %v4955 = vadd.f32 %v4953, %v4954
      %v4956 = vsel %vm4930, %v4855, 0.0
      %v4957 = vadd.f32 %v4955, %v4956
      %v4958 = vsel %vm4930, %v4860, 0.0
      %v4959 = vadd.f32 %v4957, %v4958
      %v4960 = vsel %vm4930, %v4863, 0.0
      %v4961 = vadd.f32 %v4959, %v4960
      %v4962 = vsel %vm4930, %v4868, 0.0
      %v4963 = vadd.f32 %v4961, %v4962
      %v4964 = vsel %vm4930, %v4871, 0.0
      %v4965 = vadd.f32 %v4963, %v4964
      %v4966 = vsel %vm4930, %v4876, 0.0
      %v4967 = vadd.f32 %v4965, %v4966
      %v4968 = vsel %vm4930, %v4879, 0.0
      %v4969 = vadd.f32 %v4967, %v4968
      %v4970 = vsel %vm4930, %v4884, 0.0
      %v4971 = vadd.f32 %v4969, %v4970
      %v4972 = vsel %vm4930, %v4887, 0.0
      %v4973 = vadd.f32 %v4971, %v4972
      %v4974 = vsel %vm4930, %v4892, 0.0
      %v4975 = vadd.f32 %v4973, %v4974
      %v4976 = vsel %vm4930, %v4895, 0.0
      %v4977 = vadd.f32 %v4975, %v4976
      %v4978 = vsel %vm4930, %v4900, 0.0
      %v4979 = vadd.f32 %v4977, %v4978
      %v4980 = vsel %vm4930, %v4903, 0.0
      %v4981 = vadd.f32 %v4979, %v4980
      %v4982 = vsel %vm4930, %v4908, 0.0
      %v4983 = vadd.f32 %v4981, %v4982
      %v4984 = vsel %vm4930, %v4911, 0.0
      %v4985 = vadd.f32 %v4983, %v4984
      %v4986 = vsel %vm4930, %v4916, 0.0
      %v4987 = vadd.f32 %v4985, %v4986
      %v4988 = vsel %vm4930, %v4919, 0.0
      %v4989 = vadd.f32 %v4987, %v4988
      %v4990 = vsel %vm4930, %v4924, 0.0
      %v4991 = vadd.f32 %v4989, %v4990
      %v4992 = vsel %vm4930, %v4927, 0.0
      %v4993 = vadd.f32 %v4991, %v4992
      %v4994 = vrot.slane %v4993, 4
      %v4995 = vadd.f32 %v4993, %v4994
      %v4996 = vrot.slane %v4995, 2
      %v4997 = vadd.f32 %v4995, %v4996
      %v4998 = vrot.slane %v4997, 1
      %v4999 = vadd.f32 %v4997, %v4998
      %vm5000 = vcmask 57344
      %5001 = vst.msk [vmem:[%s477] sm:$0x1] %vm5000, %v4999
      %v5002 = vmul.f32 %v4804, %v4804
      %v5003 = vmul.f32 %v4807, %v4807
      %v5004 = vmul.f32 %v4812, %v4812
      %v5005 = vmul.f32 %v4815, %v4815
      %v5006 = vmul.f32 %v4820, %v4820
      %v5007 = vmul.f32 %v4823, %v4823
      %v5008 = vmul.f32 %v4828, %v4828
      %v5009 = vmul.f32 %v4831, %v4831
      %v5010 = vmul.f32 %v4836, %v4836
      %v5011 = vmul.f32 %v4839, %v4839
      %v5012 = vmul.f32 %v4844, %v4844
      %v5013 = vmul.f32 %v4847, %v4847
      %v5014 = vmul.f32 %v4852, %v4852
      %v5015 = vmul.f32 %v4855, %v4855
      %v5016 = vmul.f32 %v4860, %v4860
      %v5017 = vmul.f32 %v4863, %v4863
      %v5018 = vmul.f32 %v4868, %v4868
      %v5019 = vmul.f32 %v4871, %v4871
      %v5020 = vmul.f32 %v4876, %v4876
      %v5021 = vmul.f32 %v4879, %v4879
      %v5022 = vmul.f32 %v4884, %v4884
      %v5023 = vmul.f32 %v4887, %v4887
      %v5024 = vmul.f32 %v4892, %v4892
      %v5025 = vmul.f32 %v4895, %v4895
      %v5026 = vmul.f32 %v4900, %v4900
      %v5027 = vmul.f32 %v4903, %v4903
      %v5028 = vmul.f32 %v4908, %v4908
      %v5029 = vmul.f32 %v4911, %v4911
      %v5030 = vmul.f32 %v4916, %v4916
      %v5031 = vmul.f32 %v4919, %v4919
      %v5032 = vmul.f32 %v4924, %v4924
      %v5033 = vmul.f32 %v4927, %v4927
      %v5034 = vsel %vm4930, %v5002, 0.0
      %v5035 = vsel %vm4930, %v5003, 0.0
      %v5036 = vadd.f32 %v5034, %v5035
      %v5037 = vsel %vm4930, %v5004, 0.0
      %v5038 = vadd.f32 %v5036, %v5037
      %v5039 = vsel %vm4930, %v5005, 0.0
      %v5040 = vadd.f32 %v5038, %v5039
      %v5041 = vsel %vm4930, %v5006, 0.0
      %v5042 = vadd.f32 %v5040, %v5041
      %v5043 = vsel %vm4930, %v5007, 0.0
      %v5044 = vadd.f32 %v5042, %v5043
      %v5045 = vsel %vm4930, %v5008, 0.0
      %v5046 = vadd.f32 %v5044, %v5045
      %v5047 = vsel %vm4930, %v5009, 0.0
      %v5048 = vadd.f32 %v5046, %v5047
      %v5049 = vsel %vm4930, %v5010, 0.0
      %v5050 = vadd.f32 %v5048, %v5049
      %v5051 = vsel %vm4930, %v5011, 0.0
      %v5052 = vadd.f32 %v5050, %v5051
      %v5053 = vsel %vm4930, %v5012, 0.0
      %v5054 = vadd.f32 %v5052, %v5053
      %v5055 = vsel %vm4930, %v5013, 0.0
      %v5056 = vadd.f32 %v5054, %v5055
      %v5057 = vsel %vm4930, %v5014, 0.0
      %v5058 = vadd.f32 %v5056, %v5057
      %v5059 = vsel %vm4930, %v5015, 0.0
      %v5060 = vadd.f32 %v5058, %v5059
      %v5061 = vsel %vm4930, %v5016, 0.0
      %v5062 = vadd.f32 %v5060, %v5061
      %v5063 = vsel %vm4930, %v5017, 0.0
      %v5064 = vadd.f32 %v5062, %v5063
      %v5065 = vsel %vm4930, %v5018, 0.0
      %v5066 = vadd.f32 %v5064, %v5065
      %v5067 = vsel %vm4930, %v5019, 0.0
      %v5068 = vadd.f32 %v5066, %v5067
      %v5069 = vsel %vm4930, %v5020, 0.0
      %v5070 = vadd.f32 %v5068, %v5069
      %v5071 = vsel %vm4930, %v5021, 0.0
      %v5072 = vadd.f32 %v5070, %v5071
      %v5073 = vsel %vm4930, %v5022, 0.0
      %v5074 = vadd.f32 %v5072, %v5073
      %v5075 = vsel %vm4930, %v5023, 0.0
      %v5076 = vadd.f32 %v5074, %v5075
      %v5077 = vsel %vm4930, %v5024, 0.0
      %v5078 = vadd.f32 %v5076, %v5077
      %v5079 = vsel %vm4930, %v5025, 0.0
      %v5080 = vadd.f32 %v5078, %v5079
      %v5081 = vsel %vm4930, %v5026, 0.0
      %v5082 = vadd.f32 %v5080, %v5081
      %v5083 = vsel %vm4930, %v5027, 0.0
      %v5084 = vadd.f32 %v5082, %v5083
      %v5085 = vsel %vm4930, %v5028, 0.0
      %v5086 = vadd.f32 %v5084, %v5085
      %v5087 = vsel %vm4930, %v5029, 0.0
      %v5088 = vadd.f32 %v5086, %v5087
      %v5089 = vsel %vm4930, %v5030, 0.0
      %v5090 = vadd.f32 %v5088, %v5089
      %v5091 = vsel %vm4930, %v5031, 0.0
      %v5092 = vadd.f32 %v5090, %v5091
      %v5093 = vsel %vm4930, %v5032, 0.0
      %v5094 = vadd.f32 %v5092, %v5093
      %v5095 = vsel %vm4930, %v5033, 0.0
      %v5096 = vadd.f32 %v5094, %v5095
      %v5097 = vrot.slane %v5096, 4
      %v5098 = vadd.f32 %v5096, %v5097
      %v5099 = vrot.slane %v5098, 2
      %v5100 = vadd.f32 %v5098, %v5099
      %v5101 = vrot.slane %v5100, 1
      %v5102 = vadd.f32 %v5100, %v5101
      %5103 = vst.msk [vmem:[%s477 + $0x1] sm:$0x1] %vm5000, %v5102
      %v5104 = vpack.c.bf16 %v4807, %v4804
      %v5105 = vpack.c.bf16 %v4815, %v4812
      %v5106 = vpack.c.bf16 %v4823, %v4820
      %v5107 = vpack.c.bf16 %v4831, %v4828
      %v5108 = vpack.c.bf16 %v4839, %v4836
      %v5109 = vpack.c.bf16 %v4847, %v4844
      %v5110 = vpack.c.bf16 %v4855, %v4852
      %v5111 = vpack.c.bf16 %v4863, %v4860
      %v5112 = vpack.c.bf16 %v4871, %v4868
      %v5113 = vpack.c.bf16 %v4879, %v4876
      %v5114 = vpack.c.bf16 %v4887, %v4884
      %v5115 = vpack.c.bf16 %v4895, %v4892
      %v5116 = vpack.c.bf16 %v4903, %v4900
      %v5117 = vpack.c.bf16 %v4911, %v4908
      %v5118 = vpack.c.bf16 %v4919, %v4916
      %v5119 = vpack.c.bf16 %v4927, %v4924
      %v5136 = vunpack.c.l.b16 %v5104
      %v5137 = vunpack.c.h.b16 %v5104
      %v5138 = vunpack.c.l.b16 %v5105
      %v5139 = vunpack.c.h.b16 %v5105
      %v5140 = vunpack.c.l.b16 %v5106
      %v5141 = vunpack.c.h.b16 %v5106
      %v5142 = vunpack.c.l.b16 %v5107
      %v5143 = vunpack.c.h.b16 %v5107
      %v5144 = vunpack.c.l.b16 %v5108
      %v5145 = vunpack.c.h.b16 %v5108
      %v5146 = vunpack.c.l.b16 %v5109
      %v5147 = vunpack.c.h.b16 %v5109
      %v5148 = vunpack.c.l.b16 %v5110
      %v5149 = vunpack.c.h.b16 %v5110
      %v5150 = vunpack.c.l.b16 %v5111
      %v5151 = vunpack.c.h.b16 %v5111
      %v5152 = vunpack.c.l.b16 %v5112
      %v5153 = vunpack.c.h.b16 %v5112
      %v5154 = vunpack.c.l.b16 %v5113
      %v5155 = vunpack.c.h.b16 %v5113
      %v5156 = vunpack.c.l.b16 %v5114
      %v5157 = vunpack.c.h.b16 %v5114
      %v5158 = vunpack.c.l.b16 %v5115
      %v5159 = vunpack.c.h.b16 %v5115
      %v5160 = vunpack.c.l.b16 %v5116
      %v5161 = vunpack.c.h.b16 %v5116
      %v5162 = vunpack.c.l.b16 %v5117
      %v5163 = vunpack.c.h.b16 %v5117
      %v5164 = vunpack.c.l.b16 %v5118
      %v5165 = vunpack.c.h.b16 %v5118
      %v5166 = vunpack.c.l.b16 %v5119
      %v5167 = vunpack.c.h.b16 %v5119
      %v5168 = vpack.c.b16 %v5136, %v5136
      %v5169 = vpack.c.b16 %v5137, %v5137
      %v5170 = vpack.c.b16 %v5138, %v5138
      %v5171 = vpack.c.b16 %v5139, %v5139
      %v5172 = vpack.c.b16 %v5140, %v5140
      %v5173 = vpack.c.b16 %v5141, %v5141
      %v5174 = vpack.c.b16 %v5142, %v5142
      %v5175 = vpack.c.b16 %v5143, %v5143
      %v5176 = vpack.c.b16 %v5144, %v5144
      %v5177 = vpack.c.b16 %v5145, %v5145
      %v5178 = vpack.c.b16 %v5146, %v5146
      %v5179 = vpack.c.b16 %v5147, %v5147
      %v5180 = vpack.c.b16 %v5148, %v5148
      %v5181 = vpack.c.b16 %v5149, %v5149
      %v5182 = vpack.c.b16 %v5150, %v5150
      %v5183 = vpack.c.b16 %v5151, %v5151
      %v5184 = vpack.c.b16 %v5152, %v5152
      %v5185 = vpack.c.b16 %v5153, %v5153
      %v5186 = vpack.c.b16 %v5154, %v5154
      %v5187 = vpack.c.b16 %v5155, %v5155
      %v5188 = vpack.c.b16 %v5156, %v5156
      %v5189 = vpack.c.b16 %v5157, %v5157
      %v5190 = vpack.c.b16 %v5158, %v5158
      %v5191 = vpack.c.b16 %v5159, %v5159
      %v5192 = vpack.c.b16 %v5160, %v5160
      %v5193 = vpack.c.b16 %v5161, %v5161
      %v5194 = vpack.c.b16 %v5162, %v5162
      %v5195 = vpack.c.b16 %v5163, %v5163
      %v5196 = vpack.c.b16 %v5164, %v5164
      %v5197 = vpack.c.b16 %v5165, %v5165
      %v5198 = vpack.c.b16 %v5166, %v5166
      %v5199 = vpack.c.b16 %v5167, %v5167
      %5232 = vst.msk [vmem:[%s469] sm:$0xf] %vm1190, %v5168
      %5233 = vst.msk [vmem:[%s469 + $0x4] sm:$0xf] %vm1190, %v5169
      %5234 = vst.msk [vmem:[%s469 + $0x8] sm:$0xf] %vm1190, %v5170
      %5235 = vst.msk [vmem:[%s469 + $0xc] sm:$0xf] %vm1190, %v5171
      %5236 = vst.msk [vmem:[%s469 + $0x10] sm:$0xf] %vm1190, %v5172
      %5237 = vst.msk [vmem:[%s469 + $0x14] sm:$0xf] %vm1190, %v5173
      %5238 = vst.msk [vmem:[%s469 + $0x18] sm:$0xf] %vm1190, %v5174
      %5239 = vst.msk [vmem:[%s469 + $0x1c] sm:$0xf] %vm1190, %v5175
      %5240 = vst.msk [vmem:[%s469 + $0x20] sm:$0xf] %vm1190, %v5176
      %5241 = vst.msk [vmem:[%s469 + $0x24] sm:$0xf] %vm1190, %v5177
      %5242 = vst.msk [vmem:[%s469 + $0x28] sm:$0xf] %vm1190, %v5178
      %5243 = vst.msk [vmem:[%s469 + $0x2c] sm:$0xf] %vm1190, %v5179
      %5244 = vst.msk [vmem:[%s469 + $0x30] sm:$0xf] %vm1190, %v5180
      %5245 = vst.msk [vmem:[%s469 + $0x34] sm:$0xf] %vm1190, %v5181
      %5246 = vst.msk [vmem:[%s469 + $0x38] sm:$0xf] %vm1190, %v5182
      %5247 = vst.msk [vmem:[%s469 + $0x3c] sm:$0xf] %vm1190, %v5183
      %5248 = vst.msk [vmem:[%s469 + $0x40] sm:$0xf] %vm1190, %v5184
      %5249 = vst.msk [vmem:[%s469 + $0x44] sm:$0xf] %vm1190, %v5185
      %5250 = vst.msk [vmem:[%s469 + $0x48] sm:$0xf] %vm1190, %v5186
      %5251 = vst.msk [vmem:[%s469 + $0x4c] sm:$0xf] %vm1190, %v5187
      %5252 = vst.msk [vmem:[%s469 + $0x50] sm:$0xf] %vm1190, %v5188
      %5253 = vst.msk [vmem:[%s469 + $0x54] sm:$0xf] %vm1190, %v5189
      %5254 = vst.msk [vmem:[%s469 + $0x58] sm:$0xf] %vm1190, %v5190
      %5255 = vst.msk [vmem:[%s469 + $0x5c] sm:$0xf] %vm1190, %v5191
      %5256 = vst.msk [vmem:[%s469 + $0x60] sm:$0xf] %vm1190, %v5192
      %5257 = vst.msk [vmem:[%s469 + $0x64] sm:$0xf] %vm1190, %v5193
      %5258 = vst.msk [vmem:[%s469 + $0x68] sm:$0xf] %vm1190, %v5194
      %5259 = vst.msk [vmem:[%s469 + $0x6c] sm:$0xf] %vm1190, %v5195
      %5260 = vst.msk [vmem:[%s469 + $0x70] sm:$0xf] %vm1190, %v5196
      %5261 = vst.msk [vmem:[%s469 + $0x74] sm:$0xf] %vm1190, %v5197
      %5262 = vst.msk [vmem:[%s469 + $0x78] sm:$0xf] %vm1190, %v5198
      %5263 = vst.msk [vmem:[%s469 + $0x7c] sm:$0xf] %vm1190, %v5199
      %s5264 = smul.u32 32, %s24
      %p5265 = scmp.lt.s32.totalorder %s23, 1
      %s5266 = scalar_select %p5265, %s23, 1
      %p5267 = scmp.lt.s32.totalorder %s5264, 31
      %s5268 = scalar_select %p5267, %s5264, 31
      %s5269 = smul.addr %s5266, 32
      %s5270 = sadd.s32 %s5268, %s5269
      %s5271 = smul.addr %s5270, 4
      %s5272 = scalar_lea.vmem %s6, %s5271
      %p5273 = scmp.lt.s32.totalorder %s23, 1
      %s5274 = scalar_select %p5273, %s23, 1
      %p5275 = scmp.lt.s32.totalorder %s24, 0
      %s5276 = scalar_select %p5275, %s24, 0
      %s5277 = sadd.s32 %s5276, %s5274
      %s5278 = smul.addr %s5277, 2
      %s5279 = scalar_lea.vmem %s7, %s5278
      // Predicated region
      $region61: #{double_conv.4} parent=43 // pred_check
        %p5280 = pneg %p218
      $region62: #{double_conv.4} parent=43 // pred_check_branch
        %5282 = sbr.rel (%p5280) target = $region64
      $region63: #{double_conv.4} parent=43 // pred_region
        %s5283 = smul.u32 32, %s24
      $region64: #{double_conv.4} parent=43 // pred_fallthru
        _
      // Predicated region
      $region65: #{double_conv.4} parent=43 // pred_check
        %p5284 = pneg %p246
      $region66: #{double_conv.4} parent=43 // pred_check_branch
        %5286 = sbr.rel (%p5284) target = $region68
      $region67: #{double_conv.4} parent=43 // pred_region
        _
      $region68: #{double_conv.4} parent=43 // pred_fallthru
        _
    $region44: #{double_conv.4} parent=5 // pred_fallthru
      _
    %p5287 = scmp.le.s32.totalorder 2, %s14
    // Predicated region
    $region69: #{double_conv.4} parent=5 // pred_check
      %p5288 = pneg %p5287
    $region70: #{double_conv.4} parent=5 // pred_check_branch
      %5290 = sbr.rel (%p5288) target = $region72
    $region71: #{double_conv.4} parent=5 // pred_region
      %s5291 = ssub.s32 %s14, 2
      // Predicated region
      $region73: #{double_conv.4} parent=71 // pred_check
        %p5292 = pneg %p224
      $region74: #{double_conv.4} parent=71 // pred_check_branch
        %5294 = sbr.rel (%p5292) target = $region76
      $region75: #{double_conv.4} parent=71 // pred_region
        %s5295 = smul.u32 32, %s26
        %p5296 = scmp.lt.s32.totalorder %s25, 1
        %s5297 = scalar_select %p5296, %s25, 1
        %p5298 = scmp.lt.s32.totalorder %s5295, 31
        %s5299 = scalar_select %p5298, %s5295, 31
        %s5300 = smul.addr %s5297, 32
        %s5301 = sadd.s32 %s5299, %s5300
        %s5302 = smul.addr %s5301, 4
        %s5303 = scalar_lea.vmem %s6, %s5302
      $region76: #{double_conv.4} parent=71 // pred_fallthru
        _
      // Predicated region
      $region77: #{double_conv.4} parent=71 // pred_check
        %p5304 = pneg %p252
      $region78: #{double_conv.4} parent=71 // pred_check_branch
        %5306 = sbr.rel (%p5304) target = $region80
      $region79: #{double_conv.4} parent=71 // pred_region
        %p5307 = scmp.lt.s32.totalorder %s25, 1
        %s5308 = scalar_select %p5307, %s25, 1
        %p5309 = scmp.lt.s32.totalorder %s26, 0
        %s5310 = scalar_select %p5309, %s26, 0
        %s5311 = sadd.s32 %s5310, %s5308
        %s5312 = smul.addr %s5311, 2
        %s5313 = scalar_lea.vmem %s7, %s5312
      $region80: #{double_conv.4} parent=71 // pred_fallthru
        _
    $region72: #{double_conv.4} parent=5 // pred_fallthru
      _
  $region6: #{double_conv.4} parent=0 // loop_footer
    %s18 = sadd.s32 1, %s14
  $region7: #{double_conv.4} parent=0 // loop_footer_branch
    %13 = sbr.rel target = $region3
  $region8: #{double_conv.4} parent=0 // loop_exit
    _

// kernel: double_conv.3
$region0: #{double_conv.3}
  #allocation0 [shape = 'u32[]', space=smem, size = 0x4, offset = 0x4, fixed_abs, tag = 'smem constant byte address 0x4 - core index']
  #allocation1 [shape = 'u32[144,128]{1,0:T(1,128)}', space=vmem, size = 0x12000, scoped, tag = 'internal scratch']
  #allocation2 [shape = 'bf16[18,18,4]{2,1,0:T(8,128)(2,1)}', space=vmem, size = 0x1b000, scoped, tag = 'scratch operand']
  #allocation3 [shape = 'bf16[256,36]{1,0:T(8,128)(2,1)}', space=vmem, size = 0x10000, scoped, tag = 'scratch operand']
  %s0 = inlined_call_operand.vmem [shape: bf16[2,16,16,4], index: 0, kind: input, shape index: {}, may-alias: {0,1,2}]
  %s1 = inlined_call_operand.vmem [shape: bf16[2,16,16,4], index: 1, kind: input, shape index: {}, may-alias: {0,1,2}]
  %s2 = inlined_call_operand.vmem [shape: bf16[2,16,16,4], index: 2, kind: input, shape index: {}, may-alias: {0,1,2}]
  %s3 = inlined_call_operand.vmem [shape: f32[1,4], index: 3, kind: input, shape index: {}]
  %s4 = inlined_call_operand.vmem [shape: f32[1,4], index: 4, kind: input, shape index: {}]
  %s5 = inlined_call_operand.vmem [shape: bf16[36,8], index: 5, kind: input, shape index: {}]
  %s6 = inlined_call_operand.vmem [shape: bf16[2,256,8], index: 6, kind: output, shape index: {0}]
  %s7 = inlined_call_operand.vmem [shape: f32[2,1,2,8], index: 7, kind: output, shape index: {1}]
  %8 = xla_tuple %s6, %s7
  %s9 = sld [smem:[#allocation0]]
  $region81: #{double_conv.3} parent=0
    _
  %s11 = ssub.s32 1, %s9
  %s12 = scalar_select 0, %s11, %s9
  loop: start=0, step=1, limit=4
  $region2: #{double_conv.3} parent=0 // loop_pre_header
    _
  $region3: #{double_conv.3} parent=0 // loop_header
    %s14 = sphi 0, %s18
    %p15 = scmp.ge.s32.totalorder %s14, 4
    %s21 = sphi 0, %s33
    %s22 = sphi 0, %s29
    %s23 = sphi 0, %s21
    %s24 = sphi 0, %s22
    %s25 = sphi 0, %s23
    %s26 = sphi 0, %s24
    %s38 = sphi 0, %s40
    %s41 = sphi 0, %s38
    %s42 = sphi 0, %s41
    %s58 = sphi 0, %s42
    %s76 = sphi 0, %s78
    %s79 = sphi 0, %s76
    %s80 = sphi 0, %s79
    %s96 = sphi 0, %s80
    %s114 = sphi 0, %s116
    %s117 = sphi 0, %s114
    %s118 = sphi 0, %s117
    %s134 = sphi 0, %s118
    %s138 = sphi 0, %s138
    %s140 = sphi 0, %s138
    %s141 = sphi 0, %s140
    %s155 = sphi 0, %s141
    %s159 = sphi 0, %s159
    %s161 = sphi 0, %s159
    %s162 = sphi 0, %s161
    %s176 = sphi 0, %s162
    %s180 = sphi 0, %s180
    %s182 = sphi 0, %s180
    %s183 = sphi 0, %s182
    %s197 = sphi 0, %s183
    %s205 = sphi 0, %s207
    %s208 = sphi 0, %s205
    %s209 = sphi 0, %s208
    %s225 = sphi 0, %s209
    %s233 = sphi 0, %s235
    %s236 = sphi 0, %s233
    %s237 = sphi 0, %s236
    %s253 = sphi 0, %s237
  $region4: #{double_conv.3} parent=0 // loop_header_branch
    %17 = sbr.rel (%p15) target = $region8
  $region5: #{double_conv.3} parent=0 // loop_body
    %s19 = ssub.s32 %s14, 1
    %s20 = ssub.s32 %s14, 2
    %s27 = sadd.s32 1, %s22
    %p28 = scmp.ge.s32.totalorder %s27, 1
    %s29 = scalar_select %p28, 0, %s27
    %s30 = sadd.s32 1, %s21
    %s31 = scalar_select %p28, %s30, %s21
    %p32 = scmp.ge.s32.totalorder %s31, 2
    %s33 = scalar_select %p32, 0, %s31
    %s34 = ssub.s32 %s21, %s33
    %s35 = ssub.s32 %s22, %s29
    %s36 = sor.u32 %s34, %s35
    %p37 = scmp.eq.s32.totalorder %s36, 0
    %s39 = sadd.s32 %s38, 1
    %s40 = scalar_select %p37, %s38, %s39
    %p43 = pneg %p37
    %p44 = scmp.eq.s32.totalorder %s14, 1
    %p45 = por %p43, %p44
    %p46 = scmp.ne.s32.totalorder %s38, %s41
    %p47 = scmp.eq.s32.totalorder %s14, 0
    %p48 = por %p46, %p47
    %p49 = scmp.ne.s32.totalorder %s38, %s41
    %p50 = scmp.eq.s32.totalorder %s19, 1
    %p51 = por %p49, %p50
    %p52 = scmp.ne.s32.totalorder %s41, %s42
    %p53 = scmp.eq.s32.totalorder %s19, 0
    %p54 = por %p52, %p53
    %p55 = scmp.ne.s32.totalorder %s41, %s42
    %p56 = scmp.eq.s32.totalorder %s20, 1
    %p57 = por %p55, %p56
    %p59 = scmp.ne.s32.totalorder %s42, %s58
    %p60 = scmp.eq.s32.totalorder %s20, 0
    %p61 = por %p59, %p60
    %p62 = scmp.gt.s32.totalorder %s22, 0
    %s63 = smul.u32 %s22, 16
    %s64 = ssub.s32 %s63, 1
    %s65 = scalar_select %p62, 1, 0
    %s66 = smul.u32 %s65, %s64
    %p67 = scmp.gt.s32.totalorder %s29, 0
    %s68 = smul.u32 %s29, 16
    %s69 = ssub.s32 %s68, 1
    %s70 = scalar_select %p67, 1, 0
    %s71 = smul.u32 %s70, %s69
    %s72 = ssub.s32 %s21, %s33
    %s73 = ssub.s32 %s66, %s71
    %s74 = sor.u32 %s72, %s73
    %p75 = scmp.eq.s32.totalorder %s74, 0
    %s77 = sadd.s32 %s76, 1
    %s78 = scalar_select %p75, %s76, %s77
    %p81 = pneg %p75
    %p82 = scmp.eq.s32.totalorder %s14, 1
    %p83 = por %p81, %p82
    %p84 = scmp.ne.s32.totalorder %s76, %s79
    %p85 = scmp.eq.s32.totalorder %s14, 0
    %p86 = por %p84, %p85
    %p87 = scmp.ne.s32.totalorder %s76, %s79
    %p88 = scmp.eq.s32.totalorder %s19, 1
    %p89 = por %p87, %p88
    %p90 = scmp.ne.s32.totalorder %s79, %s80
    %p91 = scmp.eq.s32.totalorder %s19, 0
    %p92 = por %p90, %p91
    %p93 = scmp.ne.s32.totalorder %s79, %s80
    %p94 = scmp.eq.s32.totalorder %s20, 1
    %p95 = por %p93, %p94
    %p97 = scmp.ne.s32.totalorder %s80, %s96
    %p98 = scmp.eq.s32.totalorder %s20, 0
    %p99 = por %p97, %p98
    %s100 = sadd.s32 %s22, 1
    %s101 = smul.u32 %s100, 16
    %p102 = scmp.eq.s32.totalorder %s22, 0
    %s103 = scalar_select %p102, 1, 0
    %s104 = ssub.s32 %s101, %s103
    %s105 = sadd.s32 %s29, 1
    %s106 = smul.u32 %s105, 16
    %p107 = scmp.eq.s32.totalorder %s29, 0
    %s108 = scalar_select %p107, 1, 0
    %s109 = ssub.s32 %s106, %s108
    %s110 = ssub.s32 %s21, %s33
    %s111 = ssub.s32 %s104, %s109
    %s112 = sor.u32 %s110, %s111
    %p113 = scmp.eq.s32.totalorder %s112, 0
    %s115 = sadd.s32 %s114, 1
    %s116 = scalar_select %p113, %s114, %s115
    %p119 = pneg %p113
    %p120 = scmp.eq.s32.totalorder %s14, 1
    %p121 = por %p119, %p120
    %p122 = scmp.ne.s32.totalorder %s114, %s117
    %p123 = scmp.eq.s32.totalorder %s14, 0
    %p124 = por %p122, %p123
    %p125 = scmp.ne.s32.totalorder %s114, %s117
    %p126 = scmp.eq.s32.totalorder %s19, 1
    %p127 = por %p125, %p126
    %p128 = scmp.ne.s32.totalorder %s117, %s118
    %p129 = scmp.eq.s32.totalorder %s19, 0
    %p130 = por %p128, %p129
    %p131 = scmp.ne.s32.totalorder %s117, %s118
    %p132 = scmp.eq.s32.totalorder %s20, 1
    %p133 = por %p131, %p132
    %p135 = scmp.ne.s32.totalorder %s118, %s134
    %p136 = scmp.eq.s32.totalorder %s20, 0
    %p137 = por %p135, %p136
    %s139 = sadd.s32 %s138, 1
    %p142 = scmp.eq.s32.totalorder %s14, 1
    %p143 = scmp.ne.s32.totalorder %s138, %s140
    %p144 = scmp.eq.s32.totalorder %s14, 0
    %p145 = por %p143, %p144
    %p146 = scmp.ne.s32.totalorder %s138, %s140
    %p147 = scmp.eq.s32.totalorder %s19, 1
    %p148 = por %p146, %p147
    %p149 = scmp.ne.s32.totalorder %s140, %s141
    %p150 = scmp.eq.s32.totalorder %s19, 0
    %p151 = por %p149, %p150
    %p152 = scmp.ne.s32.totalorder %s140, %s141
    %p153 = scmp.eq.s32.totalorder %s20, 1
    %p154 = por %p152, %p153
    %p156 = scmp.ne.s32.totalorder %s141, %s155
    %p157 = scmp.eq.s32.totalorder %s20, 0
    %p158 = por %p156, %p157
    %s160 = sadd.s32 %s159, 1
    %p163 = scmp.eq.s32.totalorder %s14, 1
    %p164 = scmp.ne.s32.totalorder %s159, %s161
    %p165 = scmp.eq.s32.totalorder %s14, 0
    %p166 = por %p164, %p165
    %p167 = scmp.ne.s32.totalorder %s159, %s161
    %p168 = scmp.eq.s32.totalorder %s19, 1
    %p169 = por %p167, %p168
    %p170 = scmp.ne.s32.totalorder %s161, %s162
    %p171 = scmp.eq.s32.totalorder %s19, 0
    %p172 = por %p170, %p171
    %p173 = scmp.ne.s32.totalorder %s161, %s162
    %p174 = scmp.eq.s32.totalorder %s20, 1
    %p175 = por %p173, %p174
    %p177 = scmp.ne.s32.totalorder %s162, %s176
    %p178 = scmp.eq.s32.totalorder %s20, 0
    %p179 = por %p177, %p178
    %s181 = sadd.s32 %s180, 1
    %p184 = scmp.eq.s32.totalorder %s14, 1
    %p185 = scmp.ne.s32.totalorder %s180, %s182
    %p186 = scmp.eq.s32.totalorder %s14, 0
    %p187 = por %p185, %p186
    %p188 = scmp.ne.s32.totalorder %s180, %s182
    %p189 = scmp.eq.s32.totalorder %s19, 1
    %p190 = por %p188, %p189
    %p191 = scmp.ne.s32.totalorder %s182, %s183
    %p192 = scmp.eq.s32.totalorder %s19, 0
    %p193 = por %p191, %p192
    %p194 = scmp.ne.s32.totalorder %s182, %s183
    %p195 = scmp.eq.s32.totalorder %s20, 1
    %p196 = por %p194, %p195
    %p198 = scmp.ne.s32.totalorder %s183, %s197
    %p199 = scmp.eq.s32.totalorder %s20, 0
    %p200 = por %p198, %p199
    %s201 = ssub.s32 %s21, %s33
    %s202 = ssub.s32 %s22, %s29
    %s203 = sor.u32 %s201, %s202
    %p204 = scmp.eq.s32.totalorder %s203, 0
    %s206 = sadd.s32 %s205, 1
    %s207 = scalar_select %p204, %s205, %s206
    %p210 = pneg %p204
    %p211 = scmp.eq.s32.totalorder %s14, 1
    %p212 = por %p210, %p211
    %p213 = scmp.ne.s32.totalorder %s205, %s208
    %p214 = scmp.eq.s32.totalorder %s14, 0
    %p215 = por %p213, %p214
    %p216 = scmp.ne.s32.totalorder %s205, %s208
    %p217 = scmp.eq.s32.totalorder %s19, 1
    %p218 = por %p216, %p217
    %p219 = scmp.ne.s32.totalorder %s208, %s209
    %p220 = scmp.eq.s32.totalorder %s19, 0
    %p221 = por %p219, %p220
    %p222 = scmp.ne.s32.totalorder %s208, %s209
    %p223 = scmp.eq.s32.totalorder %s20, 1
    %p224 = por %p222, %p223
    %p226 = scmp.ne.s32.totalorder %s209, %s225
    %p227 = scmp.eq.s32.totalorder %s20, 0
    %p228 = por %p226, %p227
    %s229 = ssub.s32 %s21, %s33
    %s230 = ssub.s32 %s22, %s29
    %s231 = sor.u32 %s229, %s230
    %p232 = scmp.eq.s32.totalorder %s231, 0
    %s234 = sadd.s32 %s233, 1
    %s235 = scalar_select %p232, %s233, %s234
    %p238 = pneg %p232
    %p239 = scmp.eq.s32.totalorder %s14, 1
    %p240 = por %p238, %p239
    %p241 = scmp.ne.s32.totalorder %s233, %s236
    %p242 = scmp.eq.s32.totalorder %s14, 0
    %p243 = por %p241, %p242
    %p244 = scmp.ne.s32.totalorder %s233, %s236
    %p245 = scmp.eq.s32.totalorder %s19, 1
    %p246 = por %p244, %p245
    %p247 = scmp.ne.s32.totalorder %s236, %s237
    %p248 = scmp.eq.s32.totalorder %s19, 0
    %p249 = por %p247, %p248
    %p250 = scmp.ne.s32.totalorder %s236, %s237
    %p251 = scmp.eq.s32.totalorder %s20, 1
    %p252 = por %p250, %p251
    %p254 = scmp.ne.s32.totalorder %s237, %s253
    %p255 = scmp.eq.s32.totalorder %s20, 0
    %p256 = por %p254, %p255
    %p257 = scmp.le.s32.totalorder 1, %s14
    %p258 = scmp.lt.s32.totalorder %s14, 3
    %p259 = pnand %p257, %p258
    %p260 = pneg %p259
    // Predicated region
    $region9: #{double_conv.3} parent=5 // pred_check
      _
    $region10: #{double_conv.3} parent=5 // pred_check_branch
      %262 = sbr.rel (%p259) target = $region12
    $region11: #{double_conv.3} parent=5 // pred_region
      %s263 = ssub.s32 %s14, 1
      // Predicated region
      $region13: #{double_conv.3} parent=11 // pred_check
        %p264 = pneg %p151
      $region14: #{double_conv.3} parent=11 // pred_check_branch
        %266 = sbr.rel (%p264) target = $region16
      $region15: #{double_conv.3} parent=11 // pred_region
        _
      $region16: #{double_conv.3} parent=11 // pred_fallthru
        _
      // Predicated region
      $region17: #{double_conv.3} parent=11 // pred_check
        %p267 = pneg %p172
      $region18: #{double_conv.3} parent=11 // pred_check_branch
        %269 = sbr.rel (%p267) target = $region20
      $region19: #{double_conv.3} parent=11 // pred_region
        _
      $region20: #{double_conv.3} parent=11 // pred_fallthru
        _
      // Predicated region
      $region21: #{double_conv.3} parent=11 // pred_check
        %p270 = pneg %p193
      $region22: #{double_conv.3} parent=11 // pred_check_branch
        %272 = sbr.rel (%p270) target = $region24
      $region23: #{double_conv.3} parent=11 // pred_region
        _
      $region24: #{double_conv.3} parent=11 // pred_fallthru
        _
    $region12: #{double_conv.3} parent=5 // pred_fallthru
      _
    %p273 = scmp.lt.s32.totalorder %s14, 2
    // Predicated region
    $region25: #{double_conv.3} parent=5 // pred_check
      %p274 = pneg %p273
    $region26: #{double_conv.3} parent=5 // pred_check_branch
      %276 = sbr.rel (%p274) target = $region28
    $region27: #{double_conv.3} parent=5 // pred_region
      // Predicated region
      $region29: #{double_conv.3} parent=27 // pred_check
        %p277 = pneg %p48
      $region30: #{double_conv.3} parent=27 // pred_check_branch
        %279 = sbr.rel (%p277) target = $region32
      $region31: #{double_conv.3} parent=27 // pred_region
        %s280 = smul.u32 16, %s22
        %p281 = scmp.lt.s32.totalorder %s21, 1
        %s282 = scalar_select %p281, %s21, 1
        %p283 = scmp.lt.s32.totalorder %s280, 15
        %s284 = scalar_select %p283, %s280, 15
        %s285 = smul.addr %s284, 2
        %s286 = smul.addr %s282, 32
        %s287 = sadd.s32 %s285, %s286
        %s288 = smul.addr %s287, 4
        %s289 = scalar_lea.vmem %s0, %s288
        %s290 = smul.u32 16, %s22
      $region32: #{double_conv.3} parent=27 // pred_fallthru
        _
      // Predicated region
      $region33: #{double_conv.3} parent=27 // pred_check
        %p291 = pneg %p86
      $region34: #{double_conv.3} parent=27 // pred_check_branch
        %293 = sbr.rel (%p291) target = $region36
      $region35: #{double_conv.3} parent=27 // pred_region
        %p294 = scmp.gt.s32.totalorder %s22, 0
        %s295 = smul.u32 %s22, 16
        %s296 = ssub.s32 %s295, 1
        %s297 = scalar_select %p294, 1, 0
        %s298 = smul.u32 %s297, %s296
        %p299 = scmp.lt.s32.totalorder %s21, 1
        %s300 = scalar_select %p299, %s21, 1
        %p301 = scmp.lt.s32.totalorder %s298, 15
        %s302 = scalar_select %p301, %s298, 15
        %s303 = smul.addr %s302, 2
        %s304 = smul.addr %s300, 32
        %s305 = sadd.s32 %s303, %s304
        %s306 = smul.addr %s305, 4
        %s307 = scalar_lea.vmem %s1, %s306
        %p308 = scmp.gt.s32.totalorder %s22, 0
        %s309 = smul.u32 %s22, 16
        %s310 = ssub.s32 %s309, 1
        %s311 = scalar_select %p308, 1, 0
        %s312 = smul.u32 %s311, %s310
      $region36: #{double_conv.3} parent=27 // pred_fallthru
        _
      // Predicated region
      $region37: #{double_conv.3} parent=27 // pred_check
        %p313 = pneg %p124
      $region38: #{double_conv.3} parent=27 // pred_check_branch
        %315 = sbr.rel (%p313) target = $region40
      $region39: #{double_conv.3} parent=27 // pred_region
        %s316 = sadd.s32 %s22, 1
        %s317 = smul.u32 %s316, 16
        %p318 = scmp.eq.s32.totalorder %s22, 0
        %s319 = scalar_select %p318, 1, 0
        %s320 = ssub.s32 %s317, %s319
        %p321 = scmp.lt.s32.totalorder %s21, 1
        %s322 = scalar_select %p321, %s21, 1
        %p323 = scmp.lt.s32.totalorder %s320, 15
        %s324 = scalar_select %p323, %s320, 15
        %s325 = smul.addr %s324, 2
        %s326 = smul.addr %s322, 32
        %s327 = sadd.s32 %s325, %s326
        %s328 = smul.addr %s327, 4
        %s329 = scalar_lea.vmem %s2, %s328
        %s330 = sadd.s32 %s22, 1
        %s331 = smul.u32 %s330, 16
        %p332 = scmp.eq.s32.totalorder %s22, 0
        %s333 = scalar_select %p332, 1, 0
        %s334 = ssub.s32 %s331, %s333
      $region40: #{double_conv.3} parent=27 // pred_fallthru
        _
    $region28: #{double_conv.3} parent=5 // pred_fallthru
      _
    %p335 = scmp.le.s32.totalorder 1, %s14
    %p336 = scmp.lt.s32.totalorder %s14, 3
    %p337 = pnand %p335, %p336
    %p338 = pneg %p337
    // Predicated region
    $region41: #{double_conv.3} parent=5 // pred_check
      _
    $region42: #{double_conv.3} parent=5 // pred_check_branch
      %340 = sbr.rel (%p337) target = $region44
    $region43: #{double_conv.3} parent=5 // pred_region
      %s341 = ssub.s32 %s14, 1
      %s342 = smul.u32 16, %s24
      %p343 = scmp.lt.s32.totalorder %s23, 1
      %s344 = scalar_select %p343, %s23, 1
      %p345 = scmp.lt.s32.totalorder %s342, 15
      %s346 = scalar_select %p345, %s342, 15
      %s347 = smul.addr %s346, 2
      %s348 = smul.addr %s344, 32
      %s349 = sadd.s32 %s347, %s348
      %s350 = smul.addr %s349, 4
      %s351 = scalar_lea.vmem %s0, %s350
      %p352 = pneg %p54
      %p353 = pneg %p51
      %p354 = scmp.gt.s32.totalorder %s24, 0
      %s355 = smul.u32 %s24, 16
      %s356 = ssub.s32 %s355, 1
      %s357 = scalar_select %p354, 1, 0
      %s358 = smul.u32 %s357, %s356
      %p359 = scmp.lt.s32.totalorder %s23, 1
      %s360 = scalar_select %p359, %s23, 1
      %p361 = scmp.lt.s32.totalorder %s358, 15
      %s362 = scalar_select %p361, %s358, 15
      %s363 = smul.addr %s362, 2
      %s364 = smul.addr %s360, 32
      %s365 = sadd.s32 %s363, %s364
      %s366 = smul.addr %s365, 4
      %s367 = scalar_lea.vmem %s1, %s366
      %p368 = pneg %p92
      %p369 = pneg %p89
      %s370 = sadd.s32 %s24, 1
      %s371 = smul.u32 %s370, 16
      %p372 = scmp.eq.s32.totalorder %s24, 0
      %s373 = scalar_select %p372, 1, 0
      %s374 = ssub.s32 %s371, %s373
      %p375 = scmp.lt.s32.totalorder %s23, 1
      %s376 = scalar_select %p375, %s23, 1
      %p377 = scmp.lt.s32.totalorder %s374, 15
      %s378 = scalar_select %p377, %s374, 15
      %s379 = smul.addr %s378, 2
      %s380 = smul.addr %s376, 32
      %s381 = sadd.s32 %s379, %s380
      %s382 = smul.addr %s381, 4
      %s383 = scalar_lea.vmem %s2, %s382
      %p384 = pneg %p130
      %p385 = pneg %p127
      %p386 = pneg %p151
      %p387 = pneg %p148
      %p388 = pneg %p172
      %p389 = pneg %p169
      %p390 = pneg %p193
      %p391 = pneg %p190
      %p392 = pneg %p221
      %p393 = pneg %p218
      %s394 = smul.u32 32, %s24
      %p395 = scmp.lt.s32.totalorder %s23, 1
      %s396 = scalar_select %p395, %s23, 1
      %p397 = scmp.lt.s32.totalorder %s394, 31
      %s398 = scalar_select %p397, %s394, 31
      %s399 = smul.addr %s396, 32
      %s400 = sadd.s32 %s398, %s399
      %s401 = smul.addr %s400, 4
      %s402 = scalar_lea.vmem %s6, %s401
      %p403 = pneg %p249
      %p404 = pneg %p246
      %p405 = scmp.lt.s32.totalorder %s23, 1
      %s406 = scalar_select %p405, %s23, 1
      %p407 = scmp.lt.s32.totalorder %s24, 0
      %s408 = scalar_select %p407, %s24, 0
      %s409 = sadd.s32 %s408, %s406
      %s410 = smul.addr %s409, 2
      %s411 = scalar_lea.vmem %s7, %s410
      %s412 = smul.u32 16, %s24
      %p413 = scmp.lt.s32.totalorder %s23, 1
      %s414 = scalar_select %p413, %s23, 1
      %p415 = scmp.lt.s32.totalorder %s412, 15
      %s416 = scalar_select %p415, %s412, 15
      %s417 = smul.addr %s416, 2
      %s418 = smul.addr %s414, 32
      %s419 = sadd.s32 %s417, %s418
      %s420 = smul.addr %s419, 4
      %s421 = scalar_lea.vmem %s0, %s420
      %s422 = smul.u32 16, %s24
      %p423 = scmp.gt.s32.totalorder %s24, 0
      %s424 = smul.u32 %s24, 16
      %s425 = ssub.s32 %s424, 1
      %s426 = scalar_select %p423, 1, 0
      %s427 = smul.u32 %s426, %s425
      %p428 = scmp.lt.s32.totalorder %s23, 1
      %s429 = scalar_select %p428, %s23, 1
      %p430 = scmp.lt.s32.totalorder %s427, 15
      %s431 = scalar_select %p430, %s427, 15
      %s432 = smul.addr %s431, 2
      %s433 = smul.addr %s429, 32
      %s434 = sadd.s32 %s432, %s433
      %s435 = smul.addr %s434, 4
      %s436 = scalar_lea.vmem %s1, %s435
      %p437 = scmp.gt.s32.totalorder %s24, 0
      %s438 = smul.u32 %s24, 16
      %s439 = ssub.s32 %s438, 1
      %s440 = scalar_select %p437, 1, 0
      %s441 = smul.u32 %s440, %s439
      %s442 = sadd.s32 %s24, 1
      %s443 = smul.u32 %s442, 16
      %p444 = scmp.eq.s32.totalorder %s24, 0
      %s445 = scalar_select %p444, 1, 0
      %s446 = ssub.s32 %s443, %s445
      %p447 = scmp.lt.s32.totalorder %s23, 1
      %s448 = scalar_select %p447, %s23, 1
      %p449 = scmp.lt.s32.totalorder %s446, 15
      %s450 = scalar_select %p449, %s446, 15
      %s451 = smul.addr %s450, 2
      %s452 = smul.addr %s448, 32
      %s453 = sadd.s32 %s451, %s452
      %s454 = smul.addr %s453, 4
      %s455 = scalar_lea.vmem %s2, %s454
      %s456 = sadd.s32 %s24, 1
      %s457 = smul.u32 %s456, 16
      %p458 = scmp.eq.s32.totalorder %s24, 0
      %s459 = scalar_select %p458, 1, 0
      %s460 = ssub.s32 %s457, %s459
      %s461 = smul.u32 32, %s24
      %p462 = scmp.lt.s32.totalorder %s23, 1
      %s463 = scalar_select %p462, %s23, 1
      %p464 = scmp.lt.s32.totalorder %s461, 31
      %s465 = scalar_select %p464, %s461, 31
      %s466 = smul.addr %s463, 32
      %s467 = sadd.s32 %s465, %s466
      %s468 = smul.addr %s467, 4
      %s469 = scalar_lea.vmem %s6, %s468
      %s470 = smul.u32 32, %s24
      %p471 = scmp.lt.s32.totalorder %s23, 1
      %s472 = scalar_select %p471, %s23, 1
      %p473 = scmp.lt.s32.totalorder %s24, 0
      %s474 = scalar_select %p473, %s24, 0
      %s475 = sadd.s32 %s474, %s472
      %s476 = smul.addr %s475, 2
      %s477 = scalar_lea.vmem %s7, %s476
      %vm479 = vcmask 24576
      %vm480 = vsmask.f32 256
      %vm481 = vmand %vm479, %vm480
      %v482 = vld [vmem:[#allocation2] sm:$0x1]
      %v483 = vsel %vm481, 0, %v482
      %484 = vst [vmem:[#allocation2] sm:$0x1] %v483
      %v485 = vld [vmem:[#allocation2 + $0xc] sm:$0x1]
      %v486 = vsel %vm481, 0, %v485
      %487 = vst [vmem:[#allocation2 + $0xc] sm:$0x1] %v486
      %v488 = vld [vmem:[#allocation2 + $0x18] sm:$0x1]
      %v489 = vsel %vm481, 0, %v488
      %490 = vst [vmem:[#allocation2 + $0x18] sm:$0x1] %v489
      %v491 = vld [vmem:[#allocation2 + $0x24] sm:$0x1]
      %v492 = vsel %vm481, 0, %v491
      %493 = vst [vmem:[#allocation2 + $0x24] sm:$0x1] %v492
      %v494 = vld [vmem:[#allocation2 + $0x30] sm:$0x1]
      %v495 = vsel %vm481, 0, %v494
      %496 = vst [vmem:[#allocation2 + $0x30] sm:$0x1] %v495
      %v497 = vld [vmem:[#allocation2 + $0x3c] sm:$0x1]
      %v498 = vsel %vm481, 0, %v497
      %499 = vst [vmem:[#allocation2 + $0x3c] sm:$0x1] %v498
      %v500 = vld [vmem:[#allocation2 + $0x48] sm:$0x1]
      %v501 = vsel %vm481, 0, %v500
      %502 = vst [vmem:[#allocation2 + $0x48] sm:$0x1] %v501
      %v503 = vld [vmem:[#allocation2 + $0x54] sm:$0x1]
      %v504 = vsel %vm481, 0, %v503
      %505 = vst [vmem:[#allocation2 + $0x54] sm:$0x1] %v504
      %v506 = vld [vmem:[#allocation2 + $0x60] sm:$0x1]
      %v507 = vsel %vm481, 0, %v506
      %508 = vst [vmem:[#allocation2 + $0x60] sm:$0x1] %v507
      %v509 = vld [vmem:[#allocation2 + $0x6c] sm:$0x1]
      %v510 = vsel %vm481, 0, %v509
      %511 = vst [vmem:[#allocation2 + $0x6c] sm:$0x1] %v510
      %v512 = vld [vmem:[#allocation2 + $0x78] sm:$0x1]
      %v513 = vsel %vm481, 0, %v512
      %514 = vst [vmem:[#allocation2 + $0x78] sm:$0x1] %v513
      %v515 = vld [vmem:[#allocation2 + $0x84] sm:$0x1]
      %v516 = vsel %vm481, 0, %v515
      %517 = vst [vmem:[#allocation2 + $0x84] sm:$0x1] %v516
      %v518 = vld [vmem:[#allocation2 + $0x90] sm:$0x1]
      %v519 = vsel %vm481, 0, %v518
      %520 = vst [vmem:[#allocation2 + $0x90] sm:$0x1] %v519
      %v521 = vld [vmem:[#allocation2 + $0x9c] sm:$0x1]
      %v522 = vsel %vm481, 0, %v521
      %523 = vst [vmem:[#allocation2 + $0x9c] sm:$0x1] %v522
      %v524 = vld [vmem:[#allocation2 + $0xa8] sm:$0x1]
      %v525 = vsel %vm481, 0, %v524
      %526 = vst [vmem:[#allocation2 + $0xa8] sm:$0x1] %v525
      %v527 = vld [vmem:[#allocation2 + $0xb4] sm:$0x1]
      %v528 = vsel %vm481, 0, %v527
      %529 = vst [vmem:[#allocation2 + $0xb4] sm:$0x1] %v528
      %v530 = vld [vmem:[#allocation2 + $0xc0] sm:$0x1]
      %v531 = vsel %vm481, 0, %v530
      %532 = vst [vmem:[#allocation2 + $0xc0] sm:$0x1] %v531
      %v533 = vld [vmem:[#allocation2 + $0xcc] sm:$0x1]
      %v534 = vsel %vm481, 0, %v533
      %535 = vst [vmem:[#allocation2 + $0xcc] sm:$0x1] %v534
      %vm536 = vsmask.f32 7938
      %vm537 = vmand %vm479, %vm536
      %v538 = vld [vmem:[#allocation2 + $0x8] sm:$0x1]
      %v539 = vsel %vm537, 0, %v538
      %540 = vst [vmem:[#allocation2 + $0x8] sm:$0x1] %v539
      %v541 = vld [vmem:[#allocation2 + $0x14] sm:$0x1]
      %v542 = vsel %vm537, 0, %v541
      %543 = vst [vmem:[#allocation2 + $0x14] sm:$0x1] %v542
      %v544 = vld [vmem:[#allocation2 + $0x20] sm:$0x1]
      %v545 = vsel %vm537, 0, %v544
      %546 = vst [vmem:[#allocation2 + $0x20] sm:$0x1] %v545
      %v547 = vld [vmem:[#allocation2 + $0x2c] sm:$0x1]
      %v548 = vsel %vm537, 0, %v547
      %549 = vst [vmem:[#allocation2 + $0x2c] sm:$0x1] %v548
      %v550 = vld [vmem:[#allocation2 + $0x38] sm:$0x1]
      %v551 = vsel %vm537, 0, %v550
      %552 = vst [vmem:[#allocation2 + $0x38] sm:$0x1] %v551
      %v553 = vld [vmem:[#allocation2 + $0x44] sm:$0x1]
      %v554 = vsel %vm537, 0, %v553
      %555 = vst [vmem:[#allocation2 + $0x44] sm:$0x1] %v554
      %v556 = vld [vmem:[#allocation2 + $0x50] sm:$0x1]
      %v557 = vsel %vm537, 0, %v556
      %558 = vst [vmem:[#allocation2 + $0x50] sm:$0x1] %v557
      %v559 = vld [vmem:[#allocation2 + $0x5c] sm:$0x1]
      %v560 = vsel %vm537, 0, %v559
      %561 = vst [vmem:[#allocation2 + $0x5c] sm:$0x1] %v560
      %v562 = vld [vmem:[#allocation2 + $0x68] sm:$0x1]
      %v563 = vsel %vm537, 0, %v562
      %564 = vst [vmem:[#allocation2 + $0x68] sm:$0x1] %v563
      %v565 = vld [vmem:[#allocation2 + $0x74] sm:$0x1]
      %v566 = vsel %vm537, 0, %v565
      %567 = vst [vmem:[#allocation2 + $0x74] sm:$0x1] %v566
      %v568 = vld [vmem:[#allocation2 + $0x80] sm:$0x1]
      %v569 = vsel %vm537, 0, %v568
      %570 = vst [vmem:[#allocation2 + $0x80] sm:$0x1] %v569
      %v571 = vld [vmem:[#allocation2 + $0x8c] sm:$0x1]
      %v572 = vsel %vm537, 0, %v571
      %573 = vst [vmem:[#allocation2 + $0x8c] sm:$0x1] %v572
      %v574 = vld [vmem:[#allocation2 + $0x98] sm:$0x1]
      %v575 = vsel %vm537, 0, %v574
      %576 = vst [vmem:[#allocation2 + $0x98] sm:$0x1] %v575
      %v577 = vld [vmem:[#allocation2 + $0xa4] sm:$0x1]
      %v578 = vsel %vm537, 0, %v577
      %579 = vst [vmem:[#allocation2 + $0xa4] sm:$0x1] %v578
      %v580 = vld [vmem:[#allocation2 + $0xb0] sm:$0x1]
      %v581 = vsel %vm537, 0, %v580
      %582 = vst [vmem:[#allocation2 + $0xb0] sm:$0x1] %v581
      %v583 = vld [vmem:[#allocation2 + $0xbc] sm:$0x1]
      %v584 = vsel %vm537, 0, %v583
      %585 = vst [vmem:[#allocation2 + $0xbc] sm:$0x1] %v584
      %v586 = vld [vmem:[#allocation2 + $0xc8] sm:$0x1]
      %v587 = vsel %vm537, 0, %v586
      %588 = vst [vmem:[#allocation2 + $0xc8] sm:$0x1] %v587
      %v589 = vld [vmem:[#allocation2 + $0xd4] sm:$0x1]
      %v590 = vsel %vm537, 0, %v589
      %591 = vst [vmem:[#allocation2 + $0xd4] sm:$0x1] %v590
      %v592 = vld [vmem:[%s421] sm:$0xf]
      %v593 = vld [vmem:[%s421 + $0x4] sm:$0xf]
      %v594 = vld [vmem:[%s421 + $0x8] sm:$0xf]
      %v595 = vld [vmem:[%s421 + $0xc] sm:$0xf]
      %v596 = vld [vmem:[%s421 + $0x10] sm:$0xf]
      %v597 = vld [vmem:[%s421 + $0x14] sm:$0xf]
      %v598 = vld [vmem:[%s421 + $0x18] sm:$0xf]
      %v599 = vld [vmem:[%s421 + $0x1c] sm:$0xf]
      %v600 = vld [vmem:[%s421 + $0x20] sm:$0xf]
      %v601 = vld [vmem:[%s421 + $0x24] sm:$0xf]
      %v602 = vld [vmem:[%s421 + $0x28] sm:$0xf]
      %v603 = vld [vmem:[%s421 + $0x2c] sm:$0xf]
      %v604 = vld [vmem:[%s421 + $0x30] sm:$0xf]
      %v605 = vld [vmem:[%s421 + $0x34] sm:$0xf]
      %v606 = vld [vmem:[%s421 + $0x38] sm:$0xf]
      %v607 = vld [vmem:[%s421 + $0x3c] sm:$0xf]
      %v608 = vld [vmem:[%s421 + $0x40] sm:$0xf]
      %v609 = vld [vmem:[%s421 + $0x44] sm:$0xf]
      %v610 = vld [vmem:[%s421 + $0x48] sm:$0xf]
      %v611 = vld [vmem:[%s421 + $0x4c] sm:$0xf]
      %v612 = vld [vmem:[%s421 + $0x50] sm:$0xf]
      %v613 = vld [vmem:[%s421 + $0x54] sm:$0xf]
      %v614 = vld [vmem:[%s421 + $0x58] sm:$0xf]
      %v615 = vld [vmem:[%s421 + $0x5c] sm:$0xf]
      %v616 = vld [vmem:[%s421 + $0x60] sm:$0xf]
      %v617 = vld [vmem:[%s421 + $0x64] sm:$0xf]
      %v618 = vld [vmem:[%s421 + $0x68] sm:$0xf]
      %v619 = vld [vmem:[%s421 + $0x6c] sm:$0xf]
      %v620 = vld [vmem:[%s421 + $0x70] sm:$0xf]
      %v621 = vld [vmem:[%s421 + $0x74] sm:$0xf]
      %v622 = vld [vmem:[%s421 + $0x78] sm:$0xf]
      %v623 = vld [vmem:[%s421 + $0x7c] sm:$0xf]
      %vm624 = vsmask.f32 4368
      %vm625 = vmor %vm480, %vm624
      %v627 = vshrl.u32 %v592, 16
      %v629 = vrot.slane %v627, 7
      %v630 = vshll.u32 %v592, 16
      %v632 = vor.u32 %v629, %v630
      %v633 = vrot.slane %v629, 4
      %v635 = vshrl.u32 %v593, 16
      %v637 = vrot.slane %v635, 7
      %v638 = vshll.u32 %v593, 16
      %v640 = vor.u32 %v637, %v638
      %v641 = vsel %vm625, %v633, %v640
      %v642 = vrot.slane %v637, 4
      %v644 = vshrl.u32 %v594, 16
      %v646 = vrot.slane %v644, 7
      %v647 = vshll.u32 %v594, 16
      %v649 = vor.u32 %v646, %v647
      %v650 = vrot.slane %v646, 4
      %v652 = vshrl.u32 %v595, 16
      %v654 = vrot.slane %v652, 7
      %v655 = vshll.u32 %v595, 16
      %v657 = vor.u32 %v654, %v655
      %v658 = vsel %vm625, %v650, %v657
      %v659 = vrot.slane %v654, 4
      %v661 = vshrl.u32 %v596, 16
      %v663 = vrot.slane %v661, 7
      %v664 = vshll.u32 %v596, 16
      %v666 = vor.u32 %v663, %v664
      %v667 = vrot.slane %v663, 4
      %v669 = vshrl.u32 %v597, 16
      %v671 = vrot.slane %v669, 7
      %v672 = vshll.u32 %v597, 16
      %v674 = vor.u32 %v671, %v672
      %v675 = vsel %vm625, %v667, %v674
      %v676 = vrot.slane %v671, 4
      %v678 = vshrl.u32 %v598, 16
      %v680 = vrot.slane %v678, 7
      %v681 = vshll.u32 %v598, 16
      %v683 = vor.u32 %v680, %v681
      %v684 = vrot.slane %v680, 4
      %v686 = vshrl.u32 %v599, 16
      %v688 = vrot.slane %v686, 7
      %v689 = vshll.u32 %v599, 16
      %v691 = vor.u32 %v688, %v689
      %v692 = vsel %vm625, %v684, %v691
      %v693 = vrot.slane %v688, 4
      %v695 = vshrl.u32 %v600, 16
      %v697 = vrot.slane %v695, 7
      %v698 = vshll.u32 %v600, 16
      %v700 = vor.u32 %v697, %v698
      %v701 = vrot.slane %v697, 4
      %v703 = vshrl.u32 %v601, 16
      %v705 = vrot.slane %v703, 7
      %v706 = vshll.u32 %v601, 16
      %v708 = vor.u32 %v705, %v706
      %v709 = vsel %vm625, %v701, %v708
      %v710 = vrot.slane %v705, 4
      %v712 = vshrl.u32 %v602, 16
      %v714 = vrot.slane %v712, 7
      %v715 = vshll.u32 %v602, 16
      %v717 = vor.u32 %v714, %v715
      %v718 = vrot.slane %v714, 4
      %v720 = vshrl.u32 %v603, 16
      %v722 = vrot.slane %v720, 7
      %v723 = vshll.u32 %v603, 16
      %v725 = vor.u32 %v722, %v723
      %v726 = vsel %vm625, %v718, %v725
      %v727 = vrot.slane %v722, 4
      %v729 = vshrl.u32 %v604, 16
      %v731 = vrot.slane %v729, 7
      %v732 = vshll.u32 %v604, 16
      %v734 = vor.u32 %v731, %v732
      %v735 = vrot.slane %v731, 4
      %v737 = vshrl.u32 %v605, 16
      %v739 = vrot.slane %v737, 7
      %v740 = vshll.u32 %v605, 16
      %v742 = vor.u32 %v739, %v740
      %v743 = vsel %vm625, %v735, %v742
      %v744 = vrot.slane %v739, 4
      %v746 = vshrl.u32 %v606, 16
      %v748 = vrot.slane %v746, 7
      %v749 = vshll.u32 %v606, 16
      %v751 = vor.u32 %v748, %v749
      %v752 = vrot.slane %v748, 4
      %v754 = vshrl.u32 %v607, 16
      %v756 = vrot.slane %v754, 7
      %v757 = vshll.u32 %v607, 16
      %v759 = vor.u32 %v756, %v757
      %v760 = vsel %vm625, %v752, %v759
      %v761 = vrot.slane %v756, 4
      %v763 = vshrl.u32 %v608, 16
      %v765 = vrot.slane %v763, 7
      %v766 = vshll.u32 %v608, 16
      %v768 = vor.u32 %v765, %v766
      %v769 = vrot.slane %v765, 4
      %v771 = vshrl.u32 %v609, 16
      %v773 = vrot.slane %v771, 7
      %v774 = vshll.u32 %v609, 16
      %v776 = vor.u32 %v773, %v774
      %v777 = vsel %vm625, %v769, %v776
      %v778 = vrot.slane %v773, 4
      %v780 = vshrl.u32 %v610, 16
      %v782 = vrot.slane %v780, 7
      %v783 = vshll.u32 %v610, 16
      %v785 = vor.u32 %v782, %v783
      %v786 = vrot.slane %v782, 4
      %v788 = vshrl.u32 %v611, 16
      %v790 = vrot.slane %v788, 7
      %v791 = vshll.u32 %v611, 16
      %v793 = vor.u32 %v790, %v791
      %v794 = vsel %vm625, %v786, %v793
      %v795 = vrot.slane %v790, 4
      %v797 = vshrl.u32 %v612, 16
      %v799 = vrot.slane %v797, 7
      %v800 = vshll.u32 %v612, 16
      %v802 = vor.u32 %v799, %v800
      %v803 = vrot.slane %v799, 4
      %v805 = vshrl.u32 %v613, 16
      %v807 = vrot.slane %v805, 7
      %v808 = vshll.u32 %v613, 16
      %v810 = vor.u32 %v807, %v808
      %v811 = vsel %vm625, %v803, %v810
      %v812 = vrot.slane %v807, 4
      %v814 = vshrl.u32 %v614, 16
      %v816 = vrot.slane %v814, 7
      %v817 = vshll.u32 %v614, 16
      %v819 = vor.u32 %v816, %v817
      %v820 = vrot.slane %v816, 4
      %v822 = vshrl.u32 %v615, 16
      %v824 = vrot.slane %v822, 7
      %v825 = vshll.u32 %v615, 16
      %v827 = vor.u32 %v824, %v825
      %v828 = vsel %vm625, %v820, %v827
      %v829 = vrot.slane %v824, 4
      %v831 = vshrl.u32 %v616, 16
      %v833 = vrot.slane %v831, 7
      %v834 = vshll.u32 %v616, 16
      %v836 = vor.u32 %v833, %v834
      %v837 = vrot.slane %v833, 4
      %v839 = vshrl.u32 %v617, 16
      %v841 = vrot.slane %v839, 7
      %v842 = vshll.u32 %v617, 16
      %v844 = vor.u32 %v841, %v842
      %v845 = vsel %vm625, %v837, %v844
      %v846 = vrot.slane %v841, 4
      %v848 = vshrl.u32 %v618, 16
      %v850 = vrot.slane %v848, 7
      %v851 = vshll.u32 %v618, 16
      %v853 = vor.u32 %v850, %v851
      %v854 = vrot.slane %v850, 4
      %v856 = vshrl.u32 %v619, 16
      %v858 = vrot.slane %v856, 7
      %v859 = vshll.u32 %v619, 16
      %v861 = vor.u32 %v858, %v859
      %v862 = vsel %vm625, %v854, %v861
      %v863 = vrot.slane %v858, 4
      %v865 = vshrl.u32 %v620, 16
      %v867 = vrot.slane %v865, 7
      %v868 = vshll.u32 %v620, 16
      %v870 = vor.u32 %v867, %v868
      %v871 = vrot.slane %v867, 4
      %v873 = vshrl.u32 %v621, 16
      %v875 = vrot.slane %v873, 7
      %v876 = vshll.u32 %v621, 16
      %v878 = vor.u32 %v875, %v876
      %v879 = vsel %vm625, %v871, %v878
      %v880 = vrot.slane %v875, 4
      %v882 = vshrl.u32 %v622, 16
      %v884 = vrot.slane %v882, 7
      %v885 = vshll.u32 %v622, 16
      %v887 = vor.u32 %v884, %v885
      %v888 = vrot.slane %v884, 4
      %v890 = vshrl.u32 %v623, 16
      %v892 = vrot.slane %v890, 7
      %v893 = vshll.u32 %v623, 16
      %v895 = vor.u32 %v892, %v893
      %v896 = vsel %vm625, %v888, %v895
      %v897 = vrot.slane %v892, 4
      %s946 = scalar_lea.vmem [#allocation2], 12
      %vm947 = vcmask 27648
      %vm948 = vmand %vm947, %vm536
      %v949 = vld [vmem:[%s946] sm:$0xf]
      %v950 = vsel %vm948, %v632, %v949
      %951 = vst [vmem:[%s946] sm:$0xf] %v950
      %vm952 = vcmask 27648
      %953 = vst.msk [vmem:[%s946 + $0x4] sm:$0xf] %vm952, %v641
      %v954 = vld [vmem:[%s946 + $0x8] sm:$0x1]
      %v955 = vsel %vm481, %v642, %v954
      %956 = vst [vmem:[%s946 + $0x8] sm:$0x1] %v955
      %v957 = vld [vmem:[%s946 + $0xc] sm:$0xf]
      %v958 = vsel %vm948, %v649, %v957
      %959 = vst [vmem:[%s946 + $0xc] sm:$0xf] %v958
      %960 = vst.msk [vmem:[%s946 + $0x10] sm:$0xf] %vm952, %v658
      %v961 = vld [vmem:[%s946 + $0x14] sm:$0x1]
      %v962 = vsel %vm481, %v659, %v961
      %963 = vst [vmem:[%s946 + $0x14] sm:$0x1] %v962
      %v964 = vld [vmem:[%s946 + $0x18] sm:$0xf]
      %v965 = vsel %vm948, %v666, %v964
      %966 = vst [vmem:[%s946 + $0x18] sm:$0xf] %v965
      %967 = vst.msk [vmem:[%s946 + $0x1c] sm:$0xf] %vm952, %v675
      %v968 = vld [vmem:[%s946 + $0x20] sm:$0x1]
      %v969 = vsel %vm481, %v676, %v968
      %970 = vst [vmem:[%s946 + $0x20] sm:$0x1] %v969
      %v971 = vld [vmem:[%s946 + $0x24] sm:$0xf]
      %v972 = vsel %vm948, %v683, %v971
      %973 = vst [vmem:[%s946 + $0x24] sm:$0xf] %v972
      %974 = vst.msk [vmem:[%s946 + $0x28] sm:$0xf] %vm952, %v692
      %v975 = vld [vmem:[%s946 + $0x2c] sm:$0x1]
      %v976 = vsel %vm481, %v693, %v975
      %977 = vst [vmem:[%s946 + $0x2c] sm:$0x1] %v976
      %v978 = vld [vmem:[%s946 + $0x30] sm:$0xf]
      %v979 = vsel %vm948, %v700, %v978
      %980 = vst [vmem:[%s946 + $0x30] sm:$0xf] %v979
      %981 = vst.msk [vmem:[%s946 + $0x34] sm:$0xf] %vm952, %v709
      %v982 = vld [vmem:[%s946 + $0x38] sm:$0x1]
      %v983 = vsel %vm481, %v710, %v982
      %984 = vst [vmem:[%s946 + $0x38] sm:$0x1] %v983
      %v985 = vld [vmem:[%s946 + $0x3c] sm:$0xf]
      %v986 = vsel %vm948, %v717, %v985
      %987 = vst [vmem:[%s946 + $0x3c] sm:$0xf] %v986
      %988 = vst.msk [vmem:[%s946 + $0x40] sm:$0xf] %vm952, %v726
      %v989 = vld [vmem:[%s946 + $0x44] sm:$0x1]
      %v990 = vsel %vm481, %v727, %v989
      %991 = vst [vmem:[%s946 + $0x44] sm:$0x1] %v990
      %v992 = vld [vmem:[%s946 + $0x48] sm:$0xf]
      %v993 = vsel %vm948, %v734, %v992
      %994 = vst [vmem:[%s946 + $0x48] sm:$0xf] %v993
      %995 = vst.msk [vmem:[%s946 + $0x4c] sm:$0xf] %vm952, %v743
      %v996 = vld [vmem:[%s946 + $0x50] sm:$0x1]
      %v997 = vsel %vm481, %v744, %v996
      %998 = vst [vmem:[%s946 + $0x50] sm:$0x1] %v997
      %v999 = vld [vmem:[%s946 + $0x54] sm:$0xf]
      %v1000 = vsel %vm948, %v751, %v999
      %1001 = vst [vmem:[%s946 + $0x54] sm:$0xf] %v1000
      %1002 = vst.msk [vmem:[%s946 + $0x58] sm:$0xf] %vm952, %v760
      %v1003 = vld [vmem:[%s946 + $0x5c] sm:$0x1]
      %v1004 = vsel %vm481, %v761, %v1003
      %1005 = vst [vmem:[%s946 + $0x5c] sm:$0x1] %v1004
      %v1006 = vld [vmem:[%s946 + $0x60] sm:$0xf]
      %v1007 = vsel %vm948, %v768, %v1006
      %1008 = vst [vmem:[%s946 + $0x60] sm:$0xf] %v1007
      %1009 = vst.msk [vmem:[%s946 + $0x64] sm:$0xf] %vm952, %v777
      %v1010 = vld [vmem:[%s946 + $0x68] sm:$0x1]
      %v1011 = vsel %vm481, %v778, %v1010
      %1012 = vst [vmem:[%s946 + $0x68] sm:$0x1] %v1011
      %v1013 = vld [vmem:[%s946 + $0x6c] sm:$0xf]
      %v1014 = vsel %vm948, %v785, %v1013
      %1015 = vst [vmem:[%s946 + $0x6c] sm:$0xf] %v1014
      %1016 = vst.msk [vmem:[%s946 + $0x70] sm:$0xf] %vm952, %v794
      %v1017 = vld [vmem:[%s946 + $0x74] sm:$0x1]
      %v1018 = vsel %vm481, %v795, %v1017
      %1019 = vst [vmem:[%s946 + $0x74] sm:$0x1] %v1018
      %v1020 = vld [vmem:[%s946 + $0x78] sm:$0xf]
      %v1021 = vsel %vm948, %v802, %v1020
      %1022 = vst [vmem:[%s946 + $0x78] sm:$0xf] %v1021
      %1023 = vst.msk [vmem:[%s946 + $0x7c] sm:$0xf] %vm952, %v811
      %v1024 = vld [vmem:[%s946 + $0x80] sm:$0x1]
      %v1025 = vsel %vm481, %v812, %v1024
      %1026 = vst [vmem:[%s946 + $0x80] sm:$0x1] %v1025
      %v1027 = vld [vmem:[%s946 + $0x84] sm:$0xf]
      %v1028 = vsel %vm948, %v819, %v1027
      %1029 = vst [vmem:[%s946 + $0x84] sm:$0xf] %v1028
      %1030 = vst.msk [vmem:[%s946 + $0x88] sm:$0xf] %vm952, %v828
      %v1031 = vld [vmem:[%s946 + $0x8c] sm:$0x1]
      %v1032 = vsel %vm481, %v829, %v1031
      %1033 = vst [vmem:[%s946 + $0x8c] sm:$0x1] %v1032
      %v1034 = vld [vmem:[%s946 + $0x90] sm:$0xf]
      %v1035 = vsel %vm948, %v836, %v1034
      %1036 = vst [vmem:[%s946 + $0x90] sm:$0xf] %v1035
      %1037 = vst.msk [vmem:[%s946 + $0x94] sm:$0xf] %vm952, %v845
      %v1038 = vld [vmem:[%s946 + $0x98] sm:$0x1]
      %v1039 = vsel %vm481, %v846, %v1038
      %1040 = vst [vmem:[%s946 + $0x98] sm:$0x1] %v1039
      %v1041 = vld [vmem:[%s946 + $0x9c] sm:$0xf]
      %v1042 = vsel %vm948, %v853, %v1041
      %1043 = vst [vmem:[%s946 + $0x9c] sm:$0xf] %v1042
      %1044 = vst.msk [vmem:[%s946 + $0xa0] sm:$0xf] %vm952, %v862
      %v1045 = vld [vmem:[%s946 + $0xa4] sm:$0x1]
      %v1046 = vsel %vm481, %v863, %v1045
      %1047 = vst [vmem:[%s946 + $0xa4] sm:$0x1] %v1046
      %v1048 = vld [vmem:[%s946 + $0xa8] sm:$0xf]
      %v1049 = vsel %vm948, %v870, %v1048
      %1050 = vst [vmem:[%s946 + $0xa8] sm:$0xf] %v1049
      %1051 = vst.msk [vmem:[%s946 + $0xac] sm:$0xf] %vm952, %v879
      %v1052 = vld [vmem:[%s946 + $0xb0] sm:$0x1]
      %v1053 = vsel %vm481, %v880, %v1052
      %1054 = vst [vmem:[%s946 + $0xb0] sm:$0x1] %v1053
      %v1055 = vld [vmem:[%s946 + $0xb4] sm:$0xf]
      %v1056 = vsel %vm948, %v887, %v1055
      %1057 = vst [vmem:[%s946 + $0xb4] sm:$0xf] %v1056
      %1058 = vst.msk [vmem:[%s946 + $0xb8] sm:$0xf] %vm952, %v896
      %v1059 = vld [vmem:[%s946 + $0xbc] sm:$0x1]
      %v1060 = vsel %vm481, %v897, %v1059
      %1061 = vst [vmem:[%s946 + $0xbc] sm:$0x1] %v1060
      %p1062 = scmp.eq.s32.totalorder %s24, 0
      // Predicated region
      $region45: #{double_conv.3} parent=43 // pred_check
        %p1063 = pneg %p1062
      $region46: #{double_conv.3} parent=43 // pred_check_branch
        %1065 = sbr.rel (%p1063) target = $region48
      $region47: #{double_conv.3} parent=43 // pred_region
        %v1066 = vld [vmem:[#allocation2] sm:$0xf]
        %v1067 = vsel %vm948, 0, %v1066
        %1068 = vst [vmem:[#allocation2] sm:$0xf] %v1067
        %1069 = vst.msk [vmem:[#allocation2 + $0x4] sm:$0xf] %vm952, 0
        %v1070 = vld [vmem:[#allocation2 + $0x8] sm:$0x1]
        %v1071 = vsel %vm481, 0, %v1070
        %1072 = vst [vmem:[#allocation2 + $0x8] sm:$0x1] %v1071
      $region48: #{double_conv.3} parent=43 // pred_fallthru
        _
      %p1073 = scmp.gt.s32.totalorder %s24, 0
      // Predicated region
      $region49: #{double_conv.3} parent=43 // pred_check
        %p1074 = pneg %p1073
      $region50: #{double_conv.3} parent=43 // pred_check_branch
        %1076 = sbr.rel (%p1074) target = $region52
      $region51: #{double_conv.3} parent=43 // pred_region
        %v1077 = vld [vmem:[%s436] sm:$0xf]
        %v1078 = vld [vmem:[%s436 + $0x4] sm:$0xf]
        %v1080 = vshrl.u32 %v1077, 16
        %v1082 = vrot.slane %v1080, 7
        %v1083 = vshll.u32 %v1077, 16
        %v1085 = vor.u32 %v1082, %v1083
        %v1086 = vrot.slane %v1082, 4
        %v1088 = vshrl.u32 %v1078, 16
        %v1090 = vrot.slane %v1088, 7
        %v1091 = vshll.u32 %v1078, 16
        %v1093 = vor.u32 %v1090, %v1091
        %v1094 = vsel %vm625, %v1086, %v1093
        %v1095 = vrot.slane %v1090, 4
        %v1099 = vld [vmem:[#allocation2] sm:$0xf]
        %v1100 = vsel %vm948, %v1085, %v1099
        %1101 = vst [vmem:[#allocation2] sm:$0xf] %v1100
        %1102 = vst.msk [vmem:[#allocation2 + $0x4] sm:$0xf] %vm952, %v1094
        %v1103 = vld [vmem:[#allocation2 + $0x8] sm:$0x1]
        %v1104 = vsel %vm481, %v1095, %v1103
        %1105 = vst [vmem:[#allocation2 + $0x8] sm:$0x1] %v1104
      $region52: #{double_conv.3} parent=43 // pred_fallthru
        _
      // Predicated region
      $region53: #{double_conv.3} parent=43 // pred_check
        %p1106 = pneg %p1062
      $region54: #{double_conv.3} parent=43 // pred_check_branch
        %1108 = sbr.rel (%p1106) target = $region56
      $region55: #{double_conv.3} parent=43 // pred_region
        %s1109 = scalar_lea.vmem [#allocation2], 204
        %v1110 = vld [vmem:[%s1109] sm:$0xf]
        %v1111 = vsel %vm948, 0, %v1110
        %1112 = vst [vmem:[%s1109] sm:$0xf] %v1111
        %1113 = vst.msk [vmem:[%s1109 + $0x4] sm:$0xf] %vm952, 0
        %v1114 = vld [vmem:[%s1109 + $0x8] sm:$0x1]
        %v1115 = vsel %vm481, 0, %v1114
        %1116 = vst [vmem:[%s1109 + $0x8] sm:$0x1] %v1115
      $region56: #{double_conv.3} parent=43 // pred_fallthru
        _
      %p1117 = scmp.lt.s32.totalorder %s24, 0
      // Predicated region
      $region57: #{double_conv.3} parent=43 // pred_check
        %p1118 = pneg %p1117
      $region58: #{double_conv.3} parent=43 // pred_check_branch
        %1120 = sbr.rel (%p1118) target = $region60
      $region59: #{double_conv.3} parent=43 // pred_region
        %v1121 = vld [vmem:[%s455] sm:$0xf]
        %v1122 = vld [vmem:[%s455 + $0x4] sm:$0xf]
        %v1124 = vshrl.u32 %v1121, 16
        %v1126 = vrot.slane %v1124, 7
        %v1127 = vshll.u32 %v1121, 16
        %v1129 = vor.u32 %v1126, %v1127
        %v1130 = vrot.slane %v1126, 4
        %v1132 = vshrl.u32 %v1122, 16
        %v1134 = vrot.slane %v1132, 7
        %v1135 = vshll.u32 %v1122, 16
        %v1137 = vor.u32 %v1134, %v1135
        %v1138 = vsel %vm625, %v1130, %v1137
        %v1139 = vrot.slane %v1134, 4
        %s1143 = scalar_lea.vmem [#allocation2], 204
        %v1144 = vld [vmem:[%s1143] sm:$0xf]
        %v1145 = vsel %vm948, %v1129, %v1144
        %1146 = vst [vmem:[%s1143] sm:$0xf] %v1145
        %1147 = vst.msk [vmem:[%s1143 + $0x4] sm:$0xf] %vm952, %v1138
        %v1148 = vld [vmem:[%s1143 + $0x8] sm:$0x1]
        %v1149 = vsel %vm481, %v1139, %v1148
        %1150 = vst [vmem:[%s1143 + $0x8] sm:$0x1] %v1149
      $region60: #{double_conv.3} parent=43 // pred_fallthru
        _
      %v1151 = vld [vmem:[#allocation2] sm:$0xf]
      %v1152 = vld [vmem:[#allocation2 + $0x4] sm:$0xf]
      %v1153 = vld [vmem:[#allocation2 + $0xc] sm:$0xf]
      %v1154 = vld [vmem:[#allocation2 + $0x10] sm:$0xf]
      %v1155 = vld [vmem:[#allocation2 + $0x18] sm:$0xf]
      %v1156 = vld [vmem:[#allocation2 + $0x1c] sm:$0xf]
      %v1157 = vld [vmem:[#allocation2 + $0x24] sm:$0xf]
      %v1158 = vld [vmem:[#allocation2 + $0x28] sm:$0xf]
      %v1159 = vld [vmem:[#allocation2 + $0x30] sm:$0xf]
      %v1160 = vld [vmem:[#allocation2 + $0x34] sm:$0xf]
      %v1161 = vld [vmem:[#allocation2 + $0x3c] sm:$0xf]
      %v1162 = vld [vmem:[#allocation2 + $0x40] sm:$0xf]
      %v1163 = vld [vmem:[#allocation2 + $0x48] sm:$0xf]
      %v1164 = vld [vmem:[#allocation2 + $0x4c] sm:$0xf]
      %v1165 = vld [vmem:[#allocation2 + $0x54] sm:$0xf]
      %v1166 = vld [vmem:[#allocation2 + $0x58] sm:$0xf]
      %v1167 = vld [vmem:[#allocation2 + $0x60] sm:$0xf]
      %v1168 = vld [vmem:[#allocation2 + $0x64] sm:$0xf]
      %v1169 = vld [vmem:[#allocation2 + $0x6c] sm:$0xf]
      %v1170 = vld [vmem:[#allocation2 + $0x70] sm:$0xf]
      %v1171 = vld [vmem:[#allocation2 + $0x78] sm:$0xf]
      %v1172 = vld [vmem:[#allocation2 + $0x7c] sm:$0xf]
      %v1173 = vld [vmem:[#allocation2 + $0x84] sm:$0xf]
      %v1174 = vld [vmem:[#allocation2 + $0x88] sm:$0xf]
      %v1175 = vld [vmem:[#allocation2 + $0x90] sm:$0xf]
      %v1176 = vld [vmem:[#allocation2 + $0x94] sm:$0xf]
      %v1177 = vld [vmem:[#allocation2 + $0x9c] sm:$0xf]
      %v1178 = vld [vmem:[#allocation2 + $0xa0] sm:$0xf]
      %v1179 = vld [vmem:[#allocation2 + $0xa8] sm:$0xf]
      %v1180 = vld [vmem:[#allocation2 + $0xac] sm:$0xf]
      %v1181 = vld [vmem:[#allocation2 + $0xb4] sm:$0xf]
      %v1182 = vld [vmem:[#allocation2 + $0xb8] sm:$0xf]
      %1183 = vst.msk [vmem:[#allocation3] sm:$0xf] %vm952, %v1151
      %1184 = vst.msk [vmem:[#allocation3 + $0x4] sm:$0xf] %vm952, %v1152
      %1185 = vst.msk [vmem:[#allocation3 + $0x8] sm:$0xf] %vm952, %v1153
      %1186 = vst.msk [vmem:[#allocation3 + $0xc] sm:$0xf] %vm952, %v1154
      %1187 = vst.msk [vmem:[#allocation3 + $0x10] sm:$0xf] %vm952, %v1155
      %1188 = vst.msk [vmem:[#allocation3 + $0x14] sm:$0xf] %vm952, %v1156
      %1189 = vst.msk [vmem:[#allocation3 + $0x18] sm:$0xf] %vm952, %v1157
      %1190 = vst.msk [vmem:[#allocation3 + $0x1c] sm:$0xf] %vm952, %v1158
      %1191 = vst.msk [vmem:[#allocation3 + $0x20] sm:$0xf] %vm952, %v1159
      %1192 = vst.msk [vmem:[#allocation3 + $0x24] sm:$0xf] %vm952, %v1160
      %1193 = vst.msk [vmem:[#allocation3 + $0x28] sm:$0xf] %vm952, %v1161
      %1194 = vst.msk [vmem:[#allocation3 + $0x2c] sm:$0xf] %vm952, %v1162
      %1195 = vst.msk [vmem:[#allocation3 + $0x30] sm:$0xf] %vm952, %v1163
      %1196 = vst.msk [vmem:[#allocation3 + $0x34] sm:$0xf] %vm952, %v1164
      %1197 = vst.msk [vmem:[#allocation3 + $0x38] sm:$0xf] %vm952, %v1165
      %1198 = vst.msk [vmem:[#allocation3 + $0x3c] sm:$0xf] %vm952, %v1166
      %1199 = vst.msk [vmem:[#allocation3 + $0x40] sm:$0xf] %vm952, %v1167
      %1200 = vst.msk [vmem:[#allocation3 + $0x44] sm:$0xf] %vm952, %v1168
      %1201 = vst.msk [vmem:[#allocation3 + $0x48] sm:$0xf] %vm952, %v1169
      %1202 = vst.msk [vmem:[#allocation3 + $0x4c] sm:$0xf] %vm952, %v1170
      %1203 = vst.msk [vmem:[#allocation3 + $0x50] sm:$0xf] %vm952, %v1171
      %1204 = vst.msk [vmem:[#allocation3 + $0x54] sm:$0xf] %vm952, %v1172
      %1205 = vst.msk [vmem:[#allocation3 + $0x58] sm:$0xf] %vm952, %v1173
      %1206 = vst.msk [vmem:[#allocation3 + $0x5c] sm:$0xf] %vm952, %v1174
      %1207 = vst.msk [vmem:[#allocation3 + $0x60] sm:$0xf] %vm952, %v1175
      %1208 = vst.msk [vmem:[#allocation3 + $0x64] sm:$0xf] %vm952, %v1176
      %1209 = vst.msk [vmem:[#allocation3 + $0x68] sm:$0xf] %vm952, %v1177
      %1210 = vst.msk [vmem:[#allocation3 + $0x6c] sm:$0xf] %vm952, %v1178
      %1211 = vst.msk [vmem:[#allocation3 + $0x70] sm:$0xf] %vm952, %v1179
      %1212 = vst.msk [vmem:[#allocation3 + $0x74] sm:$0xf] %vm952, %v1180
      %1213 = vst.msk [vmem:[#allocation3 + $0x78] sm:$0xf] %vm952, %v1181
      %1214 = vst.msk [vmem:[#allocation3 + $0x7c] sm:$0xf] %vm952, %v1182
      %v1215 = vld [vmem:[#allocation2] sm:$0xf]
      %v1216 = vld [vmem:[#allocation2 + $0x4] sm:$0xf]
      %v1217 = vld [vmem:[#allocation2 + $0x8] sm:$0x1]
      %v1218 = vld [vmem:[#allocation2 + $0xc] sm:$0xf]
      %v1219 = vld [vmem:[#allocation2 + $0x10] sm:$0xf]
      %v1220 = vld [vmem:[#allocation2 + $0x14] sm:$0x1]
      %v1221 = vld [vmem:[#allocation2 + $0x18] sm:$0xf]
      %v1222 = vld [vmem:[#allocation2 + $0x1c] sm:$0xf]
      %v1223 = vld [vmem:[#allocation2 + $0x20] sm:$0x1]
      %v1224 = vld [vmem:[#allocation2 + $0x24] sm:$0xf]
      %v1225 = vld [vmem:[#allocation2 + $0x28] sm:$0xf]
      %v1226 = vld [vmem:[#allocation2 + $0x2c] sm:$0x1]
      %v1227 = vld [vmem:[#allocation2 + $0x30] sm:$0xf]
      %v1228 = vld [vmem:[#allocation2 + $0x34] sm:$0xf]
      %v1229 = vld [vmem:[#allocation2 + $0x38] sm:$0x1]
      %v1230 = vld [vmem:[#allocation2 + $0x3c] sm:$0xf]
      %v1231 = vld [vmem:[#allocation2 + $0x40] sm:$0xf]
      %v1232 = vld [vmem:[#allocation2 + $0x44] sm:$0x1]
      %v1233 = vld [vmem:[#allocation2 + $0x48] sm:$0xf]
      %v1234 = vld [vmem:[#allocation2 + $0x4c] sm:$0xf]
      %v1235 = vld [vmem:[#allocation2 + $0x50] sm:$0x1]
      %v1236 = vld [vmem:[#allocation2 + $0x54] sm:$0xf]
      %v1237 = vld [vmem:[#allocation2 + $0x58] sm:$0xf]
      %v1238 = vld [vmem:[#allocation2 + $0x5c] sm:$0x1]
      %v1239 = vld [vmem:[#allocation2 + $0x60] sm:$0xf]
      %v1240 = vld [vmem:[#allocation2 + $0x64] sm:$0xf]
      %v1241 = vld [vmem:[#allocation2 + $0x68] sm:$0x1]
      %v1242 = vld [vmem:[#allocation2 + $0x6c] sm:$0xf]
      %v1243 = vld [vmem:[#allocation2 + $0x70] sm:$0xf]
      %v1244 = vld [vmem:[#allocation2 + $0x74] sm:$0x1]
      %v1245 = vld [vmem:[#allocation2 + $0x78] sm:$0xf]
      %v1246 = vld [vmem:[#allocation2 + $0x7c] sm:$0xf]
      %v1247 = vld [vmem:[#allocation2 + $0x80] sm:$0x1]
      %v1248 = vld [vmem:[#allocation2 + $0x84] sm:$0xf]
      %v1249 = vld [vmem:[#allocation2 + $0x88] sm:$0xf]
      %v1250 = vld [vmem:[#allocation2 + $0x8c] sm:$0x1]
      %v1251 = vld [vmem:[#allocation2 + $0x90] sm:$0xf]
      %v1252 = vld [vmem:[#allocation2 + $0x94] sm:$0xf]
      %v1253 = vld [vmem:[#allocation2 + $0x98] sm:$0x1]
      %v1254 = vld [vmem:[#allocation2 + $0x9c] sm:$0xf]
      %v1255 = vld [vmem:[#allocation2 + $0xa0] sm:$0xf]
      %v1256 = vld [vmem:[#allocation2 + $0xa4] sm:$0x1]
      %v1257 = vld [vmem:[#allocation2 + $0xa8] sm:$0xf]
      %v1258 = vld [vmem:[#allocation2 + $0xac] sm:$0xf]
      %v1259 = vld [vmem:[#allocation2 + $0xb0] sm:$0x1]
      %v1260 = vld [vmem:[#allocation2 + $0xb4] sm:$0xf]
      %v1261 = vld [vmem:[#allocation2 + $0xb8] sm:$0xf]
      %v1262 = vld [vmem:[#allocation2 + $0xbc] sm:$0x1]
      %vm1263 = vsmask.f32 3328
      %vm1264 = vsmask.f32 7440
      %vm1265 = vmor %vm1263, %vm1264
      %v1267 = vshrl.u32 %v1215, 16
      %v1269 = vrot.slane %v1267, 4
      %v1270 = vshll.u32 %v1215, 16
      %v1272 = vrot.slane %v1270, 5
      %v1273 = vor.u32 %v1269, %v1272
      %v1274 = vrot.slane %v1273, 4
      %v1276 = vshll.u32 %v1216, 16
      %v1278 = vrot.slane %v1276, 5
      %v1279 = vsel %vm1265, %v1274, %v1278
      %v1280 = vshrl.u32 %v1216, 16
      %v1282 = vrot.slane %v1280, 4
      %v1283 = vor.u32 %v1282, %v1278
      %v1284 = vrot.slane %v1283, 4
      %v1286 = vshll.u32 %v1217, 16
      %v1288 = vrot.slane %v1286, 5
      %v1289 = vsel %vm1265, %v1284, %v1288
      %v1291 = vshrl.u32 %v1218, 16
      %v1293 = vrot.slane %v1291, 4
      %v1294 = vshll.u32 %v1218, 16
      %v1296 = vrot.slane %v1294, 5
      %v1297 = vor.u32 %v1293, %v1296
      %v1298 = vrot.slane %v1297, 4
      %v1300 = vshll.u32 %v1219, 16
      %v1302 = vrot.slane %v1300, 5
      %v1303 = vsel %vm1265, %v1298, %v1302
      %v1304 = vshrl.u32 %v1219, 16
      %v1306 = vrot.slane %v1304, 4
      %v1307 = vor.u32 %v1306, %v1302
      %v1308 = vrot.slane %v1307, 4
      %v1310 = vshll.u32 %v1220, 16
      %v1312 = vrot.slane %v1310, 5
      %v1313 = vsel %vm1265, %v1308, %v1312
      %v1315 = vshrl.u32 %v1221, 16
      %v1317 = vrot.slane %v1315, 4
      %v1318 = vshll.u32 %v1221, 16
      %v1320 = vrot.slane %v1318, 5
      %v1321 = vor.u32 %v1317, %v1320
      %v1322 = vrot.slane %v1321, 4
      %v1324 = vshll.u32 %v1222, 16
      %v1326 = vrot.slane %v1324, 5
      %v1327 = vsel %vm1265, %v1322, %v1326
      %v1328 = vshrl.u32 %v1222, 16
      %v1330 = vrot.slane %v1328, 4
      %v1331 = vor.u32 %v1330, %v1326
      %v1332 = vrot.slane %v1331, 4
      %v1334 = vshll.u32 %v1223, 16
      %v1336 = vrot.slane %v1334, 5
      %v1337 = vsel %vm1265, %v1332, %v1336
      %v1339 = vshrl.u32 %v1224, 16
      %v1341 = vrot.slane %v1339, 4
      %v1342 = vshll.u32 %v1224, 16
      %v1344 = vrot.slane %v1342, 5
      %v1345 = vor.u32 %v1341, %v1344
      %v1346 = vrot.slane %v1345, 4
      %v1348 = vshll.u32 %v1225, 16
      %v1350 = vrot.slane %v1348, 5
      %v1351 = vsel %vm1265, %v1346, %v1350
      %v1352 = vshrl.u32 %v1225, 16
      %v1354 = vrot.slane %v1352, 4
      %v1355 = vor.u32 %v1354, %v1350
      %v1356 = vrot.slane %v1355, 4
      %v1358 = vshll.u32 %v1226, 16
      %v1360 = vrot.slane %v1358, 5
      %v1361 = vsel %vm1265, %v1356, %v1360
      %v1363 = vshrl.u32 %v1227, 16
      %v1365 = vrot.slane %v1363, 4
      %v1366 = vshll.u32 %v1227, 16
      %v1368 = vrot.slane %v1366, 5
      %v1369 = vor.u32 %v1365, %v1368
      %v1370 = vrot.slane %v1369, 4
      %v1372 = vshll.u32 %v1228, 16
      %v1374 = vrot.slane %v1372, 5
      %v1375 = vsel %vm1265, %v1370, %v1374
      %v1376 = vshrl.u32 %v1228, 16
      %v1378 = vrot.slane %v1376, 4
      %v1379 = vor.u32 %v1378, %v1374
      %v1380 = vrot.slane %v1379, 4
      %v1382 = vshll.u32 %v1229, 16
      %v1384 = vrot.slane %v1382, 5
      %v1385 = vsel %vm1265, %v1380, %v1384
      %v1387 = vshrl.u32 %v1230, 16
      %v1389 = vrot.slane %v1387, 4
      %v1390 = vshll.u32 %v1230, 16
      %v1392 = vrot.slane %v1390, 5
      %v1393 = vor.u32 %v1389, %v1392
      %v1394 = vrot.slane %v1393, 4
      %v1396 = vshll.u32 %v1231, 16
      %v1398 = vrot.slane %v1396, 5
      %v1399 = vsel %vm1265, %v1394, %v1398
      %v1400 = vshrl.u32 %v1231, 16
      %v1402 = vrot.slane %v1400, 4
      %v1403 = vor.u32 %v1402, %v1398
      %v1404 = vrot.slane %v1403, 4
      %v1406 = vshll.u32 %v1232, 16
      %v1408 = vrot.slane %v1406, 5
      %v1409 = vsel %vm1265, %v1404, %v1408
      %v1411 = vshrl.u32 %v1233, 16
      %v1413 = vrot.slane %v1411, 4
      %v1414 = vshll.u32 %v1233, 16
      %v1416 = vrot.slane %v1414, 5
      %v1417 = vor.u32 %v1413, %v1416
      %v1418 = vrot.slane %v1417, 4
      %v1420 = vshll.u32 %v1234, 16
      %v1422 = vrot.slane %v1420, 5
      %v1423 = vsel %vm1265, %v1418, %v1422
      %v1424 = vshrl.u32 %v1234, 16
      %v1426 = vrot.slane %v1424, 4
      %v1427 = vor.u32 %v1426, %v1422
      %v1428 = vrot.slane %v1427, 4
      %v1430 = vshll.u32 %v1235, 16
      %v1432 = vrot.slane %v1430, 5
      %v1433 = vsel %vm1265, %v1428, %v1432
      %v1435 = vshrl.u32 %v1236, 16
      %v1437 = vrot.slane %v1435, 4
      %v1438 = vshll.u32 %v1236, 16
      %v1440 = vrot.slane %v1438, 5
      %v1441 = vor.u32 %v1437, %v1440
      %v1442 = vrot.slane %v1441, 4
      %v1444 = vshll.u32 %v1237, 16
      %v1446 = vrot.slane %v1444, 5
      %v1447 = vsel %vm1265, %v1442, %v1446
      %v1448 = vshrl.u32 %v1237, 16
      %v1450 = vrot.slane %v1448, 4
      %v1451 = vor.u32 %v1450, %v1446
      %v1452 = vrot.slane %v1451, 4
      %v1454 = vshll.u32 %v1238, 16
      %v1456 = vrot.slane %v1454, 5
      %v1457 = vsel %vm1265, %v1452, %v1456
      %v1459 = vshrl.u32 %v1239, 16
      %v1461 = vrot.slane %v1459, 4
      %v1462 = vshll.u32 %v1239, 16
      %v1464 = vrot.slane %v1462, 5
      %v1465 = vor.u32 %v1461, %v1464
      %v1466 = vrot.slane %v1465, 4
      %v1468 = vshll.u32 %v1240, 16
      %v1470 = vrot.slane %v1468, 5
      %v1471 = vsel %vm1265, %v1466, %v1470
      %v1472 = vshrl.u32 %v1240, 16
      %v1474 = vrot.slane %v1472, 4
      %v1475 = vor.u32 %v1474, %v1470
      %v1476 = vrot.slane %v1475, 4
      %v1478 = vshll.u32 %v1241, 16
      %v1480 = vrot.slane %v1478, 5
      %v1481 = vsel %vm1265, %v1476, %v1480
      %v1483 = vshrl.u32 %v1242, 16
      %v1485 = vrot.slane %v1483, 4
      %v1486 = vshll.u32 %v1242, 16
      %v1488 = vrot.slane %v1486, 5
      %v1489 = vor.u32 %v1485, %v1488
      %v1490 = vrot.slane %v1489, 4
      %v1492 = vshll.u32 %v1243, 16
      %v1494 = vrot.slane %v1492, 5
      %v1495 = vsel %vm1265, %v1490, %v1494
      %v1496 = vshrl.u32 %v1243, 16
      %v1498 = vrot.slane %v1496, 4
      %v1499 = vor.u32 %v1498, %v1494
      %v1500 = vrot.slane %v1499, 4
      %v1502 = vshll.u32 %v1244, 16
      %v1504 = vrot.slane %v1502, 5
      %v1505 = vsel %vm1265, %v1500, %v1504
      %v1507 = vshrl.u32 %v1245, 16
      %v1509 = vrot.slane %v1507, 4
      %v1510 = vshll.u32 %v1245, 16
      %v1512 = vrot.slane %v1510, 5
      %v1513 = vor.u32 %v1509, %v1512
      %v1514 = vrot.slane %v1513, 4
      %v1516 = vshll.u32 %v1246, 16
      %v1518 = vrot.slane %v1516, 5
      %v1519 = vsel %vm1265, %v1514, %v1518
      %v1520 = vshrl.u32 %v1246, 16
      %v1522 = vrot.slane %v1520, 4
      %v1523 = vor.u32 %v1522, %v1518
      %v1524 = vrot.slane %v1523, 4
      %v1526 = vshll.u32 %v1247, 16
      %v1528 = vrot.slane %v1526, 5
      %v1529 = vsel %vm1265, %v1524, %v1528
      %v1531 = vshrl.u32 %v1248, 16
      %v1533 = vrot.slane %v1531, 4
      %v1534 = vshll.u32 %v1248, 16
      %v1536 = vrot.slane %v1534, 5
      %v1537 = vor.u32 %v1533, %v1536
      %v1538 = vrot.slane %v1537, 4
      %v1540 = vshll.u32 %v1249, 16
      %v1542 = vrot.slane %v1540, 5
      %v1543 = vsel %vm1265, %v1538, %v1542
      %v1544 = vshrl.u32 %v1249, 16
      %v1546 = vrot.slane %v1544, 4
      %v1547 = vor.u32 %v1546, %v1542
      %v1548 = vrot.slane %v1547, 4
      %v1550 = vshll.u32 %v1250, 16
      %v1552 = vrot.slane %v1550, 5
      %v1553 = vsel %vm1265, %v1548, %v1552
      %v1555 = vshrl.u32 %v1251, 16
      %v1557 = vrot.slane %v1555, 4
      %v1558 = vshll.u32 %v1251, 16
      %v1560 = vrot.slane %v1558, 5
      %v1561 = vor.u32 %v1557, %v1560
      %v1562 = vrot.slane %v1561, 4
      %v1564 = vshll.u32 %v1252, 16
      %v1566 = vrot.slane %v1564, 5
      %v1567 = vsel %vm1265, %v1562, %v1566
      %v1568 = vshrl.u32 %v1252, 16
      %v1570 = vrot.slane %v1568, 4
      %v1571 = vor.u32 %v1570, %v1566
      %v1572 = vrot.slane %v1571, 4
      %v1574 = vshll.u32 %v1253, 16
      %v1576 = vrot.slane %v1574, 5
      %v1577 = vsel %vm1265, %v1572, %v1576
      %v1579 = vshrl.u32 %v1254, 16
      %v1581 = vrot.slane %v1579, 4
      %v1582 = vshll.u32 %v1254, 16
      %v1584 = vrot.slane %v1582, 5
      %v1585 = vor.u32 %v1581, %v1584
      %v1586 = vrot.slane %v1585, 4
      %v1588 = vshll.u32 %v1255, 16
      %v1590 = vrot.slane %v1588, 5
      %v1591 = vsel %vm1265, %v1586, %v1590
      %v1592 = vshrl.u32 %v1255, 16
      %v1594 = vrot.slane %v1592, 4
      %v1595 = vor.u32 %v1594, %v1590
      %v1596 = vrot.slane %v1595, 4
      %v1598 = vshll.u32 %v1256, 16
      %v1600 = vrot.slane %v1598, 5
      %v1601 = vsel %vm1265, %v1596, %v1600
      %v1603 = vshrl.u32 %v1257, 16
      %v1605 = vrot.slane %v1603, 4
      %v1606 = vshll.u32 %v1257, 16
      %v1608 = vrot.slane %v1606, 5
      %v1609 = vor.u32 %v1605, %v1608
      %v1610 = vrot.slane %v1609, 4
      %v1612 = vshll.u32 %v1258, 16
      %v1614 = vrot.slane %v1612, 5
      %v1615 = vsel %vm1265, %v1610, %v1614
      %v1616 = vshrl.u32 %v1258, 16
      %v1618 = vrot.slane %v1616, 4
      %v1619 = vor.u32 %v1618, %v1614
      %v1620 = vrot.slane %v1619, 4
      %v1622 = vshll.u32 %v1259, 16
      %v1624 = vrot.slane %v1622, 5
      %v1625 = vsel %vm1265, %v1620, %v1624
      %v1627 = vshrl.u32 %v1260, 16
      %v1629 = vrot.slane %v1627, 4
      %v1630 = vshll.u32 %v1260, 16
      %v1632 = vrot.slane %v1630, 5
      %v1633 = vor.u32 %v1629, %v1632
      %v1634 = vrot.slane %v1633, 4
      %v1636 = vshll.u32 %v1261, 16
      %v1638 = vrot.slane %v1636, 5
      %v1639 = vsel %vm1265, %v1634, %v1638
      %v1640 = vshrl.u32 %v1261, 16
      %v1642 = vrot.slane %v1640, 4
      %v1643 = vor.u32 %v1642, %v1638
      %v1644 = vrot.slane %v1643, 4
      %v1646 = vshll.u32 %v1262, 16
      %v1648 = vrot.slane %v1646, 5
      %v1649 = vsel %vm1265, %v1644, %v1648
      %1650 = vrot.lane.b32.xlu0 %v1279, 4
      %v1651 = vpop.permute.xlu0 %1650
      %1652 = vrot.lane.b32.xlu0 %v1289, 4
      %v1653 = vpop.permute.xlu0 %1652
      %1654 = vrot.lane.b32.xlu0 %v1303, 4
      %v1655 = vpop.permute.xlu0 %1654
      %1656 = vrot.lane.b32.xlu0 %v1313, 4
      %v1657 = vpop.permute.xlu0 %1656
      %1658 = vrot.lane.b32.xlu0 %v1327, 4
      %v1659 = vpop.permute.xlu0 %1658
      %1660 = vrot.lane.b32.xlu0 %v1337, 4
      %v1661 = vpop.permute.xlu0 %1660
      %1662 = vrot.lane.b32.xlu0 %v1351, 4
      %v1663 = vpop.permute.xlu0 %1662
      %1664 = vrot.lane.b32.xlu0 %v1361, 4
      %v1665 = vpop.permute.xlu0 %1664
      %1666 = vrot.lane.b32.xlu0 %v1375, 4
      %v1667 = vpop.permute.xlu0 %1666
      %1668 = vrot.lane.b32.xlu0 %v1385, 4
      %v1669 = vpop.permute.xlu0 %1668
      %1670 = vrot.lane.b32.xlu0 %v1399, 4
      %v1671 = vpop.permute.xlu0 %1670
      %1672 = vrot.lane.b32.xlu0 %v1409, 4
      %v1673 = vpop.permute.xlu0 %1672
      %1674 = vrot.lane.b32.xlu0 %v1423, 4
      %v1675 = vpop.permute.xlu0 %1674
      %1676 = vrot.lane.b32.xlu0 %v1433, 4
      %v1677 = vpop.permute.xlu0 %1676
      %1678 = vrot.lane.b32.xlu0 %v1447, 4
      %v1679 = vpop.permute.xlu0 %1678
      %1680 = vrot.lane.b32.xlu0 %v1457, 4
      %v1681 = vpop.permute.xlu0 %1680
      %1682 = vrot.lane.b32.xlu0 %v1471, 4
      %v1683 = vpop.permute.xlu0 %1682
      %1684 = vrot.lane.b32.xlu0 %v1481, 4
      %v1685 = vpop.permute.xlu0 %1684
      %1686 = vrot.lane.b32.xlu0 %v1495, 4
      %v1687 = vpop.permute.xlu0 %1686
      %1688 = vrot.lane.b32.xlu0 %v1505, 4
      %v1689 = vpop.permute.xlu0 %1688
      %1690 = vrot.lane.b32.xlu0 %v1519, 4
      %v1691 = vpop.permute.xlu0 %1690
      %1692 = vrot.lane.b32.xlu0 %v1529, 4
      %v1693 = vpop.permute.xlu0 %1692
      %1694 = vrot.lane.b32.xlu0 %v1543, 4
      %v1695 = vpop.permute.xlu0 %1694
      %1696 = vrot.lane.b32.xlu0 %v1553, 4
      %v1697 = vpop.permute.xlu0 %1696
      %1698 = vrot.lane.b32.xlu0 %v1567, 4
      %v1699 = vpop.permute.xlu0 %1698
      %1700 = vrot.lane.b32.xlu0 %v1577, 4
      %v1701 = vpop.permute.xlu0 %1700
      %1702 = vrot.lane.b32.xlu0 %v1591, 4
      %v1703 = vpop.permute.xlu0 %1702
      %1704 = vrot.lane.b32.xlu0 %v1601, 4
      %v1705 = vpop.permute.xlu0 %1704
      %1706 = vrot.lane.b32.xlu0 %v1615, 4
      %v1707 = vpop.permute.xlu0 %1706
      %1708 = vrot.lane.b32.xlu0 %v1625, 4
      %v1709 = vpop.permute.xlu0 %1708
      %1710 = vrot.lane.b32.xlu0 %v1639, 4
      %v1711 = vpop.permute.xlu0 %1710
      %1712 = vrot.lane.b32.xlu0 %v1649, 4
      %v1713 = vpop.permute.xlu0 %1712
      %vm1746 = vcmask 60448
      %1747 = vst.msk [vmem:[#allocation3] sm:$0xf] %vm1746, %v1651
      %1748 = vst.msk [vmem:[#allocation3 + $0x4] sm:$0xf] %vm1746, %v1653
      %1749 = vst.msk [vmem:[#allocation3 + $0x8] sm:$0xf] %vm1746, %v1655
      %1750 = vst.msk [vmem:[#allocation3 + $0xc] sm:$0xf] %vm1746, %v1657
      %1751 = vst.msk [vmem:[#allocation3 + $0x10] sm:$0xf] %vm1746, %v1659
      %1752 = vst.msk [vmem:[#allocation3 + $0x14] sm:$0xf] %vm1746, %v1661
      %1753 = vst.msk [vmem:[#allocation3 + $0x18] sm:$0xf] %vm1746, %v1663
      %1754 = vst.msk [vmem:[#allocation3 + $0x1c] sm:$0xf] %vm1746, %v1665
      %1755 = vst.msk [vmem:[#allocation3 + $0x20] sm:$0xf] %vm1746, %v1667
      %1756 = vst.msk [vmem:[#allocation3 + $0x24] sm:$0xf] %vm1746, %v1669
      %1757 = vst.msk [vmem:[#allocation3 + $0x28] sm:$0xf] %vm1746, %v1671
      %1758 = vst.msk [vmem:[#allocation3 + $0x2c] sm:$0xf] %vm1746, %v1673
      %1759 = vst.msk [vmem:[#allocation3 + $0x30] sm:$0xf] %vm1746, %v1675
      %1760 = vst.msk [vmem:[#allocation3 + $0x34] sm:$0xf] %vm1746, %v1677
      %1761 = vst.msk [vmem:[#allocation3 + $0x38] sm:$0xf] %vm1746, %v1679
      %1762 = vst.msk [vmem:[#allocation3 + $0x3c] sm:$0xf] %vm1746, %v1681
      %1763 = vst.msk [vmem:[#allocation3 + $0x40] sm:$0xf] %vm1746, %v1683
      %1764 = vst.msk [vmem:[#allocation3 + $0x44] sm:$0xf] %vm1746, %v1685
      %1765 = vst.msk [vmem:[#allocation3 + $0x48] sm:$0xf] %vm1746, %v1687
      %1766 = vst.msk [vmem:[#allocation3 + $0x4c] sm:$0xf] %vm1746, %v1689
      %1767 = vst.msk [vmem:[#allocation3 + $0x50] sm:$0xf] %vm1746, %v1691
      %1768 = vst.msk [vmem:[#allocation3 + $0x54] sm:$0xf] %vm1746, %v1693
      %1769 = vst.msk [vmem:[#allocation3 + $0x58] sm:$0xf] %vm1746, %v1695
      %1770 = vst.msk [vmem:[#allocation3 + $0x5c] sm:$0xf] %vm1746, %v1697
      %1771 = vst.msk [vmem:[#allocation3 + $0x60] sm:$0xf] %vm1746, %v1699
      %1772 = vst.msk [vmem:[#allocation3 + $0x64] sm:$0xf] %vm1746, %v1701
      %1773 = vst.msk [vmem:[#allocation3 + $0x68] sm:$0xf] %vm1746, %v1703
      %1774 = vst.msk [vmem:[#allocation3 + $0x6c] sm:$0xf] %vm1746, %v1705
      %1775 = vst.msk [vmem:[#allocation3 + $0x70] sm:$0xf] %vm1746, %v1707
      %1776 = vst.msk [vmem:[#allocation3 + $0x74] sm:$0xf] %vm1746, %v1709
      %1777 = vst.msk [vmem:[#allocation3 + $0x78] sm:$0xf] %vm1746, %v1711
      %1778 = vst.msk [vmem:[#allocation3 + $0x7c] sm:$0xf] %vm1746, %v1713
      %v1779 = vld [vmem:[#allocation2] sm:$0xe]
      %v1780 = vld [vmem:[#allocation2 + $0x4] sm:$0xf]
      %v1781 = vld [vmem:[#allocation2 + $0x8] sm:$0x1]
      %v1782 = vld [vmem:[#allocation2 + $0xc] sm:$0xe]
      %v1783 = vld [vmem:[#allocation2 + $0x10] sm:$0xf]
      %v1784 = vld [vmem:[#allocation2 + $0x14] sm:$0x1]
      %v1785 = vld [vmem:[#allocation2 + $0x18] sm:$0xe]
      %v1786 = vld [vmem:[#allocation2 + $0x1c] sm:$0xf]
      %v1787 = vld [vmem:[#allocation2 + $0x20] sm:$0x1]
      %v1788 = vld [vmem:[#allocation2 + $0x24] sm:$0xe]
      %v1789 = vld [vmem:[#allocation2 + $0x28] sm:$0xf]
      %v1790 = vld [vmem:[#allocation2 + $0x2c] sm:$0x1]
      %v1791 = vld [vmem:[#allocation2 + $0x30] sm:$0xe]
      %v1792 = vld [vmem:[#allocation2 + $0x34] sm:$0xf]
      %v1793 = vld [vmem:[#allocation2 + $0x38] sm:$0x1]
      %v1794 = vld [vmem:[#allocation2 + $0x3c] sm:$0xe]
      %v1795 = vld [vmem:[#allocation2 + $0x40] sm:$0xf]
      %v1796 = vld [vmem:[#allocation2 + $0x44] sm:$0x1]
      %v1797 = vld [vmem:[#allocation2 + $0x48] sm:$0xe]
      %v1798 = vld [vmem:[#allocation2 + $0x4c] sm:$0xf]
      %v1799 = vld [vmem:[#allocation2 + $0x50] sm:$0x1]
      %v1800 = vld [vmem:[#allocation2 + $0x54] sm:$0xe]
      %v1801 = vld [vmem:[#allocation2 + $0x58] sm:$0xf]
      %v1802 = vld [vmem:[#allocation2 + $0x5c] sm:$0x1]
      %v1803 = vld [vmem:[#allocation2 + $0x60] sm:$0xe]
      %v1804 = vld [vmem:[#allocation2 + $0x64] sm:$0xf]
      %v1805 = vld [vmem:[#allocation2 + $0x68] sm:$0x1]
      %v1806 = vld [vmem:[#allocation2 + $0x6c] sm:$0xe]
      %v1807 = vld [vmem:[#allocation2 + $0x70] sm:$0xf]
      %v1808 = vld [vmem:[#allocation2 + $0x74] sm:$0x1]
      %v1809 = vld [vmem:[#allocation2 + $0x78] sm:$0xe]
      %v1810 = vld [vmem:[#allocation2 + $0x7c] sm:$0xf]
      %v1811 = vld [vmem:[#allocation2 + $0x80] sm:$0x1]
      %v1812 = vld [vmem:[#allocation2 + $0x84] sm:$0xe]
      %v1813 = vld [vmem:[#allocation2 + $0x88] sm:$0xf]
      %v1814 = vld [vmem:[#allocation2 + $0x8c] sm:$0x1]
      %v1815 = vld [vmem:[#allocation2 + $0x90] sm:$0xe]
      %v1816 = vld [vmem:[#allocation2 + $0x94] sm:$0xf]
      %v1817 = vld [vmem:[#allocation2 + $0x98] sm:$0x1]
      %v1818 = vld [vmem:[#allocation2 + $0x9c] sm:$0xe]
      %v1819 = vld [vmem:[#allocation2 + $0xa0] sm:$0xf]
      %v1820 = vld [vmem:[#allocation2 + $0xa4] sm:$0x1]
      %v1821 = vld [vmem:[#allocation2 + $0xa8] sm:$0xe]
      %v1822 = vld [vmem:[#allocation2 + $0xac] sm:$0xf]
      %v1823 = vld [vmem:[#allocation2 + $0xb0] sm:$0x1]
      %v1824 = vld [vmem:[#allocation2 + $0xb4] sm:$0xe]
      %v1825 = vld [vmem:[#allocation2 + $0xb8] sm:$0xf]
      %v1826 = vld [vmem:[#allocation2 + $0xbc] sm:$0x1]
      %vm1875 = vcmask 1042432
      %vm1876 = vcmask 1046532
      %vm1877 = vmor %vm1875, %vm1876
      %v1878 = vrot.slane %v1779, 5
      %v1879 = vrot.slane %v1878, 4
      %v1880 = vrot.slane %v1780, 5
      %v1881 = vsel %vm1877, %v1879, %v1880
      %v1882 = vrot.slane %v1880, 4
      %v1883 = vrot.slane %v1781, 5
      %v1884 = vsel %vm1877, %v1882, %v1883
      %v1885 = vrot.slane %v1782, 5
      %v1886 = vrot.slane %v1885, 4
      %v1887 = vrot.slane %v1783, 5
      %v1888 = vsel %vm1877, %v1886, %v1887
      %v1889 = vrot.slane %v1887, 4
      %v1890 = vrot.slane %v1784, 5
      %v1891 = vsel %vm1877, %v1889, %v1890
      %v1892 = vrot.slane %v1785, 5
      %v1893 = vrot.slane %v1892, 4
      %v1894 = vrot.slane %v1786, 5
      %v1895 = vsel %vm1877, %v1893, %v1894
      %v1896 = vrot.slane %v1894, 4
      %v1897 = vrot.slane %v1787, 5
      %v1898 = vsel %vm1877, %v1896, %v1897
      %v1899 = vrot.slane %v1788, 5
      %v1900 = vrot.slane %v1899, 4
      %v1901 = vrot.slane %v1789, 5
      %v1902 = vsel %vm1877, %v1900, %v1901
      %v1903 = vrot.slane %v1901, 4
      %v1904 = vrot.slane %v1790, 5
      %v1905 = vsel %vm1877, %v1903, %v1904
      %v1906 = vrot.slane %v1791, 5
      %v1907 = vrot.slane %v1906, 4
      %v1908 = vrot.slane %v1792, 5
      %v1909 = vsel %vm1877, %v1907, %v1908
      %v1910 = vrot.slane %v1908, 4
      %v1911 = vrot.slane %v1793, 5
      %v1912 = vsel %vm1877, %v1910, %v1911
      %v1913 = vrot.slane %v1794, 5
      %v1914 = vrot.slane %v1913, 4
      %v1915 = vrot.slane %v1795, 5
      %v1916 = vsel %vm1877, %v1914, %v1915
      %v1917 = vrot.slane %v1915, 4
      %v1918 = vrot.slane %v1796, 5
      %v1919 = vsel %vm1877, %v1917, %v1918
      %v1920 = vrot.slane %v1797, 5
      %v1921 = vrot.slane %v1920, 4
      %v1922 = vrot.slane %v1798, 5
      %v1923 = vsel %vm1877, %v1921, %v1922
      %v1924 = vrot.slane %v1922, 4
      %v1925 = vrot.slane %v1799, 5
      %v1926 = vsel %vm1877, %v1924, %v1925
      %v1927 = vrot.slane %v1800, 5
      %v1928 = vrot.slane %v1927, 4
      %v1929 = vrot.slane %v1801, 5
      %v1930 = vsel %vm1877, %v1928, %v1929
      %v1931 = vrot.slane %v1929, 4
      %v1932 = vrot.slane %v1802, 5
      %v1933 = vsel %vm1877, %v1931, %v1932
      %v1934 = vrot.slane %v1803, 5
      %v1935 = vrot.slane %v1934, 4
      %v1936 = vrot.slane %v1804, 5
      %v1937 = vsel %vm1877, %v1935, %v1936
      %v1938 = vrot.slane %v1936, 4
      %v1939 = vrot.slane %v1805, 5
      %v1940 = vsel %vm1877, %v1938, %v1939
      %v1941 = vrot.slane %v1806, 5
      %v1942 = vrot.slane %v1941, 4
      %v1943 = vrot.slane %v1807, 5
      %v1944 = vsel %vm1877, %v1942, %v1943
      %v1945 = vrot.slane %v1943, 4
      %v1946 = vrot.slane %v1808, 5
      %v1947 = vsel %vm1877, %v1945, %v1946
      %v1948 = vrot.slane %v1809, 5
      %v1949 = vrot.slane %v1948, 4
      %v1950 = vrot.slane %v1810, 5
      %v1951 = vsel %vm1877, %v1949, %v1950
      %v1952 = vrot.slane %v1950, 4
      %v1953 = vrot.slane %v1811, 5
      %v1954 = vsel %vm1877, %v1952, %v1953
      %v1955 = vrot.slane %v1812, 5
      %v1956 = vrot.slane %v1955, 4
      %v1957 = vrot.slane %v1813, 5
      %v1958 = vsel %vm1877, %v1956, %v1957
      %v1959 = vrot.slane %v1957, 4
      %v1960 = vrot.slane %v1814, 5
      %v1961 = vsel %vm1877, %v1959, %v1960
      %v1962 = vrot.slane %v1815, 5
      %v1963 = vrot.slane %v1962, 4
      %v1964 = vrot.slane %v1816, 5
      %v1965 = vsel %vm1877, %v1963, %v1964
      %v1966 = vrot.slane %v1964, 4
      %v1967 = vrot.slane %v1817, 5
      %v1968 = vsel %vm1877, %v1966, %v1967
      %v1969 = vrot.slane %v1818, 5
      %v1970 = vrot.slane %v1969, 4
      %v1971 = vrot.slane %v1819, 5
      %v1972 = vsel %vm1877, %v1970, %v1971
      %v1973 = vrot.slane %v1971, 4
      %v1974 = vrot.slane %v1820, 5
      %v1975 = vsel %vm1877, %v1973, %v1974
      %v1976 = vrot.slane %v1821, 5
      %v1977 = vrot.slane %v1976, 4
      %v1978 = vrot.slane %v1822, 5
      %v1979 = vsel %vm1877, %v1977, %v1978
      %v1980 = vrot.slane %v1978, 4
      %v1981 = vrot.slane %v1823, 5
      %v1982 = vsel %vm1877, %v1980, %v1981
      %v1983 = vrot.slane %v1824, 5
      %v1984 = vrot.slane %v1983, 4
      %v1985 = vrot.slane %v1825, 5
      %v1986 = vsel %vm1877, %v1984, %v1985
      %v1987 = vrot.slane %v1985, 4
      %v1988 = vrot.slane %v1826, 5
      %v1989 = vsel %vm1877, %v1987, %v1988
      %1990 = vrot.lane.b32.xlu0 %v1881, 8
      %v1991 = vpop.permute.xlu0 %1990
      %1992 = vrot.lane.b32.xlu0 %v1884, 8
      %v1993 = vpop.permute.xlu0 %1992
      %1994 = vrot.lane.b32.xlu0 %v1888, 8
      %v1995 = vpop.permute.xlu0 %1994
      %1996 = vrot.lane.b32.xlu0 %v1891, 8
      %v1997 = vpop.permute.xlu0 %1996
      %1998 = vrot.lane.b32.xlu0 %v1895, 8
      %v1999 = vpop.permute.xlu0 %1998
      %2000 = vrot.lane.b32.xlu0 %v1898, 8
      %v2001 = vpop.permute.xlu0 %2000
      %2002 = vrot.lane.b32.xlu0 %v1902, 8
      %v2003 = vpop.permute.xlu0 %2002
      %2004 = vrot.lane.b32.xlu0 %v1905, 8
      %v2005 = vpop.permute.xlu0 %2004
      %2006 = vrot.lane.b32.xlu0 %v1909, 8
      %v2007 = vpop.permute.xlu0 %2006
      %2008 = vrot.lane.b32.xlu0 %v1912, 8
      %v2009 = vpop.permute.xlu0 %2008
      %2010 = vrot.lane.b32.xlu0 %v1916, 8
      %v2011 = vpop.permute.xlu0 %2010
      %2012 = vrot.lane.b32.xlu0 %v1919, 8
      %v2013 = vpop.permute.xlu0 %2012
      %2014 = vrot.lane.b32.xlu0 %v1923, 8
      %v2015 = vpop.permute.xlu0 %2014
      %2016 = vrot.lane.b32.xlu0 %v1926, 8
      %v2017 = vpop.permute.xlu0 %2016
      %2018 = vrot.lane.b32.xlu0 %v1930, 8
      %v2019 = vpop.permute.xlu0 %2018
      %2020 = vrot.lane.b32.xlu0 %v1933, 8
      %v2021 = vpop.permute.xlu0 %2020
      %2022 = vrot.lane.b32.xlu0 %v1937, 8
      %v2023 = vpop.permute.xlu0 %2022
      %2024 = vrot.lane.b32.xlu0 %v1940, 8
      %v2025 = vpop.permute.xlu0 %2024
      %2026 = vrot.lane.b32.xlu0 %v1944, 8
      %v2027 = vpop.permute.xlu0 %2026
      %2028 = vrot.lane.b32.xlu0 %v1947, 8
      %v2029 = vpop.permute.xlu0 %2028
      %2030 = vrot.lane.b32.xlu0 %v1951, 8
      %v2031 = vpop.permute.xlu0 %2030
      %2032 = vrot.lane.b32.xlu0 %v1954, 8
      %v2033 = vpop.permute.xlu0 %2032
      %2034 = vrot.lane.b32.xlu0 %v1958, 8
      %v2035 = vpop.permute.xlu0 %2034
      %2036 = vrot.lane.b32.xlu0 %v1961, 8
      %v2037 = vpop.permute.xlu0 %2036
      %2038 = vrot.lane.b32.xlu0 %v1965, 8
      %v2039 = vpop.permute.xlu0 %2038
      %2040 = vrot.lane.b32.xlu0 %v1968, 8
      %v2041 = vpop.permute.xlu0 %2040
      %2042 = vrot.lane.b32.xlu0 %v1972, 8
      %v2043 = vpop.permute.xlu0 %2042
      %2044 = vrot.lane.b32.xlu0 %v1975, 8
      %v2045 = vpop.permute.xlu0 %2044
      %2046 = vrot.lane.b32.xlu0 %v1979, 8
      %v2047 = vpop.permute.xlu0 %2046
      %2048 = vrot.lane.b32.xlu0 %v1982, 8
      %v2049 = vpop.permute.xlu0 %2048
      %2050 = vrot.lane.b32.xlu0 %v1986, 8
      %v2051 = vpop.permute.xlu0 %2050
      %2052 = vrot.lane.b32.xlu0 %v1989, 8
      %v2053 = vpop.permute.xlu0 %2052
      %vm2086 = vcmask 93248
      %2087 = vst.msk [vmem:[#allocation3] sm:$0xf] %vm2086, %v1991
      %2088 = vst.msk [vmem:[#allocation3 + $0x4] sm:$0xf] %vm2086, %v1993
      %2089 = vst.msk [vmem:[#allocation3 + $0x8] sm:$0xf] %vm2086, %v1995
      %2090 = vst.msk [vmem:[#allocation3 + $0xc] sm:$0xf] %vm2086, %v1997
      %2091 = vst.msk [vmem:[#allocation3 + $0x10] sm:$0xf] %vm2086, %v1999
      %2092 = vst.msk [vmem:[#allocation3 + $0x14] sm:$0xf] %vm2086, %v2001
      %2093 = vst.msk [vmem:[#allocation3 + $0x18] sm:$0xf] %vm2086, %v2003
      %2094 = vst.msk [vmem:[#allocation3 + $0x1c] sm:$0xf] %vm2086, %v2005
      %2095 = vst.msk [vmem:[#allocation3 + $0x20] sm:$0xf] %vm2086, %v2007
      %2096 = vst.msk [vmem:[#allocation3 + $0x24] sm:$0xf] %vm2086, %v2009
      %2097 = vst.msk [vmem:[#allocation3 + $0x28] sm:$0xf] %vm2086, %v2011
      %2098 = vst.msk [vmem:[#allocation3 + $0x2c] sm:$0xf] %vm2086, %v2013
      %2099 = vst.msk [vmem:[#allocation3 + $0x30] sm:$0xf] %vm2086, %v2015
      %2100 = vst.msk [vmem:[#allocation3 + $0x34] sm:$0xf] %vm2086, %v2017
      %2101 = vst.msk [vmem:[#allocation3 + $0x38] sm:$0xf] %vm2086, %v2019
      %2102 = vst.msk [vmem:[#allocation3 + $0x3c] sm:$0xf] %vm2086, %v2021
      %2103 = vst.msk [vmem:[#allocation3 + $0x40] sm:$0xf] %vm2086, %v2023
      %2104 = vst.msk [vmem:[#allocation3 + $0x44] sm:$0xf] %vm2086, %v2025
      %2105 = vst.msk [vmem:[#allocation3 + $0x48] sm:$0xf] %vm2086, %v2027
      %2106 = vst.msk [vmem:[#allocation3 + $0x4c] sm:$0xf] %vm2086, %v2029
      %2107 = vst.msk [vmem:[#allocation3 + $0x50] sm:$0xf] %vm2086, %v2031
      %2108 = vst.msk [vmem:[#allocation3 + $0x54] sm:$0xf] %vm2086, %v2033
      %2109 = vst.msk [vmem:[#allocation3 + $0x58] sm:$0xf] %vm2086, %v2035
      %2110 = vst.msk [vmem:[#allocation3 + $0x5c] sm:$0xf] %vm2086, %v2037
      %2111 = vst.msk [vmem:[#allocation3 + $0x60] sm:$0xf] %vm2086, %v2039
      %2112 = vst.msk [vmem:[#allocation3 + $0x64] sm:$0xf] %vm2086, %v2041
      %2113 = vst.msk [vmem:[#allocation3 + $0x68] sm:$0xf] %vm2086, %v2043
      %2114 = vst.msk [vmem:[#allocation3 + $0x6c] sm:$0xf] %vm2086, %v2045
      %2115 = vst.msk [vmem:[#allocation3 + $0x70] sm:$0xf] %vm2086, %v2047
      %2116 = vst.msk [vmem:[#allocation3 + $0x74] sm:$0xf] %vm2086, %v2049
      %2117 = vst.msk [vmem:[#allocation3 + $0x78] sm:$0xf] %vm2086, %v2051
      %2118 = vst.msk [vmem:[#allocation3 + $0x7c] sm:$0xf] %vm2086, %v2053
      %v2119 = vld [vmem:[%s946] sm:$0xf]
      %v2120 = vld [vmem:[%s946 + $0x4] sm:$0xf]
      %v2121 = vld [vmem:[%s946 + $0xc] sm:$0xf]
      %v2122 = vld [vmem:[%s946 + $0x10] sm:$0xf]
      %v2123 = vld [vmem:[%s946 + $0x18] sm:$0xf]
      %v2124 = vld [vmem:[%s946 + $0x1c] sm:$0xf]
      %v2125 = vld [vmem:[%s946 + $0x24] sm:$0xf]
      %v2126 = vld [vmem:[%s946 + $0x28] sm:$0xf]
      %v2127 = vld [vmem:[%s946 + $0x30] sm:$0xf]
      %v2128 = vld [vmem:[%s946 + $0x34] sm:$0xf]
      %v2129 = vld [vmem:[%s946 + $0x3c] sm:$0xf]
      %v2130 = vld [vmem:[%s946 + $0x40] sm:$0xf]
      %v2131 = vld [vmem:[%s946 + $0x48] sm:$0xf]
      %v2132 = vld [vmem:[%s946 + $0x4c] sm:$0xf]
      %v2133 = vld [vmem:[%s946 + $0x54] sm:$0xf]
      %v2134 = vld [vmem:[%s946 + $0x58] sm:$0xf]
      %v2135 = vld [vmem:[%s946 + $0x60] sm:$0xf]
      %v2136 = vld [vmem:[%s946 + $0x64] sm:$0xf]
      %v2137 = vld [vmem:[%s946 + $0x6c] sm:$0xf]
      %v2138 = vld [vmem:[%s946 + $0x70] sm:$0xf]
      %v2139 = vld [vmem:[%s946 + $0x78] sm:$0xf]
      %v2140 = vld [vmem:[%s946 + $0x7c] sm:$0xf]
      %v2141 = vld [vmem:[%s946 + $0x84] sm:$0xf]
      %v2142 = vld [vmem:[%s946 + $0x88] sm:$0xf]
      %v2143 = vld [vmem:[%s946 + $0x90] sm:$0xf]
      %v2144 = vld [vmem:[%s946 + $0x94] sm:$0xf]
      %v2145 = vld [vmem:[%s946 + $0x9c] sm:$0xf]
      %v2146 = vld [vmem:[%s946 + $0xa0] sm:$0xf]
      %v2147 = vld [vmem:[%s946 + $0xa8] sm:$0xf]
      %v2148 = vld [vmem:[%s946 + $0xac] sm:$0xf]
      %v2149 = vld [vmem:[%s946 + $0xb4] sm:$0xf]
      %v2150 = vld [vmem:[%s946 + $0xb8] sm:$0xf]
      %2183 = vrot.lane.b32.xlu0 %v2119, 12
      %v2184 = vpop.permute.xlu0 %2183
      %2185 = vrot.lane.b32.xlu0 %v2120, 12
      %v2186 = vpop.permute.xlu0 %2185
      %2187 = vrot.lane.b32.xlu0 %v2121, 12
      %v2188 = vpop.permute.xlu0 %2187
      %2189 = vrot.lane.b32.xlu0 %v2122, 12
      %v2190 = vpop.permute.xlu0 %2189
      %2191 = vrot.lane.b32.xlu0 %v2123, 12
      %v2192 = vpop.permute.xlu0 %2191
      %2193 = vrot.lane.b32.xlu0 %v2124, 12
      %v2194 = vpop.permute.xlu0 %2193
      %2195 = vrot.lane.b32.xlu0 %v2125, 12
      %v2196 = vpop.permute.xlu0 %2195
      %2197 = vrot.lane.b32.xlu0 %v2126, 12
      %v2198 = vpop.permute.xlu0 %2197
      %2199 = vrot.lane.b32.xlu0 %v2127, 12
      %v2200 = vpop.permute.xlu0 %2199
      %2201 = vrot.lane.b32.xlu0 %v2128, 12
      %v2202 = vpop.permute.xlu0 %2201
      %2203 = vrot.lane.b32.xlu0 %v2129, 12
      %v2204 = vpop.permute.xlu0 %2203
      %2205 = vrot.lane.b32.xlu0 %v2130, 12
      %v2206 = vpop.permute.xlu0 %2205
      %2207 = vrot.lane.b32.xlu0 %v2131, 12
      %v2208 = vpop.permute.xlu0 %2207
      %2209 = vrot.lane.b32.xlu0 %v2132, 12
      %v2210 = vpop.permute.xlu0 %2209
      %2211 = vrot.lane.b32.xlu0 %v2133, 12
      %v2212 = vpop.permute.xlu0 %2211
      %2213 = vrot.lane.b32.xlu0 %v2134, 12
      %v2214 = vpop.permute.xlu0 %2213
      %2215 = vrot.lane.b32.xlu0 %v2135, 12
      %v2216 = vpop.permute.xlu0 %2215
      %2217 = vrot.lane.b32.xlu0 %v2136, 12
      %v2218 = vpop.permute.xlu0 %2217
      %2219 = vrot.lane.b32.xlu0 %v2137, 12
      %v2220 = vpop.permute.xlu0 %2219
      %2221 = vrot.lane.b32.xlu0 %v2138, 12
      %v2222 = vpop.permute.xlu0 %2221
      %2223 = vrot.lane.b32.xlu0 %v2139, 12
      %v2224 = vpop.permute.xlu0 %2223
      %2225 = vrot.lane.b32.xlu0 %v2140, 12
      %v2226 = vpop.permute.xlu0 %2225
      %2227 = vrot.lane.b32.xlu0 %v2141, 12
      %v2228 = vpop.permute.xlu0 %2227
      %2229 = vrot.lane.b32.xlu0 %v2142, 12
      %v2230 = vpop.permute.xlu0 %2229
      %2231 = vrot.lane.b32.xlu0 %v2143, 12
      %v2232 = vpop.permute.xlu0 %2231
      %2233 = vrot.lane.b32.xlu0 %v2144, 12
      %v2234 = vpop.permute.xlu0 %2233
      %2235 = vrot.lane.b32.xlu0 %v2145, 12
      %v2236 = vpop.permute.xlu0 %2235
      %2237 = vrot.lane.b32.xlu0 %v2146, 12
      %v2238 = vpop.permute.xlu0 %2237
      %2239 = vrot.lane.b32.xlu0 %v2147, 12
      %v2240 = vpop.permute.xlu0 %2239
      %2241 = vrot.lane.b32.xlu0 %v2148, 12
      %v2242 = vpop.permute.xlu0 %2241
      %2243 = vrot.lane.b32.xlu0 %v2149, 12
      %v2244 = vpop.permute.xlu0 %2243
      %2245 = vrot.lane.b32.xlu0 %v2150, 12
      %v2246 = vpop.permute.xlu0 %2245
      %vm2279 = vcmask 126048
      %2280 = vst.msk [vmem:[#allocation3] sm:$0xf] %vm2279, %v2184
      %2281 = vst.msk [vmem:[#allocation3 + $0x4] sm:$0xf] %vm2279, %v2186
      %2282 = vst.msk [vmem:[#allocation3 + $0x8] sm:$0xf] %vm2279, %v2188
      %2283 = vst.msk [vmem:[#allocation3 + $0xc] sm:$0xf] %vm2279, %v2190
      %2284 = vst.msk [vmem:[#allocation3 + $0x10] sm:$0xf] %vm2279, %v2192
      %2285 = vst.msk [vmem:[#allocation3 + $0x14] sm:$0xf] %vm2279, %v2194
      %2286 = vst.msk [vmem:[#allocation3 + $0x18] sm:$0xf] %vm2279, %v2196
      %2287 = vst.msk [vmem:[#allocation3 + $0x1c] sm:$0xf] %vm2279, %v2198
      %2288 = vst.msk [vmem:[#allocation3 + $0x20] sm:$0xf] %vm2279, %v2200
      %2289 = vst.msk [vmem:[#allocation3 + $0x24] sm:$0xf] %vm2279, %v2202
      %2290 = vst.msk [vmem:[#allocation3 + $0x28] sm:$0xf] %vm2279, %v2204
      %2291 = vst.msk [vmem:[#allocation3 + $0x2c] sm:$0xf] %vm2279, %v2206
      %2292 = vst.msk [vmem:[#allocation3 + $0x30] sm:$0xf] %vm2279, %v2208
      %2293 = vst.msk [vmem:[#allocation3 + $0x34] sm:$0xf] %vm2279, %v2210
      %2294 = vst.msk [vmem:[#allocation3 + $0x38] sm:$0xf] %vm2279, %v2212
      %2295 = vst.msk [vmem:[#allocation3 + $0x3c] sm:$0xf] %vm2279, %v2214
      %2296 = vst.msk [vmem:[#allocation3 + $0x40] sm:$0xf] %vm2279, %v2216
      %2297 = vst.msk [vmem:[#allocation3 + $0x44] sm:$0xf] %vm2279, %v2218
      %2298 = vst.msk [vmem:[#allocation3 + $0x48] sm:$0xf] %vm2279, %v2220
      %2299 = vst.msk [vmem:[#allocation3 + $0x4c] sm:$0xf] %vm2279, %v2222
      %2300 = vst.msk [vmem:[#allocation3 + $0x50] sm:$0xf] %vm2279, %v2224
      %2301 = vst.msk [vmem:[#allocation3 + $0x54] sm:$0xf] %vm2279, %v2226
      %2302 = vst.msk [vmem:[#allocation3 + $0x58] sm:$0xf] %vm2279, %v2228
      %2303 = vst.msk [vmem:[#allocation3 + $0x5c] sm:$0xf] %vm2279, %v2230
      %2304 = vst.msk [vmem:[#allocation3 + $0x60] sm:$0xf] %vm2279, %v2232
      %2305 = vst.msk [vmem:[#allocation3 + $0x64] sm:$0xf] %vm2279, %v2234
      %2306 = vst.msk [vmem:[#allocation3 + $0x68] sm:$0xf] %vm2279, %v2236
      %2307 = vst.msk [vmem:[#allocation3 + $0x6c] sm:$0xf] %vm2279, %v2238
      %2308 = vst.msk [vmem:[#allocation3 + $0x70] sm:$0xf] %vm2279, %v2240
      %2309 = vst.msk [vmem:[#allocation3 + $0x74] sm:$0xf] %vm2279, %v2242
      %2310 = vst.msk [vmem:[#allocation3 + $0x78] sm:$0xf] %vm2279, %v2244
      %2311 = vst.msk [vmem:[#allocation3 + $0x7c] sm:$0xf] %vm2279, %v2246
      %v2312 = vld [vmem:[%s946] sm:$0xf]
      %v2313 = vld [vmem:[%s946 + $0x4] sm:$0xf]
      %v2314 = vld [vmem:[%s946 + $0x8] sm:$0x1]
      %v2315 = vld [vmem:[%s946 + $0xc] sm:$0xf]
      %v2316 = vld [vmem:[%s946 + $0x10] sm:$0xf]
      %v2317 = vld [vmem:[%s946 + $0x14] sm:$0x1]
      %v2318 = vld [vmem:[%s946 + $0x18] sm:$0xf]
      %v2319 = vld [vmem:[%s946 + $0x1c] sm:$0xf]
      %v2320 = vld [vmem:[%s946 + $0x20] sm:$0x1]
      %v2321 = vld [vmem:[%s946 + $0x24] sm:$0xf]
      %v2322 = vld [vmem:[%s946 + $0x28] sm:$0xf]
      %v2323 = vld [vmem:[%s946 + $0x2c] sm:$0x1]
      %v2324 = vld [vmem:[%s946 + $0x30] sm:$0xf]
      %v2325 = vld [vmem:[%s946 + $0x34] sm:$0xf]
      %v2326 = vld [vmem:[%s946 + $0x38] sm:$0x1]
      %v2327 = vld [vmem:[%s946 + $0x3c] sm:$0xf]
      %v2328 = vld [vmem:[%s946 + $0x40] sm:$0xf]
      %v2329 = vld [vmem:[%s946 + $0x44] sm:$0x1]
      %v2330 = vld [vmem:[%s946 + $0x48] sm:$0xf]
      %v2331 = vld [vmem:[%s946 + $0x4c] sm:$0xf]
      %v2332 = vld [vmem:[%s946 + $0x50] sm:$0x1]
      %v2333 = vld [vmem:[%s946 + $0x54] sm:$0xf]
      %v2334 = vld [vmem:[%s946 + $0x58] sm:$0xf]
      %v2335 = vld [vmem:[%s946 + $0x5c] sm:$0x1]
      %v2336 = vld [vmem:[%s946 + $0x60] sm:$0xf]
      %v2337 = vld [vmem:[%s946 + $0x64] sm:$0xf]
      %v2338 = vld [vmem:[%s946 + $0x68] sm:$0x1]
      %v2339 = vld [vmem:[%s946 + $0x6c] sm:$0xf]
      %v2340 = vld [vmem:[%s946 + $0x70] sm:$0xf]
      %v2341 = vld [vmem:[%s946 + $0x74] sm:$0x1]
      %v2342 = vld [vmem:[%s946 + $0x78] sm:$0xf]
      %v2343 = vld [vmem:[%s946 + $0x7c] sm:$0xf]
      %v2344 = vld [vmem:[%s946 + $0x80] sm:$0x1]
      %v2345 = vld [vmem:[%s946 + $0x84] sm:$0xf]
      %v2346 = vld [vmem:[%s946 + $0x88] sm:$0xf]
      %v2347 = vld [vmem:[%s946 + $0x8c] sm:$0x1]
      %v2348 = vld [vmem:[%s946 + $0x90] sm:$0xf]
      %v2349 = vld [vmem:[%s946 + $0x94] sm:$0xf]
      %v2350 = vld [vmem:[%s946 + $0x98] sm:$0x1]
      %v2351 = vld [vmem:[%s946 + $0x9c] sm:$0xf]
      %v2352 = vld [vmem:[%s946 + $0xa0] sm:$0xf]
      %v2353 = vld [vmem:[%s946 + $0xa4] sm:$0x1]
      %v2354 = vld [vmem:[%s946 + $0xa8] sm:$0xf]
      %v2355 = vld [vmem:[%s946 + $0xac] sm:$0xf]
      %v2356 = vld [vmem:[%s946 + $0xb0] sm:$0x1]
      %v2357 = vld [vmem:[%s946 + $0xb4] sm:$0xf]
      %v2358 = vld [vmem:[%s946 + $0xb8] sm:$0xf]
      %v2359 = vld [vmem:[%s946 + $0xbc] sm:$0x1]
      %v2361 = vshrl.u32 %v2312, 16
      %v2363 = vrot.slane %v2361, 4
      %v2364 = vshll.u32 %v2312, 16
      %v2366 = vrot.slane %v2364, 5
      %v2367 = vor.u32 %v2363, %v2366
      %v2368 = vrot.slane %v2367, 4
      %v2370 = vshll.u32 %v2313, 16
      %v2372 = vrot.slane %v2370, 5
      %v2373 = vsel %vm1265, %v2368, %v2372
      %v2374 = vshrl.u32 %v2313, 16
      %v2376 = vrot.slane %v2374, 4
      %v2377 = vor.u32 %v2376, %v2372
      %v2378 = vrot.slane %v2377, 4
      %v2380 = vshll.u32 %v2314, 16
      %v2382 = vrot.slane %v2380, 5
      %v2383 = vsel %vm1265, %v2378, %v2382
      %v2385 = vshrl.u32 %v2315, 16
      %v2387 = vrot.slane %v2385, 4
      %v2388 = vshll.u32 %v2315, 16
      %v2390 = vrot.slane %v2388, 5
      %v2391 = vor.u32 %v2387, %v2390
      %v2392 = vrot.slane %v2391, 4
      %v2394 = vshll.u32 %v2316, 16
      %v2396 = vrot.slane %v2394, 5
      %v2397 = vsel %vm1265, %v2392, %v2396
      %v2398 = vshrl.u32 %v2316, 16
      %v2400 = vrot.slane %v2398, 4
      %v2401 = vor.u32 %v2400, %v2396
      %v2402 = vrot.slane %v2401, 4
      %v2404 = vshll.u32 %v2317, 16
      %v2406 = vrot.slane %v2404, 5
      %v2407 = vsel %vm1265, %v2402, %v2406
      %v2409 = vshrl.u32 %v2318, 16
      %v2411 = vrot.slane %v2409, 4
      %v2412 = vshll.u32 %v2318, 16
      %v2414 = vrot.slane %v2412, 5
      %v2415 = vor.u32 %v2411, %v2414
      %v2416 = vrot.slane %v2415, 4
      %v2418 = vshll.u32 %v2319, 16
      %v2420 = vrot.slane %v2418, 5
      %v2421 = vsel %vm1265, %v2416, %v2420
      %v2422 = vshrl.u32 %v2319, 16
      %v2424 = vrot.slane %v2422, 4
      %v2425 = vor.u32 %v2424, %v2420
      %v2426 = vrot.slane %v2425, 4
      %v2428 = vshll.u32 %v2320, 16
      %v2430 = vrot.slane %v2428, 5
      %v2431 = vsel %vm1265, %v2426, %v2430
      %v2433 = vshrl.u32 %v2321, 16
      %v2435 = vrot.slane %v2433, 4
      %v2436 = vshll.u32 %v2321, 16
      %v2438 = vrot.slane %v2436, 5
      %v2439 = vor.u32 %v2435, %v2438
      %v2440 = vrot.slane %v2439, 4
      %v2442 = vshll.u32 %v2322, 16
      %v2444 = vrot.slane %v2442, 5
      %v2445 = vsel %vm1265, %v2440, %v2444
      %v2446 = vshrl.u32 %v2322, 16
      %v2448 = vrot.slane %v2446, 4
      %v2449 = vor.u32 %v2448, %v2444
      %v2450 = vrot.slane %v2449, 4
      %v2452 = vshll.u32 %v2323, 16
      %v2454 = vrot.slane %v2452, 5
      %v2455 = vsel %vm1265, %v2450, %v2454
      %v2457 = vshrl.u32 %v2324, 16
      %v2459 = vrot.slane %v2457, 4
      %v2460 = vshll.u32 %v2324, 16
      %v2462 = vrot.slane %v2460, 5
      %v2463 = vor.u32 %v2459, %v2462
      %v2464 = vrot.slane %v2463, 4
      %v2466 = vshll.u32 %v2325, 16
      %v2468 = vrot.slane %v2466, 5
      %v2469 = vsel %vm1265, %v2464, %v2468
      %v2470 = vshrl.u32 %v2325, 16
      %v2472 = vrot.slane %v2470, 4
      %v2473 = vor.u32 %v2472, %v2468
      %v2474 = vrot.slane %v2473, 4
      %v2476 = vshll.u32 %v2326, 16
      %v2478 = vrot.slane %v2476, 5
      %v2479 = vsel %vm1265, %v2474, %v2478
      %v2481 = vshrl.u32 %v2327, 16
      %v2483 = vrot.slane %v2481, 4
      %v2484 = vshll.u32 %v2327, 16
      %v2486 = vrot.slane %v2484, 5
      %v2487 = vor.u32 %v2483, %v2486
      %v2488 = vrot.slane %v2487, 4
      %v2490 = vshll.u32 %v2328, 16
      %v2492 = vrot.slane %v2490, 5
      %v2493 = vsel %vm1265, %v2488, %v2492
      %v2494 = vshrl.u32 %v2328, 16
      %v2496 = vrot.slane %v2494, 4
      %v2497 = vor.u32 %v2496, %v2492
      %v2498 = vrot.slane %v2497, 4
      %v2500 = vshll.u32 %v2329, 16
      %v2502 = vrot.slane %v2500, 5
      %v2503 = vsel %vm1265, %v2498, %v2502
      %v2505 = vshrl.u32 %v2330, 16
      %v2507 = vrot.slane %v2505, 4
      %v2508 = vshll.u32 %v2330, 16
      %v2510 = vrot.slane %v2508, 5
      %v2511 = vor.u32 %v2507, %v2510
      %v2512 = vrot.slane %v2511, 4
      %v2514 = vshll.u32 %v2331, 16
      %v2516 = vrot.slane %v2514, 5
      %v2517 = vsel %vm1265, %v2512, %v2516
      %v2518 = vshrl.u32 %v2331, 16
      %v2520 = vrot.slane %v2518, 4
      %v2521 = vor.u32 %v2520, %v2516
      %v2522 = vrot.slane %v2521, 4
      %v2524 = vshll.u32 %v2332, 16
      %v2526 = vrot.slane %v2524, 5
      %v2527 = vsel %vm1265, %v2522, %v2526
      %v2529 = vshrl.u32 %v2333, 16
      %v2531 = vrot.slane %v2529, 4
      %v2532 = vshll.u32 %v2333, 16
      %v2534 = vrot.slane %v2532, 5
      %v2535 = vor.u32 %v2531, %v2534
      %v2536 = vrot.slane %v2535, 4
      %v2538 = vshll.u32 %v2334, 16
      %v2540 = vrot.slane %v2538, 5
      %v2541 = vsel %vm1265, %v2536, %v2540
      %v2542 = vshrl.u32 %v2334, 16
      %v2544 = vrot.slane %v2542, 4
      %v2545 = vor.u32 %v2544, %v2540
      %v2546 = vrot.slane %v2545, 4
      %v2548 = vshll.u32 %v2335, 16
      %v2550 = vrot.slane %v2548, 5
      %v2551 = vsel %vm1265, %v2546, %v2550
      %v2553 = vshrl.u32 %v2336, 16
      %v2555 = vrot.slane %v2553, 4
      %v2556 = vshll.u32 %v2336, 16
      %v2558 = vrot.slane %v2556, 5
      %v2559 = vor.u32 %v2555, %v2558
      %v2560 = vrot.slane %v2559, 4
      %v2562 = vshll.u32 %v2337, 16
      %v2564 = vrot.slane %v2562, 5
      %v2565 = vsel %vm1265, %v2560, %v2564
      %v2566 = vshrl.u32 %v2337, 16
      %v2568 = vrot.slane %v2566, 4
      %v2569 = vor.u32 %v2568, %v2564
      %v2570 = vrot.slane %v2569, 4
      %v2572 = vshll.u32 %v2338, 16
      %v2574 = vrot.slane %v2572, 5
      %v2575 = vsel %vm1265, %v2570, %v2574
      %v2577 = vshrl.u32 %v2339, 16
      %v2579 = vrot.slane %v2577, 4
      %v2580 = vshll.u32 %v2339, 16
      %v2582 = vrot.slane %v2580, 5
      %v2583 = vor.u32 %v2579, %v2582
      %v2584 = vrot.slane %v2583, 4
      %v2586 = vshll.u32 %v2340, 16
      %v2588 = vrot.slane %v2586, 5
      %v2589 = vsel %vm1265, %v2584, %v2588
      %v2590 = vshrl.u32 %v2340, 16
      %v2592 = vrot.slane %v2590, 4
      %v2593 = vor.u32 %v2592, %v2588
      %v2594 = vrot.slane %v2593, 4
      %v2596 = vshll.u32 %v2341, 16
      %v2598 = vrot.slane %v2596, 5
      %v2599 = vsel %vm1265, %v2594, %v2598
      %v2601 = vshrl.u32 %v2342, 16
      %v2603 = vrot.slane %v2601, 4
      %v2604 = vshll.u32 %v2342, 16
      %v2606 = vrot.slane %v2604, 5
      %v2607 = vor.u32 %v2603, %v2606
      %v2608 = vrot.slane %v2607, 4
      %v2610 = vshll.u32 %v2343, 16
      %v2612 = vrot.slane %v2610, 5
      %v2613 = vsel %vm1265, %v2608, %v2612
      %v2614 = vshrl.u32 %v2343, 16
      %v2616 = vrot.slane %v2614, 4
      %v2617 = vor.u32 %v2616, %v2612
      %v2618 = vrot.slane %v2617, 4
      %v2620 = vshll.u32 %v2344, 16
      %v2622 = vrot.slane %v2620, 5
      %v2623 = vsel %vm1265, %v2618, %v2622
      %v2625 = vshrl.u32 %v2345, 16
      %v2627 = vrot.slane %v2625, 4
      %v2628 = vshll.u32 %v2345, 16
      %v2630 = vrot.slane %v2628, 5
      %v2631 = vor.u32 %v2627, %v2630
      %v2632 = vrot.slane %v2631, 4
      %v2634 = vshll.u32 %v2346, 16
      %v2636 = vrot.slane %v2634, 5
      %v2637 = vsel %vm1265, %v2632, %v2636
      %v2638 = vshrl.u32 %v2346, 16
      %v2640 = vrot.slane %v2638, 4
      %v2641 = vor.u32 %v2640, %v2636
      %v2642 = vrot.slane %v2641, 4
      %v2644 = vshll.u32 %v2347, 16
      %v2646 = vrot.slane %v2644, 5
      %v2647 = vsel %vm1265, %v2642, %v2646
      %v2649 = vshrl.u32 %v2348, 16
      %v2651 = vrot.slane %v2649, 4
      %v2652 = vshll.u32 %v2348, 16
      %v2654 = vrot.slane %v2652, 5
      %v2655 = vor.u32 %v2651, %v2654
      %v2656 = vrot.slane %v2655, 4
      %v2658 = vshll.u32 %v2349, 16
      %v2660 = vrot.slane %v2658, 5
      %v2661 = vsel %vm1265, %v2656, %v2660
      %v2662 = vshrl.u32 %v2349, 16
      %v2664 = vrot.slane %v2662, 4
      %v2665 = vor.u32 %v2664, %v2660
      %v2666 = vrot.slane %v2665, 4
      %v2668 = vshll.u32 %v2350, 16
      %v2670 = vrot.slane %v2668, 5
      %v2671 = vsel %vm1265, %v2666, %v2670
      %v2673 = vshrl.u32 %v2351, 16
      %v2675 = vrot.slane %v2673, 4
      %v2676 = vshll.u32 %v2351, 16
      %v2678 = vrot.slane %v2676, 5
      %v2679 = vor.u32 %v2675, %v2678
      %v2680 = vrot.slane %v2679, 4
      %v2682 = vshll.u32 %v2352, 16
      %v2684 = vrot.slane %v2682, 5
      %v2685 = vsel %vm1265, %v2680, %v2684
      %v2686 = vshrl.u32 %v2352, 16
      %v2688 = vrot.slane %v2686, 4
      %v2689 = vor.u32 %v2688, %v2684
      %v2690 = vrot.slane %v2689, 4
      %v2692 = vshll.u32 %v2353, 16
      %v2694 = vrot.slane %v2692, 5
      %v2695 = vsel %vm1265, %v2690, %v2694
      %v2697 = vshrl.u32 %v2354, 16
      %v2699 = vrot.slane %v2697, 4
      %v2700 = vshll.u32 %v2354, 16
      %v2702 = vrot.slane %v2700, 5
      %v2703 = vor.u32 %v2699, %v2702
      %v2704 = vrot.slane %v2703, 4
      %v2706 = vshll.u32 %v2355, 16
      %v2708 = vrot.slane %v2706, 5
      %v2709 = vsel %vm1265, %v2704, %v2708
      %v2710 = vshrl.u32 %v2355, 16
      %v2712 = vrot.slane %v2710, 4
      %v2713 = vor.u32 %v2712, %v2708
      %v2714 = vrot.slane %v2713, 4
      %v2716 = vshll.u32 %v2356, 16
      %v2718 = vrot.slane %v2716, 5
      %v2719 = vsel %vm1265, %v2714, %v2718
      %v2721 = vshrl.u32 %v2357, 16
      %v2723 = vrot.slane %v2721, 4
      %v2724 = vshll.u32 %v2357, 16
      %v2726 = vrot.slane %v2724, 5
      %v2727 = vor.u32 %v2723, %v2726
      %v2728 = vrot.slane %v2727, 4
      %v2730 = vshll.u32 %v2358, 16
      %v2732 = vrot.slane %v2730, 5
      %v2733 = vsel %vm1265, %v2728, %v2732
      %v2734 = vshrl.u32 %v2358, 16
      %v2736 = vrot.slane %v2734, 4
      %v2737 = vor.u32 %v2736, %v2732
      %v2738 = vrot.slane %v2737, 4
      %v2740 = vshll.u32 %v2359, 16
      %v2742 = vrot.slane %v2740, 5
      %v2743 = vsel %vm1265, %v2738, %v2742
      %2744 = vrot.lane.b32.xlu0 %v2373, 16
      %v2745 = vpop.permute.xlu0 %2744
      %2746 = vrot.lane.b32.xlu0 %v2383, 16
      %v2747 = vpop.permute.xlu0 %2746
      %2748 = vrot.lane.b32.xlu0 %v2397, 16
      %v2749 = vpop.permute.xlu0 %2748
      %2750 = vrot.lane.b32.xlu0 %v2407, 16
      %v2751 = vpop.permute.xlu0 %2750
      %2752 = vrot.lane.b32.xlu0 %v2421, 16
      %v2753 = vpop.permute.xlu0 %2752
      %2754 = vrot.lane.b32.xlu0 %v2431, 16
      %v2755 = vpop.permute.xlu0 %2754
      %2756 = vrot.lane.b32.xlu0 %v2445, 16
      %v2757 = vpop.permute.xlu0 %2756
      %2758 = vrot.lane.b32.xlu0 %v2455, 16
      %v2759 = vpop.permute.xlu0 %2758
      %2760 = vrot.lane.b32.xlu0 %v2469, 16
      %v2761 = vpop.permute.xlu0 %2760
      %2762 = vrot.lane.b32.xlu0 %v2479, 16
      %v2763 = vpop.permute.xlu0 %2762
      %2764 = vrot.lane.b32.xlu0 %v2493, 16
      %v2765 = vpop.permute.xlu0 %2764
      %2766 = vrot.lane.b32.xlu0 %v2503, 16
      %v2767 = vpop.permute.xlu0 %2766
      %2768 = vrot.lane.b32.xlu0 %v2517, 16
      %v2769 = vpop.permute.xlu0 %2768
      %2770 = vrot.lane.b32.xlu0 %v2527, 16
      %v2771 = vpop.permute.xlu0 %2770
      %2772 = vrot.lane.b32.xlu0 %v2541, 16
      %v2773 = vpop.permute.xlu0 %2772
      %2774 = vrot.lane.b32.xlu0 %v2551, 16
      %v2775 = vpop.permute.xlu0 %2774
      %2776 = vrot.lane.b32.xlu0 %v2565, 16
      %v2777 = vpop.permute.xlu0 %2776
      %2778 = vrot.lane.b32.xlu0 %v2575, 16
      %v2779 = vpop.permute.xlu0 %2778
      %2780 = vrot.lane.b32.xlu0 %v2589, 16
      %v2781 = vpop.permute.xlu0 %2780
      %2782 = vrot.lane.b32.xlu0 %v2599, 16
      %v2783 = vpop.permute.xlu0 %2782
      %2784 = vrot.lane.b32.xlu0 %v2613, 16
      %v2785 = vpop.permute.xlu0 %2784
      %2786 = vrot.lane.b32.xlu0 %v2623, 16
      %v2787 = vpop.permute.xlu0 %2786
      %2788 = vrot.lane.b32.xlu0 %v2637, 16
      %v2789 = vpop.permute.xlu0 %2788
      %2790 = vrot.lane.b32.xlu0 %v2647, 16
      %v2791 = vpop.permute.xlu0 %2790
      %2792 = vrot.lane.b32.xlu0 %v2661, 16
      %v2793 = vpop.permute.xlu0 %2792
      %2794 = vrot.lane.b32.xlu0 %v2671, 16
      %v2795 = vpop.permute.xlu0 %2794
      %2796 = vrot.lane.b32.xlu0 %v2685, 16
      %v2797 = vpop.permute.xlu0 %2796
      %2798 = vrot.lane.b32.xlu0 %v2695, 16
      %v2799 = vpop.permute.xlu0 %2798
      %2800 = vrot.lane.b32.xlu0 %v2709, 16
      %v2801 = vpop.permute.xlu0 %2800
      %2802 = vrot.lane.b32.xlu0 %v2719, 16
      %v2803 = vpop.permute.xlu0 %2802
      %2804 = vrot.lane.b32.xlu0 %v2733, 16
      %v2805 = vpop.permute.xlu0 %2804
      %2806 = vrot.lane.b32.xlu0 %v2743, 16
      %v2807 = vpop.permute.xlu0 %2806
      %vm2840 = vcmask 158848
      %2841 = vst.msk [vmem:[#allocation3] sm:$0xf] %vm2840, %v2745
      %2842 = vst.msk [vmem:[#allocation3 + $0x4] sm:$0xf] %vm2840, %v2747
      %2843 = vst.msk [vmem:[#allocation3 + $0x8] sm:$0xf] %vm2840, %v2749
      %2844 = vst.msk [vmem:[#allocation3 + $0xc] sm:$0xf] %vm2840, %v2751
      %2845 = vst.msk [vmem:[#allocation3 + $0x10] sm:$0xf] %vm2840, %v2753
      %2846 = vst.msk [vmem:[#allocation3 + $0x14] sm:$0xf] %vm2840, %v2755
      %2847 = vst.msk [vmem:[#allocation3 + $0x18] sm:$0xf] %vm2840, %v2757
      %2848 = vst.msk [vmem:[#allocation3 + $0x1c] sm:$0xf] %vm2840, %v2759
      %2849 = vst.msk [vmem:[#allocation3 + $0x20] sm:$0xf] %vm2840, %v2761
      %2850 = vst.msk [vmem:[#allocation3 + $0x24] sm:$0xf] %vm2840, %v2763
      %2851 = vst.msk [vmem:[#allocation3 + $0x28] sm:$0xf] %vm2840, %v2765
      %2852 = vst.msk [vmem:[#allocation3 + $0x2c] sm:$0xf] %vm2840, %v2767
      %2853 = vst.msk [vmem:[#allocation3 + $0x30] sm:$0xf] %vm2840, %v2769
      %2854 = vst.msk [vmem:[#allocation3 + $0x34] sm:$0xf] %vm2840, %v2771
      %2855 = vst.msk [vmem:[#allocation3 + $0x38] sm:$0xf] %vm2840, %v2773
      %2856 = vst.msk [vmem:[#allocation3 + $0x3c] sm:$0xf] %vm2840, %v2775
      %2857 = vst.msk [vmem:[#allocation3 + $0x40] sm:$0xf] %vm2840, %v2777
      %2858 = vst.msk [vmem:[#allocation3 + $0x44] sm:$0xf] %vm2840, %v2779
      %2859 = vst.msk [vmem:[#allocation3 + $0x48] sm:$0xf] %vm2840, %v2781
      %2860 = vst.msk [vmem:[#allocation3 + $0x4c] sm:$0xf] %vm2840, %v2783
      %2861 = vst.msk [vmem:[#allocation3 + $0x50] sm:$0xf] %vm2840, %v2785
      %2862 = vst.msk [vmem:[#allocation3 + $0x54] sm:$0xf] %vm2840, %v2787
      %2863 = vst.msk [vmem:[#allocation3 + $0x58] sm:$0xf] %vm2840, %v2789
      %2864 = vst.msk [vmem:[#allocation3 + $0x5c] sm:$0xf] %vm2840, %v2791
      %2865 = vst.msk [vmem:[#allocation3 + $0x60] sm:$0xf] %vm2840, %v2793
      %2866 = vst.msk [vmem:[#allocation3 + $0x64] sm:$0xf] %vm2840, %v2795
      %2867 = vst.msk [vmem:[#allocation3 + $0x68] sm:$0xf] %vm2840, %v2797
      %2868 = vst.msk [vmem:[#allocation3 + $0x6c] sm:$0xf] %vm2840, %v2799
      %2869 = vst.msk [vmem:[#allocation3 + $0x70] sm:$0xf] %vm2840, %v2801
      %2870 = vst.msk [vmem:[#allocation3 + $0x74] sm:$0xf] %vm2840, %v2803
      %2871 = vst.msk [vmem:[#allocation3 + $0x78] sm:$0xf] %vm2840, %v2805
      %2872 = vst.msk [vmem:[#allocation3 + $0x7c] sm:$0xf] %vm2840, %v2807
      %v2873 = vld [vmem:[%s946] sm:$0xe]
      %v2874 = vld [vmem:[%s946 + $0x4] sm:$0xf]
      %v2875 = vld [vmem:[%s946 + $0x8] sm:$0x1]
      %v2876 = vld [vmem:[%s946 + $0xc] sm:$0xe]
      %v2877 = vld [vmem:[%s946 + $0x10] sm:$0xf]
      %v2878 = vld [vmem:[%s946 + $0x14] sm:$0x1]
      %v2879 = vld [vmem:[%s946 + $0x18] sm:$0xe]
      %v2880 = vld [vmem:[%s946 + $0x1c] sm:$0xf]
      %v2881 = vld [vmem:[%s946 + $0x20] sm:$0x1]
      %v2882 = vld [vmem:[%s946 + $0x24] sm:$0xe]
      %v2883 = vld [vmem:[%s946 + $0x28] sm:$0xf]
      %v2884 = vld [vmem:[%s946 + $0x2c] sm:$0x1]
      %v2885 = vld [vmem:[%s946 + $0x30] sm:$0xe]
      %v2886 = vld [vmem:[%s946 + $0x34] sm:$0xf]
      %v2887 = vld [vmem:[%s946 + $0x38] sm:$0x1]
      %v2888 = vld [vmem:[%s946 + $0x3c] sm:$0xe]
      %v2889 = vld [vmem:[%s946 + $0x40] sm:$0xf]
      %v2890 = vld [vmem:[%s946 + $0x44] sm:$0x1]
      %v2891 = vld [vmem:[%s946 + $0x48] sm:$0xe]
      %v2892 = vld [vmem:[%s946 + $0x4c] sm:$0xf]
      %v2893 = vld [vmem:[%s946 + $0x50] sm:$0x1]
      %v2894 = vld [vmem:[%s946 + $0x54] sm:$0xe]
      %v2895 = vld [vmem:[%s946 + $0x58] sm:$0xf]
      %v2896 = vld [vmem:[%s946 + $0x5c] sm:$0x1]
      %v2897 = vld [vmem:[%s946 + $0x60] sm:$0xe]
      %v2898 = vld [vmem:[%s946 + $0x64] sm:$0xf]
      %v2899 = vld [vmem:[%s946 + $0x68] sm:$0x1]
      %v2900 = vld [vmem:[%s946 + $0x6c] sm:$0xe]
      %v2901 = vld [vmem:[%s946 + $0x70] sm:$0xf]
      %v2902 = vld [vmem:[%s946 + $0x74] sm:$0x1]
      %v2903 = vld [vmem:[%s946 + $0x78] sm:$0xe]
      %v2904 = vld [vmem:[%s946 + $0x7c] sm:$0xf]
      %v2905 = vld [vmem:[%s946 + $0x80] sm:$0x1]
      %v2906 = vld [vmem:[%s946 + $0x84] sm:$0xe]
      %v2907 = vld [vmem:[%s946 + $0x88] sm:$0xf]
      %v2908 = vld [vmem:[%s946 + $0x8c] sm:$0x1]
      %v2909 = vld [vmem:[%s946 + $0x90] sm:$0xe]
      %v2910 = vld [vmem:[%s946 + $0x94] sm:$0xf]
      %v2911 = vld [vmem:[%s946 + $0x98] sm:$0x1]
      %v2912 = vld [vmem:[%s946 + $0x9c] sm:$0xe]
      %v2913 = vld [vmem:[%s946 + $0xa0] sm:$0xf]
      %v2914 = vld [vmem:[%s946 + $0xa4] sm:$0x1]
      %v2915 = vld [vmem:[%s946 + $0xa8] sm:$0xe]
      %v2916 = vld [vmem:[%s946 + $0xac] sm:$0xf]
      %v2917 = vld [vmem:[%s946 + $0xb0] sm:$0x1]
      %v2918 = vld [vmem:[%s946 + $0xb4] sm:$0xe]
      %v2919 = vld [vmem:[%s946 + $0xb8] sm:$0xf]
      %v2920 = vld [vmem:[%s946 + $0xbc] sm:$0x1]
      %v2969 = vrot.slane %v2873, 5
      %v2970 = vrot.slane %v2969, 4
      %v2971 = vrot.slane %v2874, 5
      %v2972 = vsel %vm1877, %v2970, %v2971
      %v2973 = vrot.slane %v2971, 4
      %v2974 = vrot.slane %v2875, 5
      %v2975 = vsel %vm1877, %v2973, %v2974
      %v2976 = vrot.slane %v2876, 5
      %v2977 = vrot.slane %v2976, 4
      %v2978 = vrot.slane %v2877, 5
      %v2979 = vsel %vm1877, %v2977, %v2978
      %v2980 = vrot.slane %v2978, 4
      %v2981 = vrot.slane %v2878, 5
      %v2982 = vsel %vm1877, %v2980, %v2981
      %v2983 = vrot.slane %v2879, 5
      %v2984 = vrot.slane %v2983, 4
      %v2985 = vrot.slane %v2880, 5
      %v2986 = vsel %vm1877, %v2984, %v2985
      %v2987 = vrot.slane %v2985, 4
      %v2988 = vrot.slane %v2881, 5
      %v2989 = vsel %vm1877, %v2987, %v2988
      %v2990 = vrot.slane %v2882, 5
      %v2991 = vrot.slane %v2990, 4
      %v2992 = vrot.slane %v2883, 5
      %v2993 = vsel %vm1877, %v2991, %v2992
      %v2994 = vrot.slane %v2992, 4
      %v2995 = vrot.slane %v2884, 5
      %v2996 = vsel %vm1877, %v2994, %v2995
      %v2997 = vrot.slane %v2885, 5
      %v2998 = vrot.slane %v2997, 4
      %v2999 = vrot.slane %v2886, 5
      %v3000 = vsel %vm1877, %v2998, %v2999
      %v3001 = vrot.slane %v2999, 4
      %v3002 = vrot.slane %v2887, 5
      %v3003 = vsel %vm1877, %v3001, %v3002
      %v3004 = vrot.slane %v2888, 5
      %v3005 = vrot.slane %v3004, 4
      %v3006 = vrot.slane %v2889, 5
      %v3007 = vsel %vm1877, %v3005, %v3006
      %v3008 = vrot.slane %v3006, 4
      %v3009 = vrot.slane %v2890, 5
      %v3010 = vsel %vm1877, %v3008, %v3009
      %v3011 = vrot.slane %v2891, 5
      %v3012 = vrot.slane %v3011, 4
      %v3013 = vrot.slane %v2892, 5
      %v3014 = vsel %vm1877, %v3012, %v3013
      %v3015 = vrot.slane %v3013, 4
      %v3016 = vrot.slane %v2893, 5
      %v3017 = vsel %vm1877, %v3015, %v3016
      %v3018 = vrot.slane %v2894, 5
      %v3019 = vrot.slane %v3018, 4
      %v3020 = vrot.slane %v2895, 5
      %v3021 = vsel %vm1877, %v3019, %v3020
      %v3022 = vrot.slane %v3020, 4
      %v3023 = vrot.slane %v2896, 5
      %v3024 = vsel %vm1877, %v3022, %v3023
      %v3025 = vrot.slane %v2897, 5
      %v3026 = vrot.slane %v3025, 4
      %v3027 = vrot.slane %v2898, 5
      %v3028 = vsel %vm1877, %v3026, %v3027
      %v3029 = vrot.slane %v3027, 4
      %v3030 = vrot.slane %v2899, 5
      %v3031 = vsel %vm1877, %v3029, %v3030
      %v3032 = vrot.slane %v2900, 5
      %v3033 = vrot.slane %v3032, 4
      %v3034 = vrot.slane %v2901, 5
      %v3035 = vsel %vm1877, %v3033, %v3034
      %v3036 = vrot.slane %v3034, 4
      %v3037 = vrot.slane %v2902, 5
      %v3038 = vsel %vm1877, %v3036, %v3037
      %v3039 = vrot.slane %v2903, 5
      %v3040 = vrot.slane %v3039, 4
      %v3041 = vrot.slane %v2904, 5
      %v3042 = vsel %vm1877, %v3040, %v3041
      %v3043 = vrot.slane %v3041, 4
      %v3044 = vrot.slane %v2905, 5
      %v3045 = vsel %vm1877, %v3043, %v3044
      %v3046 = vrot.slane %v2906, 5
      %v3047 = vrot.slane %v3046, 4
      %v3048 = vrot.slane %v2907, 5
      %v3049 = vsel %vm1877, %v3047, %v3048
      %v3050 = vrot.slane %v3048, 4
      %v3051 = vrot.slane %v2908, 5
      %v3052 = vsel %vm1877, %v3050, %v3051
      %v3053 = vrot.slane %v2909, 5
      %v3054 = vrot.slane %v3053, 4
      %v3055 = vrot.slane %v2910, 5
      %v3056 = vsel %vm1877, %v3054, %v3055
      %v3057 = vrot.slane %v3055, 4
      %v3058 = vrot.slane %v2911, 5
      %v3059 = vsel %vm1877, %v3057, %v3058
      %v3060 = vrot.slane %v2912, 5
      %v3061 = vrot.slane %v3060, 4
      %v3062 = vrot.slane %v2913, 5
      %v3063 = vsel %vm1877, %v3061, %v3062
      %v3064 = vrot.slane %v3062, 4
      %v3065 = vrot.slane %v2914, 5
      %v3066 = vsel %vm1877, %v3064, %v3065
      %v3067 = vrot.slane %v2915, 5
      %v3068 = vrot.slane %v3067, 4
      %v3069 = vrot.slane %v2916, 5
      %v3070 = vsel %vm1877, %v3068, %v3069
      %v3071 = vrot.slane %v3069, 4
      %v3072 = vrot.slane %v2917, 5
      %v3073 = vsel %vm1877, %v3071, %v3072
      %v3074 = vrot.slane %v2918, 5
      %v3075 = vrot.slane %v3074, 4
      %v3076 = vrot.slane %v2919, 5
      %v3077 = vsel %vm1877, %v3075, %v3076
      %v3078 = vrot.slane %v3076, 4
      %v3079 = vrot.slane %v2920, 5
      %v3080 = vsel %vm1877, %v3078, %v3079
      %3081 = vrot.lane.b32.xlu0 %v2972, 20
      %v3082 = vpop.permute.xlu0 %3081
      %3083 = vrot.lane.b32.xlu0 %v2975, 20
      %v3084 = vpop.permute.xlu0 %3083
      %3085 = vrot.lane.b32.xlu0 %v2979, 20
      %v3086 = vpop.permute.xlu0 %3085
      %3087 = vrot.lane.b32.xlu0 %v2982, 20
      %v3088 = vpop.permute.xlu0 %3087
      %3089 = vrot.lane.b32.xlu0 %v2986, 20
      %v3090 = vpop.permute.xlu0 %3089
      %3091 = vrot.lane.b32.xlu0 %v2989, 20
      %v3092 = vpop.permute.xlu0 %3091
      %3093 = vrot.lane.b32.xlu0 %v2993, 20
      %v3094 = vpop.permute.xlu0 %3093
      %3095 = vrot.lane.b32.xlu0 %v2996, 20
      %v3096 = vpop.permute.xlu0 %3095
      %3097 = vrot.lane.b32.xlu0 %v3000, 20
      %v3098 = vpop.permute.xlu0 %3097
      %3099 = vrot.lane.b32.xlu0 %v3003, 20
      %v3100 = vpop.permute.xlu0 %3099
      %3101 = vrot.lane.b32.xlu0 %v3007, 20
      %v3102 = vpop.permute.xlu0 %3101
      %3103 = vrot.lane.b32.xlu0 %v3010, 20
      %v3104 = vpop.permute.xlu0 %3103
      %3105 = vrot.lane.b32.xlu0 %v3014, 20
      %v3106 = vpop.permute.xlu0 %3105
      %3107 = vrot.lane.b32.xlu0 %v3017, 20
      %v3108 = vpop.permute.xlu0 %3107
      %3109 = vrot.lane.b32.xlu0 %v3021, 20
      %v3110 = vpop.permute.xlu0 %3109
      %3111 = vrot.lane.b32.xlu0 %v3024, 20
      %v3112 = vpop.permute.xlu0 %3111
      %3113 = vrot.lane.b32.xlu0 %v3028, 20
      %v3114 = vpop.permute.xlu0 %3113
      %3115 = vrot.lane.b32.xlu0 %v3031, 20
      %v3116 = vpop.permute.xlu0 %3115
      %3117 = vrot.lane.b32.xlu0 %v3035, 20
      %v3118 = vpop.permute.xlu0 %3117
      %3119 = vrot.lane.b32.xlu0 %v3038, 20
      %v3120 = vpop.permute.xlu0 %3119
      %3121 = vrot.lane.b32.xlu0 %v3042, 20
      %v3122 = vpop.permute.xlu0 %3121
      %3123 = vrot.lane.b32.xlu0 %v3045, 20
      %v3124 = vpop.permute.xlu0 %3123
      %3125 = vrot.lane.b32.xlu0 %v3049, 20
      %v3126 = vpop.permute.xlu0 %3125
      %3127 = vrot.lane.b32.xlu0 %v3052, 20
      %v3128 = vpop.permute.xlu0 %3127
      %3129 = vrot.lane.b32.xlu0 %v3056, 20
      %v3130 = vpop.permute.xlu0 %3129
      %3131 = vrot.lane.b32.xlu0 %v3059, 20
      %v3132 = vpop.permute.xlu0 %3131
      %3133 = vrot.lane.b32.xlu0 %v3063, 20
      %v3134 = vpop.permute.xlu0 %3133
      %3135 = vrot.lane.b32.xlu0 %v3066, 20
      %v3136 = vpop.permute.xlu0 %3135
      %3137 = vrot.lane.b32.xlu0 %v3070, 20
      %v3138 = vpop.permute.xlu0 %3137
      %3139 = vrot.lane.b32.xlu0 %v3073, 20
      %v3140 = vpop.permute.xlu0 %3139
      %3141 = vrot.lane.b32.xlu0 %v3077, 20
      %v3142 = vpop.permute.xlu0 %3141
      %3143 = vrot.lane.b32.xlu0 %v3080, 20
      %v3144 = vpop.permute.xlu0 %3143
      %vm3177 = vcmask 191648
      %3178 = vst.msk [vmem:[#allocation3] sm:$0xf] %vm3177, %v3082
      %3179 = vst.msk [vmem:[#allocation3 + $0x4] sm:$0xf] %vm3177, %v3084
      %3180 = vst.msk [vmem:[#allocation3 + $0x8] sm:$0xf] %vm3177, %v3086
      %3181 = vst.msk [vmem:[#allocation3 + $0xc] sm:$0xf] %vm3177, %v3088
      %3182 = vst.msk [vmem:[#allocation3 + $0x10] sm:$0xf] %vm3177, %v3090
      %3183 = vst.msk [vmem:[#allocation3 + $0x14] sm:$0xf] %vm3177, %v3092
      %3184 = vst.msk [vmem:[#allocation3 + $0x18] sm:$0xf] %vm3177, %v3094
      %3185 = vst.msk [vmem:[#allocation3 + $0x1c] sm:$0xf] %vm3177, %v3096
      %3186 = vst.msk [vmem:[#allocation3 + $0x20] sm:$0xf] %vm3177, %v3098
      %3187 = vst.msk [vmem:[#allocation3 + $0x24] sm:$0xf] %vm3177, %v3100
      %3188 = vst.msk [vmem:[#allocation3 + $0x28] sm:$0xf] %vm3177, %v3102
      %3189 = vst.msk [vmem:[#allocation3 + $0x2c] sm:$0xf] %vm3177, %v3104
      %3190 = vst.msk [vmem:[#allocation3 + $0x30] sm:$0xf] %vm3177, %v3106
      %3191 = vst.msk [vmem:[#allocation3 + $0x34] sm:$0xf] %vm3177, %v3108
      %3192 = vst.msk [vmem:[#allocation3 + $0x38] sm:$0xf] %vm3177, %v3110
      %3193 = vst.msk [vmem:[#allocation3 + $0x3c] sm:$0xf] %vm3177, %v3112
      %3194 = vst.msk [vmem:[#allocation3 + $0x40] sm:$0xf] %vm3177, %v3114
      %3195 = vst.msk [vmem:[#allocation3 + $0x44] sm:$0xf] %vm3177, %v3116
      %3196 = vst.msk [vmem:[#allocation3 + $0x48] sm:$0xf] %vm3177, %v3118
      %3197 = vst.msk [vmem:[#allocation3 + $0x4c] sm:$0xf] %vm3177, %v3120
      %3198 = vst.msk [vmem:[#allocation3 + $0x50] sm:$0xf] %vm3177, %v3122
      %3199 = vst.msk [vmem:[#allocation3 + $0x54] sm:$0xf] %vm3177, %v3124
      %3200 = vst.msk [vmem:[#allocation3 + $0x58] sm:$0xf] %vm3177, %v3126
      %3201 = vst.msk [vmem:[#allocation3 + $0x5c] sm:$0xf] %vm3177, %v3128
      %3202 = vst.msk [vmem:[#allocation3 + $0x60] sm:$0xf] %vm3177, %v3130
      %3203 = vst.msk [vmem:[#allocation3 + $0x64] sm:$0xf] %vm3177, %v3132
      %3204 = vst.msk [vmem:[#allocation3 + $0x68] sm:$0xf] %vm3177, %v3134
      %3205 = vst.msk [vmem:[#allocation3 + $0x6c] sm:$0xf] %vm3177, %v3136
      %3206 = vst.msk [vmem:[#allocation3 + $0x70] sm:$0xf] %vm3177, %v3138
      %3207 = vst.msk [vmem:[#allocation3 + $0x74] sm:$0xf] %vm3177, %v3140
      %3208 = vst.msk [vmem:[#allocation3 + $0x78] sm:$0xf] %vm3177, %v3142
      %3209 = vst.msk [vmem:[#allocation3 + $0x7c] sm:$0xf] %vm3177, %v3144
      %s3210 = scalar_lea.vmem [#allocation2], 24
      %v3211 = vld [vmem:[%s3210] sm:$0xf]
      %v3212 = vld [vmem:[%s3210 + $0x4] sm:$0xf]
      %v3213 = vld [vmem:[%s3210 + $0xc] sm:$0xf]
      %v3214 = vld [vmem:[%s3210 + $0x10] sm:$0xf]
      %v3215 = vld [vmem:[%s3210 + $0x18] sm:$0xf]
      %v3216 = vld [vmem:[%s3210 + $0x1c] sm:$0xf]
      %v3217 = vld [vmem:[%s3210 + $0x24] sm:$0xf]
      %v3218 = vld [vmem:[%s3210 + $0x28] sm:$0xf]
      %v3219 = vld [vmem:[%s3210 + $0x30] sm:$0xf]
      %v3220 = vld [vmem:[%s3210 + $0x34] sm:$0xf]
      %v3221 = vld [vmem:[%s3210 + $0x3c] sm:$0xf]
      %v3222 = vld [vmem:[%s3210 + $0x40] sm:$0xf]
      %v3223 = vld [vmem:[%s3210 + $0x48] sm:$0xf]
      %v3224 = vld [vmem:[%s3210 + $0x4c] sm:$0xf]
      %v3225 = vld [vmem:[%s3210 + $0x54] sm:$0xf]
      %v3226 = vld [vmem:[%s3210 + $0x58] sm:$0xf]
      %v3227 = vld [vmem:[%s3210 + $0x60] sm:$0xf]
      %v3228 = vld [vmem:[%s3210 + $0x64] sm:$0xf]
      %v3229 = vld [vmem:[%s3210 + $0x6c] sm:$0xf]
      %v3230 = vld [vmem:[%s3210 + $0x70] sm:$0xf]
      %v3231 = vld [vmem:[%s3210 + $0x78] sm:$0xf]
      %v3232 = vld [vmem:[%s3210 + $0x7c] sm:$0xf]
      %v3233 = vld [vmem:[%s3210 + $0x84] sm:$0xf]
      %v3234 = vld [vmem:[%s3210 + $0x88] sm:$0xf]
      %v3235 = vld [vmem:[%s3210 + $0x90] sm:$0xf]
      %v3236 = vld [vmem:[%s3210 + $0x94] sm:$0xf]
      %v3237 = vld [vmem:[%s3210 + $0x9c] sm:$0xf]
      %v3238 = vld [vmem:[%s3210 + $0xa0] sm:$0xf]
      %v3239 = vld [vmem:[%s3210 + $0xa8] sm:$0xf]
      %v3240 = vld [vmem:[%s3210 + $0xac] sm:$0xf]
      %v3241 = vld [vmem:[%s3210 + $0xb4] sm:$0xf]
      %v3242 = vld [vmem:[%s3210 + $0xb8] sm:$0xf]
      %3275 = vrot.lane.b32.xlu0 %v3211, 24
      %v3276 = vpop.permute.xlu0 %3275
      %3277 = vrot.lane.b32.xlu0 %v3212, 24
      %v3278 = vpop.permute.xlu0 %3277
      %3279 = vrot.lane.b32.xlu0 %v3213, 24
      %v3280 = vpop.permute.xlu0 %3279
      %3281 = vrot.lane.b32.xlu0 %v3214, 24
      %v3282 = vpop.permute.xlu0 %3281
      %3283 = vrot.lane.b32.xlu0 %v3215, 24
      %v3284 = vpop.permute.xlu0 %3283
      %3285 = vrot.lane.b32.xlu0 %v3216, 24
      %v3286 = vpop.permute.xlu0 %3285
      %3287 = vrot.lane.b32.xlu0 %v3217, 24
      %v3288 = vpop.permute.xlu0 %3287
      %3289 = vrot.lane.b32.xlu0 %v3218, 24
      %v3290 = vpop.permute.xlu0 %3289
      %3291 = vrot.lane.b32.xlu0 %v3219, 24
      %v3292 = vpop.permute.xlu0 %3291
      %3293 = vrot.lane.b32.xlu0 %v3220, 24
      %v3294 = vpop.permute.xlu0 %3293
      %3295 = vrot.lane.b32.xlu0 %v3221, 24
      %v3296 = vpop.permute.xlu0 %3295
      %3297 = vrot.lane.b32.xlu0 %v3222, 24
      %v3298 = vpop.permute.xlu0 %3297
      %3299 = vrot.lane.b32.xlu0 %v3223, 24
      %v3300 = vpop.permute.xlu0 %3299
      %3301 = vrot.lane.b32.xlu0 %v3224, 24
      %v3302 = vpop.permute.xlu0 %3301
      %3303 = vrot.lane.b32.xlu0 %v3225, 24
      %v3304 = vpop.permute.xlu0 %3303
      %3305 = vrot.lane.b32.xlu0 %v3226, 24
      %v3306 = vpop.permute.xlu0 %3305
      %3307 = vrot.lane.b32.xlu0 %v3227, 24
      %v3308 = vpop.permute.xlu0 %3307
      %3309 = vrot.lane.b32.xlu0 %v3228, 24
      %v3310 = vpop.permute.xlu0 %3309
      %3311 = vrot.lane.b32.xlu0 %v3229, 24
      %v3312 = vpop.permute.xlu0 %3311
      %3313 = vrot.lane.b32.xlu0 %v3230, 24
      %v3314 = vpop.permute.xlu0 %3313
      %3315 = vrot.lane.b32.xlu0 %v3231, 24
      %v3316 = vpop.permute.xlu0 %3315
      %3317 = vrot.lane.b32.xlu0 %v3232, 24
      %v3318 = vpop.permute.xlu0 %3317
      %3319 = vrot.lane.b32.xlu0 %v3233, 24
      %v3320 = vpop.permute.xlu0 %3319
      %3321 = vrot.lane.b32.xlu0 %v3234, 24
      %v3322 = vpop.permute.xlu0 %3321
      %3323 = vrot.lane.b32.xlu0 %v3235, 24
      %v3324 = vpop.permute.xlu0 %3323
      %3325 = vrot.lane.b32.xlu0 %v3236, 24
      %v3326 = vpop.permute.xlu0 %3325
      %3327 = vrot.lane.b32.xlu0 %v3237, 24
      %v3328 = vpop.permute.xlu0 %3327
      %3329 = vrot.lane.b32.xlu0 %v3238, 24
      %v3330 = vpop.permute.xlu0 %3329
      %3331 = vrot.lane.b32.xlu0 %v3239, 24
      %v3332 = vpop.permute.xlu0 %3331
      %3333 = vrot.lane.b32.xlu0 %v3240, 24
      %v3334 = vpop.permute.xlu0 %3333
      %3335 = vrot.lane.b32.xlu0 %v3241, 24
      %v3336 = vpop.permute.xlu0 %3335
      %3337 = vrot.lane.b32.xlu0 %v3242, 24
      %v3338 = vpop.permute.xlu0 %3337
      %vm3371 = vcmask 224448
      %3372 = vst.msk [vmem:[#allocation3] sm:$0xf] %vm3371, %v3276
      %3373 = vst.msk [vmem:[#allocation3 + $0x4] sm:$0xf] %vm3371, %v3278
      %3374 = vst.msk [vmem:[#allocation3 + $0x8] sm:$0xf] %vm3371, %v3280
      %3375 = vst.msk [vmem:[#allocation3 + $0xc] sm:$0xf] %vm3371, %v3282
      %3376 = vst.msk [vmem:[#allocation3 + $0x10] sm:$0xf] %vm3371, %v3284
      %3377 = vst.msk [vmem:[#allocation3 + $0x14] sm:$0xf] %vm3371, %v3286
      %3378 = vst.msk [vmem:[#allocation3 + $0x18] sm:$0xf] %vm3371, %v3288
      %3379 = vst.msk [vmem:[#allocation3 + $0x1c] sm:$0xf] %vm3371, %v3290
      %3380 = vst.msk [vmem:[#allocation3 + $0x20] sm:$0xf] %vm3371, %v3292
      %3381 = vst.msk [vmem:[#allocation3 + $0x24] sm:$0xf] %vm3371, %v3294
      %3382 = vst.msk [vmem:[#allocation3 + $0x28] sm:$0xf] %vm3371, %v3296
      %3383 = vst.msk [vmem:[#allocation3 + $0x2c] sm:$0xf] %vm3371, %v3298
      %3384 = vst.msk [vmem:[#allocation3 + $0x30] sm:$0xf] %vm3371, %v3300
      %3385 = vst.msk [vmem:[#allocation3 + $0x34] sm:$0xf] %vm3371, %v3302
      %3386 = vst.msk [vmem:[#allocation3 + $0x38] sm:$0xf] %vm3371, %v3304
      %3387 = vst.msk [vmem:[#allocation3 + $0x3c] sm:$0xf] %vm3371, %v3306
      %3388 = vst.msk [vmem:[#allocation3 + $0x40] sm:$0xf] %vm3371, %v3308
      %3389 = vst.msk [vmem:[#allocation3 + $0x44] sm:$0xf] %vm3371, %v3310
      %3390 = vst.msk [vmem:[#allocation3 + $0x48] sm:$0xf] %vm3371, %v3312
      %3391 = vst.msk [vmem:[#allocation3 + $0x4c] sm:$0xf] %vm3371, %v3314
      %3392 = vst.msk [vmem:[#allocation3 + $0x50] sm:$0xf] %vm3371, %v3316
      %3393 = vst.msk [vmem:[#allocation3 + $0x54] sm:$0xf] %vm3371, %v3318
      %3394 = vst.msk [vmem:[#allocation3 + $0x58] sm:$0xf] %vm3371, %v3320
      %3395 = vst.msk [vmem:[#allocation3 + $0x5c] sm:$0xf] %vm3371, %v3322
      %3396 = vst.msk [vmem:[#allocation3 + $0x60] sm:$0xf] %vm3371, %v3324
      %3397 = vst.msk [vmem:[#allocation3 + $0x64] sm:$0xf] %vm3371, %v3326
      %3398 = vst.msk [vmem:[#allocation3 + $0x68] sm:$0xf] %vm3371, %v3328
      %3399 = vst.msk [vmem:[#allocation3 + $0x6c] sm:$0xf] %vm3371, %v3330
      %3400 = vst.msk [vmem:[#allocation3 + $0x70] sm:$0xf] %vm3371, %v3332
      %3401 = vst.msk [vmem:[#allocation3 + $0x74] sm:$0xf] %vm3371, %v3334
      %3402 = vst.msk [vmem:[#allocation3 + $0x78] sm:$0xf] %vm3371, %v3336
      %3403 = vst.msk [vmem:[#allocation3 + $0x7c] sm:$0xf] %vm3371, %v3338
      %v3404 = vld [vmem:[%s3210] sm:$0xf]
      %v3405 = vld [vmem:[%s3210 + $0x4] sm:$0xf]
      %v3406 = vld [vmem:[%s3210 + $0x8] sm:$0x1]
      %v3407 = vld [vmem:[%s3210 + $0xc] sm:$0xf]
      %v3408 = vld [vmem:[%s3210 + $0x10] sm:$0xf]
      %v3409 = vld [vmem:[%s3210 + $0x14] sm:$0x1]
      %v3410 = vld [vmem:[%s3210 + $0x18] sm:$0xf]
      %v3411 = vld [vmem:[%s3210 + $0x1c] sm:$0xf]
      %v3412 = vld [vmem:[%s3210 + $0x20] sm:$0x1]
      %v3413 = vld [vmem:[%s3210 + $0x24] sm:$0xf]
      %v3414 = vld [vmem:[%s3210 + $0x28] sm:$0xf]
      %v3415 = vld [vmem:[%s3210 + $0x2c] sm:$0x1]
      %v3416 = vld [vmem:[%s3210 + $0x30] sm:$0xf]
      %v3417 = vld [vmem:[%s3210 + $0x34] sm:$0xf]
      %v3418 = vld [vmem:[%s3210 + $0x38] sm:$0x1]
      %v3419 = vld [vmem:[%s3210 + $0x3c] sm:$0xf]
      %v3420 = vld [vmem:[%s3210 + $0x40] sm:$0xf]
      %v3421 = vld [vmem:[%s3210 + $0x44] sm:$0x1]
      %v3422 = vld [vmem:[%s3210 + $0x48] sm:$0xf]
      %v3423 = vld [vmem:[%s3210 + $0x4c] sm:$0xf]
      %v3424 = vld [vmem:[%s3210 + $0x50] sm:$0x1]
      %v3425 = vld [vmem:[%s3210 + $0x54] sm:$0xf]
      %v3426 = vld [vmem:[%s3210 + $0x58] sm:$0xf]
      %v3427 = vld [vmem:[%s3210 + $0x5c] sm:$0x1]
      %v3428 = vld [vmem:[%s3210 + $0x60] sm:$0xf]
      %v3429 = vld [vmem:[%s3210 + $0x64] sm:$0xf]
      %v3430 = vld [vmem:[%s3210 + $0x68] sm:$0x1]
      %v3431 = vld [vmem:[%s3210 + $0x6c] sm:$0xf]
      %v3432 = vld [vmem:[%s3210 + $0x70] sm:$0xf]
      %v3433 = vld [vmem:[%s3210 + $0x74] sm:$0x1]
      %v3434 = vld [vmem:[%s3210 + $0x78] sm:$0xf]
      %v3435 = vld [vmem:[%s3210 + $0x7c] sm:$0xf]
      %v3436 = vld [vmem:[%s3210 + $0x80] sm:$0x1]
      %v3437 = vld [vmem:[%s3210 + $0x84] sm:$0xf]
      %v3438 = vld [vmem:[%s3210 + $0x88] sm:$0xf]
      %v3439 = vld [vmem:[%s3210 + $0x8c] sm:$0x1]
      %v3440 = vld [vmem:[%s3210 + $0x90] sm:$0xf]
      %v3441 = vld [vmem:[%s3210 + $0x94] sm:$0xf]
      %v3442 = vld [vmem:[%s3210 + $0x98] sm:$0x1]
      %v3443 = vld [vmem:[%s3210 + $0x9c] sm:$0xf]
      %v3444 = vld [vmem:[%s3210 + $0xa0] sm:$0xf]
      %v3445 = vld [vmem:[%s3210 + $0xa4] sm:$0x1]
      %v3446 = vld [vmem:[%s3210 + $0xa8] sm:$0xf]
      %v3447 = vld [vmem:[%s3210 + $0xac] sm:$0xf]
      %v3448 = vld [vmem:[%s3210 + $0xb0] sm:$0x1]
      %v3449 = vld [vmem:[%s3210 + $0xb4] sm:$0xf]
      %v3450 = vld [vmem:[%s3210 + $0xb8] sm:$0xf]
      %v3451 = vld [vmem:[%s3210 + $0xbc] sm:$0x1]
      %v3453 = vshrl.u32 %v3404, 16
      %v3455 = vrot.slane %v3453, 4
      %v3456 = vshll.u32 %v3404, 16
      %v3458 = vrot.slane %v3456, 5
      %v3459 = vor.u32 %v3455, %v3458
      %v3460 = vrot.slane %v3459, 4
      %v3462 = vshll.u32 %v3405, 16
      %v3464 = vrot.slane %v3462, 5
      %v3465 = vsel %vm1265, %v3460, %v3464
      %v3466 = vshrl.u32 %v3405, 16
      %v3468 = vrot.slane %v3466, 4
      %v3469 = vor.u32 %v3468, %v3464
      %v3470 = vrot.slane %v3469, 4
      %v3472 = vshll.u32 %v3406, 16
      %v3474 = vrot.slane %v3472, 5
      %v3475 = vsel %vm1265, %v3470, %v3474
      %v3477 = vshrl.u32 %v3407, 16
      %v3479 = vrot.slane %v3477, 4
      %v3480 = vshll.u32 %v3407, 16
      %v3482 = vrot.slane %v3480, 5
      %v3483 = vor.u32 %v3479, %v3482
      %v3484 = vrot.slane %v3483, 4
      %v3486 = vshll.u32 %v3408, 16
      %v3488 = vrot.slane %v3486, 5
      %v3489 = vsel %vm1265, %v3484, %v3488
      %v3490 = vshrl.u32 %v3408, 16
      %v3492 = vrot.slane %v3490, 4
      %v3493 = vor.u32 %v3492, %v3488
      %v3494 = vrot.slane %v3493, 4
      %v3496 = vshll.u32 %v3409, 16
      %v3498 = vrot.slane %v3496, 5
      %v3499 = vsel %vm1265, %v3494, %v3498
      %v3501 = vshrl.u32 %v3410, 16
      %v3503 = vrot.slane %v3501, 4
      %v3504 = vshll.u32 %v3410, 16
      %v3506 = vrot.slane %v3504, 5
      %v3507 = vor.u32 %v3503, %v3506
      %v3508 = vrot.slane %v3507, 4
      %v3510 = vshll.u32 %v3411, 16
      %v3512 = vrot.slane %v3510, 5
      %v3513 = vsel %vm1265, %v3508, %v3512
      %v3514 = vshrl.u32 %v3411, 16
      %v3516 = vrot.slane %v3514, 4
      %v3517 = vor.u32 %v3516, %v3512
      %v3518 = vrot.slane %v3517, 4
      %v3520 = vshll.u32 %v3412, 16
      %v3522 = vrot.slane %v3520, 5
      %v3523 = vsel %vm1265, %v3518, %v3522
      %v3525 = vshrl.u32 %v3413, 16
      %v3527 = vrot.slane %v3525, 4
      %v3528 = vshll.u32 %v3413, 16
      %v3530 = vrot.slane %v3528, 5
      %v3531 = vor.u32 %v3527, %v3530
      %v3532 = vrot.slane %v3531, 4
      %v3534 = vshll.u32 %v3414, 16
      %v3536 = vrot.slane %v3534, 5
      %v3537 = vsel %vm1265, %v3532, %v3536
      %v3538 = vshrl.u32 %v3414, 16
      %v3540 = vrot.slane %v3538, 4
      %v3541 = vor.u32 %v3540, %v3536
      %v3542 = vrot.slane %v3541, 4
      %v3544 = vshll.u32 %v3415, 16
      %v3546 = vrot.slane %v3544, 5
      %v3547 = vsel %vm1265, %v3542, %v3546
      %v3549 = vshrl.u32 %v3416, 16
      %v3551 = vrot.slane %v3549, 4
      %v3552 = vshll.u32 %v3416, 16
      %v3554 = vrot.slane %v3552, 5
      %v3555 = vor.u32 %v3551, %v3554
      %v3556 = vrot.slane %v3555, 4
      %v3558 = vshll.u32 %v3417, 16
      %v3560 = vrot.slane %v3558, 5
      %v3561 = vsel %vm1265, %v3556, %v3560
      %v3562 = vshrl.u32 %v3417, 16
      %v3564 = vrot.slane %v3562, 4
      %v3565 = vor.u32 %v3564, %v3560
      %v3566 = vrot.slane %v3565, 4
      %v3568 = vshll.u32 %v3418, 16
      %v3570 = vrot.slane %v3568, 5
      %v3571 = vsel %vm1265, %v3566, %v3570
      %v3573 = vshrl.u32 %v3419, 16
      %v3575 = vrot.slane %v3573, 4
      %v3576 = vshll.u32 %v3419, 16
      %v3578 = vrot.slane %v3576, 5
      %v3579 = vor.u32 %v3575, %v3578
      %v3580 = vrot.slane %v3579, 4
      %v3582 = vshll.u32 %v3420, 16
      %v3584 = vrot.slane %v3582, 5
      %v3585 = vsel %vm1265, %v3580, %v3584
      %v3586 = vshrl.u32 %v3420, 16
      %v3588 = vrot.slane %v3586, 4
      %v3589 = vor.u32 %v3588, %v3584
      %v3590 = vrot.slane %v3589, 4
      %v3592 = vshll.u32 %v3421, 16
      %v3594 = vrot.slane %v3592, 5
      %v3595 = vsel %vm1265, %v3590, %v3594
      %v3597 = vshrl.u32 %v3422, 16
      %v3599 = vrot.slane %v3597, 4
      %v3600 = vshll.u32 %v3422, 16
      %v3602 = vrot.slane %v3600, 5
      %v3603 = vor.u32 %v3599, %v3602
      %v3604 = vrot.slane %v3603, 4
      %v3606 = vshll.u32 %v3423, 16
      %v3608 = vrot.slane %v3606, 5
      %v3609 = vsel %vm1265, %v3604, %v3608
      %v3610 = vshrl.u32 %v3423, 16
      %v3612 = vrot.slane %v3610, 4
      %v3613 = vor.u32 %v3612, %v3608
      %v3614 = vrot.slane %v3613, 4
      %v3616 = vshll.u32 %v3424, 16
      %v3618 = vrot.slane %v3616, 5
      %v3619 = vsel %vm1265, %v3614, %v3618
      %v3621 = vshrl.u32 %v3425, 16
      %v3623 = vrot.slane %v3621, 4
      %v3624 = vshll.u32 %v3425, 16
      %v3626 = vrot.slane %v3624, 5
      %v3627 = vor.u32 %v3623, %v3626
      %v3628 = vrot.slane %v3627, 4
      %v3630 = vshll.u32 %v3426, 16
      %v3632 = vrot.slane %v3630, 5
      %v3633 = vsel %vm1265, %v3628, %v3632
      %v3634 = vshrl.u32 %v3426, 16
      %v3636 = vrot.slane %v3634, 4
      %v3637 = vor.u32 %v3636, %v3632
      %v3638 = vrot.slane %v3637, 4
      %v3640 = vshll.u32 %v3427, 16
      %v3642 = vrot.slane %v3640, 5
      %v3643 = vsel %vm1265, %v3638, %v3642
      %v3645 = vshrl.u32 %v3428, 16
      %v3647 = vrot.slane %v3645, 4
      %v3648 = vshll.u32 %v3428, 16
      %v3650 = vrot.slane %v3648, 5
      %v3651 = vor.u32 %v3647, %v3650
      %v3652 = vrot.slane %v3651, 4
      %v3654 = vshll.u32 %v3429, 16
      %v3656 = vrot.slane %v3654, 5
      %v3657 = vsel %vm1265, %v3652, %v3656
      %v3658 = vshrl.u32 %v3429, 16
      %v3660 = vrot.slane %v3658, 4
      %v3661 = vor.u32 %v3660, %v3656
      %v3662 = vrot.slane %v3661, 4
      %v3664 = vshll.u32 %v3430, 16
      %v3666 = vrot.slane %v3664, 5
      %v3667 = vsel %vm1265, %v3662, %v3666
      %v3669 = vshrl.u32 %v3431, 16
      %v3671 = vrot.slane %v3669, 4
      %v3672 = vshll.u32 %v3431, 16
      %v3674 = vrot.slane %v3672, 5
      %v3675 = vor.u32 %v3671, %v3674
      %v3676 = vrot.slane %v3675, 4
      %v3678 = vshll.u32 %v3432, 16
      %v3680 = vrot.slane %v3678, 5
      %v3681 = vsel %vm1265, %v3676, %v3680
      %v3682 = vshrl.u32 %v3432, 16
      %v3684 = vrot.slane %v3682, 4
      %v3685 = vor.u32 %v3684, %v3680
      %v3686 = vrot.slane %v3685, 4
      %v3688 = vshll.u32 %v3433, 16
      %v3690 = vrot.slane %v3688, 5
      %v3691 = vsel %vm1265, %v3686, %v3690
      %v3693 = vshrl.u32 %v3434, 16
      %v3695 = vrot.slane %v3693, 4
      %v3696 = vshll.u32 %v3434, 16
      %v3698 = vrot.slane %v3696, 5
      %v3699 = vor.u32 %v3695, %v3698
      %v3700 = vrot.slane %v3699, 4
      %v3702 = vshll.u32 %v3435, 16
      %v3704 = vrot.slane %v3702, 5
      %v3705 = vsel %vm1265, %v3700, %v3704
      %v3706 = vshrl.u32 %v3435, 16
      %v3708 = vrot.slane %v3706, 4
      %v3709 = vor.u32 %v3708, %v3704
      %v3710 = vrot.slane %v3709, 4
      %v3712 = vshll.u32 %v3436, 16
      %v3714 = vrot.slane %v3712, 5
      %v3715 = vsel %vm1265, %v3710, %v3714
      %v3717 = vshrl.u32 %v3437, 16
      %v3719 = vrot.slane %v3717, 4
      %v3720 = vshll.u32 %v3437, 16
      %v3722 = vrot.slane %v3720, 5
      %v3723 = vor.u32 %v3719, %v3722
      %v3724 = vrot.slane %v3723, 4
      %v3726 = vshll.u32 %v3438, 16
      %v3728 = vrot.slane %v3726, 5
      %v3729 = vsel %vm1265, %v3724, %v3728
      %v3730 = vshrl.u32 %v3438, 16
      %v3732 = vrot.slane %v3730, 4
      %v3733 = vor.u32 %v3732, %v3728
      %v3734 = vrot.slane %v3733, 4
      %v3736 = vshll.u32 %v3439, 16
      %v3738 = vrot.slane %v3736, 5
      %v3739 = vsel %vm1265, %v3734, %v3738
      %v3741 = vshrl.u32 %v3440, 16
      %v3743 = vrot.slane %v3741, 4
      %v3744 = vshll.u32 %v3440, 16
      %v3746 = vrot.slane %v3744, 5
      %v3747 = vor.u32 %v3743, %v3746
      %v3748 = vrot.slane %v3747, 4
      %v3750 = vshll.u32 %v3441, 16
      %v3752 = vrot.slane %v3750, 5
      %v3753 = vsel %vm1265, %v3748, %v3752
      %v3754 = vshrl.u32 %v3441, 16
      %v3756 = vrot.slane %v3754, 4
      %v3757 = vor.u32 %v3756, %v3752
      %v3758 = vrot.slane %v3757, 4
      %v3760 = vshll.u32 %v3442, 16
      %v3762 = vrot.slane %v3760, 5
      %v3763 = vsel %vm1265, %v3758, %v3762
      %v3765 = vshrl.u32 %v3443, 16
      %v3767 = vrot.slane %v3765, 4
      %v3768 = vshll.u32 %v3443, 16
      %v3770 = vrot.slane %v3768, 5
      %v3771 = vor.u32 %v3767, %v3770
      %v3772 = vrot.slane %v3771, 4
      %v3774 = vshll.u32 %v3444, 16
      %v3776 = vrot.slane %v3774, 5
      %v3777 = vsel %vm1265, %v3772, %v3776
      %v3778 = vshrl.u32 %v3444, 16
      %v3780 = vrot.slane %v3778, 4
      %v3781 = vor.u32 %v3780, %v3776
      %v3782 = vrot.slane %v3781, 4
      %v3784 = vshll.u32 %v3445, 16
      %v3786 = vrot.slane %v3784, 5
      %v3787 = vsel %vm1265, %v3782, %v3786
      %v3789 = vshrl.u32 %v3446, 16
      %v3791 = vrot.slane %v3789, 4
      %v3792 = vshll.u32 %v3446, 16
      %v3794 = vrot.slane %v3792, 5
      %v3795 = vor.u32 %v3791, %v3794
      %v3796 = vrot.slane %v3795, 4
      %v3798 = vshll.u32 %v3447, 16
      %v3800 = vrot.slane %v3798, 5
      %v3801 = vsel %vm1265, %v3796, %v3800
      %v3802 = vshrl.u32 %v3447, 16
      %v3804 = vrot.slane %v3802, 4
      %v3805 = vor.u32 %v3804, %v3800
      %v3806 = vrot.slane %v3805, 4
      %v3808 = vshll.u32 %v3448, 16
      %v3810 = vrot.slane %v3808, 5
      %v3811 = vsel %vm1265, %v3806, %v3810
      %v3813 = vshrl.u32 %v3449, 16
      %v3815 = vrot.slane %v3813, 4
      %v3816 = vshll.u32 %v3449, 16
      %v3818 = vrot.slane %v3816, 5
      %v3819 = vor.u32 %v3815, %v3818
      %v3820 = vrot.slane %v3819, 4
      %v3822 = vshll.u32 %v3450, 16
      %v3824 = vrot.slane %v3822, 5
      %v3825 = vsel %vm1265, %v3820, %v3824
      %v3826 = vshrl.u32 %v3450, 16
      %v3828 = vrot.slane %v3826, 4
      %v3829 = vor.u32 %v3828, %v3824
      %v3830 = vrot.slane %v3829, 4
      %v3832 = vshll.u32 %v3451, 16
      %v3834 = vrot.slane %v3832, 5
      %v3835 = vsel %vm1265, %v3830, %v3834
      %3836 = vrot.lane.b32.xlu0 %v3465, 28
      %v3837 = vpop.permute.xlu0 %3836
      %3838 = vrot.lane.b32.xlu0 %v3475, 28
      %v3839 = vpop.permute.xlu0 %3838
      %3840 = vrot.lane.b32.xlu0 %v3489, 28
      %v3841 = vpop.permute.xlu0 %3840
      %3842 = vrot.lane.b32.xlu0 %v3499, 28
      %v3843 = vpop.permute.xlu0 %3842
      %3844 = vrot.lane.b32.xlu0 %v3513, 28
      %v3845 = vpop.permute.xlu0 %3844
      %3846 = vrot.lane.b32.xlu0 %v3523, 28
      %v3847 = vpop.permute.xlu0 %3846
      %3848 = vrot.lane.b32.xlu0 %v3537, 28
      %v3849 = vpop.permute.xlu0 %3848
      %3850 = vrot.lane.b32.xlu0 %v3547, 28
      %v3851 = vpop.permute.xlu0 %3850
      %3852 = vrot.lane.b32.xlu0 %v3561, 28
      %v3853 = vpop.permute.xlu0 %3852
      %3854 = vrot.lane.b32.xlu0 %v3571, 28
      %v3855 = vpop.permute.xlu0 %3854
      %3856 = vrot.lane.b32.xlu0 %v3585, 28
      %v3857 = vpop.permute.xlu0 %3856
      %3858 = vrot.lane.b32.xlu0 %v3595, 28
      %v3859 = vpop.permute.xlu0 %3858
      %3860 = vrot.lane.b32.xlu0 %v3609, 28
      %v3861 = vpop.permute.xlu0 %3860
      %3862 = vrot.lane.b32.xlu0 %v3619, 28
      %v3863 = vpop.permute.xlu0 %3862
      %3864 = vrot.lane.b32.xlu0 %v3633, 28
      %v3865 = vpop.permute.xlu0 %3864
      %3866 = vrot.lane.b32.xlu0 %v3643, 28
      %v3867 = vpop.permute.xlu0 %3866
      %3868 = vrot.lane.b32.xlu0 %v3657, 28
      %v3869 = vpop.permute.xlu0 %3868
      %3870 = vrot.lane.b32.xlu0 %v3667, 28
      %v3871 = vpop.permute.xlu0 %3870
      %3872 = vrot.lane.b32.xlu0 %v3681, 28
      %v3873 = vpop.permute.xlu0 %3872
      %3874 = vrot.lane.b32.xlu0 %v3691, 28
      %v3875 = vpop.permute.xlu0 %3874
      %3876 = vrot.lane.b32.xlu0 %v3705, 28
      %v3877 = vpop.permute.xlu0 %3876
      %3878 = vrot.lane.b32.xlu0 %v3715, 28
      %v3879 = vpop.permute.xlu0 %3878
      %3880 = vrot.lane.b32.xlu0 %v3729, 28
      %v3881 = vpop.permute.xlu0 %3880
      %3882 = vrot.lane.b32.xlu0 %v3739, 28
      %v3883 = vpop.permute.xlu0 %3882
      %3884 = vrot.lane.b32.xlu0 %v3753, 28
      %v3885 = vpop.permute.xlu0 %3884
      %3886 = vrot.lane.b32.xlu0 %v3763, 28
      %v3887 = vpop.permute.xlu0 %3886
      %3888 = vrot.lane.b32.xlu0 %v3777, 28
      %v3889 = vpop.permute.xlu0 %3888
      %3890 = vrot.lane.b32.xlu0 %v3787, 28
      %v3891 = vpop.permute.xlu0 %3890
      %3892 = vrot.lane.b32.xlu0 %v3801, 28
      %v3893 = vpop.permute.xlu0 %3892
      %3894 = vrot.lane.b32.xlu0 %v3811, 28
      %v3895 = vpop.permute.xlu0 %3894
      %3896 = vrot.lane.b32.xlu0 %v3825, 28
      %v3897 = vpop.permute.xlu0 %3896
      %3898 = vrot.lane.b32.xlu0 %v3835, 28
      %v3899 = vpop.permute.xlu0 %3898
      %vm3932 = vcmask 257248
      %3933 = vst.msk [vmem:[#allocation3] sm:$0xf] %vm3932, %v3837
      %3934 = vst.msk [vmem:[#allocation3 + $0x4] sm:$0xf] %vm3932, %v3839
      %3935 = vst.msk [vmem:[#allocation3 + $0x8] sm:$0xf] %vm3932, %v3841
      %3936 = vst.msk [vmem:[#allocation3 + $0xc] sm:$0xf] %vm3932, %v3843
      %3937 = vst.msk [vmem:[#allocation3 + $0x10] sm:$0xf] %vm3932, %v3845
      %3938 = vst.msk [vmem:[#allocation3 + $0x14] sm:$0xf] %vm3932, %v3847
      %3939 = vst.msk [vmem:[#allocation3 + $0x18] sm:$0xf] %vm3932, %v3849
      %3940 = vst.msk [vmem:[#allocation3 + $0x1c] sm:$0xf] %vm3932, %v3851
      %3941 = vst.msk [vmem:[#allocation3 + $0x20] sm:$0xf] %vm3932, %v3853
      %3942 = vst.msk [vmem:[#allocation3 + $0x24] sm:$0xf] %vm3932, %v3855
      %3943 = vst.msk [vmem:[#allocation3 + $0x28] sm:$0xf] %vm3932, %v3857
      %3944 = vst.msk [vmem:[#allocation3 + $0x2c] sm:$0xf] %vm3932, %v3859
      %3945 = vst.msk [vmem:[#allocation3 + $0x30] sm:$0xf] %vm3932, %v3861
      %3946 = vst.msk [vmem:[#allocation3 + $0x34] sm:$0xf] %vm3932, %v3863
      %3947 = vst.msk [vmem:[#allocation3 + $0x38] sm:$0xf] %vm3932, %v3865
      %3948 = vst.msk [vmem:[#allocation3 + $0x3c] sm:$0xf] %vm3932, %v3867
      %3949 = vst.msk [vmem:[#allocation3 + $0x40] sm:$0xf] %vm3932, %v3869
      %3950 = vst.msk [vmem:[#allocation3 + $0x44] sm:$0xf] %vm3932, %v3871
      %3951 = vst.msk [vmem:[#allocation3 + $0x48] sm:$0xf] %vm3932, %v3873
      %3952 = vst.msk [vmem:[#allocation3 + $0x4c] sm:$0xf] %vm3932, %v3875
      %3953 = vst.msk [vmem:[#allocation3 + $0x50] sm:$0xf] %vm3932, %v3877
      %3954 = vst.msk [vmem:[#allocation3 + $0x54] sm:$0xf] %vm3932, %v3879
      %3955 = vst.msk [vmem:[#allocation3 + $0x58] sm:$0xf] %vm3932, %v3881
      %3956 = vst.msk [vmem:[#allocation3 + $0x5c] sm:$0xf] %vm3932, %v3883
      %3957 = vst.msk [vmem:[#allocation3 + $0x60] sm:$0xf] %vm3932, %v3885
      %3958 = vst.msk [vmem:[#allocation3 + $0x64] sm:$0xf] %vm3932, %v3887
      %3959 = vst.msk [vmem:[#allocation3 + $0x68] sm:$0xf] %vm3932, %v3889
      %3960 = vst.msk [vmem:[#allocation3 + $0x6c] sm:$0xf] %vm3932, %v3891
      %3961 = vst.msk [vmem:[#allocation3 + $0x70] sm:$0xf] %vm3932, %v3893
      %3962 = vst.msk [vmem:[#allocation3 + $0x74] sm:$0xf] %vm3932, %v3895
      %3963 = vst.msk [vmem:[#allocation3 + $0x78] sm:$0xf] %vm3932, %v3897
      %3964 = vst.msk [vmem:[#allocation3 + $0x7c] sm:$0xf] %vm3932, %v3899
      %v3965 = vld [vmem:[%s3210] sm:$0xe]
      %v3966 = vld [vmem:[%s3210 + $0x4] sm:$0xf]
      %v3967 = vld [vmem:[%s3210 + $0x8] sm:$0x1]
      %v3968 = vld [vmem:[%s3210 + $0xc] sm:$0xe]
      %v3969 = vld [vmem:[%s3210 + $0x10] sm:$0xf]
      %v3970 = vld [vmem:[%s3210 + $0x14] sm:$0x1]
      %v3971 = vld [vmem:[%s3210 + $0x18] sm:$0xe]
      %v3972 = vld [vmem:[%s3210 + $0x1c] sm:$0xf]
      %v3973 = vld [vmem:[%s3210 + $0x20] sm:$0x1]
      %v3974 = vld [vmem:[%s3210 + $0x24] sm:$0xe]
      %v3975 = vld [vmem:[%s3210 + $0x28] sm:$0xf]
      %v3976 = vld [vmem:[%s3210 + $0x2c] sm:$0x1]
      %v3977 = vld [vmem:[%s3210 + $0x30] sm:$0xe]
      %v3978 = vld [vmem:[%s3210 + $0x34] sm:$0xf]
      %v3979 = vld [vmem:[%s3210 + $0x38] sm:$0x1]
      %v3980 = vld [vmem:[%s3210 + $0x3c] sm:$0xe]
      %v3981 = vld [vmem:[%s3210 + $0x40] sm:$0xf]
      %v3982 = vld [vmem:[%s3210 + $0x44] sm:$0x1]
      %v3983 = vld [vmem:[%s3210 + $0x48] sm:$0xe]
      %v3984 = vld [vmem:[%s3210 + $0x4c] sm:$0xf]
      %v3985 = vld [vmem:[%s3210 + $0x50] sm:$0x1]
      %v3986 = vld [vmem:[%s3210 + $0x54] sm:$0xe]
      %v3987 = vld [vmem:[%s3210 + $0x58] sm:$0xf]
      %v3988 = vld [vmem:[%s3210 + $0x5c] sm:$0x1]
      %v3989 = vld [vmem:[%s3210 + $0x60] sm:$0xe]
      %v3990 = vld [vmem:[%s3210 + $0x64] sm:$0xf]
      %v3991 = vld [vmem:[%s3210 + $0x68] sm:$0x1]
      %v3992 = vld [vmem:[%s3210 + $0x6c] sm:$0xe]
      %v3993 = vld [vmem:[%s3210 + $0x70] sm:$0xf]
      %v3994 = vld [vmem:[%s3210 + $0x74] sm:$0x1]
      %v3995 = vld [vmem:[%s3210 + $0x78] sm:$0xe]
      %v3996 = vld [vmem:[%s3210 + $0x7c] sm:$0xf]
      %v3997 = vld [vmem:[%s3210 + $0x80] sm:$0x1]
      %v3998 = vld [vmem:[%s3210 + $0x84] sm:$0xe]
      %v3999 = vld [vmem:[%s3210 + $0x88] sm:$0xf]
      %v4000 = vld [vmem:[%s3210 + $0x8c] sm:$0x1]
      %v4001 = vld [vmem:[%s3210 + $0x90] sm:$0xe]
      %v4002 = vld [vmem:[%s3210 + $0x94] sm:$0xf]
      %v4003 = vld [vmem:[%s3210 + $0x98] sm:$0x1]
      %v4004 = vld [vmem:[%s3210 + $0x9c] sm:$0xe]
      %v4005 = vld [vmem:[%s3210 + $0xa0] sm:$0xf]
      %v4006 = vld [vmem:[%s3210 + $0xa4] sm:$0x1]
      %v4007 = vld [vmem:[%s3210 + $0xa8] sm:$0xe]
      %v4008 = vld [vmem:[%s3210 + $0xac] sm:$0xf]
      %v4009 = vld [vmem:[%s3210 + $0xb0] sm:$0x1]
      %v4010 = vld [vmem:[%s3210 + $0xb4] sm:$0xe]
      %v4011 = vld [vmem:[%s3210 + $0xb8] sm:$0xf]
      %v4012 = vld [vmem:[%s3210 + $0xbc] sm:$0x1]
      %v4061 = vrot.slane %v3965, 5
      %v4062 = vrot.slane %v4061, 4
      %v4063 = vrot.slane %v3966, 5
      %v4064 = vsel %vm1877, %v4062, %v4063
      %v4065 = vrot.slane %v4063, 4
      %v4066 = vrot.slane %v3967, 5
      %v4067 = vsel %vm1877, %v4065, %v4066
      %v4068 = vrot.slane %v3968, 5
      %v4069 = vrot.slane %v4068, 4
      %v4070 = vrot.slane %v3969, 5
      %v4071 = vsel %vm1877, %v4069, %v4070
      %v4072 = vrot.slane %v4070, 4
      %v4073 = vrot.slane %v3970, 5
      %v4074 = vsel %vm1877, %v4072, %v4073
      %v4075 = vrot.slane %v3971, 5
      %v4076 = vrot.slane %v4075, 4
      %v4077 = vrot.slane %v3972, 5
      %v4078 = vsel %vm1877, %v4076, %v4077
      %v4079 = vrot.slane %v4077, 4
      %v4080 = vrot.slane %v3973, 5
      %v4081 = vsel %vm1877, %v4079, %v4080
      %v4082 = vrot.slane %v3974, 5
      %v4083 = vrot.slane %v4082, 4
      %v4084 = vrot.slane %v3975, 5
      %v4085 = vsel %vm1877, %v4083, %v4084
      %v4086 = vrot.slane %v4084, 4
      %v4087 = vrot.slane %v3976, 5
      %v4088 = vsel %vm1877, %v4086, %v4087
      %v4089 = vrot.slane %v3977, 5
      %v4090 = vrot.slane %v4089, 4
      %v4091 = vrot.slane %v3978, 5
      %v4092 = vsel %vm1877, %v4090, %v4091
      %v4093 = vrot.slane %v4091, 4
      %v4094 = vrot.slane %v3979, 5
      %v4095 = vsel %vm1877, %v4093, %v4094
      %v4096 = vrot.slane %v3980, 5
      %v4097 = vrot.slane %v4096, 4
      %v4098 = vrot.slane %v3981, 5
      %v4099 = vsel %vm1877, %v4097, %v4098
      %v4100 = vrot.slane %v4098, 4
      %v4101 = vrot.slane %v3982, 5
      %v4102 = vsel %vm1877, %v4100, %v4101
      %v4103 = vrot.slane %v3983, 5
      %v4104 = vrot.slane %v4103, 4
      %v4105 = vrot.slane %v3984, 5
      %v4106 = vsel %vm1877, %v4104, %v4105
      %v4107 = vrot.slane %v4105, 4
      %v4108 = vrot.slane %v3985, 5
      %v4109 = vsel %vm1877, %v4107, %v4108
      %v4110 = vrot.slane %v3986, 5
      %v4111 = vrot.slane %v4110, 4
      %v4112 = vrot.slane %v3987, 5
      %v4113 = vsel %vm1877, %v4111, %v4112
      %v4114 = vrot.slane %v4112, 4
      %v4115 = vrot.slane %v3988, 5
      %v4116 = vsel %vm1877, %v4114, %v4115
      %v4117 = vrot.slane %v3989, 5
      %v4118 = vrot.slane %v4117, 4
      %v4119 = vrot.slane %v3990, 5
      %v4120 = vsel %vm1877, %v4118, %v4119
      %v4121 = vrot.slane %v4119, 4
      %v4122 = vrot.slane %v3991, 5
      %v4123 = vsel %vm1877, %v4121, %v4122
      %v4124 = vrot.slane %v3992, 5
      %v4125 = vrot.slane %v4124, 4
      %v4126 = vrot.slane %v3993, 5
      %v4127 = vsel %vm1877, %v4125, %v4126
      %v4128 = vrot.slane %v4126, 4
      %v4129 = vrot.slane %v3994, 5
      %v4130 = vsel %vm1877, %v4128, %v4129
      %v4131 = vrot.slane %v3995, 5
      %v4132 = vrot.slane %v4131, 4
      %v4133 = vrot.slane %v3996, 5
      %v4134 = vsel %vm1877, %v4132, %v4133
      %v4135 = vrot.slane %v4133, 4
      %v4136 = vrot.slane %v3997, 5
      %v4137 = vsel %vm1877, %v4135, %v4136
      %v4138 = vrot.slane %v3998, 5
      %v4139 = vrot.slane %v4138, 4
      %v4140 = vrot.slane %v3999, 5
      %v4141 = vsel %vm1877, %v4139, %v4140
      %v4142 = vrot.slane %v4140, 4
      %v4143 = vrot.slane %v4000, 5
      %v4144 = vsel %vm1877, %v4142, %v4143
      %v4145 = vrot.slane %v4001, 5
      %v4146 = vrot.slane %v4145, 4
      %v4147 = vrot.slane %v4002, 5
      %v4148 = vsel %vm1877, %v4146, %v4147
      %v4149 = vrot.slane %v4147, 4
      %v4150 = vrot.slane %v4003, 5
      %v4151 = vsel %vm1877, %v4149, %v4150
      %v4152 = vrot.slane %v4004, 5
      %v4153 = vrot.slane %v4152, 4
      %v4154 = vrot.slane %v4005, 5
      %v4155 = vsel %vm1877, %v4153, %v4154
      %v4156 = vrot.slane %v4154, 4
      %v4157 = vrot.slane %v4006, 5
      %v4158 = vsel %vm1877, %v4156, %v4157
      %v4159 = vrot.slane %v4007, 5
      %v4160 = vrot.slane %v4159, 4
      %v4161 = vrot.slane %v4008, 5
      %v4162 = vsel %vm1877, %v4160, %v4161
      %v4163 = vrot.slane %v4161, 4
      %v4164 = vrot.slane %v4009, 5
      %v4165 = vsel %vm1877, %v4163, %v4164
      %v4166 = vrot.slane %v4010, 5
      %v4167 = vrot.slane %v4166, 4
      %v4168 = vrot.slane %v4011, 5
      %v4169 = vsel %vm1877, %v4167, %v4168
      %v4170 = vrot.slane %v4168, 4
      %v4171 = vrot.slane %v4012, 5
      %v4172 = vsel %vm1877, %v4170, %v4171
      %4173 = vrot.lane.b32.xlu0 %v4064, 32
      %v4174 = vpop.permute.xlu0 %4173
      %4175 = vrot.lane.b32.xlu0 %v4067, 32
      %v4176 = vpop.permute.xlu0 %4175
      %4177 = vrot.lane.b32.xlu0 %v4071, 32
      %v4178 = vpop.permute.xlu0 %4177
      %4179 = vrot.lane.b32.xlu0 %v4074, 32
      %v4180 = vpop.permute.xlu0 %4179
      %4181 = vrot.lane.b32.xlu0 %v4078, 32
      %v4182 = vpop.permute.xlu0 %4181
      %4183 = vrot.lane.b32.xlu0 %v4081, 32
      %v4184 = vpop.permute.xlu0 %4183
      %4185 = vrot.lane.b32.xlu0 %v4085, 32
      %v4186 = vpop.permute.xlu0 %4185
      %4187 = vrot.lane.b32.xlu0 %v4088, 32
      %v4188 = vpop.permute.xlu0 %4187
      %4189 = vrot.lane.b32.xlu0 %v4092, 32
      %v4190 = vpop.permute.xlu0 %4189
      %4191 = vrot.lane.b32.xlu0 %v4095, 32
      %v4192 = vpop.permute.xlu0 %4191
      %4193 = vrot.lane.b32.xlu0 %v4099, 32
      %v4194 = vpop.permute.xlu0 %4193
      %4195 = vrot.lane.b32.xlu0 %v4102, 32
      %v4196 = vpop.permute.xlu0 %4195
      %4197 = vrot.lane.b32.xlu0 %v4106, 32
      %v4198 = vpop.permute.xlu0 %4197
      %4199 = vrot.lane.b32.xlu0 %v4109, 32
      %v4200 = vpop.permute.xlu0 %4199
      %4201 = vrot.lane.b32.xlu0 %v4113, 32
      %v4202 = vpop.permute.xlu0 %4201
      %4203 = vrot.lane.b32.xlu0 %v4116, 32
      %v4204 = vpop.permute.xlu0 %4203
      %4205 = vrot.lane.b32.xlu0 %v4120, 32
      %v4206 = vpop.permute.xlu0 %4205
      %4207 = vrot.lane.b32.xlu0 %v4123, 32
      %v4208 = vpop.permute.xlu0 %4207
      %4209 = vrot.lane.b32.xlu0 %v4127, 32
      %v4210 = vpop.permute.xlu0 %4209
      %4211 = vrot.lane.b32.xlu0 %v4130, 32
      %v4212 = vpop.permute.xlu0 %4211
      %4213 = vrot.lane.b32.xlu0 %v4134, 32
      %v4214 = vpop.permute.xlu0 %4213
      %4215 = vrot.lane.b32.xlu0 %v4137, 32
      %v4216 = vpop.permute.xlu0 %4215
      %4217 = vrot.lane.b32.xlu0 %v4141, 32
      %v4218 = vpop.permute.xlu0 %4217
      %4219 = vrot.lane.b32.xlu0 %v4144, 32
      %v4220 = vpop.permute.xlu0 %4219
      %4221 = vrot.lane.b32.xlu0 %v4148, 32
      %v4222 = vpop.permute.xlu0 %4221
      %4223 = vrot.lane.b32.xlu0 %v4151, 32
      %v4224 = vpop.permute.xlu0 %4223
      %4225 = vrot.lane.b32.xlu0 %v4155, 32
      %v4226 = vpop.permute.xlu0 %4225
      %4227 = vrot.lane.b32.xlu0 %v4158, 32
      %v4228 = vpop.permute.xlu0 %4227
      %4229 = vrot.lane.b32.xlu0 %v4162, 32
      %v4230 = vpop.permute.xlu0 %4229
      %4231 = vrot.lane.b32.xlu0 %v4165, 32
      %v4232 = vpop.permute.xlu0 %4231
      %4233 = vrot.lane.b32.xlu0 %v4169, 32
      %v4234 = vpop.permute.xlu0 %4233
      %4235 = vrot.lane.b32.xlu0 %v4172, 32
      %v4236 = vpop.permute.xlu0 %4235
      %vm4269 = vcmask 290048
      %4270 = vst.msk [vmem:[#allocation3] sm:$0xf] %vm4269, %v4174
      %4271 = vst.msk [vmem:[#allocation3 + $0x4] sm:$0xf] %vm4269, %v4176
      %4272 = vst.msk [vmem:[#allocation3 + $0x8] sm:$0xf] %vm4269, %v4178
      %4273 = vst.msk [vmem:[#allocation3 + $0xc] sm:$0xf] %vm4269, %v4180
      %4274 = vst.msk [vmem:[#allocation3 + $0x10] sm:$0xf] %vm4269, %v4182
      %4275 = vst.msk [vmem:[#allocation3 + $0x14] sm:$0xf] %vm4269, %v4184
      %4276 = vst.msk [vmem:[#allocation3 + $0x18] sm:$0xf] %vm4269, %v4186
      %4277 = vst.msk [vmem:[#allocation3 + $0x1c] sm:$0xf] %vm4269, %v4188
      %4278 = vst.msk [vmem:[#allocation3 + $0x20] sm:$0xf] %vm4269, %v4190
      %4279 = vst.msk [vmem:[#allocation3 + $0x24] sm:$0xf] %vm4269, %v4192
      %4280 = vst.msk [vmem:[#allocation3 + $0x28] sm:$0xf] %vm4269, %v4194
      %4281 = vst.msk [vmem:[#allocation3 + $0x2c] sm:$0xf] %vm4269, %v4196
      %4282 = vst.msk [vmem:[#allocation3 + $0x30] sm:$0xf] %vm4269, %v4198
      %4283 = vst.msk [vmem:[#allocation3 + $0x34] sm:$0xf] %vm4269, %v4200
      %4284 = vst.msk [vmem:[#allocation3 + $0x38] sm:$0xf] %vm4269, %v4202
      %4285 = vst.msk [vmem:[#allocation3 + $0x3c] sm:$0xf] %vm4269, %v4204
      %4286 = vst.msk [vmem:[#allocation3 + $0x40] sm:$0xf] %vm4269, %v4206
      %4287 = vst.msk [vmem:[#allocation3 + $0x44] sm:$0xf] %vm4269, %v4208
      %4288 = vst.msk [vmem:[#allocation3 + $0x48] sm:$0xf] %vm4269, %v4210
      %4289 = vst.msk [vmem:[#allocation3 + $0x4c] sm:$0xf] %vm4269, %v4212
      %4290 = vst.msk [vmem:[#allocation3 + $0x50] sm:$0xf] %vm4269, %v4214
      %4291 = vst.msk [vmem:[#allocation3 + $0x54] sm:$0xf] %vm4269, %v4216
      %4292 = vst.msk [vmem:[#allocation3 + $0x58] sm:$0xf] %vm4269, %v4218
      %4293 = vst.msk [vmem:[#allocation3 + $0x5c] sm:$0xf] %vm4269, %v4220
      %4294 = vst.msk [vmem:[#allocation3 + $0x60] sm:$0xf] %vm4269, %v4222
      %4295 = vst.msk [vmem:[#allocation3 + $0x64] sm:$0xf] %vm4269, %v4224
      %4296 = vst.msk [vmem:[#allocation3 + $0x68] sm:$0xf] %vm4269, %v4226
      %4297 = vst.msk [vmem:[#allocation3 + $0x6c] sm:$0xf] %vm4269, %v4228
      %4298 = vst.msk [vmem:[#allocation3 + $0x70] sm:$0xf] %vm4269, %v4230
      %4299 = vst.msk [vmem:[#allocation3 + $0x74] sm:$0xf] %vm4269, %v4232
      %4300 = vst.msk [vmem:[#allocation3 + $0x78] sm:$0xf] %vm4269, %v4234
      %4301 = vst.msk [vmem:[#allocation3 + $0x7c] sm:$0xf] %vm4269, %v4236
      %v4302 = vld [vmem:[#allocation3] sm:$0xf]
      %v4303 = vld [vmem:[#allocation3 + $0x4] sm:$0xf]
      %v4304 = vld [vmem:[#allocation3 + $0x8] sm:$0xf]
      %v4305 = vld [vmem:[#allocation3 + $0xc] sm:$0xf]
      %v4306 = vld [vmem:[#allocation3 + $0x10] sm:$0xf]
      %v4307 = vld [vmem:[#allocation3 + $0x14] sm:$0xf]
      %v4308 = vld [vmem:[#allocation3 + $0x18] sm:$0xf]
      %v4309 = vld [vmem:[#allocation3 + $0x1c] sm:$0xf]
      %v4310 = vld [vmem:[#allocation3 + $0x20] sm:$0xf]
      %v4311 = vld [vmem:[#allocation3 + $0x24] sm:$0xf]
      %v4312 = vld [vmem:[#allocation3 + $0x28] sm:$0xf]
      %v4313 = vld [vmem:[#allocation3 + $0x2c] sm:$0xf]
      %v4314 = vld [vmem:[#allocation3 + $0x30] sm:$0xf]
      %v4315 = vld [vmem:[#allocation3 + $0x34] sm:$0xf]
      %v4316 = vld [vmem:[#allocation3 + $0x38] sm:$0xf]
      %v4317 = vld [vmem:[#allocation3 + $0x3c] sm:$0xf]
      %v4318 = vld [vmem:[#allocation3 + $0x40] sm:$0xf]
      %v4319 = vld [vmem:[#allocation3 + $0x44] sm:$0xf]
      %v4320 = vld [vmem:[#allocation3 + $0x48] sm:$0xf]
      %v4321 = vld [vmem:[#allocation3 + $0x4c] sm:$0xf]
      %v4322 = vld [vmem:[#allocation3 + $0x50] sm:$0xf]
      %v4323 = vld [vmem:[#allocation3 + $0x54] sm:$0xf]
      %v4324 = vld [vmem:[#allocation3 + $0x58] sm:$0xf]
      %v4325 = vld [vmem:[#allocation3 + $0x5c] sm:$0xf]
      %v4326 = vld [vmem:[#allocation3 + $0x60] sm:$0xf]
      %v4327 = vld [vmem:[#allocation3 + $0x64] sm:$0xf]
      %v4328 = vld [vmem:[#allocation3 + $0x68] sm:$0xf]
      %v4329 = vld [vmem:[#allocation3 + $0x6c] sm:$0xf]
      %v4330 = vld [vmem:[#allocation3 + $0x70] sm:$0xf]
      %v4331 = vld [vmem:[#allocation3 + $0x74] sm:$0xf]
      %v4332 = vld [vmem:[#allocation3 + $0x78] sm:$0xf]
      %v4333 = vld [vmem:[#allocation3 + $0x7c] sm:$0xf]
      %v4334 = vld [vmem:[%s5] sm:$0xf]
      %v4335 = vld [vmem:[%s5 + $0x4] sm:$0xf]
      %v4336 = vld [vmem:[%s5 + $0x8] sm:$0xf]
      %v4337 = vld [vmem:[%s5 + $0xc] sm:$0xf]
      %v4338 = vld [vmem:[%s5 + $0x10] sm:$0x3]
      %v4371 = vunpack.c.l.b16 %v4302
      %v4372 = vunpack.c.l.b16 %v4303
      %v4373 = vunpack.c.l.b16 %v4304
      %v4374 = vunpack.c.l.b16 %v4305
      %v4375 = vunpack.c.l.b16 %v4306
      %v4376 = vunpack.c.l.b16 %v4307
      %v4377 = vunpack.c.l.b16 %v4308
      %v4378 = vunpack.c.l.b16 %v4309
      %v4379 = vunpack.c.l.b16 %v4310
      %v4380 = vunpack.c.l.b16 %v4311
      %v4381 = vunpack.c.l.b16 %v4312
      %v4382 = vunpack.c.l.b16 %v4313
      %v4383 = vunpack.c.l.b16 %v4314
      %v4384 = vunpack.c.l.b16 %v4315
      %v4385 = vunpack.c.l.b16 %v4316
      %v4386 = vunpack.c.l.b16 %v4317
      %v4387 = vunpack.c.l.b16 %v4318
      %v4388 = vunpack.c.l.b16 %v4319
      %v4389 = vunpack.c.l.b16 %v4320
      %v4390 = vunpack.c.l.b16 %v4321
      %v4391 = vunpack.c.l.b16 %v4322
      %v4392 = vunpack.c.l.b16 %v4323
      %v4393 = vunpack.c.l.b16 %v4324
      %v4394 = vunpack.c.l.b16 %v4325
      %v4395 = vunpack.c.l.b16 %v4326
      %v4396 = vunpack.c.l.b16 %v4327
      %v4397 = vunpack.c.l.b16 %v4328
      %v4398 = vunpack.c.l.b16 %v4329
      %v4399 = vunpack.c.l.b16 %v4330
      %v4400 = vunpack.c.l.b16 %v4331
      %v4401 = vunpack.c.l.b16 %v4332
      %v4402 = vunpack.c.l.b16 %v4333
      %v4403 = vpack.c.b16 %v4372, %v4371
      %v4404 = vpack.c.b16 %v4374, %v4373
      %v4405 = vpack.c.b16 %v4376, %v4375
      %v4406 = vpack.c.b16 %v4378, %v4377
      %v4407 = vpack.c.b16 %v4380, %v4379
      %v4408 = vpack.c.b16 %v4382, %v4381
      %v4409 = vpack.c.b16 %v4384, %v4383
      %v4410 = vpack.c.b16 %v4386, %v4385
      %v4411 = vpack.c.b16 %v4388, %v4387
      %v4412 = vpack.c.b16 %v4390, %v4389
      %v4413 = vpack.c.b16 %v4392, %v4391
      %v4414 = vpack.c.b16 %v4394, %v4393
      %v4415 = vpack.c.b16 %v4396, %v4395
      %v4416 = vpack.c.b16 %v4398, %v4397
      %v4417 = vpack.c.b16 %v4400, %v4399
      %v4418 = vpack.c.b16 %v4402, %v4401
      %v4424 = vunpack.c.l.b16 %v4334
      %v4425 = vunpack.c.l.b16 %v4335
      %v4426 = vunpack.c.l.b16 %v4336
      %v4427 = vunpack.c.l.b16 %v4337
      %v4428 = vunpack.c.l.b16 %v4338
      %v4429 = vpack.c.b16 %v4425, %v4424
      %v4430 = vpack.c.b16 %v4427, %v4426
      %v4431 = vpack.c.b16 %v4428, %v4428
      %vm4434 = vcmask 293888
      %v4436 = vsel %vm4434, %v4403, 0
      %v4439 = vsel %vm4434, %v4404, 0
      %v4442 = vsel %vm4434, %v4405, 0
      %v4445 = vsel %vm4434, %v4406, 0
      %v4448 = vsel %vm4434, %v4407, 0
      %v4451 = vsel %vm4434, %v4408, 0
      %v4454 = vsel %vm4434, %v4409, 0
      %v4457 = vsel %vm4434, %v4410, 0
      %v4460 = vsel %vm4434, %v4411, 0
      %v4463 = vsel %vm4434, %v4412, 0
      %v4466 = vsel %vm4434, %v4413, 0
      %v4469 = vsel %vm4434, %v4414, 0
      %v4472 = vsel %vm4434, %v4415, 0
      %v4475 = vsel %vm4434, %v4416, 0
      %v4478 = vsel %vm4434, %v4417, 0
      %v4481 = vsel %vm4434, %v4418, 0
      %vm4483 = vcmask 1041408
      %v4485 = vsel %vm4483, %v4431, 0
      %4487 = vmatprep.subr.bf16.mxu0 0
      %4488 = vmatpush1.bf16.msra.mxu0 0
      %4489 = vmatprep.subr.bf16.mxu0 0
      %4490 = vmatpush1.bf16.msra.mxu0 0
      %4491 = vmatprep.subr.bf16.mxu0 0
      %4492 = vmatpush1.bf16.msra.mxu0 0
      %4493 = vmatprep.subr.bf16.mxu0 0
      %4494 = vmatpush1.bf16.msra.mxu0 0
      %4495 = vmatprep.subr.bf16.mxu0 0
      %4496 = vmatpush1.bf16.msra.mxu0 0
      %4497 = vmatprep.subr.bf16.mxu0 0
      %4498 = vmatpush1.bf16.msra.mxu0 %v4485
      %4499 = vmatprep.subr.bf16.mxu0 0
      %4500 = vmatpush1.bf16.msra.mxu0 %v4430
      %4501 = vmatprep.subr.bf16.mxu0 0
      %4502 = vmatpush1.bf16.msra.mxu0 %v4429
      %4503 = vmatprep.subr.bf16.mxu0 0
      %4504 = vmatpush2.bf16.msra.mxu0 0
      %4505 = vmatprep.subr.bf16.mxu0 0
      %4506 = vmatpush2.bf16.msra.mxu0 0
      %4507 = vmatprep.subr.bf16.mxu0 0
      %4508 = vmatpush2.bf16.msra.mxu0 0
      %4509 = vmatprep.subr.bf16.mxu0 0
      %4510 = vmatpush2.bf16.msra.mxu0 0
      %4511 = vmatprep.subr.bf16.mxu0 0
      %4512 = vmatpush2.bf16.msra.mxu0 0
      %4513 = vmatprep.subr.bf16.mxu0 0
      %4514 = vmatpush2.bf16.msra.mxu0 0
      %4515 = vmatprep.subr.bf16.mxu0 0
      %4516 = vmatpush2.bf16.msra.mxu0 0
      %4517 = vmatprep.subr.bf16.mxu0 0
      %4518 = vmatpush2.bf16.msra.mxu0 0
      %4519 = vmatprep.mubr.bf16.mxu0 0
      %4520 = vmatmul.mubr.bf16.gmra.mxu0 %v4436
      %v4521 = vpop.f32.mrf.mxu0
      %v4522 = vadd.f32 0.0, %v4521
      %v4523 = vpop.f32.mrf.mxu0
      %v4524 = vpop.f32.mrf.mxu0
      %v4525 = vadd.f32 0.0, %v4524
      %v4526 = vpop.f32.mrf.mxu0
      %4527 = vmatprep.mubr.bf16.mxu0 0
      %4528 = vmatmul.mubr.bf16.gmra.mxu0 %v4439
      %v4529 = vpop.f32.mrf.mxu0
      %v4530 = vadd.f32 0.0, %v4529
      %v4531 = vpop.f32.mrf.mxu0
      %v4532 = vpop.f32.mrf.mxu0
      %v4533 = vadd.f32 0.0, %v4532
      %v4534 = vpop.f32.mrf.mxu0
      %4535 = vmatprep.mubr.bf16.mxu0 0
      %4536 = vmatmul.mubr.bf16.gmra.mxu0 %v4442
      %v4537 = vpop.f32.mrf.mxu0
      %v4538 = vadd.f32 0.0, %v4537
      %v4539 = vpop.f32.mrf.mxu0
      %v4540 = vpop.f32.mrf.mxu0
      %v4541 = vadd.f32 0.0, %v4540
      %v4542 = vpop.f32.mrf.mxu0
      %4543 = vmatprep.mubr.bf16.mxu0 0
      %4544 = vmatmul.mubr.bf16.gmra.mxu0 %v4445
      %v4545 = vpop.f32.mrf.mxu0
      %v4546 = vadd.f32 0.0, %v4545
      %v4547 = vpop.f32.mrf.mxu0
      %v4548 = vpop.f32.mrf.mxu0
      %v4549 = vadd.f32 0.0, %v4548
      %v4550 = vpop.f32.mrf.mxu0
      %4551 = vmatprep.mubr.bf16.mxu0 0
      %4552 = vmatmul.mubr.bf16.gmra.mxu0 %v4448
      %v4553 = vpop.f32.mrf.mxu0
      %v4554 = vadd.f32 0.0, %v4553
      %v4555 = vpop.f32.mrf.mxu0
      %v4556 = vpop.f32.mrf.mxu0
      %v4557 = vadd.f32 0.0, %v4556
      %v4558 = vpop.f32.mrf.mxu0
      %4559 = vmatprep.mubr.bf16.mxu0 0
      %4560 = vmatmul.mubr.bf16.gmra.mxu0 %v4451
      %v4561 = vpop.f32.mrf.mxu0
      %v4562 = vadd.f32 0.0, %v4561
      %v4563 = vpop.f32.mrf.mxu0
      %v4564 = vpop.f32.mrf.mxu0
      %v4565 = vadd.f32 0.0, %v4564
      %v4566 = vpop.f32.mrf.mxu0
      %4567 = vmatprep.mubr.bf16.mxu0 0
      %4568 = vmatmul.mubr.bf16.gmra.mxu0 %v4454
      %v4569 = vpop.f32.mrf.mxu0
      %v4570 = vadd.f32 0.0, %v4569
      %v4571 = vpop.f32.mrf.mxu0
      %v4572 = vpop.f32.mrf.mxu0
      %v4573 = vadd.f32 0.0, %v4572
      %v4574 = vpop.f32.mrf.mxu0
      %4575 = vmatprep.mubr.bf16.mxu0 0
      %4576 = vmatmul.mubr.bf16.gmra.mxu0 %v4457
      %v4577 = vpop.f32.mrf.mxu0
      %v4578 = vadd.f32 0.0, %v4577
      %v4579 = vpop.f32.mrf.mxu0
      %v4580 = vpop.f32.mrf.mxu0
      %v4581 = vadd.f32 0.0, %v4580
      %v4582 = vpop.f32.mrf.mxu0
      %4583 = vmatprep.mubr.bf16.mxu0 0
      %4584 = vmatmul.mubr.bf16.gmra.mxu0 %v4460
      %v4585 = vpop.f32.mrf.mxu0
      %v4586 = vadd.f32 0.0, %v4585
      %v4587 = vpop.f32.mrf.mxu0
      %v4588 = vpop.f32.mrf.mxu0
      %v4589 = vadd.f32 0.0, %v4588
      %v4590 = vpop.f32.mrf.mxu0
      %4591 = vmatprep.mubr.bf16.mxu0 0
      %4592 = vmatmul.mubr.bf16.gmra.mxu0 %v4463
      %v4593 = vpop.f32.mrf.mxu0
      %v4594 = vadd.f32 0.0, %v4593
      %v4595 = vpop.f32.mrf.mxu0
      %v4596 = vpop.f32.mrf.mxu0
      %v4597 = vadd.f32 0.0, %v4596
      %v4598 = vpop.f32.mrf.mxu0
      %4599 = vmatprep.mubr.bf16.mxu0 0
      %4600 = vmatmul.mubr.bf16.gmra.mxu0 %v4466
      %v4601 = vpop.f32.mrf.mxu0
      %v4602 = vadd.f32 0.0, %v4601
      %v4603 = vpop.f32.mrf.mxu0
      %v4604 = vpop.f32.mrf.mxu0
      %v4605 = vadd.f32 0.0, %v4604
      %v4606 = vpop.f32.mrf.mxu0
      %4607 = vmatprep.mubr.bf16.mxu0 0
      %4608 = vmatmul.mubr.bf16.gmra.mxu0 %v4469
      %v4609 = vpop.f32.mrf.mxu0
      %v4610 = vadd.f32 0.0, %v4609
      %v4611 = vpop.f32.mrf.mxu0
      %v4612 = vpop.f32.mrf.mxu0
      %v4613 = vadd.f32 0.0, %v4612
      %v4614 = vpop.f32.mrf.mxu0
      %4615 = vmatprep.mubr.bf16.mxu0 0
      %4616 = vmatmul.mubr.bf16.gmra.mxu0 %v4472
      %v4617 = vpop.f32.mrf.mxu0
      %v4618 = vadd.f32 0.0, %v4617
      %v4619 = vpop.f32.mrf.mxu0
      %v4620 = vpop.f32.mrf.mxu0
      %v4621 = vadd.f32 0.0, %v4620
      %v4622 = vpop.f32.mrf.mxu0
      %4623 = vmatprep.mubr.bf16.mxu0 0
      %4624 = vmatmul.mubr.bf16.gmra.mxu0 %v4475
      %v4625 = vpop.f32.mrf.mxu0
      %v4626 = vadd.f32 0.0, %v4625
      %v4627 = vpop.f32.mrf.mxu0
      %v4628 = vpop.f32.mrf.mxu0
      %v4629 = vadd.f32 0.0, %v4628
      %v4630 = vpop.f32.mrf.mxu0
      %4631 = vmatprep.mubr.bf16.mxu0 0
      %4632 = vmatmul.mubr.bf16.gmra.mxu0 %v4478
      %v4633 = vpop.f32.mrf.mxu0
      %v4634 = vadd.f32 0.0, %v4633
      %v4635 = vpop.f32.mrf.mxu0
      %v4636 = vpop.f32.mrf.mxu0
      %v4637 = vadd.f32 0.0, %v4636
      %v4638 = vpop.f32.mrf.mxu0
      %4639 = vmatprep.mubr.bf16.mxu0 0
      %4640 = vmatmul.mubr.bf16.gmra.mxu0 %v4481
      %v4641 = vpop.f32.mrf.mxu0
      %v4642 = vadd.f32 0.0, %v4641
      %v4643 = vpop.f32.mrf.mxu0
      %v4644 = vpop.f32.mrf.mxu0
      %v4645 = vadd.f32 0.0, %v4644
      %v4646 = vpop.f32.mrf.mxu0
      %4647 = vdwg.mxu0
      %vm4648 = vcmask 64512
      %v4649 = vsel %vm4648, %v4522, 0.0
      %v4650 = vsel %vm4648, %v4525, 0.0
      %v4651 = vadd.f32 %v4649, %v4650
      %v4652 = vsel %vm4648, %v4530, 0.0
      %v4653 = vadd.f32 %v4651, %v4652
      %v4654 = vsel %vm4648, %v4533, 0.0
      %v4655 = vadd.f32 %v4653, %v4654
      %v4656 = vsel %vm4648, %v4538, 0.0
      %v4657 = vadd.f32 %v4655, %v4656
      %v4658 = vsel %vm4648, %v4541, 0.0
      %v4659 = vadd.f32 %v4657, %v4658
      %v4660 = vsel %vm4648, %v4546, 0.0
      %v4661 = vadd.f32 %v4659, %v4660
      %v4662 = vsel %vm4648, %v4549, 0.0
      %v4663 = vadd.f32 %v4661, %v4662
      %v4664 = vsel %vm4648, %v4554, 0.0
      %v4665 = vadd.f32 %v4663, %v4664
      %v4666 = vsel %vm4648, %v4557, 0.0
      %v4667 = vadd.f32 %v4665, %v4666
      %v4668 = vsel %vm4648, %v4562, 0.0
      %v4669 = vadd.f32 %v4667, %v4668
      %v4670 = vsel %vm4648, %v4565, 0.0
      %v4671 = vadd.f32 %v4669, %v4670
      %v4672 = vsel %vm4648, %v4570, 0.0
      %v4673 = vadd.f32 %v4671, %v4672
      %v4674 = vsel %vm4648, %v4573, 0.0
      %v4675 = vadd.f32 %v4673, %v4674
      %v4676 = vsel %vm4648, %v4578, 0.0
      %v4677 = vadd.f32 %v4675, %v4676
      %v4678 = vsel %vm4648, %v4581, 0.0
      %v4679 = vadd.f32 %v4677, %v4678
      %v4680 = vsel %vm4648, %v4586, 0.0
      %v4681 = vadd.f32 %v4679, %v4680
      %v4682 = vsel %vm4648, %v4589, 0.0
      %v4683 = vadd.f32 %v4681, %v4682
      %v4684 = vsel %vm4648, %v4594, 0.0
      %v4685 = vadd.f32 %v4683, %v4684
      %v4686 = vsel %vm4648, %v4597, 0.0
      %v4687 = vadd.f32 %v4685, %v4686
      %v4688 = vsel %vm4648, %v4602, 0.0
      %v4689 = vadd.f32 %v4687, %v4688
      %v4690 = vsel %vm4648, %v4605, 0.0
      %v4691 = vadd.f32 %v4689, %v4690
      %v4692 = vsel %vm4648, %v4610, 0.0
      %v4693 = vadd.f32 %v4691, %v4692
      %v4694 = vsel %vm4648, %v4613, 0.0
      %v4695 = vadd.f32 %v4693, %v4694
      %v4696 = vsel %vm4648, %v4618, 0.0
      %v4697 = vadd.f32 %v4695, %v4696
      %v4698 = vsel %vm4648, %v4621, 0.0
      %v4699 = vadd.f32 %v4697, %v4698
      %v4700 = vsel %vm4648, %v4626, 0.0
      %v4701 = vadd.f32 %v4699, %v4700
      %v4702 = vsel %vm4648, %v4629, 0.0
      %v4703 = vadd.f32 %v4701, %v4702
      %v4704 = vsel %vm4648, %v4634, 0.0
      %v4705 = vadd.f32 %v4703, %v4704
      %v4706 = vsel %vm4648, %v4637, 0.0
      %v4707 = vadd.f32 %v4705, %v4706
      %v4708 = vsel %vm4648, %v4642, 0.0
      %v4709 = vadd.f32 %v4707, %v4708
      %v4710 = vsel %vm4648, %v4645, 0.0
      %v4711 = vadd.f32 %v4709, %v4710
      %v4712 = vrot.slane %v4711, 4
      %v4713 = vadd.f32 %v4711, %v4712
      %v4714 = vrot.slane %v4713, 2
      %v4715 = vadd.f32 %v4713, %v4714
      %v4716 = vrot.slane %v4715, 1
      %v4717 = vadd.f32 %v4715, %v4716
      %vm4718 = vcmask 57344
      %4719 = vst.msk [vmem:[%s477] sm:$0x1] %vm4718, %v4717
      %v4720 = vmul.f32 %v4522, %v4522
      %v4721 = vmul.f32 %v4525, %v4525
      %v4722 = vmul.f32 %v4530, %v4530
      %v4723 = vmul.f32 %v4533, %v4533
      %v4724 = vmul.f32 %v4538, %v4538
      %v4725 = vmul.f32 %v4541, %v4541
      %v4726 = vmul.f32 %v4546, %v4546
      %v4727 = vmul.f32 %v4549, %v4549
      %v4728 = vmul.f32 %v4554, %v4554
      %v4729 = vmul.f32 %v4557, %v4557
      %v4730 = vmul.f32 %v4562, %v4562
      %v4731 = vmul.f32 %v4565, %v4565
      %v4732 = vmul.f32 %v4570, %v4570
      %v4733 = vmul.f32 %v4573, %v4573
      %v4734 = vmul.f32 %v4578, %v4578
      %v4735 = vmul.f32 %v4581, %v4581
      %v4736 = vmul.f32 %v4586, %v4586
      %v4737 = vmul.f32 %v4589, %v4589
      %v4738 = vmul.f32 %v4594, %v4594
      %v4739 = vmul.f32 %v4597, %v4597
      %v4740 = vmul.f32 %v4602, %v4602
      %v4741 = vmul.f32 %v4605, %v4605
      %v4742 = vmul.f32 %v4610, %v4610
      %v4743 = vmul.f32 %v4613, %v4613
      %v4744 = vmul.f32 %v4618, %v4618
      %v4745 = vmul.f32 %v4621, %v4621
      %v4746 = vmul.f32 %v4626, %v4626
      %v4747 = vmul.f32 %v4629, %v4629
      %v4748 = vmul.f32 %v4634, %v4634
      %v4749 = vmul.f32 %v4637, %v4637
      %v4750 = vmul.f32 %v4642, %v4642
      %v4751 = vmul.f32 %v4645, %v4645
      %v4752 = vsel %vm4648, %v4720, 0.0
      %v4753 = vsel %vm4648, %v4721, 0.0
      %v4754 = vadd.f32 %v4752, %v4753
      %v4755 = vsel %vm4648, %v4722, 0.0
      %v4756 = vadd.f32 %v4754, %v4755
      %v4757 = vsel %vm4648, %v4723, 0.0
      %v4758 = vadd.f32 %v4756, %v4757
      %v4759 = vsel %vm4648, %v4724, 0.0
      %v4760 = vadd.f32 %v4758, %v4759
      %v4761 = vsel %vm4648, %v4725, 0.0
      %v4762 = vadd.f32 %v4760, %v4761
      %v4763 = vsel %vm4648, %v4726, 0.0
      %v4764 = vadd.f32 %v4762, %v4763
      %v4765 = vsel %vm4648, %v4727, 0.0
      %v4766 = vadd.f32 %v4764, %v4765
      %v4767 = vsel %vm4648, %v4728, 0.0
      %v4768 = vadd.f32 %v4766, %v4767
      %v4769 = vsel %vm4648, %v4729, 0.0
      %v4770 = vadd.f32 %v4768, %v4769
      %v4771 = vsel %vm4648, %v4730, 0.0
      %v4772 = vadd.f32 %v4770, %v4771
      %v4773 = vsel %vm4648, %v4731, 0.0
      %v4774 = vadd.f32 %v4772, %v4773
      %v4775 = vsel %vm4648, %v4732, 0.0
      %v4776 = vadd.f32 %v4774, %v4775
      %v4777 = vsel %vm4648, %v4733, 0.0
      %v4778 = vadd.f32 %v4776, %v4777
      %v4779 = vsel %vm4648, %v4734, 0.0
      %v4780 = vadd.f32 %v4778, %v4779
      %v4781 = vsel %vm4648, %v4735, 0.0
      %v4782 = vadd.f32 %v4780, %v4781
      %v4783 = vsel %vm4648, %v4736, 0.0
      %v4784 = vadd.f32 %v4782, %v4783
      %v4785 = vsel %vm4648, %v4737, 0.0
      %v4786 = vadd.f32 %v4784, %v4785
      %v4787 = vsel %vm4648, %v4738, 0.0
      %v4788 = vadd.f32 %v4786, %v4787
      %v4789 = vsel %vm4648, %v4739, 0.0
      %v4790 = vadd.f32 %v4788, %v4789
      %v4791 = vsel %vm4648, %v4740, 0.0
      %v4792 = vadd.f32 %v4790, %v4791
      %v4793 = vsel %vm4648, %v4741, 0.0
      %v4794 = vadd.f32 %v4792, %v4793
      %v4795 = vsel %vm4648, %v4742, 0.0
      %v4796 = vadd.f32 %v4794, %v4795
      %v4797 = vsel %vm4648, %v4743, 0.0
      %v4798 = vadd.f32 %v4796, %v4797
      %v4799 = vsel %vm4648, %v4744, 0.0
      %v4800 = vadd.f32 %v4798, %v4799
      %v4801 = vsel %vm4648, %v4745, 0.0
      %v4802 = vadd.f32 %v4800, %v4801
      %v4803 = vsel %vm4648, %v4746, 0.0
      %v4804 = vadd.f32 %v4802, %v4803
      %v4805 = vsel %vm4648, %v4747, 0.0
      %v4806 = vadd.f32 %v4804, %v4805
      %v4807 = vsel %vm4648, %v4748, 0.0
      %v4808 = vadd.f32 %v4806, %v4807
      %v4809 = vsel %vm4648, %v4749, 0.0
      %v4810 = vadd.f32 %v4808, %v4809
      %v4811 = vsel %vm4648, %v4750, 0.0
      %v4812 = vadd.f32 %v4810, %v4811
      %v4813 = vsel %vm4648, %v4751, 0.0
      %v4814 = vadd.f32 %v4812, %v4813
      %v4815 = vrot.slane %v4814, 4
      %v4816 = vadd.f32 %v4814, %v4815
      %v4817 = vrot.slane %v4816, 2
      %v4818 = vadd.f32 %v4816, %v4817
      %v4819 = vrot.slane %v4818, 1
      %v4820 = vadd.f32 %v4818, %v4819
      %4821 = vst.msk [vmem:[%s477 + $0x1] sm:$0x1] %vm4718, %v4820
      %v4822 = vpack.c.bf16 %v4525, %v4522
      %v4823 = vpack.c.bf16 %v4533, %v4530
      %v4824 = vpack.c.bf16 %v4541, %v4538
      %v4825 = vpack.c.bf16 %v4549, %v4546
      %v4826 = vpack.c.bf16 %v4557, %v4554
      %v4827 = vpack.c.bf16 %v4565, %v4562
      %v4828 = vpack.c.bf16 %v4573, %v4570
      %v4829 = vpack.c.bf16 %v4581, %v4578
      %v4830 = vpack.c.bf16 %v4589, %v4586
      %v4831 = vpack.c.bf16 %v4597, %v4594
      %v4832 = vpack.c.bf16 %v4605, %v4602
      %v4833 = vpack.c.bf16 %v4613, %v4610
      %v4834 = vpack.c.bf16 %v4621, %v4618
      %v4835 = vpack.c.bf16 %v4629, %v4626
      %v4836 = vpack.c.bf16 %v4637, %v4634
      %v4837 = vpack.c.bf16 %v4645, %v4642
      %v4854 = vunpack.c.l.b16 %v4822
      %v4855 = vunpack.c.h.b16 %v4822
      %v4856 = vunpack.c.l.b16 %v4823
      %v4857 = vunpack.c.h.b16 %v4823
      %v4858 = vunpack.c.l.b16 %v4824
      %v4859 = vunpack.c.h.b16 %v4824
      %v4860 = vunpack.c.l.b16 %v4825
      %v4861 = vunpack.c.h.b16 %v4825
      %v4862 = vunpack.c.l.b16 %v4826
      %v4863 = vunpack.c.h.b16 %v4826
      %v4864 = vunpack.c.l.b16 %v4827
      %v4865 = vunpack.c.h.b16 %v4827
      %v4866 = vunpack.c.l.b16 %v4828
      %v4867 = vunpack.c.h.b16 %v4828
      %v4868 = vunpack.c.l.b16 %v4829
      %v4869 = vunpack.c.h.b16 %v4829
      %v4870 = vunpack.c.l.b16 %v4830
      %v4871 = vunpack.c.h.b16 %v4830
      %v4872 = vunpack.c.l.b16 %v4831
      %v4873 = vunpack.c.h.b16 %v4831
      %v4874 = vunpack.c.l.b16 %v4832
      %v4875 = vunpack.c.h.b16 %v4832
      %v4876 = vunpack.c.l.b16 %v4833
      %v4877 = vunpack.c.h.b16 %v4833
      %v4878 = vunpack.c.l.b16 %v4834
      %v4879 = vunpack.c.h.b16 %v4834
      %v4880 = vunpack.c.l.b16 %v4835
      %v4881 = vunpack.c.h.b16 %v4835
      %v4882 = vunpack.c.l.b16 %v4836
      %v4883 = vunpack.c.h.b16 %v4836
      %v4884 = vunpack.c.l.b16 %v4837
      %v4885 = vunpack.c.h.b16 %v4837
      %v4886 = vpack.c.b16 %v4854, %v4854
      %v4887 = vpack.c.b16 %v4855, %v4855
      %v4888 = vpack.c.b16 %v4856, %v4856
      %v4889 = vpack.c.b16 %v4857, %v4857
      %v4890 = vpack.c.b16 %v4858, %v4858
      %v4891 = vpack.c.b16 %v4859, %v4859
      %v4892 = vpack.c.b16 %v4860, %v4860
      %v4893 = vpack.c.b16 %v4861, %v4861
      %v4894 = vpack.c.b16 %v4862, %v4862
      %v4895 = vpack.c.b16 %v4863, %v4863
      %v4896 = vpack.c.b16 %v4864, %v4864
      %v4897 = vpack.c.b16 %v4865, %v4865
      %v4898 = vpack.c.b16 %v4866, %v4866
      %v4899 = vpack.c.b16 %v4867, %v4867
      %v4900 = vpack.c.b16 %v4868, %v4868
      %v4901 = vpack.c.b16 %v4869, %v4869
      %v4902 = vpack.c.b16 %v4870, %v4870
      %v4903 = vpack.c.b16 %v4871, %v4871
      %v4904 = vpack.c.b16 %v4872, %v4872
      %v4905 = vpack.c.b16 %v4873, %v4873
      %v4906 = vpack.c.b16 %v4874, %v4874
      %v4907 = vpack.c.b16 %v4875, %v4875
      %v4908 = vpack.c.b16 %v4876, %v4876
      %v4909 = vpack.c.b16 %v4877, %v4877
      %v4910 = vpack.c.b16 %v4878, %v4878
      %v4911 = vpack.c.b16 %v4879, %v4879
      %v4912 = vpack.c.b16 %v4880, %v4880
      %v4913 = vpack.c.b16 %v4881, %v4881
      %v4914 = vpack.c.b16 %v4882, %v4882
      %v4915 = vpack.c.b16 %v4883, %v4883
      %v4916 = vpack.c.b16 %v4884, %v4884
      %v4917 = vpack.c.b16 %v4885, %v4885
      %vm4950 = vcmask 60416
      %4951 = vst.msk [vmem:[%s469] sm:$0xf] %vm4950, %v4886
      %4952 = vst.msk [vmem:[%s469 + $0x4] sm:$0xf] %vm4950, %v4887
      %4953 = vst.msk [vmem:[%s469 + $0x8] sm:$0xf] %vm4950, %v4888
      %4954 = vst.msk [vmem:[%s469 + $0xc] sm:$0xf] %vm4950, %v4889
      %4955 = vst.msk [vmem:[%s469 + $0x10] sm:$0xf] %vm4950, %v4890
      %4956 = vst.msk [vmem:[%s469 + $0x14] sm:$0xf] %vm4950, %v4891
      %4957 = vst.msk [vmem:[%s469 + $0x18] sm:$0xf] %vm4950, %v4892
      %4958 = vst.msk [vmem:[%s469 + $0x1c] sm:$0xf] %vm4950, %v4893
      %4959 = vst.msk [vmem:[%s469 + $0x20] sm:$0xf] %vm4950, %v4894
      %4960 = vst.msk [vmem:[%s469 + $0x24] sm:$0xf] %vm4950, %v4895
      %4961 = vst.msk [vmem:[%s469 + $0x28] sm:$0xf] %vm4950, %v4896
      %4962 = vst.msk [vmem:[%s469 + $0x2c] sm:$0xf] %vm4950, %v4897
      %4963 = vst.msk [vmem:[%s469 + $0x30] sm:$0xf] %vm4950, %v4898
      %4964 = vst.msk [vmem:[%s469 + $0x34] sm:$0xf] %vm4950, %v4899
      %4965 = vst.msk [vmem:[%s469 + $0x38] sm:$0xf] %vm4950, %v4900
      %4966 = vst.msk [vmem:[%s469 + $0x3c] sm:$0xf] %vm4950, %v4901
      %4967 = vst.msk [vmem:[%s469 + $0x40] sm:$0xf] %vm4950, %v4902
      %4968 = vst.msk [vmem:[%s469 + $0x44] sm:$0xf] %vm4950, %v4903
      %4969 = vst.msk [vmem:[%s469 + $0x48] sm:$0xf] %vm4950, %v4904
      %4970 = vst.msk [vmem:[%s469 + $0x4c] sm:$0xf] %vm4950, %v4905
      %4971 = vst.msk [vmem:[%s469 + $0x50] sm:$0xf] %vm4950, %v4906
      %4972 = vst.msk [vmem:[%s469 + $0x54] sm:$0xf] %vm4950, %v4907
      %4973 = vst.msk [vmem:[%s469 + $0x58] sm:$0xf] %vm4950, %v4908
      %4974 = vst.msk [vmem:[%s469 + $0x5c] sm:$0xf] %vm4950, %v4909
      %4975 = vst.msk [vmem:[%s469 + $0x60] sm:$0xf] %vm4950, %v4910
      %4976 = vst.msk [vmem:[%s469 + $0x64] sm:$0xf] %vm4950, %v4911
      %4977 = vst.msk [vmem:[%s469 + $0x68] sm:$0xf] %vm4950, %v4912
      %4978 = vst.msk [vmem:[%s469 + $0x6c] sm:$0xf] %vm4950, %v4913
      %4979 = vst.msk [vmem:[%s469 + $0x70] sm:$0xf] %vm4950, %v4914
      %4980 = vst.msk [vmem:[%s469 + $0x74] sm:$0xf] %vm4950, %v4915
      %4981 = vst.msk [vmem:[%s469 + $0x78] sm:$0xf] %vm4950, %v4916
      %4982 = vst.msk [vmem:[%s469 + $0x7c] sm:$0xf] %vm4950, %v4917
      %s4983 = smul.u32 32, %s24
      %p4984 = scmp.lt.s32.totalorder %s23, 1
      %s4985 = scalar_select %p4984, %s23, 1
      %p4986 = scmp.lt.s32.totalorder %s4983, 31
      %s4987 = scalar_select %p4986, %s4983, 31
      %s4988 = smul.addr %s4985, 32
      %s4989 = sadd.s32 %s4987, %s4988
      %s4990 = smul.addr %s4989, 4
      %s4991 = scalar_lea.vmem %s6, %s4990
      %p4992 = scmp.lt.s32.totalorder %s23, 1
      %s4993 = scalar_select %p4992, %s23, 1
      %p4994 = scmp.lt.s32.totalorder %s24, 0
      %s4995 = scalar_select %p4994, %s24, 0
      %s4996 = sadd.s32 %s4995, %s4993
      %s4997 = smul.addr %s4996, 2
      %s4998 = scalar_lea.vmem %s7, %s4997
      // Predicated region
      $region61: #{double_conv.3} parent=43 // pred_check
        %p4999 = pneg %p218
      $region62: #{double_conv.3} parent=43 // pred_check_branch
        %5001 = sbr.rel (%p4999) target = $region64
      $region63: #{double_conv.3} parent=43 // pred_region
        %s5002 = smul.u32 32, %s24
      $region64: #{double_conv.3} parent=43 // pred_fallthru
        _
      // Predicated region
      $region65: #{double_conv.3} parent=43 // pred_check
        %p5003 = pneg %p246
      $region66: #{double_conv.3} parent=43 // pred_check_branch
        %5005 = sbr.rel (%p5003) target = $region68
      $region67: #{double_conv.3} parent=43 // pred_region
        _
      $region68: #{double_conv.3} parent=43 // pred_fallthru
        _
    $region44: #{double_conv.3} parent=5 // pred_fallthru
      _
    %p5006 = scmp.le.s32.totalorder 2, %s14
    // Predicated region
    $region69: #{double_conv.3} parent=5 // pred_check
      %p5007 = pneg %p5006
    $region70: #{double_conv.3} parent=5 // pred_check_branch
      %5009 = sbr.rel (%p5007) target = $region72
    $region71: #{double_conv.3} parent=5 // pred_region
      %s5010 = ssub.s32 %s14, 2
      // Predicated region
      $region73: #{double_conv.3} parent=71 // pred_check
        %p5011 = pneg %p224
      $region74: #{double_conv.3} parent=71 // pred_check_branch
        %5013 = sbr.rel (%p5011) target = $region76
      $region75: #{double_conv.3} parent=71 // pred_region
        %s5014 = smul.u32 32, %s26
        %p5015 = scmp.lt.s32.totalorder %s25, 1
        %s5016 = scalar_select %p5015, %s25, 1
        %p5017 = scmp.lt.s32.totalorder %s5014, 31
        %s5018 = scalar_select %p5017, %s5014, 31
        %s5019 = smul.addr %s5016, 32
        %s5020 = sadd.s32 %s5018, %s5019
        %s5021 = smul.addr %s5020, 4
        %s5022 = scalar_lea.vmem %s6, %s5021
      $region76: #{double_conv.3} parent=71 // pred_fallthru
        _
      // Predicated region
      $region77: #{double_conv.3} parent=71 // pred_check
        %p5023 = pneg %p252
      $region78: #{double_conv.3} parent=71 // pred_check_branch
        %5025 = sbr.rel (%p5023) target = $region80
      $region79: #{double_conv.3} parent=71 // pred_region
        %p5026 = scmp.lt.s32.totalorder %s25, 1
        %s5027 = scalar_select %p5026, %s25, 1
        %p5028 = scmp.lt.s32.totalorder %s26, 0
        %s5029 = scalar_select %p5028, %s26, 0
        %s5030 = sadd.s32 %s5029, %s5027
        %s5031 = smul.addr %s5030, 2
        %s5032 = scalar_lea.vmem %s7, %s5031
      $region80: #{double_conv.3} parent=71 // pred_fallthru
        _
    $region72: #{double_conv.3} parent=5 // pred_fallthru
      _
  $region6: #{double_conv.3} parent=0 // loop_footer
    %s18 = sadd.s32 1, %s14
  $region7: #{double_conv.3} parent=0 // loop_footer_branch
    %13 = sbr.rel target = $region3
  $region8: #{double_conv.3} parent=0 // loop_exit
    _

</llo_original>
